<compile_context>
chip_gen: v5e
topology: v5e:2x2
jax: 0.10.0
libtpu: 0.0.40
codegen_flags: <defaults>
</compile_context>

<pallas_src>
import functools
import math

import jax
import jax.numpy as jnp
from jax.experimental import pallas as pl
from jax.experimental.pallas import tpu as pltpu


COMPUTE_DTYPE = jnp.bfloat16          # MXU inputs / inter-kernel activations
VMEM_LIMIT = 48 * 1024 * 1024         # < 64 MiB -> legal on v7x; raiseable on v5e/v6e
LN_EPS = 1e-5                         # PyTorch LayerNorm default


# ----------------------------------------------------------------------------
# In-kernel building blocks
# ----------------------------------------------------------------------------

def _layernorm_f32(y, g, b, eps):
    # y: [T, D] f32, g/b: [1, D] f32   (PyTorch LayerNorm, biased variance)
    mean = jnp.mean(y, axis=-1, keepdims=True)
    var = jnp.mean(jnp.square(y - mean), axis=-1, keepdims=True)
    return (y - mean) * jax.lax.rsqrt(var + eps) * g + b


def _mha(q, k, v, *, nhead, scale, causal):
    """Multi-head attention for ONE batch element, all heads batched.

    q: [Tq, D], k/v: [Tk, D] (compute dtype).  Returns [Tq, D] float32.
    """
    Tq, D = q.shape
    Tk = k.shape[0]
    Dh = D // nhead

    def split_heads(x, T):                       # [T, D] -> [nhead, T, Dh]
        return jnp.transpose(x.reshape(T, nhead, Dh), (1, 0, 2))

    qh = split_heads(q, Tq)
    kh = split_heads(k, Tk)
    vh = split_heads(v, Tk)

    # one batched QK^T over all heads (f32 accumulation on the MXU)
    s = jnp.einsum('hqd,hkd->hqk', qh, kh,
                   preferred_element_type=jnp.float32) * scale     # [H, Tq, Tk]
    if causal:
        row = jax.lax.broadcasted_iota(jnp.int32, (Tq, Tk), 0)
        col = jax.lax.broadcasted_iota(jnp.int32, (Tq, Tk), 1)
        s = jnp.where((col <= row)[None, :, :], s, jnp.float32(-1e30))

    m = jnp.max(s, axis=-1, keepdims=True)
    p = jnp.exp(s - m)
    p = p / jnp.sum(p, axis=-1, keepdims=True)                     # exact softmax

    # one batched PV over all heads
    o = jnp.einsum('hqk,hkd->hqd', p.astype(vh.dtype), vh,
                   preferred_element_type=jnp.float32)             # [H, Tq, Dh]
    return jnp.transpose(o, (1, 0, 2)).reshape(Tq, D)              # [Tq, D] f32


# ----------------------------------------------------------------------------
# Fused decoder-layer kernel (one batch element per grid step)
# ----------------------------------------------------------------------------

def _decoder_layer_kernel(
        x_ref, mem_ref,
        sa_qkv_w, sa_qkv_b, sa_out_w, sa_out_b, n1_g, n1_b,
        ca_q_w, ca_q_b, ca_kv_w, ca_kv_b, ca_out_w, ca_out_b, n2_g, n2_b,
        ff_w1, ff_b1, ff_w2, ff_b2, n3_g, n3_b,
        o_ref, *, nhead, scale, causal, eps):
    # TODO(synk): flash-style K-tiling (online softmax over Tk tiles) would be
    # needed before scaling T/S to multi-thousand tokens on v7x's 64 MiB VMEM.
    x = x_ref[0]                 # [T, D]   compute dtype
    mem = mem_ref[0]             # [S, D]   compute dtype
    D = x.shape[-1]

    # ---- self-attention block (post-norm, nn.TransformerDecoderLayer default) ----
    qkv = jnp.dot(x, sa_qkv_w[...], preferred_element_type=jnp.float32) + sa_qkv_b[...]
    qkv = qkv.astype(x.dtype)
    attn = _mha(qkv[:, :D], qkv[:, D:2 * D], qkv[:, 2 * D:],
                nhead=nhead, scale=scale, causal=causal)            # [T, D] f32
    y = jnp.dot(attn.astype(x.dtype), sa_out_w[...],
                preferred_element_type=jnp.float32)
    y = y + sa_out_b[...] + x.astype(jnp.float32)
    x1 = _layernorm_f32(y, n1_g[...], n1_b[...], eps)               # f32
    x1c = x1.astype(x.dtype)

    # ---- cross-attention block (memory_mask = None -> no mask add) ----
    q = jnp.dot(x1c, ca_q_w[...], preferred_element_type=jnp.float32) + ca_q_b[...]
    kv = jnp.dot(mem, ca_kv_w[...], preferred_element_type=jnp.float32) + ca_kv_b[...]
    kv = kv.astype(x.dtype)
    attn2 = _mha(q.astype(x.dtype), kv[:, :D], kv[:, D:],
                 nhead=nhead, scale=scale, causal=False)            # [T, D] f32
    y2 = jnp.dot(attn2.astype(x.dtype), ca_out_w[...],
                 preferred_element_type=jnp.float32)
    y2 = y2 + ca_out_b[...] + x1
    x2 = _layernorm_f32(y2, n2_g[...], n2_b[...], eps)              # f32
    x2c = x2.astype(x.dtype)

    # ---- feed-forward block (linear1 + ReLU + linear2 + residual + LN) ----
    h = jnp.dot(x2c, ff_w1[...], preferred_element_type=jnp.float32) + ff_b1[...]
    h = jnp.maximum(h, 0.0).astype(x.dtype)
    y3 = jnp.dot(h, ff_w2[...], preferred_element_type=jnp.float32) + ff_b2[...]
    y3 = y3 + x2
    o_ref[0] = _layernorm_f32(y3, n3_g[...], n3_b[...], eps).astype(o_ref.dtype)


_LAYER_WEIGHT_NAMES = (
    "sa_qkv_w", "sa_qkv_b", "sa_out_w", "sa_out_b", "norm1_g", "norm1_b",
    "ca_q_w", "ca_q_b", "ca_kv_w", "ca_kv_b", "ca_out_w", "ca_out_b",
    "norm2_g", "norm2_b",
    "ff_w1", "ff_b1", "ff_w2", "ff_b2", "norm3_g", "norm3_b",
)


def decoder_layer(x, mem, p, *, nhead, scale, causal):
    """One fused TransformerDecoderLayer.  x: [B, T, D], mem: [B, S, D]."""
    B, T, D = x.shape
    S = mem.shape[1]
    weights = [p[n] for n in _LAYER_WEIGHT_NAMES]

    # All weights / biases / LN params are 2-D and constant across the grid.
    # (On v7x these could additionally be single-buffered via pipeline_mode.)
    weight_specs = [pl.BlockSpec(w.shape, lambda b: (0, 0)) for w in weights]

    return pl.pallas_call(
        functools.partial(_decoder_layer_kernel, nhead=nhead, scale=scale,
                          causal=causal, eps=LN_EPS),
        out_shape=jax.ShapeDtypeStruct((B, T, D), x.dtype),
        grid=(B,),
        in_specs=[pl.BlockSpec((1, T, D), lambda b: (b, 0, 0)),
                  pl.BlockSpec((1, S, D), lambda b: (b, 0, 0))] + weight_specs,
        out_specs=pl.BlockSpec((1, T, D), lambda b: (b, 0, 0)),
        compiler_params=pltpu.CompilerParams(
            dimension_semantics=("parallel",),
            vmem_limit_bytes=VMEM_LIMIT),
    )(x, mem, *weights)


# ----------------------------------------------------------------------------
# Final output projection (row-tiled, lane-padded to 128)
# ----------------------------------------------------------------------------

def _proj_kernel(x_ref, w_ref, b_ref, o_ref):
    y = jnp.dot(x_ref[...], w_ref[...], preferred_element_type=jnp.float32)
    o_ref[...] = (y + b_ref[...]).astype(o_ref.dtype)


def output_projection(x2, w, b, *, out_dtype=jnp.float32, tm=512):
    M, K = x2.shape
    N = w.shape[1]
    bm = min(tm, M)
    return pl.pallas_call(
        _proj_kernel,
        out_shape=jax.ShapeDtypeStruct((M, N), out_dtype),
        grid=(pl.cdiv(M, bm),),
        in_specs=[pl.BlockSpec((bm, K), lambda i: (i, 0)),
                  pl.BlockSpec((K, N), lambda i: (0, 0)),
                  pl.BlockSpec((1, N), lambda i: (0, 0))],
        out_specs=pl.BlockSpec((bm, N), lambda i: (i, 0)),
        compiler_params=pltpu.CompilerParams(
            dimension_semantics=("parallel",),
            vmem_limit_bytes=VMEM_LIMIT),
    )(x2, w, b)


# ----------------------------------------------------------------------------
# Model forward (glue in plain JAX, hot path in Pallas)
# ----------------------------------------------------------------------------

def positional_encoding(T, d_model, dtype=jnp.float32):
    position = jnp.arange(T, dtype=jnp.float32)[:, None]
    div_term = jnp.exp(jnp.arange(0, d_model, 2, dtype=jnp.float32)
                       * (-math.log(10000.0) / d_model))
    pe = jnp.zeros((T, d_model), jnp.float32)
    pe = pe.at[:, 0::2].set(jnp.sin(position * div_term))
    pe = pe.at[:, 1::2].set(jnp.cos(position * div_term))
    return pe.astype(dtype)


def beatmap_decoder_forward(params, tgt, memory, *, nhead, out_dim, causal_tgt=True):
    """PyTorch BeatmapDecoder.forward with tgt_mask = causal mask, memory_mask = None.

    TODO(synk): arbitrary dense tgt_mask / memory_mask tensors are not plumbed into
    the fused layer kernel (the causal mask is generated in-kernel with iota).
    """
    B, T, D = tgt.shape
    assert D % nhead == 0
    scale = 1.0 / math.sqrt(D // nhead)

    # positional encoding + dropout(eval => identity): cheap elementwise glue
    x = (tgt + positional_encoding(T, D)[None]).astype(COMPUTE_DTYPE)
    mem = memory.astype(COMPUTE_DTYPE)

    # one fused pallas_call per decoder layer
    for p in params["layers"]:
        x = decoder_layer(x, mem, p, nhead=nhead, scale=scale, causal=causal_tgt)

    # final output projection, lane-padded to 128 then sliced back (out_dim is static)
    y = output_projection(x.reshape(B * T, D), params["out_w"], params["out_b"])
    return y[:, :out_dim].reshape(B, T, out_dim)


# ----------------------------------------------------------------------------
# Parameters: PyTorch-layout construction + one-time prep into kernel layout
# ----------------------------------------------------------------------------

def make_torch_params(key, d_model, output_dim, nhead, num_layers, dim_ff):
    """Parameters in PyTorch layout (Linear weight = [out, in]; in_proj = [3D, D])."""
    def nrm(k, shape, sc=0.05):
        return sc * jax.random.normal(k, shape, jnp.float32)

    layers = []
    for li in range(num_layers):
        ks = jax.random.split(jax.random.fold_in(key, li), 12)
        layers.append({
            "self_in_proj_w": nrm(ks[0], (3 * d_model, d_model)),
            "self_in_proj_b": nrm(ks[1], (3 * d_model,)),
            "self_out_proj_w": nrm(ks[2], (d_model, d_model)),
            "self_out_proj_b": nrm(ks[3], (d_model,)),
            "cross_in_proj_w": nrm(ks[4], (3 * d_model, d_model)),
            "cross_in_proj_b": nrm(ks[5], (3 * d_model,)),
            "cross_out_proj_w": nrm(ks[6], (d_model, d_model)),
            "cross_out_proj_b": nrm(ks[7], (d_model,)),
            "linear1_w": nrm(ks[8], (dim_ff, d_model)),
            "linear1_b": jnp.zeros((dim_ff,), jnp.float32),
            "linear2_w": nrm(ks[9], (d_model, dim_ff)),
            "linear2_b": jnp.zeros((d_model,), jnp.float32),
            "norm1_g": jnp.ones((d_model,), jnp.float32),
            "norm1_b": jnp.zeros((d_model,), jnp.float32),
            "norm2_g": jnp.ones((d_model,), jnp.float32),
            "norm2_b": jnp.zeros((d_model,), jnp.float32),
            "norm3_g": jnp.ones((d_model,), jnp.float32),
            "norm3_b": jnp.zeros((d_model,), jnp.float32),
        })
    ko = jax.random.split(jax.random.fold_in(key, 10_000), 2)
    return {"layers": layers,
            "output_projection_w": nrm(ko[0], (output_dim, d_model)),
            "output_projection_b": nrm(ko[1], (output_dim,))}


def prepare_params(torch_params, compute_dtype=COMPUTE_DTYPE):
    """One-time prep (outside hot path): transpose weights to [K, N], cast to bf16,
    fuse QKV, split cross-attn in_proj into Q / KV, lane-pad the final projection.
    Returns (params_pytree, out_dim) -- out_dim is a static Python int."""
    def tw(w):        # [out, in] -> [in, out]
        return jnp.asarray(w).T.astype(compute_dtype)

    def brow(b):      # bias / LN param -> [1, N] f32
        return jnp.asarray(b, jnp.float32).reshape(1, -1)

    d_model = int(torch_params["layers"][0]["norm1_g"].shape[0])
    dim_ff = int(torch_params["layers"][0]["linear1_b"].shape[0])
    # TODO(synk): non-multiple-of-128 d_model / dim_feedforward would need zero
    # lane-padding plus width-masked LayerNorm / softmax statistics.
    assert d_model % 128 == 0 and dim_ff % 128 == 0, "use lane-dense widths"

    layers = []
    for p in torch_params["layers"]:
        D = d_model
        ca_w, ca_b = p["cross_in_proj_w"], p["cross_in_proj_b"]
        layers.append({
            "sa_qkv_w": tw(p["self_in_proj_w"]),       # [D, 3D]
            "sa_qkv_b": brow(p["self_in_proj_b"]),
            "sa_out_w": tw(p["self_out_proj_w"]),
            "sa_out_b": brow(p["self_out_proj_b"]),
            "ca_q_w": tw(ca_w[:D]),                    # [D, D]
            "ca_q_b": brow(ca_b[:D]),
            "ca_kv_w": tw(ca_w[D:]),                   # [D, 2D]
            "ca_kv_b": brow(ca_b[D:]),
            "ca_out_w": tw(p["cross_out_proj_w"]),
            "ca_out_b": brow(p["cross_out_proj_b"]),
            "ff_w1": tw(p["linear1_w"]),               # [D, F]
            "ff_b1": brow(p["linear1_b"]),
            "ff_w2": tw(p["linear2_w"]),               # [F, D]
            "ff_b2": brow(p["linear2_b"]),
            "norm1_g": brow(p["norm1_g"]), "norm1_b": brow(p["norm1_b"]),
            "norm2_g": brow(p["norm2_g"]), "norm2_b": brow(p["norm2_b"]),
            "norm3_g": brow(p["norm3_g"]), "norm3_b": brow(p["norm3_b"]),
        })

    w_out = jnp.asarray(torch_params["output_projection_w"]).T    # [D, out_dim]
    b_out = jnp.asarray(torch_params["output_projection_b"], jnp.float32)
    out_dim = int(w_out.shape[1])
    n_pad = ((out_dim + 127) // 128) * 128                        # lane-dense output
    w_pad = jnp.zeros((w_out.shape[0], n_pad), compute_dtype)
    w_pad = w_pad.at[:, :out_dim].set(w_out.astype(compute_dtype))
    b_pad = jnp.zeros((1, n_pad), jnp.float32).at[:, :out_dim].set(b_out)

    return {"layers": layers, "out_w": w_pad, "out_b": b_pad}, out_dim


# ----------------------------------------------------------------------------
# Main
# ----------------------------------------------------------------------------

if __name__ == "__main__":
    # small, decoder-consistent, lane-dense shapes
    d_model = 128
    output_dim = 16
    nhead = 4
    num_decoder_layers = 2
    dim_feedforward = 256
    B, T_tgt, T_src = 2, 8, 8

    key = jax.random.PRNGKey(0)
    k_p, k_tgt, k_mem = jax.random.split(key, 3)

    torch_params = make_torch_params(k_p, d_model, output_dim, nhead,
                                     num_decoder_layers, dim_feedforward)
    params, out_dim = prepare_params(torch_params)

    tgt = jax.random.normal(k_tgt, (B, T_tgt, d_model), jnp.float32)
    memory = jax.random.normal(k_mem, (B, T_src, d_model), jnp.float32)

    # tgt_mask = causal (generated in-kernel), memory_mask = None (no mask add)
    fwd = jax.jit(functools.partial(beatmap_decoder_forward, nhead=nhead,
                                    out_dim=out_dim, causal_tgt=True))
    out = jax.block_until_ready(fwd(params, tgt, memory))

    assert out.shape == (B, T_tgt, output_dim), out.shape
    assert bool(jnp.all(jnp.isfinite(out)))
    print("KERNEL_OK")
</pallas_src>

<mosaic_0001>
module attributes {stable_mosaic.version = 11 : i64} {
  func.func @_decoder_layer_kernel(%arg0: i32, %arg1: memref<1x8x128xbf16, #tpu.memory_space<vmem>>, %arg2: memref<1x8x128xbf16, #tpu.memory_space<vmem>>, %arg3: memref<128x384xbf16, #tpu.memory_space<vmem>>, %arg4: memref<1x384xf32, #tpu.memory_space<vmem>>, %arg5: memref<128x128xbf16, #tpu.memory_space<vmem>>, %arg6: memref<1x128xf32, #tpu.memory_space<vmem>>, %arg7: memref<1x128xf32, #tpu.memory_space<vmem>>, %arg8: memref<1x128xf32, #tpu.memory_space<vmem>>, %arg9: memref<128x128xbf16, #tpu.memory_space<vmem>>, %arg10: memref<1x128xf32, #tpu.memory_space<vmem>>, %arg11: memref<128x256xbf16, #tpu.memory_space<vmem>>, %arg12: memref<1x256xf32, #tpu.memory_space<vmem>>, %arg13: memref<128x128xbf16, #tpu.memory_space<vmem>>, %arg14: memref<1x128xf32, #tpu.memory_space<vmem>>, %arg15: memref<1x128xf32, #tpu.memory_space<vmem>>, %arg16: memref<1x128xf32, #tpu.memory_space<vmem>>, %arg17: memref<128x256xbf16, #tpu.memory_space<vmem>>, %arg18: memref<1x256xf32, #tpu.memory_space<vmem>>, %arg19: memref<256x128xbf16, #tpu.memory_space<vmem>>, %arg20: memref<1x128xf32, #tpu.memory_space<vmem>>, %arg21: memref<1x128xf32, #tpu.memory_space<vmem>>, %arg22: memref<1x128xf32, #tpu.memory_space<vmem>>, %arg23: memref<1x8x128xbf16, #tpu.memory_space<vmem>>) attributes {dimension_semantics = [#tpu.dimension_semantics<parallel>], iteration_bounds = array<i64: 2>, scalar_prefetch = 0 : i64, scratch_operands = 0 : i64, tpu.core_type = #tpu.core_type<tc>, window_params = [{transform_indices = @transform_0, window_bounds = array<i64: 1, 8, 128>}, {transform_indices = @transform_1, window_bounds = array<i64: 1, 8, 128>}, {pipeline_mode = #tpu.pipeline_mode<synchronous>, transform_indices = @transform_2, window_bounds = array<i64: 128, 384>}, {pipeline_mode = #tpu.pipeline_mode<synchronous>, transform_indices = @transform_3, window_bounds = array<i64: 1, 384>}, {pipeline_mode = #tpu.pipeline_mode<synchronous>, transform_indices = @transform_4, window_bounds = array<i64: 128, 128>}, {pipeline_mode = #tpu.pipeline_mode<synchronous>, transform_indices = @transform_5, window_bounds = array<i64: 1, 128>}, {pipeline_mode = #tpu.pipeline_mode<synchronous>, transform_indices = @transform_6, window_bounds = array<i64: 1, 128>}, {pipeline_mode = #tpu.pipeline_mode<synchronous>, transform_indices = @transform_7, window_bounds = array<i64: 1, 128>}, {pipeline_mode = #tpu.pipeline_mode<synchronous>, transform_indices = @transform_8, window_bounds = array<i64: 128, 128>}, {pipeline_mode = #tpu.pipeline_mode<synchronous>, transform_indices = @transform_9, window_bounds = array<i64: 1, 128>}, {pipeline_mode = #tpu.pipeline_mode<synchronous>, transform_indices = @transform_10, window_bounds = array<i64: 128, 256>}, {pipeline_mode = #tpu.pipeline_mode<synchronous>, transform_indices = @transform_11, window_bounds = array<i64: 1, 256>}, {pipeline_mode = #tpu.pipeline_mode<synchronous>, transform_indices = @transform_12, window_bounds = array<i64: 128, 128>}, {pipeline_mode = #tpu.pipeline_mode<synchronous>, transform_indices = @transform_13, window_bounds = array<i64: 1, 128>}, {pipeline_mode = #tpu.pipeline_mode<synchronous>, transform_indices = @transform_14, window_bounds = array<i64: 1, 128>}, {pipeline_mode = #tpu.pipeline_mode<synchronous>, transform_indices = @transform_15, window_bounds = array<i64: 1, 128>}, {pipeline_mode = #tpu.pipeline_mode<synchronous>, transform_indices = @transform_16, window_bounds = array<i64: 128, 256>}, {pipeline_mode = #tpu.pipeline_mode<synchronous>, transform_indices = @transform_17, window_bounds = array<i64: 1, 256>}, {pipeline_mode = #tpu.pipeline_mode<synchronous>, transform_indices = @transform_18, window_bounds = array<i64: 256, 128>}, {pipeline_mode = #tpu.pipeline_mode<synchronous>, transform_indices = @transform_19, window_bounds = array<i64: 1, 128>}, {pipeline_mode = #tpu.pipeline_mode<synchronous>, transform_indices = @transform_20, window_bounds = array<i64: 1, 128>}, {pipeline_mode = #tpu.pipeline_mode<synchronous>, transform_indices = @transform_21, window_bounds = array<i64: 1, 128>}, {transform_indices = @transform_22, window_bounds = array<i64: 1, 8, 128>}]} {
    %c0 = arith.constant 0 : index
    %c0_0 = arith.constant 0 : index
    %c0_1 = arith.constant 0 : index
    %0 = vector.load %arg1[%c0, %c0_0, %c0_1] : memref<1x8x128xbf16, #tpu.memory_space<vmem>>, vector<1x8x128xbf16>
    %1 = vector.shape_cast %0 : vector<1x8x128xbf16> to vector<8x128xbf16>
    %c0_2 = arith.constant 0 : index
    %c0_3 = arith.constant 0 : index
    %c0_4 = arith.constant 0 : index
    %2 = vector.load %arg2[%c0_2, %c0_3, %c0_4] : memref<1x8x128xbf16, #tpu.memory_space<vmem>>, vector<1x8x128xbf16>
    %3 = vector.shape_cast %2 : vector<1x8x128xbf16> to vector<8x128xbf16>
    %c0_5 = arith.constant 0 : index
    %c0_6 = arith.constant 0 : index
    %4 = vector.load %arg3[%c0_5, %c0_6] : memref<128x384xbf16, #tpu.memory_space<vmem>>, vector<128x384xbf16>
    %cst = arith.constant dense<0.000000e+00> : vector<8x384xf32>
    %5 = tpu.matmul %1, %4, %cst {dimension_numbers = #tpu.dot_dimension_numbers<[1], [0], [0], [1], [0, 0, 1, 1], [], []>} : vector<8x128xbf16>, vector<128x384xbf16>, vector<8x384xf32> -> vector<8x384xf32>
    %c0_7 = arith.constant 0 : index
    %c0_8 = arith.constant 0 : index
    %6 = vector.load %arg4[%c0_7, %c0_8] : memref<1x384xf32, #tpu.memory_space<vmem>>, vector<1x384xf32>
    %7 = vector.broadcast %6 : vector<1x384xf32> to vector<8x384xf32>
    %8 = arith.addf %5, %7 : vector<8x384xf32>
    %9 = arith.truncf %8 : vector<8x384xf32> to vector<8x384xbf16>
    %10 = vector.extract_strided_slice %9 {offsets = [0, 0], sizes = [8, 128], strides = [1, 1]} : vector<8x384xbf16> to vector<8x128xbf16>
    %11 = vector.extract_strided_slice %9 {offsets = [0, 128], sizes = [8, 128], strides = [1, 1]} : vector<8x384xbf16> to vector<8x128xbf16>
    %12 = vector.extract_strided_slice %9 {offsets = [0, 256], sizes = [8, 128], strides = [1, 1]} : vector<8x384xbf16> to vector<8x128xbf16>
    %13 = vector.shape_cast %10 : vector<8x128xbf16> to vector<8x4x32xbf16>
    %14 = tpu.transpose %13, [1, 0, 2] : vector<8x4x32xbf16> -> vector<4x8x32xbf16>
    %15 = vector.shape_cast %11 : vector<8x128xbf16> to vector<8x4x32xbf16>
    %16 = tpu.transpose %15, [1, 0, 2] : vector<8x4x32xbf16> -> vector<4x8x32xbf16>
    %17 = vector.shape_cast %12 : vector<8x128xbf16> to vector<8x4x32xbf16>
    %18 = tpu.transpose %17, [1, 0, 2] : vector<8x4x32xbf16> -> vector<4x8x32xbf16>
    "tpu.trace_start"() <{level = 10 : i32, message = "hqd,hkd->hqk"}> : () -> ()
    %cst_9 = arith.constant dense<0.000000e+00> : vector<4x8x8xf32>
    %19 = tpu.matmul %14, %16, %cst_9 {dimension_numbers = #tpu.dot_dimension_numbers<[2], [2], [1], [1], [0, 0, 0, 1, 1, 1], [0], [0]>} : vector<4x8x32xbf16>, vector<4x8x32xbf16>, vector<4x8x8xf32> -> vector<4x8x8xf32>
    "tpu.trace_stop"() : () -> ()
    %cst_10 = arith.constant 0.176776692 : f32
    %20 = vector.broadcast %cst_10 : f32 to vector<4x8x8xf32>
    %21 = arith.mulf %19, %20 : vector<4x8x8xf32>
    %22 = tpu.iota {dimensions = array<i32: 0>} : vector<8x8xi32>
    %23 = tpu.iota {dimensions = array<i32: 1>} : vector<8x8xi32>
    %24 = arith.cmpi sle, %23, %22 : vector<8x8xi32>
    %25 = vector.shape_cast %24 : vector<8x8xi1> to vector<1x8x8xi1>
    %cst_11 = arith.constant -1.000000e+30 : f32
    %26 = vector.shape_cast %25 : vector<1x8x8xi1> to vector<1x8x8xi1>
    %27 = vector.broadcast %26 : vector<1x8x8xi1> to vector<4x8x8xi1>
    %28 = vector.broadcast %cst_11 : f32 to vector<4x8x8xf32>
    %29 = arith.select %27, %21, %28 : vector<4x8x8xi1>, vector<4x8x8xf32>
    %cst_12 = arith.constant dense<0xFF800000> : vector<4x8xf32>
    %30 = vector.multi_reduction <maximumf>, %29, %cst_12 [2] : vector<4x8x8xf32> to vector<4x8xf32>
    %31 = vector.shape_cast %30 : vector<4x8xf32> to vector<4x8x1xf32>
    %32 = vector.broadcast %31 : vector<4x8x1xf32> to vector<4x8x8xf32>
    %33 = arith.subf %29, %32 : vector<4x8x8xf32>
    %34 = math.exp %33 : vector<4x8x8xf32>
    %cst_13 = arith.constant dense<0.000000e+00> : vector<4x8xf32>
    %35 = vector.multi_reduction <add>, %34, %cst_13 [2] : vector<4x8x8xf32> to vector<4x8xf32>
    %36 = vector.shape_cast %35 : vector<4x8xf32> to vector<4x8x1xf32>
    %37 = vector.broadcast %36 : vector<4x8x1xf32> to vector<4x8x8xf32>
    %38 = arith.divf %34, %37 : vector<4x8x8xf32>
    %39 = arith.truncf %38 : vector<4x8x8xf32> to vector<4x8x8xbf16>
    "tpu.trace_start"() <{level = 10 : i32, message = "hqk,hkd->hqd"}> : () -> ()
    %cst_14 = arith.constant dense<0.000000e+00> : vector<4x8x32xf32>
    %40 = tpu.matmul %39, %18, %cst_14 {dimension_numbers = #tpu.dot_dimension_numbers<[2], [1], [1], [2], [0, 0, 0, 1, 1, 2], [0], [0]>} : vector<4x8x8xbf16>, vector<4x8x32xbf16>, vector<4x8x32xf32> -> vector<4x8x32xf32>
    "tpu.trace_stop"() : () -> ()
    %41 = tpu.transpose %40, [1, 0, 2] : vector<4x8x32xf32> -> vector<8x4x32xf32>
    %42 = vector.shape_cast %41 : vector<8x4x32xf32> to vector<8x128xf32>
    %43 = arith.truncf %42 : vector<8x128xf32> to vector<8x128xbf16>
    %c0_15 = arith.constant 0 : index
    %c0_16 = arith.constant 0 : index
    %44 = vector.load %arg5[%c0_15, %c0_16] : memref<128x128xbf16, #tpu.memory_space<vmem>>, vector<128x128xbf16>
    %cst_17 = arith.constant dense<0.000000e+00> : vector<8x128xf32>
    %45 = tpu.matmul %43, %44, %cst_17 {dimension_numbers = #tpu.dot_dimension_numbers<[1], [0], [0], [1], [0, 0, 1, 1], [], []>} : vector<8x128xbf16>, vector<128x128xbf16>, vector<8x128xf32> -> vector<8x128xf32>
    %c0_18 = arith.constant 0 : index
    %c0_19 = arith.constant 0 : index
    %46 = vector.load %arg6[%c0_18, %c0_19] : memref<1x128xf32, #tpu.memory_space<vmem>>, vector<1x128xf32>
    %47 = vector.broadcast %46 : vector<1x128xf32> to vector<8x128xf32>
    %48 = arith.addf %45, %47 : vector<8x128xf32>
    %49 = arith.extf %1 : vector<8x128xbf16> to vector<8x128xf32>
    %50 = arith.addf %48, %49 : vector<8x128xf32>
    %c0_20 = arith.constant 0 : index
    %c0_21 = arith.constant 0 : index
    %51 = vector.load %arg7[%c0_20, %c0_21] : memref<1x128xf32, #tpu.memory_space<vmem>>, vector<1x128xf32>
    %c0_22 = arith.constant 0 : index
    %c0_23 = arith.constant 0 : index
    %52 = vector.load %arg8[%c0_22, %c0_23] : memref<1x128xf32, #tpu.memory_space<vmem>>, vector<1x128xf32>
    %cst_24 = arith.constant dense<0.000000e+00> : vector<8xf32>
    %53 = vector.multi_reduction <add>, %50, %cst_24 [1] : vector<8x128xf32> to vector<8xf32>
    %54 = vector.shape_cast %53 : vector<8xf32> to vector<8x1xf32>
    %cst_25 = arith.constant 1.280000e+02 : f32
    %55 = vector.broadcast %cst_25 : f32 to vector<8x1xf32>
    %56 = arith.divf %54, %55 : vector<8x1xf32>
    %57 = vector.broadcast %56 : vector<8x1xf32> to vector<8x128xf32>
    %58 = arith.subf %50, %57 : vector<8x128xf32>
    %59 = arith.mulf %58, %58 : vector<8x128xf32>
    %cst_26 = arith.constant dense<0.000000e+00> : vector<8xf32>
    %60 = vector.multi_reduction <add>, %59, %cst_26 [1] : vector<8x128xf32> to vector<8xf32>
    %61 = vector.shape_cast %60 : vector<8xf32> to vector<8x1xf32>
    %cst_27 = arith.constant 1.280000e+02 : f32
    %62 = vector.broadcast %cst_27 : f32 to vector<8x1xf32>
    %63 = arith.divf %61, %62 : vector<8x1xf32>
    %64 = vector.broadcast %56 : vector<8x1xf32> to vector<8x128xf32>
    %65 = arith.subf %50, %64 : vector<8x128xf32>
    %cst_28 = arith.constant 9.99999974E-6 : f32
    %66 = vector.broadcast %cst_28 : f32 to vector<8x1xf32>
    %67 = arith.addf %63, %66 : vector<8x1xf32>
    %68 = math.rsqrt %67 : vector<8x1xf32>
    %69 = vector.broadcast %68 : vector<8x1xf32> to vector<8x128xf32>
    %70 = arith.mulf %65, %69 : vector<8x128xf32>
    %71 = vector.broadcast %51 : vector<1x128xf32> to vector<8x128xf32>
    %72 = arith.mulf %70, %71 : vector<8x128xf32>
    %73 = vector.broadcast %52 : vector<1x128xf32> to vector<8x128xf32>
    %74 = arith.addf %72, %73 : vector<8x128xf32>
    %75 = arith.truncf %74 : vector<8x128xf32> to vector<8x128xbf16>
    %c0_29 = arith.constant 0 : index
    %c0_30 = arith.constant 0 : index
    %76 = vector.load %arg9[%c0_29, %c0_30] : memref<128x128xbf16, #tpu.memory_space<vmem>>, vector<128x128xbf16>
    %cst_31 = arith.constant dense<0.000000e+00> : vector<8x128xf32>
    %77 = tpu.matmul %75, %76, %cst_31 {dimension_numbers = #tpu.dot_dimension_numbers<[1], [0], [0], [1], [0, 0, 1, 1], [], []>} : vector<8x128xbf16>, vector<128x128xbf16>, vector<8x128xf32> -> vector<8x128xf32>
    %c0_32 = arith.constant 0 : index
    %c0_33 = arith.constant 0 : index
    %78 = vector.load %arg10[%c0_32, %c0_33] : memref<1x128xf32, #tpu.memory_space<vmem>>, vector<1x128xf32>
    %79 = vector.broadcast %78 : vector<1x128xf32> to vector<8x128xf32>
    %80 = arith.addf %77, %79 : vector<8x128xf32>
    %c0_34 = arith.constant 0 : index
    %c0_35 = arith.constant 0 : index
    %81 = vector.load %arg11[%c0_34, %c0_35] : memref<128x256xbf16, #tpu.memory_space<vmem>>, vector<128x256xbf16>
    %cst_36 = arith.constant dense<0.000000e+00> : vector<8x256xf32>
    %82 = tpu.matmul %3, %81, %cst_36 {dimension_numbers = #tpu.dot_dimension_numbers<[1], [0], [0], [1], [0, 0, 1, 1], [], []>} : vector<8x128xbf16>, vector<128x256xbf16>, vector<8x256xf32> -> vector<8x256xf32>
    %c0_37 = arith.constant 0 : index
    %c0_38 = arith.constant 0 : index
    %83 = vector.load %arg12[%c0_37, %c0_38] : memref<1x256xf32, #tpu.memory_space<vmem>>, vector<1x256xf32>
    %84 = vector.broadcast %83 : vector<1x256xf32> to vector<8x256xf32>
    %85 = arith.addf %82, %84 : vector<8x256xf32>
    %86 = arith.truncf %85 : vector<8x256xf32> to vector<8x256xbf16>
    %87 = arith.truncf %80 : vector<8x128xf32> to vector<8x128xbf16>
    %88 = vector.extract_strided_slice %86 {offsets = [0, 0], sizes = [8, 128], strides = [1, 1]} : vector<8x256xbf16> to vector<8x128xbf16>
    %89 = vector.extract_strided_slice %86 {offsets = [0, 128], sizes = [8, 128], strides = [1, 1]} : vector<8x256xbf16> to vector<8x128xbf16>
    %90 = vector.shape_cast %87 : vector<8x128xbf16> to vector<8x4x32xbf16>
    %91 = tpu.transpose %90, [1, 0, 2] : vector<8x4x32xbf16> -> vector<4x8x32xbf16>
    %92 = vector.shape_cast %88 : vector<8x128xbf16> to vector<8x4x32xbf16>
    %93 = tpu.transpose %92, [1, 0, 2] : vector<8x4x32xbf16> -> vector<4x8x32xbf16>
    %94 = vector.shape_cast %89 : vector<8x128xbf16> to vector<8x4x32xbf16>
    %95 = tpu.transpose %94, [1, 0, 2] : vector<8x4x32xbf16> -> vector<4x8x32xbf16>
    "tpu.trace_start"() <{level = 10 : i32, message = "hqd,hkd->hqk"}> : () -> ()
    %cst_39 = arith.constant dense<0.000000e+00> : vector<4x8x8xf32>
    %96 = tpu.matmul %91, %93, %cst_39 {dimension_numbers = #tpu.dot_dimension_numbers<[2], [2], [1], [1], [0, 0, 0, 1, 1, 1], [0], [0]>} : vector<4x8x32xbf16>, vector<4x8x32xbf16>, vector<4x8x8xf32> -> vector<4x8x8xf32>
    "tpu.trace_stop"() : () -> ()
    %cst_40 = arith.constant 0.176776692 : f32
    %97 = vector.broadcast %cst_40 : f32 to vector<4x8x8xf32>
    %98 = arith.mulf %96, %97 : vector<4x8x8xf32>
    %cst_41 = arith.constant dense<0xFF800000> : vector<4x8xf32>
    %99 = vector.multi_reduction <maximumf>, %98, %cst_41 [2] : vector<4x8x8xf32> to vector<4x8xf32>
    %100 = vector.shape_cast %99 : vector<4x8xf32> to vector<4x8x1xf32>
    %101 = vector.broadcast %100 : vector<4x8x1xf32> to vector<4x8x8xf32>
    %102 = arith.subf %98, %101 : vector<4x8x8xf32>
    %103 = math.exp %102 : vector<4x8x8xf32>
    %cst_42 = arith.constant dense<0.000000e+00> : vector<4x8xf32>
    %104 = vector.multi_reduction <add>, %103, %cst_42 [2] : vector<4x8x8xf32> to vector<4x8xf32>
    %105 = vector.shape_cast %104 : vector<4x8xf32> to vector<4x8x1xf32>
    %106 = vector.broadcast %105 : vector<4x8x1xf32> to vector<4x8x8xf32>
    %107 = arith.divf %103, %106 : vector<4x8x8xf32>
    %108 = arith.truncf %107 : vector<4x8x8xf32> to vector<4x8x8xbf16>
    "tpu.trace_start"() <{level = 10 : i32, message = "hqk,hkd->hqd"}> : () -> ()
    %cst_43 = arith.constant dense<0.000000e+00> : vector<4x8x32xf32>
    %109 = tpu.matmul %108, %95, %cst_43 {dimension_numbers = #tpu.dot_dimension_numbers<[2], [1], [1], [2], [0, 0, 0, 1, 1, 2], [0], [0]>} : vector<4x8x8xbf16>, vector<4x8x32xbf16>, vector<4x8x32xf32> -> vector<4x8x32xf32>
    "tpu.trace_stop"() : () -> ()
    %110 = tpu.transpose %109, [1, 0, 2] : vector<4x8x32xf32> -> vector<8x4x32xf32>
    %111 = vector.shape_cast %110 : vector<8x4x32xf32> to vector<8x128xf32>
    %112 = arith.truncf %111 : vector<8x128xf32> to vector<8x128xbf16>
    %c0_44 = arith.constant 0 : index
    %c0_45 = arith.constant 0 : index
    %113 = vector.load %arg13[%c0_44, %c0_45] : memref<128x128xbf16, #tpu.memory_space<vmem>>, vector<128x128xbf16>
    %cst_46 = arith.constant dense<0.000000e+00> : vector<8x128xf32>
    %114 = tpu.matmul %112, %113, %cst_46 {dimension_numbers = #tpu.dot_dimension_numbers<[1], [0], [0], [1], [0, 0, 1, 1], [], []>} : vector<8x128xbf16>, vector<128x128xbf16>, vector<8x128xf32> -> vector<8x128xf32>
    %c0_47 = arith.constant 0 : index
    %c0_48 = arith.constant 0 : index
    %115 = vector.load %arg14[%c0_47, %c0_48] : memref<1x128xf32, #tpu.memory_space<vmem>>, vector<1x128xf32>
    %116 = vector.broadcast %115 : vector<1x128xf32> to vector<8x128xf32>
    %117 = arith.addf %114, %116 : vector<8x128xf32>
    %118 = arith.addf %117, %74 : vector<8x128xf32>
    %c0_49 = arith.constant 0 : index
    %c0_50 = arith.constant 0 : index
    %119 = vector.load %arg15[%c0_49, %c0_50] : memref<1x128xf32, #tpu.memory_space<vmem>>, vector<1x128xf32>
    %c0_51 = arith.constant 0 : index
    %c0_52 = arith.constant 0 : index
    %120 = vector.load %arg16[%c0_51, %c0_52] : memref<1x128xf32, #tpu.memory_space<vmem>>, vector<1x128xf32>
    %cst_53 = arith.constant dense<0.000000e+00> : vector<8xf32>
    %121 = vector.multi_reduction <add>, %118, %cst_53 [1] : vector<8x128xf32> to vector<8xf32>
    %122 = vector.shape_cast %121 : vector<8xf32> to vector<8x1xf32>
    %cst_54 = arith.constant 1.280000e+02 : f32
    %123 = vector.broadcast %cst_54 : f32 to vector<8x1xf32>
    %124 = arith.divf %122, %123 : vector<8x1xf32>
    %125 = vector.broadcast %124 : vector<8x1xf32> to vector<8x128xf32>
    %126 = arith.subf %118, %125 : vector<8x128xf32>
    %127 = arith.mulf %126, %126 : vector<8x128xf32>
    %cst_55 = arith.constant dense<0.000000e+00> : vector<8xf32>
    %128 = vector.multi_reduction <add>, %127, %cst_55 [1] : vector<8x128xf32> to vector<8xf32>
    %129 = vector.shape_cast %128 : vector<8xf32> to vector<8x1xf32>
    %cst_56 = arith.constant 1.280000e+02 : f32
    %130 = vector.broadcast %cst_56 : f32 to vector<8x1xf32>
    %131 = arith.divf %129, %130 : vector<8x1xf32>
    %132 = vector.broadcast %124 : vector<8x1xf32> to vector<8x128xf32>
    %133 = arith.subf %118, %132 : vector<8x128xf32>
    %cst_57 = arith.constant 9.99999974E-6 : f32
    %134 = vector.broadcast %cst_57 : f32 to vector<8x1xf32>
    %135 = arith.addf %131, %134 : vector<8x1xf32>
    %136 = math.rsqrt %135 : vector<8x1xf32>
    %137 = vector.broadcast %136 : vector<8x1xf32> to vector<8x128xf32>
    %138 = arith.mulf %133, %137 : vector<8x128xf32>
    %139 = vector.broadcast %119 : vector<1x128xf32> to vector<8x128xf32>
    %140 = arith.mulf %138, %139 : vector<8x128xf32>
    %141 = vector.broadcast %120 : vector<1x128xf32> to vector<8x128xf32>
    %142 = arith.addf %140, %141 : vector<8x128xf32>
    %143 = arith.truncf %142 : vector<8x128xf32> to vector<8x128xbf16>
    %c0_58 = arith.constant 0 : index
    %c0_59 = arith.constant 0 : index
    %144 = vector.load %arg17[%c0_58, %c0_59] : memref<128x256xbf16, #tpu.memory_space<vmem>>, vector<128x256xbf16>
    %cst_60 = arith.constant dense<0.000000e+00> : vector<8x256xf32>
    %145 = tpu.matmul %143, %144, %cst_60 {dimension_numbers = #tpu.dot_dimension_numbers<[1], [0], [0], [1], [0, 0, 1, 1], [], []>} : vector<8x128xbf16>, vector<128x256xbf16>, vector<8x256xf32> -> vector<8x256xf32>
    %c0_61 = arith.constant 0 : index
    %c0_62 = arith.constant 0 : index
    %146 = vector.load %arg18[%c0_61, %c0_62] : memref<1x256xf32, #tpu.memory_space<vmem>>, vector<1x256xf32>
    %147 = vector.broadcast %146 : vector<1x256xf32> to vector<8x256xf32>
    %148 = arith.addf %145, %147 : vector<8x256xf32>
    %cst_63 = arith.constant 0.000000e+00 : f32
    %149 = vector.broadcast %cst_63 : f32 to vector<8x256xf32>
    %150 = arith.maximumf %148, %149 : vector<8x256xf32>
    %151 = arith.truncf %150 : vector<8x256xf32> to vector<8x256xbf16>
    %c0_64 = arith.constant 0 : index
    %c0_65 = arith.constant 0 : index
    %152 = vector.load %arg19[%c0_64, %c0_65] : memref<256x128xbf16, #tpu.memory_space<vmem>>, vector<256x128xbf16>
    %cst_66 = arith.constant dense<0.000000e+00> : vector<8x128xf32>
    %153 = tpu.matmul %151, %152, %cst_66 {dimension_numbers = #tpu.dot_dimension_numbers<[1], [0], [0], [1], [0, 0, 1, 1], [], []>} : vector<8x256xbf16>, vector<256x128xbf16>, vector<8x128xf32> -> vector<8x128xf32>
    %c0_67 = arith.constant 0 : index
    %c0_68 = arith.constant 0 : index
    %154 = vector.load %arg20[%c0_67, %c0_68] : memref<1x128xf32, #tpu.memory_space<vmem>>, vector<1x128xf32>
    %155 = vector.broadcast %154 : vector<1x128xf32> to vector<8x128xf32>
    %156 = arith.addf %153, %155 : vector<8x128xf32>
    %157 = arith.addf %156, %142 : vector<8x128xf32>
    %c0_69 = arith.constant 0 : index
    %c0_70 = arith.constant 0 : index
    %158 = vector.load %arg21[%c0_69, %c0_70] : memref<1x128xf32, #tpu.memory_space<vmem>>, vector<1x128xf32>
    %c0_71 = arith.constant 0 : index
    %c0_72 = arith.constant 0 : index
    %159 = vector.load %arg22[%c0_71, %c0_72] : memref<1x128xf32, #tpu.memory_space<vmem>>, vector<1x128xf32>
    %cst_73 = arith.constant dense<0.000000e+00> : vector<8xf32>
    %160 = vector.multi_reduction <add>, %157, %cst_73 [1] : vector<8x128xf32> to vector<8xf32>
    %161 = vector.shape_cast %160 : vector<8xf32> to vector<8x1xf32>
    %cst_74 = arith.constant 1.280000e+02 : f32
    %162 = vector.broadcast %cst_74 : f32 to vector<8x1xf32>
    %163 = arith.divf %161, %162 : vector<8x1xf32>
    %164 = vector.broadcast %163 : vector<8x1xf32> to vector<8x128xf32>
    %165 = arith.subf %157, %164 : vector<8x128xf32>
    %166 = arith.mulf %165, %165 : vector<8x128xf32>
    %cst_75 = arith.constant dense<0.000000e+00> : vector<8xf32>
    %167 = vector.multi_reduction <add>, %166, %cst_75 [1] : vector<8x128xf32> to vector<8xf32>
    %168 = vector.shape_cast %167 : vector<8xf32> to vector<8x1xf32>
    %cst_76 = arith.constant 1.280000e+02 : f32
    %169 = vector.broadcast %cst_76 : f32 to vector<8x1xf32>
    %170 = arith.divf %168, %169 : vector<8x1xf32>
    %171 = vector.broadcast %163 : vector<8x1xf32> to vector<8x128xf32>
    %172 = arith.subf %157, %171 : vector<8x128xf32>
    %cst_77 = arith.constant 9.99999974E-6 : f32
    %173 = vector.broadcast %cst_77 : f32 to vector<8x1xf32>
    %174 = arith.addf %170, %173 : vector<8x1xf32>
    %175 = math.rsqrt %174 : vector<8x1xf32>
    %176 = vector.broadcast %175 : vector<8x1xf32> to vector<8x128xf32>
    %177 = arith.mulf %172, %176 : vector<8x128xf32>
    %178 = vector.broadcast %158 : vector<1x128xf32> to vector<8x128xf32>
    %179 = arith.mulf %177, %178 : vector<8x128xf32>
    %180 = vector.broadcast %159 : vector<1x128xf32> to vector<8x128xf32>
    %181 = arith.addf %179, %180 : vector<8x128xf32>
    %182 = arith.truncf %181 : vector<8x128xf32> to vector<8x128xbf16>
    %c0_78 = arith.constant 0 : index
    %c0_79 = arith.constant 0 : index
    %c0_80 = arith.constant 0 : index
    %183 = vector.load %arg23[%c0_78, %c0_79, %c0_80] : memref<1x8x128xbf16, #tpu.memory_space<vmem>>, vector<1x8x128xbf16>
    %184 = vector.shape_cast %183 : vector<1x8x128xbf16> to vector<8x128xbf16>
    %185 = vector.shape_cast %182 : vector<8x128xbf16> to vector<1x8x128xbf16>
    tpu.vector_store %arg23[%c0_78, %c0_79, %c0_80], %185 {strides = array<i32>} : memref<1x8x128xbf16, #tpu.memory_space<vmem>>, vector<1x8x128xbf16>,
    return
  }
  func.func @transform_0(%arg0: i32) -> (i32, i32, i32) {
    %c0_i32 = arith.constant 0 : i32
    %c0_i32_0 = arith.constant 0 : i32
    %c0_i32_1 = arith.constant 0 : i32
    return %arg0, %c0_i32, %c0_i32_0 : i32, i32, i32
  }
  func.func @transform_1(%arg0: i32) -> (i32, i32, i32) {
    %c0_i32 = arith.constant 0 : i32
    %c0_i32_0 = arith.constant 0 : i32
    %c0_i32_1 = arith.constant 0 : i32
    return %arg0, %c0_i32, %c0_i32_0 : i32, i32, i32
  }
  func.func @transform_2(%arg0: i32) -> (i32, i32) {
    %c0_i32 = arith.constant 0 : i32
    %c0_i32_0 = arith.constant 0 : i32
    %c0_i32_1 = arith.constant 0 : i32
    return %c0_i32, %c0_i32_0 : i32, i32
  }
  func.func @transform_3(%arg0: i32) -> (i32, i32) {
    %c0_i32 = arith.constant 0 : i32
    %c0_i32_0 = arith.constant 0 : i32
    %c0_i32_1 = arith.constant 0 : i32
    return %c0_i32, %c0_i32_0 : i32, i32
  }
  func.func @transform_4(%arg0: i32) -> (i32, i32) {
    %c0_i32 = arith.constant 0 : i32
    %c0_i32_0 = arith.constant 0 : i32
    %c0_i32_1 = arith.constant 0 : i32
    return %c0_i32, %c0_i32_0 : i32, i32
  }
  func.func @transform_5(%arg0: i32) -> (i32, i32) {
    %c0_i32 = arith.constant 0 : i32
    %c0_i32_0 = arith.constant 0 : i32
    %c0_i32_1 = arith.constant 0 : i32
    return %c0_i32, %c0_i32_0 : i32, i32
  }
  func.func @transform_6(%arg0: i32) -> (i32, i32) {
    %c0_i32 = arith.constant 0 : i32
    %c0_i32_0 = arith.constant 0 : i32
    %c0_i32_1 = arith.constant 0 : i32
    return %c0_i32, %c0_i32_0 : i32, i32
  }
  func.func @transform_7(%arg0: i32) -> (i32, i32) {
    %c0_i32 = arith.constant 0 : i32
    %c0_i32_0 = arith.constant 0 : i32
    %c0_i32_1 = arith.constant 0 : i32
    return %c0_i32, %c0_i32_0 : i32, i32
  }
  func.func @transform_8(%arg0: i32) -> (i32, i32) {
    %c0_i32 = arith.constant 0 : i32
    %c0_i32_0 = arith.constant 0 : i32
    %c0_i32_1 = arith.constant 0 : i32
    return %c0_i32, %c0_i32_0 : i32, i32
  }
  func.func @transform_9(%arg0: i32) -> (i32, i32) {
    %c0_i32 = arith.constant 0 : i32
    %c0_i32_0 = arith.constant 0 : i32
    %c0_i32_1 = arith.constant 0 : i32
    return %c0_i32, %c0_i32_0 : i32, i32
  }
  func.func @transform_10(%arg0: i32) -> (i32, i32) {
    %c0_i32 = arith.constant 0 : i32
    %c0_i32_0 = arith.constant 0 : i32
    %c0_i32_1 = arith.constant 0 : i32
    return %c0_i32, %c0_i32_0 : i32, i32
  }
  func.func @transform_11(%arg0: i32) -> (i32, i32) {
    %c0_i32 = arith.constant 0 : i32
    %c0_i32_0 = arith.constant 0 : i32
    %c0_i32_1 = arith.constant 0 : i32
    return %c0_i32, %c0_i32_0 : i32, i32
  }
  func.func @transform_12(%arg0: i32) -> (i32, i32) {
    %c0_i32 = arith.constant 0 : i32
    %c0_i32_0 = arith.constant 0 : i32
    %c0_i32_1 = arith.constant 0 : i32
    return %c0_i32, %c0_i32_0 : i32, i32
  }
  func.func @transform_13(%arg0: i32) -> (i32, i32) {
    %c0_i32 = arith.constant 0 : i32
    %c0_i32_0 = arith.constant 0 : i32
    %c0_i32_1 = arith.constant 0 : i32
    return %c0_i32, %c0_i32_0 : i32, i32
  }
  func.func @transform_14(%arg0: i32) -> (i32, i32) {
    %c0_i32 = arith.constant 0 : i32
    %c0_i32_0 = arith.constant 0 : i32
    %c0_i32_1 = arith.constant 0 : i32
    return %c0_i32, %c0_i32_0 : i32, i32
  }
  func.func @transform_15(%arg0: i32) -> (i32, i32) {
    %c0_i32 = arith.constant 0 : i32
    %c0_i32_0 = arith.constant 0 : i32
    %c0_i32_1 = arith.constant 0 : i32
    return %c0_i32, %c0_i32_0 : i32, i32
  }
  func.func @transform_16(%arg0: i32) -> (i32, i32) {
    %c0_i32 = arith.constant 0 : i32
    %c0_i32_0 = arith.constant 0 : i32
    %c0_i32_1 = arith.constant 0 : i32
    return %c0_i32, %c0_i32_0 : i32, i32
  }
  func.func @transform_17(%arg0: i32) -> (i32, i32) {
    %c0_i32 = arith.constant 0 : i32
    %c0_i32_0 = arith.constant 0 : i32
    %c0_i32_1 = arith.constant 0 : i32
    return %c0_i32, %c0_i32_0 : i32, i32
  }
  func.func @transform_18(%arg0: i32) -> (i32, i32) {
    %c0_i32 = arith.constant 0 : i32
    %c0_i32_0 = arith.constant 0 : i32
    %c0_i32_1 = arith.constant 0 : i32
    return %c0_i32, %c0_i32_0 : i32, i32
  }
  func.func @transform_19(%arg0: i32) -> (i32, i32) {
    %c0_i32 = arith.constant 0 : i32
    %c0_i32_0 = arith.constant 0 : i32
    %c0_i32_1 = arith.constant 0 : i32
    return %c0_i32, %c0_i32_0 : i32, i32
  }
  func.func @transform_20(%arg0: i32) -> (i32, i32) {
    %c0_i32 = arith.constant 0 : i32
    %c0_i32_0 = arith.constant 0 : i32
    %c0_i32_1 = arith.constant 0 : i32
    return %c0_i32, %c0_i32_0 : i32, i32
  }
  func.func @transform_21(%arg0: i32) -> (i32, i32) {
    %c0_i32 = arith.constant 0 : i32
    %c0_i32_0 = arith.constant 0 : i32
    %c0_i32_1 = arith.constant 0 : i32
    return %c0_i32, %c0_i32_0 : i32, i32
  }
  func.func @transform_22(%arg0: i32) -> (i32, i32, i32) {
    %c0_i32 = arith.constant 0 : i32
    %c0_i32_0 = arith.constant 0 : i32
    %c0_i32_1 = arith.constant 0 : i32
    return %arg0, %c0_i32, %c0_i32_0 : i32, i32, i32
  }
}

module attributes {stable_mosaic.version = 11 : i64} {
  func.func @_decoder_layer_kernel(%arg0: i32, %arg1: memref<1x8x128xbf16, #tpu.memory_space<vmem>>, %arg2: memref<1x8x128xbf16, #tpu.memory_space<vmem>>, %arg3: memref<128x384xbf16, #tpu.memory_space<vmem>>, %arg4: memref<1x384xf32, #tpu.memory_space<vmem>>, %arg5: memref<128x128xbf16, #tpu.memory_space<vmem>>, %arg6: memref<1x128xf32, #tpu.memory_space<vmem>>, %arg7: memref<1x128xf32, #tpu.memory_space<vmem>>, %arg8: memref<1x128xf32, #tpu.memory_space<vmem>>, %arg9: memref<128x128xbf16, #tpu.memory_space<vmem>>, %arg10: memref<1x128xf32, #tpu.memory_space<vmem>>, %arg11: memref<128x256xbf16, #tpu.memory_space<vmem>>, %arg12: memref<1x256xf32, #tpu.memory_space<vmem>>, %arg13: memref<128x128xbf16, #tpu.memory_space<vmem>>, %arg14: memref<1x128xf32, #tpu.memory_space<vmem>>, %arg15: memref<1x128xf32, #tpu.memory_space<vmem>>, %arg16: memref<1x128xf32, #tpu.memory_space<vmem>>, %arg17: memref<128x256xbf16, #tpu.memory_space<vmem>>, %arg18: memref<1x256xf32, #tpu.memory_space<vmem>>, %arg19: memref<256x128xbf16, #tpu.memory_space<vmem>>, %arg20: memref<1x128xf32, #tpu.memory_space<vmem>>, %arg21: memref<1x128xf32, #tpu.memory_space<vmem>>, %arg22: memref<1x128xf32, #tpu.memory_space<vmem>>, %arg23: memref<1x8x128xbf16, #tpu.memory_space<vmem>>) attributes {dimension_semantics = [#tpu.dimension_semantics<parallel>], iteration_bounds = array<i64: 2>, scalar_prefetch = 0 : i64, scratch_operands = 0 : i64, tpu.core_type = #tpu.core_type<tc>, window_params = [{transform_indices = @transform_0, window_bounds = array<i64: 1, 8, 128>}, {transform_indices = @transform_1, window_bounds = array<i64: 1, 8, 128>}, {pipeline_mode = #tpu.pipeline_mode<synchronous>, transform_indices = @transform_2, window_bounds = array<i64: 128, 384>}, {pipeline_mode = #tpu.pipeline_mode<synchronous>, transform_indices = @transform_3, window_bounds = array<i64: 1, 384>}, {pipeline_mode = #tpu.pipeline_mode<synchronous>, transform_indices = @transform_4, window_bounds = array<i64: 128, 128>}, {pipeline_mode = #tpu.pipeline_mode<synchronous>, transform_indices = @transform_5, window_bounds = array<i64: 1, 128>}, {pipeline_mode = #tpu.pipeline_mode<synchronous>, transform_indices = @transform_6, window_bounds = array<i64: 1, 128>}, {pipeline_mode = #tpu.pipeline_mode<synchronous>, transform_indices = @transform_7, window_bounds = array<i64: 1, 128>}, {pipeline_mode = #tpu.pipeline_mode<synchronous>, transform_indices = @transform_8, window_bounds = array<i64: 128, 128>}, {pipeline_mode = #tpu.pipeline_mode<synchronous>, transform_indices = @transform_9, window_bounds = array<i64: 1, 128>}, {pipeline_mode = #tpu.pipeline_mode<synchronous>, transform_indices = @transform_10, window_bounds = array<i64: 128, 256>}, {pipeline_mode = #tpu.pipeline_mode<synchronous>, transform_indices = @transform_11, window_bounds = array<i64: 1, 256>}, {pipeline_mode = #tpu.pipeline_mode<synchronous>, transform_indices = @transform_12, window_bounds = array<i64: 128, 128>}, {pipeline_mode = #tpu.pipeline_mode<synchronous>, transform_indices = @transform_13, window_bounds = array<i64: 1, 128>}, {pipeline_mode = #tpu.pipeline_mode<synchronous>, transform_indices = @transform_14, window_bounds = array<i64: 1, 128>}, {pipeline_mode = #tpu.pipeline_mode<synchronous>, transform_indices = @transform_15, window_bounds = array<i64: 1, 128>}, {pipeline_mode = #tpu.pipeline_mode<synchronous>, transform_indices = @transform_16, window_bounds = array<i64: 128, 256>}, {pipeline_mode = #tpu.pipeline_mode<synchronous>, transform_indices = @transform_17, window_bounds = array<i64: 1, 256>}, {pipeline_mode = #tpu.pipeline_mode<synchronous>, transform_indices = @transform_18, window_bounds = array<i64: 256, 128>}, {pipeline_mode = #tpu.pipeline_mode<synchronous>, transform_indices = @transform_19, window_bounds = array<i64: 1, 128>}, {pipeline_mode = #tpu.pipeline_mode<synchronous>, transform_indices = @transform_20, window_bounds = array<i64: 1, 128>}, {pipeline_mode = #tpu.pipeline_mode<synchronous>, transform_indices = @transform_21, window_bounds = array<i64: 1, 128>}, {transform_indices = @transform_22, window_bounds = array<i64: 1, 8, 128>}]} {
    %c0 = arith.constant 0 : index
    %c0_0 = arith.constant 0 : index
    %c0_1 = arith.constant 0 : index
    %0 = vector.load %arg1[%c0, %c0_0, %c0_1] : memref<1x8x128xbf16, #tpu.memory_space<vmem>>, vector<1x8x128xbf16>
    %1 = vector.shape_cast %0 : vector<1x8x128xbf16> to vector<8x128xbf16>
    %c0_2 = arith.constant 0 : index
    %c0_3 = arith.constant 0 : index
    %c0_4 = arith.constant 0 : index
    %2 = vector.load %arg2[%c0_2, %c0_3, %c0_4] : memref<1x8x128xbf16, #tpu.memory_space<vmem>>, vector<1x8x128xbf16>
    %3 = vector.shape_cast %2 : vector<1x8x128xbf16> to vector<8x128xbf16>
    %c0_5 = arith.constant 0 : index
    %c0_6 = arith.constant 0 : index
    %4 = vector.load %arg3[%c0_5, %c0_6] : memref<128x384xbf16, #tpu.memory_space<vmem>>, vector<128x384xbf16>
    %cst = arith.constant dense<0.000000e+00> : vector<8x384xf32>
    %5 = tpu.matmul %1, %4, %cst {dimension_numbers = #tpu.dot_dimension_numbers<[1], [0], [0], [1], [0, 0, 1, 1], [], []>} : vector<8x128xbf16>, vector<128x384xbf16>, vector<8x384xf32> -> vector<8x384xf32>
    %c0_7 = arith.constant 0 : index
    %c0_8 = arith.constant 0 : index
    %6 = vector.load %arg4[%c0_7, %c0_8] : memref<1x384xf32, #tpu.memory_space<vmem>>, vector<1x384xf32>
    %7 = vector.broadcast %6 : vector<1x384xf32> to vector<8x384xf32>
    %8 = arith.addf %5, %7 : vector<8x384xf32>
    %9 = arith.truncf %8 : vector<8x384xf32> to vector<8x384xbf16>
    %10 = vector.extract_strided_slice %9 {offsets = [0, 0], sizes = [8, 128], strides = [1, 1]} : vector<8x384xbf16> to vector<8x128xbf16>
    %11 = vector.extract_strided_slice %9 {offsets = [0, 128], sizes = [8, 128], strides = [1, 1]} : vector<8x384xbf16> to vector<8x128xbf16>
    %12 = vector.extract_strided_slice %9 {offsets = [0, 256], sizes = [8, 128], strides = [1, 1]} : vector<8x384xbf16> to vector<8x128xbf16>
    %13 = vector.shape_cast %10 : vector<8x128xbf16> to vector<8x4x32xbf16>
    %14 = tpu.transpose %13, [1, 0, 2] : vector<8x4x32xbf16> -> vector<4x8x32xbf16>
    %15 = vector.shape_cast %11 : vector<8x128xbf16> to vector<8x4x32xbf16>
    %16 = tpu.transpose %15, [1, 0, 2] : vector<8x4x32xbf16> -> vector<4x8x32xbf16>
    %17 = vector.shape_cast %12 : vector<8x128xbf16> to vector<8x4x32xbf16>
    %18 = tpu.transpose %17, [1, 0, 2] : vector<8x4x32xbf16> -> vector<4x8x32xbf16>
    "tpu.trace_start"() <{level = 10 : i32, message = "hqd,hkd->hqk"}> : () -> ()
    %cst_9 = arith.constant dense<0.000000e+00> : vector<4x8x8xf32>
    %19 = tpu.matmul %14, %16, %cst_9 {dimension_numbers = #tpu.dot_dimension_numbers<[2], [2], [1], [1], [0, 0, 0, 1, 1, 1], [0], [0]>} : vector<4x8x32xbf16>, vector<4x8x32xbf16>, vector<4x8x8xf32> -> vector<4x8x8xf32>
    "tpu.trace_stop"() : () -> ()
    %cst_10 = arith.constant 0.176776692 : f32
    %20 = vector.broadcast %cst_10 : f32 to vector<4x8x8xf32>
    %21 = arith.mulf %19, %20 : vector<4x8x8xf32>
    %22 = tpu.iota {dimensions = array<i32: 0>} : vector<8x8xi32>
    %23 = tpu.iota {dimensions = array<i32: 1>} : vector<8x8xi32>
    %24 = arith.cmpi sle, %23, %22 : vector<8x8xi32>
    %25 = vector.shape_cast %24 : vector<8x8xi1> to vector<1x8x8xi1>
    %cst_11 = arith.constant -1.000000e+30 : f32
    %26 = vector.shape_cast %25 : vector<1x8x8xi1> to vector<1x8x8xi1>
    %27 = vector.broadcast %26 : vector<1x8x8xi1> to vector<4x8x8xi1>
    %28 = vector.broadcast %cst_11 : f32 to vector<4x8x8xf32>
    %29 = arith.select %27, %21, %28 : vector<4x8x8xi1>, vector<4x8x8xf32>
    %cst_12 = arith.constant dense<0xFF800000> : vector<4x8xf32>
    %30 = vector.multi_reduction <maximumf>, %29, %cst_12 [2] : vector<4x8x8xf32> to vector<4x8xf32>
    %31 = vector.shape_cast %30 : vector<4x8xf32> to vector<4x8x1xf32>
    %32 = vector.broadcast %31 : vector<4x8x1xf32> to vector<4x8x8xf32>
    %33 = arith.subf %29, %32 : vector<4x8x8xf32>
    %34 = math.exp %33 : vector<4x8x8xf32>
    %cst_13 = arith.constant dense<0.000000e+00> : vector<4x8xf32>
    %35 = vector.multi_reduction <add>, %34, %cst_13 [2] : vector<4x8x8xf32> to vector<4x8xf32>
    %36 = vector.shape_cast %35 : vector<4x8xf32> to vector<4x8x1xf32>
    %37 = vector.broadcast %36 : vector<4x8x1xf32> to vector<4x8x8xf32>
    %38 = arith.divf %34, %37 : vector<4x8x8xf32>
    %39 = arith.truncf %38 : vector<4x8x8xf32> to vector<4x8x8xbf16>
    "tpu.trace_start"() <{level = 10 : i32, message = "hqk,hkd->hqd"}> : () -> ()
    %cst_14 = arith.constant dense<0.000000e+00> : vector<4x8x32xf32>
    %40 = tpu.matmul %39, %18, %cst_14 {dimension_numbers = #tpu.dot_dimension_numbers<[2], [1], [1], [2], [0, 0, 0, 1, 1, 2], [0], [0]>} : vector<4x8x8xbf16>, vector<4x8x32xbf16>, vector<4x8x32xf32> -> vector<4x8x32xf32>
    "tpu.trace_stop"() : () -> ()
    %41 = tpu.transpose %40, [1, 0, 2] : vector<4x8x32xf32> -> vector<8x4x32xf32>
    %42 = vector.shape_cast %41 : vector<8x4x32xf32> to vector<8x128xf32>
    %43 = arith.truncf %42 : vector<8x128xf32> to vector<8x128xbf16>
    %c0_15 = arith.constant 0 : index
    %c0_16 = arith.constant 0 : index
    %44 = vector.load %arg5[%c0_15, %c0_16] : memref<128x128xbf16, #tpu.memory_space<vmem>>, vector<128x128xbf16>
    %cst_17 = arith.constant dense<0.000000e+00> : vector<8x128xf32>
    %45 = tpu.matmul %43, %44, %cst_17 {dimension_numbers = #tpu.dot_dimension_numbers<[1], [0], [0], [1], [0, 0, 1, 1], [], []>} : vector<8x128xbf16>, vector<128x128xbf16>, vector<8x128xf32> -> vector<8x128xf32>
    %c0_18 = arith.constant 0 : index
    %c0_19 = arith.constant 0 : index
    %46 = vector.load %arg6[%c0_18, %c0_19] : memref<1x128xf32, #tpu.memory_space<vmem>>, vector<1x128xf32>
    %47 = vector.broadcast %46 : vector<1x128xf32> to vector<8x128xf32>
    %48 = arith.addf %45, %47 : vector<8x128xf32>
    %49 = arith.extf %1 : vector<8x128xbf16> to vector<8x128xf32>
    %50 = arith.addf %48, %49 : vector<8x128xf32>
    %c0_20 = arith.constant 0 : index
    %c0_21 = arith.constant 0 : index
    %51 = vector.load %arg7[%c0_20, %c0_21] : memref<1x128xf32, #tpu.memory_space<vmem>>, vector<1x128xf32>
    %c0_22 = arith.constant 0 : index
    %c0_23 = arith.constant 0 : index
    %52 = vector.load %arg8[%c0_22, %c0_23] : memref<1x128xf32, #tpu.memory_space<vmem>>, vector<1x128xf32>
    %cst_24 = arith.constant dense<0.000000e+00> : vector<8xf32>
    %53 = vector.multi_reduction <add>, %50, %cst_24 [1] : vector<8x128xf32> to vector<8xf32>
    %54 = vector.shape_cast %53 : vector<8xf32> to vector<8x1xf32>
    %cst_25 = arith.constant 1.280000e+02 : f32
    %55 = vector.broadcast %cst_25 : f32 to vector<8x1xf32>
    %56 = arith.divf %54, %55 : vector<8x1xf32>
    %57 = vector.broadcast %56 : vector<8x1xf32> to vector<8x128xf32>
    %58 = arith.subf %50, %57 : vector<8x128xf32>
    %59 = arith.mulf %58, %58 : vector<8x128xf32>
    %cst_26 = arith.constant dense<0.000000e+00> : vector<8xf32>
    %60 = vector.multi_reduction <add>, %59, %cst_26 [1] : vector<8x128xf32> to vector<8xf32>
    %61 = vector.shape_cast %60 : vector<8xf32> to vector<8x1xf32>
    %cst_27 = arith.constant 1.280000e+02 : f32
    %62 = vector.broadcast %cst_27 : f32 to vector<8x1xf32>
    %63 = arith.divf %61, %62 : vector<8x1xf32>
    %64 = vector.broadcast %56 : vector<8x1xf32> to vector<8x128xf32>
    %65 = arith.subf %50, %64 : vector<8x128xf32>
    %cst_28 = arith.constant 9.99999974E-6 : f32
    %66 = vector.broadcast %cst_28 : f32 to vector<8x1xf32>
    %67 = arith.addf %63, %66 : vector<8x1xf32>
    %68 = math.rsqrt %67 : vector<8x1xf32>
    %69 = vector.broadcast %68 : vector<8x1xf32> to vector<8x128xf32>
    %70 = arith.mulf %65, %69 : vector<8x128xf32>
    %71 = vector.broadcast %51 : vector<1x128xf32> to vector<8x128xf32>
    %72 = arith.mulf %70, %71 : vector<8x128xf32>
    %73 = vector.broadcast %52 : vector<1x128xf32> to vector<8x128xf32>
    %74 = arith.addf %72, %73 : vector<8x128xf32>
    %75 = arith.truncf %74 : vector<8x128xf32> to vector<8x128xbf16>
    %c0_29 = arith.constant 0 : index
    %c0_30 = arith.constant 0 : index
    %76 = vector.load %arg9[%c0_29, %c0_30] : memref<128x128xbf16, #tpu.memory_space<vmem>>, vector<128x128xbf16>
    %cst_31 = arith.constant dense<0.000000e+00> : vector<8x128xf32>
    %77 = tpu.matmul %75, %76, %cst_31 {dimension_numbers = #tpu.dot_dimension_numbers<[1], [0], [0], [1], [0, 0, 1, 1], [], []>} : vector<8x128xbf16>, vector<128x128xbf16>, vector<8x128xf32> -> vector<8x128xf32>
    %c0_32 = arith.constant 0 : index
    %c0_33 = arith.constant 0 : index
    %78 = vector.load %arg10[%c0_32, %c0_33] : memref<1x128xf32, #tpu.memory_space<vmem>>, vector<1x128xf32>
    %79 = vector.broadcast %78 : vector<1x128xf32> to vector<8x128xf32>
    %80 = arith.addf %77, %79 : vector<8x128xf32>
    %c0_34 = arith.constant 0 : index
    %c0_35 = arith.constant 0 : index
    %81 = vector.load %arg11[%c0_34, %c0_35] : memref<128x256xbf16, #tpu.memory_space<vmem>>, vector<128x256xbf16>
    %cst_36 = arith.constant dense<0.000000e+00> : vector<8x256xf32>
    %82 = tpu.matmul %3, %81, %cst_36 {dimension_numbers = #tpu.dot_dimension_numbers<[1], [0], [0], [1], [0, 0, 1, 1], [], []>} : vector<8x128xbf16>, vector<128x256xbf16>, vector<8x256xf32> -> vector<8x256xf32>
    %c0_37 = arith.constant 0 : index
    %c0_38 = arith.constant 0 : index
    %83 = vector.load %arg12[%c0_37, %c0_38] : memref<1x256xf32, #tpu.memory_space<vmem>>, vector<1x256xf32>
    %84 = vector.broadcast %83 : vector<1x256xf32> to vector<8x256xf32>
    %85 = arith.addf %82, %84 : vector<8x256xf32>
    %86 = arith.truncf %85 : vector<8x256xf32> to vector<8x256xbf16>
    %87 = arith.truncf %80 : vector<8x128xf32> to vector<8x128xbf16>
    %88 = vector.extract_strided_slice %86 {offsets = [0, 0], sizes = [8, 128], strides = [1, 1]} : vector<8x256xbf16> to vector<8x128xbf16>
    %89 = vector.extract_strided_slice %86 {offsets = [0, 128], sizes = [8, 128], strides = [1, 1]} : vector<8x256xbf16> to vector<8x128xbf16>
    %90 = vector.shape_cast %87 : vector<8x128xbf16> to vector<8x4x32xbf16>
    %91 = tpu.transpose %90, [1, 0, 2] : vector<8x4x32xbf16> -> vector<4x8x32xbf16>
    %92 = vector.shape_cast %88 : vector<8x128xbf16> to vector<8x4x32xbf16>
    %93 = tpu.transpose %92, [1, 0, 2] : vector<8x4x32xbf16> -> vector<4x8x32xbf16>
    %94 = vector.shape_cast %89 : vector<8x128xbf16> to vector<8x4x32xbf16>
    %95 = tpu.transpose %94, [1, 0, 2] : vector<8x4x32xbf16> -> vector<4x8x32xbf16>
    "tpu.trace_start"() <{level = 10 : i32, message = "hqd,hkd->hqk"}> : () -> ()
    %cst_39 = arith.constant dense<0.000000e+00> : vector<4x8x8xf32>
    %96 = tpu.matmul %91, %93, %cst_39 {dimension_numbers = #tpu.dot_dimension_numbers<[2], [2], [1], [1], [0, 0, 0, 1, 1, 1], [0], [0]>} : vector<4x8x32xbf16>, vector<4x8x32xbf16>, vector<4x8x8xf32> -> vector<4x8x8xf32>
    "tpu.trace_stop"() : () -> ()
    %cst_40 = arith.constant 0.176776692 : f32
    %97 = vector.broadcast %cst_40 : f32 to vector<4x8x8xf32>
    %98 = arith.mulf %96, %97 : vector<4x8x8xf32>
    %cst_41 = arith.constant dense<0xFF800000> : vector<4x8xf32>
    %99 = vector.multi_reduction <maximumf>, %98, %cst_41 [2] : vector<4x8x8xf32> to vector<4x8xf32>
    %100 = vector.shape_cast %99 : vector<4x8xf32> to vector<4x8x1xf32>
    %101 = vector.broadcast %100 : vector<4x8x1xf32> to vector<4x8x8xf32>
    %102 = arith.subf %98, %101 : vector<4x8x8xf32>
    %103 = math.exp %102 : vector<4x8x8xf32>
    %cst_42 = arith.constant dense<0.000000e+00> : vector<4x8xf32>
    %104 = vector.multi_reduction <add>, %103, %cst_42 [2] : vector<4x8x8xf32> to vector<4x8xf32>
    %105 = vector.shape_cast %104 : vector<4x8xf32> to vector<4x8x1xf32>
    %106 = vector.broadcast %105 : vector<4x8x1xf32> to vector<4x8x8xf32>
    %107 = arith.divf %103, %106 : vector<4x8x8xf32>
    %108 = arith.truncf %107 : vector<4x8x8xf32> to vector<4x8x8xbf16>
    "tpu.trace_start"() <{level = 10 : i32, message = "hqk,hkd->hqd"}> : () -> ()
    %cst_43 = arith.constant dense<0.000000e+00> : vector<4x8x32xf32>
    %109 = tpu.matmul %108, %95, %cst_43 {dimension_numbers = #tpu.dot_dimension_numbers<[2], [1], [1], [2], [0, 0, 0, 1, 1, 2], [0], [0]>} : vector<4x8x8xbf16>, vector<4x8x32xbf16>, vector<4x8x32xf32> -> vector<4x8x32xf32>
    "tpu.trace_stop"() : () -> ()
    %110 = tpu.transpose %109, [1, 0, 2] : vector<4x8x32xf32> -> vector<8x4x32xf32>
    %111 = vector.shape_cast %110 : vector<8x4x32xf32> to vector<8x128xf32>
    %112 = arith.truncf %111 : vector<8x128xf32> to vector<8x128xbf16>
    %c0_44 = arith.constant 0 : index
    %c0_45 = arith.constant 0 : index
    %113 = vector.load %arg13[%c0_44, %c0_45] : memref<128x128xbf16, #tpu.memory_space<vmem>>, vector<128x128xbf16>
    %cst_46 = arith.constant dense<0.000000e+00> : vector<8x128xf32>
    %114 = tpu.matmul %112, %113, %cst_46 {dimension_numbers = #tpu.dot_dimension_numbers<[1], [0], [0], [1], [0, 0, 1, 1], [], []>} : vector<8x128xbf16>, vector<128x128xbf16>, vector<8x128xf32> -> vector<8x128xf32>
    %c0_47 = arith.constant 0 : index
    %c0_48 = arith.constant 0 : index
    %115 = vector.load %arg14[%c0_47, %c0_48] : memref<1x128xf32, #tpu.memory_space<vmem>>, vector<1x128xf32>
    %116 = vector.broadcast %115 : vector<1x128xf32> to vector<8x128xf32>
    %117 = arith.addf %114, %116 : vector<8x128xf32>
    %118 = arith.addf %117, %74 : vector<8x128xf32>
    %c0_49 = arith.constant 0 : index
    %c0_50 = arith.constant 0 : index
    %119 = vector.load %arg15[%c0_49, %c0_50] : memref<1x128xf32, #tpu.memory_space<vmem>>, vector<1x128xf32>
    %c0_51 = arith.constant 0 : index
    %c0_52 = arith.constant 0 : index
    %120 = vector.load %arg16[%c0_51, %c0_52] : memref<1x128xf32, #tpu.memory_space<vmem>>, vector<1x128xf32>
    %cst_53 = arith.constant dense<0.000000e+00> : vector<8xf32>
    %121 = vector.multi_reduction <add>, %118, %cst_53 [1] : vector<8x128xf32> to vector<8xf32>
    %122 = vector.shape_cast %121 : vector<8xf32> to vector<8x1xf32>
    %cst_54 = arith.constant 1.280000e+02 : f32
    %123 = vector.broadcast %cst_54 : f32 to vector<8x1xf32>
    %124 = arith.divf %122, %123 : vector<8x1xf32>
    %125 = vector.broadcast %124 : vector<8x1xf32> to vector<8x128xf32>
    %126 = arith.subf %118, %125 : vector<8x128xf32>
    %127 = arith.mulf %126, %126 : vector<8x128xf32>
    %cst_55 = arith.constant dense<0.000000e+00> : vector<8xf32>
    %128 = vector.multi_reduction <add>, %127, %cst_55 [1] : vector<8x128xf32> to vector<8xf32>
    %129 = vector.shape_cast %128 : vector<8xf32> to vector<8x1xf32>
    %cst_56 = arith.constant 1.280000e+02 : f32
    %130 = vector.broadcast %cst_56 : f32 to vector<8x1xf32>
    %131 = arith.divf %129, %130 : vector<8x1xf32>
    %132 = vector.broadcast %124 : vector<8x1xf32> to vector<8x128xf32>
    %133 = arith.subf %118, %132 : vector<8x128xf32>
    %cst_57 = arith.constant 9.99999974E-6 : f32
    %134 = vector.broadcast %cst_57 : f32 to vector<8x1xf32>
    %135 = arith.addf %131, %134 : vector<8x1xf32>
    %136 = math.rsqrt %135 : vector<8x1xf32>
    %137 = vector.broadcast %136 : vector<8x1xf32> to vector<8x128xf32>
    %138 = arith.mulf %133, %137 : vector<8x128xf32>
    %139 = vector.broadcast %119 : vector<1x128xf32> to vector<8x128xf32>
    %140 = arith.mulf %138, %139 : vector<8x128xf32>
    %141 = vector.broadcast %120 : vector<1x128xf32> to vector<8x128xf32>
    %142 = arith.addf %140, %141 : vector<8x128xf32>
    %143 = arith.truncf %142 : vector<8x128xf32> to vector<8x128xbf16>
    %c0_58 = arith.constant 0 : index
    %c0_59 = arith.constant 0 : index
    %144 = vector.load %arg17[%c0_58, %c0_59] : memref<128x256xbf16, #tpu.memory_space<vmem>>, vector<128x256xbf16>
    %cst_60 = arith.constant dense<0.000000e+00> : vector<8x256xf32>
    %145 = tpu.matmul %143, %144, %cst_60 {dimension_numbers = #tpu.dot_dimension_numbers<[1], [0], [0], [1], [0, 0, 1, 1], [], []>} : vector<8x128xbf16>, vector<128x256xbf16>, vector<8x256xf32> -> vector<8x256xf32>
    %c0_61 = arith.constant 0 : index
    %c0_62 = arith.constant 0 : index
    %146 = vector.load %arg18[%c0_61, %c0_62] : memref<1x256xf32, #tpu.memory_space<vmem>>, vector<1x256xf32>
    %147 = vector.broadcast %146 : vector<1x256xf32> to vector<8x256xf32>
    %148 = arith.addf %145, %147 : vector<8x256xf32>
    %cst_63 = arith.constant 0.000000e+00 : f32
    %149 = vector.broadcast %cst_63 : f32 to vector<8x256xf32>
    %150 = arith.maximumf %148, %149 : vector<8x256xf32>
    %151 = arith.truncf %150 : vector<8x256xf32> to vector<8x256xbf16>
    %c0_64 = arith.constant 0 : index
    %c0_65 = arith.constant 0 : index
    %152 = vector.load %arg19[%c0_64, %c0_65] : memref<256x128xbf16, #tpu.memory_space<vmem>>, vector<256x128xbf16>
    %cst_66 = arith.constant dense<0.000000e+00> : vector<8x128xf32>
    %153 = tpu.matmul %151, %152, %cst_66 {dimension_numbers = #tpu.dot_dimension_numbers<[1], [0], [0], [1], [0, 0, 1, 1], [], []>} : vector<8x256xbf16>, vector<256x128xbf16>, vector<8x128xf32> -> vector<8x128xf32>
    %c0_67 = arith.constant 0 : index
    %c0_68 = arith.constant 0 : index
    %154 = vector.load %arg20[%c0_67, %c0_68] : memref<1x128xf32, #tpu.memory_space<vmem>>, vector<1x128xf32>
    %155 = vector.broadcast %154 : vector<1x128xf32> to vector<8x128xf32>
    %156 = arith.addf %153, %155 : vector<8x128xf32>
    %157 = arith.addf %156, %142 : vector<8x128xf32>
    %c0_69 = arith.constant 0 : index
    %c0_70 = arith.constant 0 : index
    %158 = vector.load %arg21[%c0_69, %c0_70] : memref<1x128xf32, #tpu.memory_space<vmem>>, vector<1x128xf32>
    %c0_71 = arith.constant 0 : index
    %c0_72 = arith.constant 0 : index
    %159 = vector.load %arg22[%c0_71, %c0_72] : memref<1x128xf32, #tpu.memory_space<vmem>>, vector<1x128xf32>
    %cst_73 = arith.constant dense<0.000000e+00> : vector<8xf32>
    %160 = vector.multi_reduction <add>, %157, %cst_73 [1] : vector<8x128xf32> to vector<8xf32>
    %161 = vector.shape_cast %160 : vector<8xf32> to vector<8x1xf32>
    %cst_74 = arith.constant 1.280000e+02 : f32
    %162 = vector.broadcast %cst_74 : f32 to vector<8x1xf32>
    %163 = arith.divf %161, %162 : vector<8x1xf32>
    %164 = vector.broadcast %163 : vector<8x1xf32> to vector<8x128xf32>
    %165 = arith.subf %157, %164 : vector<8x128xf32>
    %166 = arith.mulf %165, %165 : vector<8x128xf32>
    %cst_75 = arith.constant dense<0.000000e+00> : vector<8xf32>
    %167 = vector.multi_reduction <add>, %166, %cst_75 [1] : vector<8x128xf32> to vector<8xf32>
    %168 = vector.shape_cast %167 : vector<8xf32> to vector<8x1xf32>
    %cst_76 = arith.constant 1.280000e+02 : f32
    %169 = vector.broadcast %cst_76 : f32 to vector<8x1xf32>
    %170 = arith.divf %168, %169 : vector<8x1xf32>
    %171 = vector.broadcast %163 : vector<8x1xf32> to vector<8x128xf32>
    %172 = arith.subf %157, %171 : vector<8x128xf32>
    %cst_77 = arith.constant 9.99999974E-6 : f32
    %173 = vector.broadcast %cst_77 : f32 to vector<8x1xf32>
    %174 = arith.addf %170, %173 : vector<8x1xf32>
    %175 = math.rsqrt %174 : vector<8x1xf32>
    %176 = vector.broadcast %175 : vector<8x1xf32> to vector<8x128xf32>
    %177 = arith.mulf %172, %176 : vector<8x128xf32>
    %178 = vector.broadcast %158 : vector<1x128xf32> to vector<8x128xf32>
    %179 = arith.mulf %177, %178 : vector<8x128xf32>
    %180 = vector.broadcast %159 : vector<1x128xf32> to vector<8x128xf32>
    %181 = arith.addf %179, %180 : vector<8x128xf32>
    %182 = arith.truncf %181 : vector<8x128xf32> to vector<8x128xbf16>
    %c0_78 = arith.constant 0 : index
    %c0_79 = arith.constant 0 : index
    %c0_80 = arith.constant 0 : index
    %183 = vector.load %arg23[%c0_78, %c0_79, %c0_80] : memref<1x8x128xbf16, #tpu.memory_space<vmem>>, vector<1x8x128xbf16>
    %184 = vector.shape_cast %183 : vector<1x8x128xbf16> to vector<8x128xbf16>
    %185 = vector.shape_cast %182 : vector<8x128xbf16> to vector<1x8x128xbf16>
    tpu.vector_store %arg23[%c0_78, %c0_79, %c0_80], %185 {strides = array<i32>} : memref<1x8x128xbf16, #tpu.memory_space<vmem>>, vector<1x8x128xbf16>,
    return
  }
  func.func @transform_0(%arg0: i32) -> (i32, i32, i32) {
    %c0_i32 = arith.constant 0 : i32
    %c0_i32_0 = arith.constant 0 : i32
    %c0_i32_1 = arith.constant 0 : i32
    return %arg0, %c0_i32, %c0_i32_0 : i32, i32, i32
  }
  func.func @transform_1(%arg0: i32) -> (i32, i32, i32) {
    %c0_i32 = arith.constant 0 : i32
    %c0_i32_0 = arith.constant 0 : i32
    %c0_i32_1 = arith.constant 0 : i32
    return %arg0, %c0_i32, %c0_i32_0 : i32, i32, i32
  }
  func.func @transform_2(%arg0: i32) -> (i32, i32) {
    %c0_i32 = arith.constant 0 : i32
    %c0_i32_0 = arith.constant 0 : i32
    %c0_i32_1 = arith.constant 0 : i32
    return %c0_i32, %c0_i32_0 : i32, i32
  }
  func.func @transform_3(%arg0: i32) -> (i32, i32) {
    %c0_i32 = arith.constant 0 : i32
    %c0_i32_0 = arith.constant 0 : i32
    %c0_i32_1 = arith.constant 0 : i32
    return %c0_i32, %c0_i32_0 : i32, i32
  }
  func.func @transform_4(%arg0: i32) -> (i32, i32) {
    %c0_i32 = arith.constant 0 : i32
    %c0_i32_0 = arith.constant 0 : i32
    %c0_i32_1 = arith.constant 0 : i32
    return %c0_i32, %c0_i32_0 : i32, i32
  }
  func.func @transform_5(%arg0: i32) -> (i32, i32) {
    %c0_i32 = arith.constant 0 : i32
    %c0_i32_0 = arith.constant 0 : i32
    %c0_i32_1 = arith.constant 0 : i32
    return %c0_i32, %c0_i32_0 : i32, i32
  }
  func.func @transform_6(%arg0: i32) -> (i32, i32) {
    %c0_i32 = arith.constant 0 : i32
    %c0_i32_0 = arith.constant 0 : i32
    %c0_i32_1 = arith.constant 0 : i32
    return %c0_i32, %c0_i32_0 : i32, i32
  }
  func.func @transform_7(%arg0: i32) -> (i32, i32) {
    %c0_i32 = arith.constant 0 : i32
    %c0_i32_0 = arith.constant 0 : i32
    %c0_i32_1 = arith.constant 0 : i32
    return %c0_i32, %c0_i32_0 : i32, i32
  }
  func.func @transform_8(%arg0: i32) -> (i32, i32) {
    %c0_i32 = arith.constant 0 : i32
    %c0_i32_0 = arith.constant 0 : i32
    %c0_i32_1 = arith.constant 0 : i32
    return %c0_i32, %c0_i32_0 : i32, i32
  }
  func.func @transform_9(%arg0: i32) -> (i32, i32) {
    %c0_i32 = arith.constant 0 : i32
    %c0_i32_0 = arith.constant 0 : i32
    %c0_i32_1 = arith.constant 0 : i32
    return %c0_i32, %c0_i32_0 : i32, i32
  }
  func.func @transform_10(%arg0: i32) -> (i32, i32) {
    %c0_i32 = arith.constant 0 : i32
    %c0_i32_0 = arith.constant 0 : i32
    %c0_i32_1 = arith.constant 0 : i32
    return %c0_i32, %c0_i32_0 : i32, i32
  }
  func.func @transform_11(%arg0: i32) -> (i32, i32) {
    %c0_i32 = arith.constant 0 : i32
    %c0_i32_0 = arith.constant 0 : i32
    %c0_i32_1 = arith.constant 0 : i32
    return %c0_i32, %c0_i32_0 : i32, i32
  }
  func.func @transform_12(%arg0: i32) -> (i32, i32) {
    %c0_i32 = arith.constant 0 : i32
    %c0_i32_0 = arith.constant 0 : i32
    %c0_i32_1 = arith.constant 0 : i32
    return %c0_i32, %c0_i32_0 : i32, i32
  }
  func.func @transform_13(%arg0: i32) -> (i32, i32) {
    %c0_i32 = arith.constant 0 : i32
    %c0_i32_0 = arith.constant 0 : i32
    %c0_i32_1 = arith.constant 0 : i32
    return %c0_i32, %c0_i32_0 : i32, i32
  }
  func.func @transform_14(%arg0: i32) -> (i32, i32) {
    %c0_i32 = arith.constant 0 : i32
    %c0_i32_0 = arith.constant 0 : i32
    %c0_i32_1 = arith.constant 0 : i32
    return %c0_i32, %c0_i32_0 : i32, i32
  }
  func.func @transform_15(%arg0: i32) -> (i32, i32) {
    %c0_i32 = arith.constant 0 : i32
    %c0_i32_0 = arith.constant 0 : i32
    %c0_i32_1 = arith.constant 0 : i32
    return %c0_i32, %c0_i32_0 : i32, i32
  }
  func.func @transform_16(%arg0: i32) -> (i32, i32) {
    %c0_i32 = arith.constant 0 : i32
    %c0_i32_0 = arith.constant 0 : i32
    %c0_i32_1 = arith.constant 0 : i32
    return %c0_i32, %c0_i32_0 : i32, i32
  }
  func.func @transform_17(%arg0: i32) -> (i32, i32) {
    %c0_i32 = arith.constant 0 : i32
    %c0_i32_0 = arith.constant 0 : i32
    %c0_i32_1 = arith.constant 0 : i32
    return %c0_i32, %c0_i32_0 : i32, i32
  }
  func.func @transform_18(%arg0: i32) -> (i32, i32) {
    %c0_i32 = arith.constant 0 : i32
    %c0_i32_0 = arith.constant 0 : i32
    %c0_i32_1 = arith.constant 0 : i32
    return %c0_i32, %c0_i32_0 : i32, i32
  }
  func.func @transform_19(%arg0: i32) -> (i32, i32) {
    %c0_i32 = arith.constant 0 : i32
    %c0_i32_0 = arith.constant 0 : i32
    %c0_i32_1 = arith.constant 0 : i32
    return %c0_i32, %c0_i32_0 : i32, i32
  }
  func.func @transform_20(%arg0: i32) -> (i32, i32) {
    %c0_i32 = arith.constant 0 : i32
    %c0_i32_0 = arith.constant 0 : i32
    %c0_i32_1 = arith.constant 0 : i32
    return %c0_i32, %c0_i32_0 : i32, i32
  }
  func.func @transform_21(%arg0: i32) -> (i32, i32) {
    %c0_i32 = arith.constant 0 : i32
    %c0_i32_0 = arith.constant 0 : i32
    %c0_i32_1 = arith.constant 0 : i32
    return %c0_i32, %c0_i32_0 : i32, i32
  }
  func.func @transform_22(%arg0: i32) -> (i32, i32, i32) {
    %c0_i32 = arith.constant 0 : i32
    %c0_i32_0 = arith.constant 0 : i32
    %c0_i32_1 = arith.constant 0 : i32
    return %arg0, %c0_i32, %c0_i32_0 : i32, i32, i32
  }
}

module attributes {stable_mosaic.version = 11 : i64} {
  func.func @_proj_kernel(%arg0: i32, %arg1: memref<16x128xbf16, #tpu.memory_space<vmem>>, %arg2: memref<128x128xbf16, #tpu.memory_space<vmem>>, %arg3: memref<1x128xf32, #tpu.memory_space<vmem>>, %arg4: memref<16x128xf32, #tpu.memory_space<vmem>>) attributes {dimension_semantics = [#tpu.dimension_semantics<parallel>], iteration_bounds = array<i64: 1>, scalar_prefetch = 0 : i64, scratch_operands = 0 : i64, tpu.core_type = #tpu.core_type<tc>, window_params = [{transform_indices = @transform_0, window_bounds = array<i64: 16, 128>}, {pipeline_mode = #tpu.pipeline_mode<synchronous>, transform_indices = @transform_1, window_bounds = array<i64: 128, 128>}, {pipeline_mode = #tpu.pipeline_mode<synchronous>, transform_indices = @transform_2, window_bounds = array<i64: 1, 128>}, {transform_indices = @transform_3, window_bounds = array<i64: 16, 128>}]} {
    %c0 = arith.constant 0 : index
    %c0_0 = arith.constant 0 : index
    %0 = vector.load %arg1[%c0, %c0_0] : memref<16x128xbf16, #tpu.memory_space<vmem>>, vector<16x128xbf16>
    %c0_1 = arith.constant 0 : index
    %c0_2 = arith.constant 0 : index
    %1 = vector.load %arg2[%c0_1, %c0_2] : memref<128x128xbf16, #tpu.memory_space<vmem>>, vector<128x128xbf16>
    %cst = arith.constant dense<0.000000e+00> : vector<16x128xf32>
    %2 = tpu.matmul %0, %1, %cst {dimension_numbers = #tpu.dot_dimension_numbers<[1], [0], [0], [1], [0, 0, 1, 1], [], []>} : vector<16x128xbf16>, vector<128x128xbf16>, vector<16x128xf32> -> vector<16x128xf32>
    %c0_3 = arith.constant 0 : index
    %c0_4 = arith.constant 0 : index
    %3 = vector.load %arg3[%c0_3, %c0_4] : memref<1x128xf32, #tpu.memory_space<vmem>>, vector<1x128xf32>
    %4 = vector.broadcast %3 : vector<1x128xf32> to vector<16x128xf32>
    %5 = arith.addf %2, %4 : vector<16x128xf32>
    %c0_5 = arith.constant 0 : index
    %c0_6 = arith.constant 0 : index
    %6 = vector.load %arg4[%c0_5, %c0_6] : memref<16x128xf32, #tpu.memory_space<vmem>>, vector<16x128xf32>
    tpu.vector_store %arg4[%c0_5, %c0_6], %5 {strides = array<i32>} : memref<16x128xf32, #tpu.memory_space<vmem>>, vector<16x128xf32>,
    return
  }
  func.func @transform_0(%arg0: i32) -> (i32, i32) {
    %c0_i32 = arith.constant 0 : i32
    %c0_i32_0 = arith.constant 0 : i32
    return %arg0, %c0_i32 : i32, i32
  }
  func.func @transform_1(%arg0: i32) -> (i32, i32) {
    %c0_i32 = arith.constant 0 : i32
    %c0_i32_0 = arith.constant 0 : i32
    %c0_i32_1 = arith.constant 0 : i32
    return %c0_i32, %c0_i32_0 : i32, i32
  }
  func.func @transform_2(%arg0: i32) -> (i32, i32) {
    %c0_i32 = arith.constant 0 : i32
    %c0_i32_0 = arith.constant 0 : i32
    %c0_i32_1 = arith.constant 0 : i32
    return %c0_i32, %c0_i32_0 : i32, i32
  }
  func.func @transform_3(%arg0: i32) -> (i32, i32) {
    %c0_i32 = arith.constant 0 : i32
    %c0_i32_0 = arith.constant 0 : i32
    return %arg0, %c0_i32 : i32, i32
  }
}

</mosaic_0001>

<llo_original>
// kernel: beatmap_decoder_forward.5
$region0: #{beatmap_decoder_forward.5}
  #allocation0 [shape = 'u32[]', space=smem, size = 0x4, offset = 0x4, fixed_abs, tag = 'smem constant byte address 0x4 - core index']
  #allocation1 [shape = 'u32[72,128]{1,0:T(1,128)}', space=vmem, size = 0x9000, scoped, tag = 'internal scratch']
  %s0 = inlined_call_operand.vmem [shape: bf16[16,128], index: 0, kind: input, shape index: {}]
  %s1 = inlined_call_operand.hbm [shape: bf16[128,128], index: 1, kind: input, shape index: {}]
  %s2 = inlined_call_operand.vmem [shape: f32[1,128], index: 2, kind: input, shape index: {}]
  %s3 = inlined_call_operand.vmem [shape: f32[16,128], index: 3, kind: output, shape index: {}]
  %s4 = sld [smem:[#allocation0]]
  $region26: #{beatmap_decoder_forward.5} parent=0
    _
  %s6 = ssub.s32 1, %s4
  %s7 = scalar_select 0, %s6, %s4
  $region1: #{beatmap_decoder_forward.5} parent=0
    #allocation2 [shape = 'u8[32768]{0}', space=vmem, size = 0x8000, scoped, tag = 'input window, operand 1, single buffered']
    #allocation3 [shape = 's32[1]{0}', space=sflag, size = 0x4, scoped, tag = 'scoped memory for beatmap_decoder_forward.5']
    %8 = vsyncpa [#allocation3], 0
    // Predicated region
    $region2: #{beatmap_decoder_forward.5} parent=1 // pred_check
      _
    $region3: #{beatmap_decoder_forward.5} parent=1 // pred_check_branch
      %10 = sbr.rel (0) target = $region5
    $region4: #{beatmap_decoder_forward.5} parent=1 // pred_region
      _
    $region5: #{beatmap_decoder_forward.5} parent=1 // pred_fallthru
      _
    // Predicated region
    $region6: #{beatmap_decoder_forward.5} parent=1 // pred_check
      _
    $region7: #{beatmap_decoder_forward.5} parent=1 // pred_check_branch
      %12 = sbr.rel (0) target = $region9
    $region8: #{beatmap_decoder_forward.5} parent=1 // pred_region
      %14 = vsyncadd [#allocation3], 0
      %s15 = sshll.u32 %s1, 4
      %s16 = int_to_ptr.hbm [resolvable:$true] %s15
      %s17 = sshll.u32 [#allocation2], 4
      %s18 = int_to_ptr.vmem [resolvable:$true] %s17
      %23 = dma.hbm_to_vmem [thread:$0]  %s16, 1024, %s18, [#allocation3], 64, 64, 4
    $region9: #{beatmap_decoder_forward.5} parent=1 // pred_fallthru
      _
    // Predicated region
    $region10: #{beatmap_decoder_forward.5} parent=1 // pred_check
      _
    $region11: #{beatmap_decoder_forward.5} parent=1 // pred_check_branch
      %25 = sbr.rel (0) target = $region13
    $region12: #{beatmap_decoder_forward.5} parent=1 // pred_region
      _
    $region13: #{beatmap_decoder_forward.5} parent=1 // pred_fallthru
      _
    // Predicated region
    $region14: #{beatmap_decoder_forward.5} parent=1 // pred_check
      _
    $region15: #{beatmap_decoder_forward.5} parent=1 // pred_check_branch
      %27 = sbr.rel (0) target = $region17
    $region16: #{beatmap_decoder_forward.5} parent=1 // pred_region
      %29 = dma.done [#allocation3], 1024
    $region17: #{beatmap_decoder_forward.5} parent=1 // pred_fallthru
      _
    %v30 = vld [vmem:[%s0] sm:$0xf]
    %v31 = vld [vmem:[%s0 + $0x4] sm:$0xf]
    %v32 = vld [vmem:[#allocation2] sm:$0xf]
    %v33 = vld [vmem:[#allocation2 + $0x4] sm:$0xf]
    %v34 = vld [vmem:[#allocation2 + $0x8] sm:$0xf]
    %v35 = vld [vmem:[#allocation2 + $0xc] sm:$0xf]
    %v36 = vld [vmem:[#allocation2 + $0x10] sm:$0xf]
    %v37 = vld [vmem:[#allocation2 + $0x14] sm:$0xf]
    %v38 = vld [vmem:[#allocation2 + $0x18] sm:$0xf]
    %v39 = vld [vmem:[#allocation2 + $0x1c] sm:$0xf]
    %v40 = vld [vmem:[#allocation2 + $0x20] sm:$0xf]
    %v41 = vld [vmem:[#allocation2 + $0x24] sm:$0xf]
    %v42 = vld [vmem:[#allocation2 + $0x28] sm:$0xf]
    %v43 = vld [vmem:[#allocation2 + $0x2c] sm:$0xf]
    %v44 = vld [vmem:[#allocation2 + $0x30] sm:$0xf]
    %v45 = vld [vmem:[#allocation2 + $0x34] sm:$0xf]
    %v46 = vld [vmem:[#allocation2 + $0x38] sm:$0xf]
    %v47 = vld [vmem:[#allocation2 + $0x3c] sm:$0xf]
    %v48 = vld [vmem:[%s2] sm:$0x1]
    %v50 = vperm.slane %v48, 0
    %v54 = vunpack.c.l.b16 %v30
    %v55 = vunpack.c.l.b16 %v31
    %v56 = vpack.c.b16 %v55, %v54
    %v74 = vunpack.c.l.b16 %v32
    %v75 = vunpack.c.l.b16 %v33
    %v76 = vunpack.c.l.b16 %v34
    %v77 = vunpack.c.l.b16 %v35
    %v78 = vunpack.c.l.b16 %v36
    %v79 = vunpack.c.l.b16 %v37
    %v80 = vunpack.c.l.b16 %v38
    %v81 = vunpack.c.l.b16 %v39
    %v82 = vunpack.c.l.b16 %v40
    %v83 = vunpack.c.l.b16 %v41
    %v84 = vunpack.c.l.b16 %v42
    %v85 = vunpack.c.l.b16 %v43
    %v86 = vunpack.c.l.b16 %v44
    %v87 = vunpack.c.l.b16 %v45
    %v88 = vunpack.c.l.b16 %v46
    %v89 = vunpack.c.l.b16 %v47
    %v90 = vpack.c.b16 %v75, %v74
    %v91 = vpack.c.b16 %v77, %v76
    %v92 = vpack.c.b16 %v79, %v78
    %v93 = vpack.c.b16 %v81, %v80
    %v94 = vpack.c.b16 %v83, %v82
    %v95 = vpack.c.b16 %v85, %v84
    %v96 = vpack.c.b16 %v87, %v86
    %v97 = vpack.c.b16 %v89, %v88
    %106 = vmatpush.bf16.msra.mxu0 %v97
    %107 = vmatpush.bf16.msra.mxu0 %v96
    %108 = vmatpush.bf16.msra.mxu0 %v95
    %109 = vmatpush.bf16.msra.mxu0 %v94
    %110 = vmatpush.bf16.msra.mxu0 %v93
    %111 = vmatpush.bf16.msra.mxu0 %v92
    %112 = vmatpush.bf16.msra.mxu0 %v91
    %113 = vmatpush.bf16.msra.mxu0 %v90
    %114 = vmatmul.bf16.gmra.mxu0 %v56
    %v115 = vpop.f32.mrf.mxu0
    %v116 = vadd.f32 %v50, %v115
    %v117 = vpop.f32.mrf.mxu0
    %v118 = vadd.f32 %v50, %v117
    %119 = vdwg.mxu0
    %120 = vst [vmem:[%s3] sm:$0xff] %v116
    %121 = vst [vmem:[%s3 + $0x8] sm:$0xff] %v118
    // Predicated region
    $region18: #{beatmap_decoder_forward.5} parent=1 // pred_check
      _
    $region19: #{beatmap_decoder_forward.5} parent=1 // pred_check_branch
      %123 = sbr.rel (0) target = $region21
    $region20: #{beatmap_decoder_forward.5} parent=1 // pred_region
      _
    $region21: #{beatmap_decoder_forward.5} parent=1 // pred_fallthru
      _
    // Predicated region
    $region22: #{beatmap_decoder_forward.5} parent=1 // pred_check
      _
    $region23: #{beatmap_decoder_forward.5} parent=1 // pred_check_branch
      %125 = sbr.rel (0) target = $region25
    $region24: #{beatmap_decoder_forward.5} parent=1 // pred_region
      _
    $region25: #{beatmap_decoder_forward.5} parent=1 // pred_fallthru
      _
    %126 = vsyncpa [#allocation3], 1

// kernel: beatmap_decoder_forward.3
$region0: #{beatmap_decoder_forward.3}
  #allocation0 [shape = 'u32[]', space=smem, size = 0x4, offset = 0x4, fixed_abs, tag = 'smem constant byte address 0x4 - core index']
  #allocation1 [shape = 'u32[72,128]{1,0:T(1,128)}', space=vmem, size = 0x9000, scoped, tag = 'internal scratch']
  %s0 = inlined_call_operand.vmem [shape: bf16[2,8,128], index: 0, kind: input, shape index: {}]
  %s1 = inlined_call_operand.vmem [shape: bf16[2,8,128], index: 1, kind: input, shape index: {}]
  %s2 = inlined_call_operand.vmem [shape: bf16[128,384], index: 2, kind: input, shape index: {}]
  %s3 = inlined_call_operand.vmem [shape: f32[1,384], index: 3, kind: input, shape index: {}]
  %s4 = inlined_call_operand.vmem [shape: bf16[128,128], index: 4, kind: input, shape index: {}]
  %s5 = inlined_call_operand.vmem [shape: f32[1,128], index: 5, kind: input, shape index: {}]
  %s6 = inlined_call_operand.vmem [shape: f32[1,128], index: 6, kind: input, shape index: {}]
  %s7 = inlined_call_operand.vmem [shape: f32[1,128], index: 7, kind: input, shape index: {}]
  %s8 = inlined_call_operand.hbm [shape: bf16[128,128], index: 8, kind: input, shape index: {}]
  %s9 = inlined_call_operand.vmem [shape: f32[1,128], index: 9, kind: input, shape index: {}]
  %s10 = inlined_call_operand.vmem [shape: bf16[128,256], index: 10, kind: input, shape index: {}]
  %s11 = inlined_call_operand.vmem [shape: f32[1,256], index: 11, kind: input, shape index: {}]
  %s12 = inlined_call_operand.hbm [shape: bf16[128,128], index: 12, kind: input, shape index: {}]
  %s13 = inlined_call_operand.vmem [shape: f32[1,128], index: 13, kind: input, shape index: {}]
  %s14 = inlined_call_operand.vmem [shape: f32[1,128], index: 14, kind: input, shape index: {}]
  %s15 = inlined_call_operand.vmem [shape: f32[1,128], index: 15, kind: input, shape index: {}]
  %s16 = inlined_call_operand.hbm [shape: bf16[128,256], index: 16, kind: input, shape index: {}]
  %s17 = inlined_call_operand.vmem [shape: f32[1,256], index: 17, kind: input, shape index: {}]
  %s18 = inlined_call_operand.hbm [shape: bf16[256,128], index: 18, kind: input, shape index: {}]
  %s19 = inlined_call_operand.vmem [shape: f32[1,128], index: 19, kind: input, shape index: {}]
  %s20 = inlined_call_operand.vmem [shape: f32[1,128], index: 20, kind: input, shape index: {}]
  %s21 = inlined_call_operand.vmem [shape: f32[1,128], index: 21, kind: input, shape index: {}]
  %s22 = inlined_call_operand.vmem [shape: bf16[2,8,128], index: 22, kind: output, shape index: {}]
  %s23 = sld [smem:[#allocation0]]
  $region137: #{beatmap_decoder_forward.3} parent=0
    _
  %s25 = ssub.s32 1, %s23
  %s26 = scalar_select 0, %s25, %s23
  $region1: #{beatmap_decoder_forward.3} parent=0
    #allocation2 [shape = 'u8[32768]{0}', space=vmem, size = 0x8000, scoped, tag = 'input window, operand 8, single buffered']
    #allocation3 [shape = 's32[2]{0}', space=sflag, size = 0x8, scoped, tag = 'scoped memory for beatmap_decoder_forward.3']
    #allocation4 [shape = 'u8[32768]{0}', space=vmem, size = 0x8000, scoped, tag = 'input window, operand 12, single buffered']
    #allocation5 [shape = 's32[1]{0}', space=sflag, size = 0x4, scoped, tag = 'scoped memory for beatmap_decoder_forward.3']
    #allocation6 [shape = 'u8[65536]{0}', space=vmem, size = 0x10000, scoped, tag = 'input window, operand 16, single buffered']
    #allocation7 [shape = 'u8[65536]{0}', space=vmem, size = 0x10000, scoped, tag = 'input window, operand 18, single buffered']
    #allocation8 [shape = 's32[1]{0}', space=sflag, size = 0x4, scoped, tag = 'scoped memory for beatmap_decoder_forward.3']
    %27 = vsyncpa [#allocation3], 0
    %28 = vsyncpa [#allocation5], 0
    %29 = vsyncpa [#allocation8], 0
    loop: start=0, step=1, limit=4
    $region2: #{beatmap_decoder_forward.3} parent=1 // loop_pre_header
      _
    $region3: #{beatmap_decoder_forward.3} parent=1 // loop_header
      %s31 = sphi 0, %s35
      %p32 = scmp.ge.s32.totalorder %s31, 4
      %s41 = sphi 0, %s43
      %s44 = sphi 0, %s41
      %s45 = sphi 0, %s44
      %s61 = sphi 0, %s45
      %s67 = sphi 0, %s69
      %s70 = sphi 0, %s67
      %s71 = sphi 0, %s70
      %s87 = sphi 0, %s71
      %s91 = sphi 0, %s91
      %s93 = sphi 0, %s91
      %s94 = sphi 0, %s93
      %s108 = sphi 0, %s94
      %s112 = sphi 0, %s112
      %s114 = sphi 0, %s112
      %s115 = sphi 0, %s114
      %s129 = sphi 0, %s115
      %s133 = sphi 0, %s133
      %s135 = sphi 0, %s133
      %s136 = sphi 0, %s135
      %s150 = sphi 0, %s136
      %s154 = sphi 0, %s154
      %s156 = sphi 0, %s154
      %s157 = sphi 0, %s156
      %s171 = sphi 0, %s157
      %s175 = sphi 0, %s175
      %s177 = sphi 0, %s175
      %s178 = sphi 0, %s177
      %s192 = sphi 0, %s178
      %s196 = sphi 0, %s196
      %s198 = sphi 0, %s196
      %s199 = sphi 0, %s198
      %s213 = sphi 0, %s199
      %s217 = sphi 0, %s217
      %s219 = sphi 0, %s217
      %s220 = sphi 0, %s219
      %s234 = sphi 0, %s220
      %s238 = sphi 0, %s238
      %s240 = sphi 0, %s238
      %s241 = sphi 0, %s240
      %s255 = sphi 0, %s241
      %s259 = sphi 0, %s259
      %s261 = sphi 0, %s259
      %s262 = sphi 0, %s261
      %s276 = sphi 0, %s262
      %s280 = sphi 0, %s280
      %s282 = sphi 0, %s280
      %s283 = sphi 0, %s282
      %s297 = sphi 0, %s283
      %s301 = sphi 0, %s301
      %s303 = sphi 0, %s301
      %s304 = sphi 0, %s303
      %s318 = sphi 0, %s304
      %s322 = sphi 0, %s322
      %s324 = sphi 0, %s322
      %s325 = sphi 0, %s324
      %s339 = sphi 0, %s325
      %s343 = sphi 0, %s343
      %s345 = sphi 0, %s343
      %s346 = sphi 0, %s345
      %s360 = sphi 0, %s346
      %s364 = sphi 0, %s364
      %s366 = sphi 0, %s364
      %s367 = sphi 0, %s366
      %s381 = sphi 0, %s367
      %s385 = sphi 0, %s385
      %s387 = sphi 0, %s385
      %s388 = sphi 0, %s387
      %s402 = sphi 0, %s388
      %s406 = sphi 0, %s406
      %s408 = sphi 0, %s406
      %s409 = sphi 0, %s408
      %s423 = sphi 0, %s409
      %s427 = sphi 0, %s427
      %s429 = sphi 0, %s427
      %s430 = sphi 0, %s429
      %s444 = sphi 0, %s430
      %s448 = sphi 0, %s448
      %s450 = sphi 0, %s448
      %s451 = sphi 0, %s450
      %s465 = sphi 0, %s451
      %s469 = sphi 0, %s469
      %s471 = sphi 0, %s469
      %s472 = sphi 0, %s471
      %s486 = sphi 0, %s472
      %s490 = sphi 0, %s490
      %s492 = sphi 0, %s490
      %s493 = sphi 0, %s492
      %s507 = sphi 0, %s493
      %s513 = sphi 0, %s515
      %s516 = sphi 0, %s513
      %s517 = sphi 0, %s516
      %s533 = sphi 0, %s517
    $region4: #{beatmap_decoder_forward.3} parent=1 // loop_header_branch
      %34 = sbr.rel (%p32) target = $region8
    $region5: #{beatmap_decoder_forward.3} parent=1 // loop_body
      %s36 = ssub.s32 %s31, 1
      %s37 = ssub.s32 %s31, 2
      %s38 = sadd.s32 %s31, 1
      %s39 = ssub.s32 %s31, %s38
      %p40 = scmp.eq.s32.totalorder %s39, 0
      %s42 = sadd.s32 %s41, 1
      %s43 = scalar_select %p40, %s41, %s42
      %p46 = pneg %p40
      %p47 = scmp.eq.s32.totalorder %s31, 1
      %p48 = por %p46, %p47
      %p49 = scmp.ne.s32.totalorder %s41, %s44
      %p50 = scmp.eq.s32.totalorder %s31, 0
      %p51 = por %p49, %p50
      %p52 = scmp.ne.s32.totalorder %s41, %s44
      %p53 = scmp.eq.s32.totalorder %s36, 1
      %p54 = por %p52, %p53
      %p55 = scmp.ne.s32.totalorder %s44, %s45
      %p56 = scmp.eq.s32.totalorder %s36, 0
      %p57 = por %p55, %p56
      %p58 = scmp.ne.s32.totalorder %s44, %s45
      %p59 = scmp.eq.s32.totalorder %s37, 1
      %p60 = por %p58, %p59
      %p62 = scmp.ne.s32.totalorder %s45, %s61
      %p63 = scmp.eq.s32.totalorder %s37, 0
      %p64 = por %p62, %p63
      %s65 = ssub.s32 %s31, %s38
      %p66 = scmp.eq.s32.totalorder %s65, 0
      %s68 = sadd.s32 %s67, 1
      %s69 = scalar_select %p66, %s67, %s68
      %p72 = pneg %p66
      %p73 = scmp.eq.s32.totalorder %s31, 1
      %p74 = por %p72, %p73
      %p75 = scmp.ne.s32.totalorder %s67, %s70
      %p76 = scmp.eq.s32.totalorder %s31, 0
      %p77 = por %p75, %p76
      %p78 = scmp.ne.s32.totalorder %s67, %s70
      %p79 = scmp.eq.s32.totalorder %s36, 1
      %p80 = por %p78, %p79
      %p81 = scmp.ne.s32.totalorder %s70, %s71
      %p82 = scmp.eq.s32.totalorder %s36, 0
      %p83 = por %p81, %p82
      %p84 = scmp.ne.s32.totalorder %s70, %s71
      %p85 = scmp.eq.s32.totalorder %s37, 1
      %p86 = por %p84, %p85
      %p88 = scmp.ne.s32.totalorder %s71, %s87
      %p89 = scmp.eq.s32.totalorder %s37, 0
      %p90 = por %p88, %p89
      %s92 = sadd.s32 %s91, 1
      %p95 = scmp.eq.s32.totalorder %s31, 1
      %p96 = scmp.ne.s32.totalorder %s91, %s93
      %p97 = scmp.eq.s32.totalorder %s31, 0
      %p98 = por %p96, %p97
      %p99 = scmp.ne.s32.totalorder %s91, %s93
      %p100 = scmp.eq.s32.totalorder %s36, 1
      %p101 = por %p99, %p100
      %p102 = scmp.ne.s32.totalorder %s93, %s94
      %p103 = scmp.eq.s32.totalorder %s36, 0
      %p104 = por %p102, %p103
      %p105 = scmp.ne.s32.totalorder %s93, %s94
      %p106 = scmp.eq.s32.totalorder %s37, 1
      %p107 = por %p105, %p106
      %p109 = scmp.ne.s32.totalorder %s94, %s108
      %p110 = scmp.eq.s32.totalorder %s37, 0
      %p111 = por %p109, %p110
      %s113 = sadd.s32 %s112, 1
      %p116 = scmp.eq.s32.totalorder %s31, 1
      %p117 = scmp.ne.s32.totalorder %s112, %s114
      %p118 = scmp.eq.s32.totalorder %s31, 0
      %p119 = por %p117, %p118
      %p120 = scmp.ne.s32.totalorder %s112, %s114
      %p121 = scmp.eq.s32.totalorder %s36, 1
      %p122 = por %p120, %p121
      %p123 = scmp.ne.s32.totalorder %s114, %s115
      %p124 = scmp.eq.s32.totalorder %s36, 0
      %p125 = por %p123, %p124
      %p126 = scmp.ne.s32.totalorder %s114, %s115
      %p127 = scmp.eq.s32.totalorder %s37, 1
      %p128 = por %p126, %p127
      %p130 = scmp.ne.s32.totalorder %s115, %s129
      %p131 = scmp.eq.s32.totalorder %s37, 0
      %p132 = por %p130, %p131
      %s134 = sadd.s32 %s133, 1
      %p137 = scmp.eq.s32.totalorder %s31, 1
      %p138 = scmp.ne.s32.totalorder %s133, %s135
      %p139 = scmp.eq.s32.totalorder %s31, 0
      %p140 = por %p138, %p139
      %p141 = scmp.ne.s32.totalorder %s133, %s135
      %p142 = scmp.eq.s32.totalorder %s36, 1
      %p143 = por %p141, %p142
      %p144 = scmp.ne.s32.totalorder %s135, %s136
      %p145 = scmp.eq.s32.totalorder %s36, 0
      %p146 = por %p144, %p145
      %p147 = scmp.ne.s32.totalorder %s135, %s136
      %p148 = scmp.eq.s32.totalorder %s37, 1
      %p149 = por %p147, %p148
      %p151 = scmp.ne.s32.totalorder %s136, %s150
      %p152 = scmp.eq.s32.totalorder %s37, 0
      %p153 = por %p151, %p152
      %s155 = sadd.s32 %s154, 1
      %p158 = scmp.eq.s32.totalorder %s31, 1
      %p159 = scmp.ne.s32.totalorder %s154, %s156
      %p160 = scmp.eq.s32.totalorder %s31, 0
      %p161 = por %p159, %p160
      %p162 = scmp.ne.s32.totalorder %s154, %s156
      %p163 = scmp.eq.s32.totalorder %s36, 1
      %p164 = por %p162, %p163
      %p165 = scmp.ne.s32.totalorder %s156, %s157
      %p166 = scmp.eq.s32.totalorder %s36, 0
      %p167 = por %p165, %p166
      %p168 = scmp.ne.s32.totalorder %s156, %s157
      %p169 = scmp.eq.s32.totalorder %s37, 1
      %p170 = por %p168, %p169
      %p172 = scmp.ne.s32.totalorder %s157, %s171
      %p173 = scmp.eq.s32.totalorder %s37, 0
      %p174 = por %p172, %p173
      %s176 = sadd.s32 %s175, 1
      %p179 = scmp.eq.s32.totalorder %s31, 1
      %p180 = scmp.ne.s32.totalorder %s175, %s177
      %p181 = scmp.eq.s32.totalorder %s31, 0
      %p182 = por %p180, %p181
      %p183 = scmp.ne.s32.totalorder %s175, %s177
      %p184 = scmp.eq.s32.totalorder %s36, 1
      %p185 = por %p183, %p184
      %p186 = scmp.ne.s32.totalorder %s177, %s178
      %p187 = scmp.eq.s32.totalorder %s36, 0
      %p188 = por %p186, %p187
      %p189 = scmp.ne.s32.totalorder %s177, %s178
      %p190 = scmp.eq.s32.totalorder %s37, 1
      %p191 = por %p189, %p190
      %p193 = scmp.ne.s32.totalorder %s178, %s192
      %p194 = scmp.eq.s32.totalorder %s37, 0
      %p195 = por %p193, %p194
      %s197 = sadd.s32 %s196, 1
      %p200 = scmp.eq.s32.totalorder %s31, 1
      %p201 = scmp.ne.s32.totalorder %s196, %s198
      %p202 = scmp.eq.s32.totalorder %s31, 0
      %p203 = por %p201, %p202
      %p204 = scmp.ne.s32.totalorder %s196, %s198
      %p205 = scmp.eq.s32.totalorder %s36, 1
      %p206 = por %p204, %p205
      %p207 = scmp.ne.s32.totalorder %s198, %s199
      %p208 = scmp.eq.s32.totalorder %s36, 0
      %p209 = por %p207, %p208
      %p210 = scmp.ne.s32.totalorder %s198, %s199
      %p211 = scmp.eq.s32.totalorder %s37, 1
      %p212 = por %p210, %p211
      %p214 = scmp.ne.s32.totalorder %s199, %s213
      %p215 = scmp.eq.s32.totalorder %s37, 0
      %p216 = por %p214, %p215
      %s218 = sadd.s32 %s217, 1
      %p221 = scmp.eq.s32.totalorder %s31, 1
      %p222 = scmp.ne.s32.totalorder %s217, %s219
      %p223 = scmp.eq.s32.totalorder %s31, 0
      %p224 = por %p222, %p223
      %p225 = scmp.ne.s32.totalorder %s217, %s219
      %p226 = scmp.eq.s32.totalorder %s36, 1
      %p227 = por %p225, %p226
      %p228 = scmp.ne.s32.totalorder %s219, %s220
      %p229 = scmp.eq.s32.totalorder %s36, 0
      %p230 = por %p228, %p229
      %p231 = scmp.ne.s32.totalorder %s219, %s220
      %p232 = scmp.eq.s32.totalorder %s37, 1
      %p233 = por %p231, %p232
      %p235 = scmp.ne.s32.totalorder %s220, %s234
      %p236 = scmp.eq.s32.totalorder %s37, 0
      %p237 = por %p235, %p236
      %s239 = sadd.s32 %s238, 1
      %p242 = scmp.eq.s32.totalorder %s31, 1
      %p243 = scmp.ne.s32.totalorder %s238, %s240
      %p244 = scmp.eq.s32.totalorder %s31, 0
      %p245 = por %p243, %p244
      %p246 = scmp.ne.s32.totalorder %s238, %s240
      %p247 = scmp.eq.s32.totalorder %s36, 1
      %p248 = por %p246, %p247
      %p249 = scmp.ne.s32.totalorder %s240, %s241
      %p250 = scmp.eq.s32.totalorder %s36, 0
      %p251 = por %p249, %p250
      %p252 = scmp.ne.s32.totalorder %s240, %s241
      %p253 = scmp.eq.s32.totalorder %s37, 1
      %p254 = por %p252, %p253
      %p256 = scmp.ne.s32.totalorder %s241, %s255
      %p257 = scmp.eq.s32.totalorder %s37, 0
      %p258 = por %p256, %p257
      %s260 = sadd.s32 %s259, 1
      %p263 = scmp.eq.s32.totalorder %s31, 1
      %p264 = scmp.ne.s32.totalorder %s259, %s261
      %p265 = scmp.eq.s32.totalorder %s31, 0
      %p266 = por %p264, %p265
      %p267 = scmp.ne.s32.totalorder %s259, %s261
      %p268 = scmp.eq.s32.totalorder %s36, 1
      %p269 = por %p267, %p268
      %p270 = scmp.ne.s32.totalorder %s261, %s262
      %p271 = scmp.eq.s32.totalorder %s36, 0
      %p272 = por %p270, %p271
      %p273 = scmp.ne.s32.totalorder %s261, %s262
      %p274 = scmp.eq.s32.totalorder %s37, 1
      %p275 = por %p273, %p274
      %p277 = scmp.ne.s32.totalorder %s262, %s276
      %p278 = scmp.eq.s32.totalorder %s37, 0
      %p279 = por %p277, %p278
      %s281 = sadd.s32 %s280, 1
      %p284 = scmp.eq.s32.totalorder %s31, 1
      %p285 = scmp.ne.s32.totalorder %s280, %s282
      %p286 = scmp.eq.s32.totalorder %s31, 0
      %p287 = por %p285, %p286
      %p288 = scmp.ne.s32.totalorder %s280, %s282
      %p289 = scmp.eq.s32.totalorder %s36, 1
      %p290 = por %p288, %p289
      %p291 = scmp.ne.s32.totalorder %s282, %s283
      %p292 = scmp.eq.s32.totalorder %s36, 0
      %p293 = por %p291, %p292
      %p294 = scmp.ne.s32.totalorder %s282, %s283
      %p295 = scmp.eq.s32.totalorder %s37, 1
      %p296 = por %p294, %p295
      %p298 = scmp.ne.s32.totalorder %s283, %s297
      %p299 = scmp.eq.s32.totalorder %s37, 0
      %p300 = por %p298, %p299
      %s302 = sadd.s32 %s301, 1
      %p305 = scmp.eq.s32.totalorder %s31, 1
      %p306 = scmp.ne.s32.totalorder %s301, %s303
      %p307 = scmp.eq.s32.totalorder %s31, 0
      %p308 = por %p306, %p307
      %p309 = scmp.ne.s32.totalorder %s301, %s303
      %p310 = scmp.eq.s32.totalorder %s36, 1
      %p311 = por %p309, %p310
      %p312 = scmp.ne.s32.totalorder %s303, %s304
      %p313 = scmp.eq.s32.totalorder %s36, 0
      %p314 = por %p312, %p313
      %p315 = scmp.ne.s32.totalorder %s303, %s304
      %p316 = scmp.eq.s32.totalorder %s37, 1
      %p317 = por %p315, %p316
      %p319 = scmp.ne.s32.totalorder %s304, %s318
      %p320 = scmp.eq.s32.totalorder %s37, 0
      %p321 = por %p319, %p320
      %s323 = sadd.s32 %s322, 1
      %p326 = scmp.eq.s32.totalorder %s31, 1
      %p327 = scmp.ne.s32.totalorder %s322, %s324
      %p328 = scmp.eq.s32.totalorder %s31, 0
      %p329 = por %p327, %p328
      %p330 = scmp.ne.s32.totalorder %s322, %s324
      %p331 = scmp.eq.s32.totalorder %s36, 1
      %p332 = por %p330, %p331
      %p333 = scmp.ne.s32.totalorder %s324, %s325
      %p334 = scmp.eq.s32.totalorder %s36, 0
      %p335 = por %p333, %p334
      %p336 = scmp.ne.s32.totalorder %s324, %s325
      %p337 = scmp.eq.s32.totalorder %s37, 1
      %p338 = por %p336, %p337
      %p340 = scmp.ne.s32.totalorder %s325, %s339
      %p341 = scmp.eq.s32.totalorder %s37, 0
      %p342 = por %p340, %p341
      %s344 = sadd.s32 %s343, 1
      %p347 = scmp.eq.s32.totalorder %s31, 1
      %p348 = scmp.ne.s32.totalorder %s343, %s345
      %p349 = scmp.eq.s32.totalorder %s31, 0
      %p350 = por %p348, %p349
      %p351 = scmp.ne.s32.totalorder %s343, %s345
      %p352 = scmp.eq.s32.totalorder %s36, 1
      %p353 = por %p351, %p352
      %p354 = scmp.ne.s32.totalorder %s345, %s346
      %p355 = scmp.eq.s32.totalorder %s36, 0
      %p356 = por %p354, %p355
      %p357 = scmp.ne.s32.totalorder %s345, %s346
      %p358 = scmp.eq.s32.totalorder %s37, 1
      %p359 = por %p357, %p358
      %p361 = scmp.ne.s32.totalorder %s346, %s360
      %p362 = scmp.eq.s32.totalorder %s37, 0
      %p363 = por %p361, %p362
      %s365 = sadd.s32 %s364, 1
      %p368 = scmp.eq.s32.totalorder %s31, 1
      %p369 = scmp.ne.s32.totalorder %s364, %s366
      %p370 = scmp.eq.s32.totalorder %s31, 0
      %p371 = por %p369, %p370
      %p372 = scmp.ne.s32.totalorder %s364, %s366
      %p373 = scmp.eq.s32.totalorder %s36, 1
      %p374 = por %p372, %p373
      %p375 = scmp.ne.s32.totalorder %s366, %s367
      %p376 = scmp.eq.s32.totalorder %s36, 0
      %p377 = por %p375, %p376
      %p378 = scmp.ne.s32.totalorder %s366, %s367
      %p379 = scmp.eq.s32.totalorder %s37, 1
      %p380 = por %p378, %p379
      %p382 = scmp.ne.s32.totalorder %s367, %s381
      %p383 = scmp.eq.s32.totalorder %s37, 0
      %p384 = por %p382, %p383
      %s386 = sadd.s32 %s385, 1
      %p389 = scmp.eq.s32.totalorder %s31, 1
      %p390 = scmp.ne.s32.totalorder %s385, %s387
      %p391 = scmp.eq.s32.totalorder %s31, 0
      %p392 = por %p390, %p391
      %p393 = scmp.ne.s32.totalorder %s385, %s387
      %p394 = scmp.eq.s32.totalorder %s36, 1
      %p395 = por %p393, %p394
      %p396 = scmp.ne.s32.totalorder %s387, %s388
      %p397 = scmp.eq.s32.totalorder %s36, 0
      %p398 = por %p396, %p397
      %p399 = scmp.ne.s32.totalorder %s387, %s388
      %p400 = scmp.eq.s32.totalorder %s37, 1
      %p401 = por %p399, %p400
      %p403 = scmp.ne.s32.totalorder %s388, %s402
      %p404 = scmp.eq.s32.totalorder %s37, 0
      %p405 = por %p403, %p404
      %s407 = sadd.s32 %s406, 1
      %p410 = scmp.eq.s32.totalorder %s31, 1
      %p411 = scmp.ne.s32.totalorder %s406, %s408
      %p412 = scmp.eq.s32.totalorder %s31, 0
      %p413 = por %p411, %p412
      %p414 = scmp.ne.s32.totalorder %s406, %s408
      %p415 = scmp.eq.s32.totalorder %s36, 1
      %p416 = por %p414, %p415
      %p417 = scmp.ne.s32.totalorder %s408, %s409
      %p418 = scmp.eq.s32.totalorder %s36, 0
      %p419 = por %p417, %p418
      %p420 = scmp.ne.s32.totalorder %s408, %s409
      %p421 = scmp.eq.s32.totalorder %s37, 1
      %p422 = por %p420, %p421
      %p424 = scmp.ne.s32.totalorder %s409, %s423
      %p425 = scmp.eq.s32.totalorder %s37, 0
      %p426 = por %p424, %p425
      %s428 = sadd.s32 %s427, 1
      %p431 = scmp.eq.s32.totalorder %s31, 1
      %p432 = scmp.ne.s32.totalorder %s427, %s429
      %p433 = scmp.eq.s32.totalorder %s31, 0
      %p434 = por %p432, %p433
      %p435 = scmp.ne.s32.totalorder %s427, %s429
      %p436 = scmp.eq.s32.totalorder %s36, 1
      %p437 = por %p435, %p436
      %p438 = scmp.ne.s32.totalorder %s429, %s430
      %p439 = scmp.eq.s32.totalorder %s36, 0
      %p440 = por %p438, %p439
      %p441 = scmp.ne.s32.totalorder %s429, %s430
      %p442 = scmp.eq.s32.totalorder %s37, 1
      %p443 = por %p441, %p442
      %p445 = scmp.ne.s32.totalorder %s430, %s444
      %p446 = scmp.eq.s32.totalorder %s37, 0
      %p447 = por %p445, %p446
      %s449 = sadd.s32 %s448, 1
      %p452 = scmp.eq.s32.totalorder %s31, 1
      %p453 = scmp.ne.s32.totalorder %s448, %s450
      %p454 = scmp.eq.s32.totalorder %s31, 0
      %p455 = por %p453, %p454
      %p456 = scmp.ne.s32.totalorder %s448, %s450
      %p457 = scmp.eq.s32.totalorder %s36, 1
      %p458 = por %p456, %p457
      %p459 = scmp.ne.s32.totalorder %s450, %s451
      %p460 = scmp.eq.s32.totalorder %s36, 0
      %p461 = por %p459, %p460
      %p462 = scmp.ne.s32.totalorder %s450, %s451
      %p463 = scmp.eq.s32.totalorder %s37, 1
      %p464 = por %p462, %p463
      %p466 = scmp.ne.s32.totalorder %s451, %s465
      %p467 = scmp.eq.s32.totalorder %s37, 0
      %p468 = por %p466, %p467
      %s470 = sadd.s32 %s469, 1
      %p473 = scmp.eq.s32.totalorder %s31, 1
      %p474 = scmp.ne.s32.totalorder %s469, %s471
      %p475 = scmp.eq.s32.totalorder %s31, 0
      %p476 = por %p474, %p475
      %p477 = scmp.ne.s32.totalorder %s469, %s471
      %p478 = scmp.eq.s32.totalorder %s36, 1
      %p479 = por %p477, %p478
      %p480 = scmp.ne.s32.totalorder %s471, %s472
      %p481 = scmp.eq.s32.totalorder %s36, 0
      %p482 = por %p480, %p481
      %p483 = scmp.ne.s32.totalorder %s471, %s472
      %p484 = scmp.eq.s32.totalorder %s37, 1
      %p485 = por %p483, %p484
      %p487 = scmp.ne.s32.totalorder %s472, %s486
      %p488 = scmp.eq.s32.totalorder %s37, 0
      %p489 = por %p487, %p488
      %s491 = sadd.s32 %s490, 1
      %p494 = scmp.eq.s32.totalorder %s31, 1
      %p495 = scmp.ne.s32.totalorder %s490, %s492
      %p496 = scmp.eq.s32.totalorder %s31, 0
      %p497 = por %p495, %p496
      %p498 = scmp.ne.s32.totalorder %s490, %s492
      %p499 = scmp.eq.s32.totalorder %s36, 1
      %p500 = por %p498, %p499
      %p501 = scmp.ne.s32.totalorder %s492, %s493
      %p502 = scmp.eq.s32.totalorder %s36, 0
      %p503 = por %p501, %p502
      %p504 = scmp.ne.s32.totalorder %s492, %s493
      %p505 = scmp.eq.s32.totalorder %s37, 1
      %p506 = por %p504, %p505
      %p508 = scmp.ne.s32.totalorder %s493, %s507
      %p509 = scmp.eq.s32.totalorder %s37, 0
      %p510 = por %p508, %p509
      %s511 = ssub.s32 %s31, %s38
      %p512 = scmp.eq.s32.totalorder %s511, 0
      %s514 = sadd.s32 %s513, 1
      %s515 = scalar_select %p512, %s513, %s514
      %p518 = pneg %p512
      %p519 = scmp.eq.s32.totalorder %s31, 1
      %p520 = por %p518, %p519
      %p521 = scmp.ne.s32.totalorder %s513, %s516
      %p522 = scmp.eq.s32.totalorder %s31, 0
      %p523 = por %p521, %p522
      %p524 = scmp.ne.s32.totalorder %s513, %s516
      %p525 = scmp.eq.s32.totalorder %s36, 1
      %p526 = por %p524, %p525
      %p527 = scmp.ne.s32.totalorder %s516, %s517
      %p528 = scmp.eq.s32.totalorder %s36, 0
      %p529 = por %p527, %p528
      %p530 = scmp.ne.s32.totalorder %s516, %s517
      %p531 = scmp.eq.s32.totalorder %s37, 1
      %p532 = por %p530, %p531
      %p534 = scmp.ne.s32.totalorder %s517, %s533
      %p535 = scmp.eq.s32.totalorder %s37, 0
      %p536 = por %p534, %p535
      %p537 = scmp.le.s32.totalorder 1, %s31
      %p538 = scmp.lt.s32.totalorder %s31, 3
      %p539 = pnand %p537, %p538
      %p540 = pneg %p539
      // Predicated region
      $region9: #{beatmap_decoder_forward.3} parent=5 // pred_check
        _
      $region10: #{beatmap_decoder_forward.3} parent=5 // pred_check_branch
        %542 = sbr.rel (%p539) target = $region12
      $region11: #{beatmap_decoder_forward.3} parent=5 // pred_region
        %s543 = ssub.s32 %s31, 1
        // Predicated region
        $region13: #{beatmap_decoder_forward.3} parent=11 // pred_check
          %p544 = pneg %p104
        $region14: #{beatmap_decoder_forward.3} parent=11 // pred_check_branch
          %546 = sbr.rel (%p544) target = $region16
        $region15: #{beatmap_decoder_forward.3} parent=11 // pred_region
          _
        $region16: #{beatmap_decoder_forward.3} parent=11 // pred_fallthru
          _
        // Predicated region
        $region17: #{beatmap_decoder_forward.3} parent=11 // pred_check
          %p547 = pneg %p125
        $region18: #{beatmap_decoder_forward.3} parent=11 // pred_check_branch
          %549 = sbr.rel (%p547) target = $region20
        $region19: #{beatmap_decoder_forward.3} parent=11 // pred_region
          _
        $region20: #{beatmap_decoder_forward.3} parent=11 // pred_fallthru
          _
        // Predicated region
        $region21: #{beatmap_decoder_forward.3} parent=11 // pred_check
          %p550 = pneg %p146
        $region22: #{beatmap_decoder_forward.3} parent=11 // pred_check_branch
          %552 = sbr.rel (%p550) target = $region24
        $region23: #{beatmap_decoder_forward.3} parent=11 // pred_region
          _
        $region24: #{beatmap_decoder_forward.3} parent=11 // pred_fallthru
          _
        // Predicated region
        $region25: #{beatmap_decoder_forward.3} parent=11 // pred_check
          %p553 = pneg %p167
        $region26: #{beatmap_decoder_forward.3} parent=11 // pred_check_branch
          %555 = sbr.rel (%p553) target = $region28
        $region27: #{beatmap_decoder_forward.3} parent=11 // pred_region
          _
        $region28: #{beatmap_decoder_forward.3} parent=11 // pred_fallthru
          _
        // Predicated region
        $region29: #{beatmap_decoder_forward.3} parent=11 // pred_check
          %p556 = pneg %p188
        $region30: #{beatmap_decoder_forward.3} parent=11 // pred_check_branch
          %558 = sbr.rel (%p556) target = $region32
        $region31: #{beatmap_decoder_forward.3} parent=11 // pred_region
          _
        $region32: #{beatmap_decoder_forward.3} parent=11 // pred_fallthru
          _
        // Predicated region
        $region33: #{beatmap_decoder_forward.3} parent=11 // pred_check
          %p559 = pneg %p209
        $region34: #{beatmap_decoder_forward.3} parent=11 // pred_check_branch
          %561 = sbr.rel (%p559) target = $region36
        $region35: #{beatmap_decoder_forward.3} parent=11 // pred_region
          _
        $region36: #{beatmap_decoder_forward.3} parent=11 // pred_fallthru
          _
        // Predicated region
        $region37: #{beatmap_decoder_forward.3} parent=11 // pred_check
          %p562 = pneg %p230
        $region38: #{beatmap_decoder_forward.3} parent=11 // pred_check_branch
          %564 = sbr.rel (%p562) target = $region40
        $region39: #{beatmap_decoder_forward.3} parent=11 // pred_region
          %566 = vsyncadd [#allocation3], 0
          %s567 = sshll.u32 %s8, 4
          %s568 = int_to_ptr.hbm [resolvable:$true] %s567
          %s569 = sshll.u32 [#allocation2], 4
          %s570 = int_to_ptr.vmem [resolvable:$true] %s569
          %575 = dma.hbm_to_vmem [thread:$0]  %s568, 1024, %s570, [#allocation3], 64, 64, 4
        $region40: #{beatmap_decoder_forward.3} parent=11 // pred_fallthru
          _
        // Predicated region
        $region41: #{beatmap_decoder_forward.3} parent=11 // pred_check
          %p576 = pneg %p251
        $region42: #{beatmap_decoder_forward.3} parent=11 // pred_check_branch
          %578 = sbr.rel (%p576) target = $region44
        $region43: #{beatmap_decoder_forward.3} parent=11 // pred_region
          _
        $region44: #{beatmap_decoder_forward.3} parent=11 // pred_fallthru
          _
        // Predicated region
        $region45: #{beatmap_decoder_forward.3} parent=11 // pred_check
          %p579 = pneg %p272
        $region46: #{beatmap_decoder_forward.3} parent=11 // pred_check_branch
          %581 = sbr.rel (%p579) target = $region48
        $region47: #{beatmap_decoder_forward.3} parent=11 // pred_region
          _
        $region48: #{beatmap_decoder_forward.3} parent=11 // pred_fallthru
          _
        // Predicated region
        $region49: #{beatmap_decoder_forward.3} parent=11 // pred_check
          %p582 = pneg %p293
        $region50: #{beatmap_decoder_forward.3} parent=11 // pred_check_branch
          %584 = sbr.rel (%p582) target = $region52
        $region51: #{beatmap_decoder_forward.3} parent=11 // pred_region
          _
        $region52: #{beatmap_decoder_forward.3} parent=11 // pred_fallthru
          _
        // Predicated region
        $region53: #{beatmap_decoder_forward.3} parent=11 // pred_check
          %p585 = pneg %p314
        $region54: #{beatmap_decoder_forward.3} parent=11 // pred_check_branch
          %587 = sbr.rel (%p585) target = $region56
        $region55: #{beatmap_decoder_forward.3} parent=11 // pred_region
          %589 = vsyncadd [#allocation5], 0
          %s590 = sshll.u32 %s12, 4
          %s591 = int_to_ptr.hbm [resolvable:$true] %s590
          %s592 = sshll.u32 [#allocation4], 4
          %s593 = int_to_ptr.vmem [resolvable:$true] %s592
          %598 = dma.hbm_to_vmem [thread:$0]  %s591, 1024, %s593, [#allocation5], 64, 64, 4
        $region56: #{beatmap_decoder_forward.3} parent=11 // pred_fallthru
          _
        // Predicated region
        $region57: #{beatmap_decoder_forward.3} parent=11 // pred_check
          %p599 = pneg %p335
        $region58: #{beatmap_decoder_forward.3} parent=11 // pred_check_branch
          %601 = sbr.rel (%p599) target = $region60
        $region59: #{beatmap_decoder_forward.3} parent=11 // pred_region
          _
        $region60: #{beatmap_decoder_forward.3} parent=11 // pred_fallthru
          _
        // Predicated region
        $region61: #{beatmap_decoder_forward.3} parent=11 // pred_check
          %p602 = pneg %p356
        $region62: #{beatmap_decoder_forward.3} parent=11 // pred_check_branch
          %604 = sbr.rel (%p602) target = $region64
        $region63: #{beatmap_decoder_forward.3} parent=11 // pred_region
          _
        $region64: #{beatmap_decoder_forward.3} parent=11 // pred_fallthru
          _
        // Predicated region
        $region65: #{beatmap_decoder_forward.3} parent=11 // pred_check
          %p605 = pneg %p377
        $region66: #{beatmap_decoder_forward.3} parent=11 // pred_check_branch
          %607 = sbr.rel (%p605) target = $region68
        $region67: #{beatmap_decoder_forward.3} parent=11 // pred_region
          _
        $region68: #{beatmap_decoder_forward.3} parent=11 // pred_fallthru
          _
        // Predicated region
        $region69: #{beatmap_decoder_forward.3} parent=11 // pred_check
          %p608 = pneg %p398
        $region70: #{beatmap_decoder_forward.3} parent=11 // pred_check_branch
          %610 = sbr.rel (%p608) target = $region72
        $region71: #{beatmap_decoder_forward.3} parent=11 // pred_region
          %612 = vsyncadd [#allocation5], 0
          %s613 = sshll.u32 %s16, 4
          %s614 = int_to_ptr.hbm [resolvable:$true] %s613
          %s615 = sshll.u32 [#allocation6], 4
          %s616 = int_to_ptr.vmem [resolvable:$true] %s615
          %621 = dma.hbm_to_vmem [thread:$0]  %s614, 2048, %s616, [#allocation5], 128, 128, 8
        $region72: #{beatmap_decoder_forward.3} parent=11 // pred_fallthru
          _
        // Predicated region
        $region73: #{beatmap_decoder_forward.3} parent=11 // pred_check
          %p622 = pneg %p419
        $region74: #{beatmap_decoder_forward.3} parent=11 // pred_check_branch
          %624 = sbr.rel (%p622) target = $region76
        $region75: #{beatmap_decoder_forward.3} parent=11 // pred_region
          _
        $region76: #{beatmap_decoder_forward.3} parent=11 // pred_fallthru
          _
        // Predicated region
        $region77: #{beatmap_decoder_forward.3} parent=11 // pred_check
          %p625 = pneg %p440
        $region78: #{beatmap_decoder_forward.3} parent=11 // pred_check_branch
          %627 = sbr.rel (%p625) target = $region80
        $region79: #{beatmap_decoder_forward.3} parent=11 // pred_region
          %629 = vsyncadd [#allocation8], 0
          %s630 = sshll.u32 %s18, 4
          %s631 = int_to_ptr.hbm [resolvable:$true] %s630
          %s632 = sshll.u32 [#allocation7], 4
          %s633 = int_to_ptr.vmem [resolvable:$true] %s632
          %638 = dma.hbm_to_vmem [thread:$0]  %s631, 2048, %s633, [#allocation8], 64, 64, 4
        $region80: #{beatmap_decoder_forward.3} parent=11 // pred_fallthru
          _
        // Predicated region
        $region81: #{beatmap_decoder_forward.3} parent=11 // pred_check
          %p639 = pneg %p461
        $region82: #{beatmap_decoder_forward.3} parent=11 // pred_check_branch
          %641 = sbr.rel (%p639) target = $region84
        $region83: #{beatmap_decoder_forward.3} parent=11 // pred_region
          _
        $region84: #{beatmap_decoder_forward.3} parent=11 // pred_fallthru
          _
        // Predicated region
        $region85: #{beatmap_decoder_forward.3} parent=11 // pred_check
          %p642 = pneg %p482
        $region86: #{beatmap_decoder_forward.3} parent=11 // pred_check_branch
          %644 = sbr.rel (%p642) target = $region88
        $region87: #{beatmap_decoder_forward.3} parent=11 // pred_region
          _
        $region88: #{beatmap_decoder_forward.3} parent=11 // pred_fallthru
          _
        // Predicated region
        $region89: #{beatmap_decoder_forward.3} parent=11 // pred_check
          %p645 = pneg %p503
        $region90: #{beatmap_decoder_forward.3} parent=11 // pred_check_branch
          %647 = sbr.rel (%p645) target = $region92
        $region91: #{beatmap_decoder_forward.3} parent=11 // pred_region
          _
        $region92: #{beatmap_decoder_forward.3} parent=11 // pred_fallthru
          _
      $region12: #{beatmap_decoder_forward.3} parent=5 // pred_fallthru
        _
      %p648 = scmp.lt.s32.totalorder %s31, 2
      // Predicated region
      $region93: #{beatmap_decoder_forward.3} parent=5 // pred_check
        %p649 = pneg %p648
      $region94: #{beatmap_decoder_forward.3} parent=5 // pred_check_branch
        %651 = sbr.rel (%p649) target = $region96
      $region95: #{beatmap_decoder_forward.3} parent=5 // pred_region
        // Predicated region
        $region97: #{beatmap_decoder_forward.3} parent=95 // pred_check
          %p652 = pneg %p51
        $region98: #{beatmap_decoder_forward.3} parent=95 // pred_check_branch
          %654 = sbr.rel (%p652) target = $region100
        $region99: #{beatmap_decoder_forward.3} parent=95 // pred_region
          %p655 = scmp.lt.s32.totalorder %s31, 1
          %s656 = scalar_select %p655, %s31, 1
          %s657 = smul.addr %s656, 4
          %s658 = scalar_lea.vmem %s0, %s657
        $region100: #{beatmap_decoder_forward.3} parent=95 // pred_fallthru
          _
        // Predicated region
        $region101: #{beatmap_decoder_forward.3} parent=95 // pred_check
          %p659 = pneg %p77
        $region102: #{beatmap_decoder_forward.3} parent=95 // pred_check_branch
          %661 = sbr.rel (%p659) target = $region104
        $region103: #{beatmap_decoder_forward.3} parent=95 // pred_region
          %p662 = scmp.lt.s32.totalorder %s31, 1
          %s663 = scalar_select %p662, %s31, 1
          %s664 = smul.addr %s663, 4
          %s665 = scalar_lea.vmem %s1, %s664
        $region104: #{beatmap_decoder_forward.3} parent=95 // pred_fallthru
          _
      $region96: #{beatmap_decoder_forward.3} parent=5 // pred_fallthru
        _
      %p666 = scmp.le.s32.totalorder 1, %s31
      %p667 = scmp.lt.s32.totalorder %s31, 3
      %p668 = pnand %p666, %p667
      %p669 = pneg %p668
      // Predicated region
      $region105: #{beatmap_decoder_forward.3} parent=5 // pred_check
        _
      $region106: #{beatmap_decoder_forward.3} parent=5 // pred_check_branch
        %671 = sbr.rel (%p668) target = $region108
      $region107: #{beatmap_decoder_forward.3} parent=5 // pred_region
        %s672 = ssub.s32 %s31, 1
        // Predicated region
        $region109: #{beatmap_decoder_forward.3} parent=107 // pred_check
          %p673 = pneg %p230
        $region110: #{beatmap_decoder_forward.3} parent=107 // pred_check_branch
          %675 = sbr.rel (%p673) target = $region112
        $region111: #{beatmap_decoder_forward.3} parent=107 // pred_region
          %677 = dma.done [#allocation3], 1024
        $region112: #{beatmap_decoder_forward.3} parent=107 // pred_fallthru
          _
        // Predicated region
        $region113: #{beatmap_decoder_forward.3} parent=107 // pred_check
          %p678 = pneg %p314
        $region114: #{beatmap_decoder_forward.3} parent=107 // pred_check_branch
          %680 = sbr.rel (%p678) target = $region116
        $region115: #{beatmap_decoder_forward.3} parent=107 // pred_region
          %682 = dma.done [#allocation5], 1024
        $region116: #{beatmap_decoder_forward.3} parent=107 // pred_fallthru
          _
        // Predicated region
        $region117: #{beatmap_decoder_forward.3} parent=107 // pred_check
          %p683 = pneg %p398
        $region118: #{beatmap_decoder_forward.3} parent=107 // pred_check_branch
          %685 = sbr.rel (%p683) target = $region120
        $region119: #{beatmap_decoder_forward.3} parent=107 // pred_region
          %687 = dma.done [#allocation5], 2048
        $region120: #{beatmap_decoder_forward.3} parent=107 // pred_fallthru
          _
        // Predicated region
        $region121: #{beatmap_decoder_forward.3} parent=107 // pred_check
          %p688 = pneg %p440
        $region122: #{beatmap_decoder_forward.3} parent=107 // pred_check_branch
          %690 = sbr.rel (%p688) target = $region124
        $region123: #{beatmap_decoder_forward.3} parent=107 // pred_region
          %692 = dma.done [#allocation8], 2048
        $region124: #{beatmap_decoder_forward.3} parent=107 // pred_fallthru
          _
        %p693 = scmp.lt.s32.totalorder %s36, 1
        %s694 = scalar_select %p693, %s36, 1
        %s695 = smul.addr %s694, 4
        %s696 = scalar_lea.vmem %s0, %s695
        %p697 = pneg %p57
        %p698 = pneg %p54
        %p699 = scmp.lt.s32.totalorder %s36, 1
        %s700 = scalar_select %p699, %s36, 1
        %s701 = smul.addr %s700, 4
        %s702 = scalar_lea.vmem %s1, %s701
        %p703 = pneg %p83
        %p704 = pneg %p80
        %p705 = pneg %p104
        %p706 = pneg %p101
        %p707 = pneg %p125
        %p708 = pneg %p122
        %p709 = pneg %p146
        %p710 = pneg %p143
        %p711 = pneg %p167
        %p712 = pneg %p164
        %p713 = pneg %p188
        %p714 = pneg %p185
        %p715 = pneg %p209
        %p716 = pneg %p206
        %p717 = pneg %p230
        %p718 = pneg %p227
        %p719 = pneg %p251
        %p720 = pneg %p248
        %p721 = pneg %p272
        %p722 = pneg %p269
        %p723 = pneg %p293
        %p724 = pneg %p290
        %p725 = pneg %p314
        %p726 = pneg %p311
        %p727 = pneg %p335
        %p728 = pneg %p332
        %p729 = pneg %p356
        %p730 = pneg %p353
        %p731 = pneg %p377
        %p732 = pneg %p374
        %p733 = pneg %p398
        %p734 = pneg %p395
        %p735 = pneg %p419
        %p736 = pneg %p416
        %p737 = pneg %p440
        %p738 = pneg %p437
        %p739 = pneg %p461
        %p740 = pneg %p458
        %p741 = pneg %p482
        %p742 = pneg %p479
        %p743 = pneg %p503
        %p744 = pneg %p500
        %p745 = pneg %p529
        %p746 = pneg %p526
        %p747 = scmp.lt.s32.totalorder %s36, 1
        %s748 = scalar_select %p747, %s36, 1
        %s749 = smul.addr %s748, 4
        %s750 = scalar_lea.vmem %s22, %s749
        %p751 = scmp.lt.s32.totalorder %s36, 1
        %s752 = scalar_select %p751, %s36, 1
        %s753 = smul.addr %s752, 4
        %s754 = scalar_lea.vmem %s0, %s753
        %p755 = scmp.lt.s32.totalorder %s36, 1
        %s756 = scalar_select %p755, %s36, 1
        %s757 = smul.addr %s756, 4
        %s758 = scalar_lea.vmem %s1, %s757
        %p759 = scmp.lt.s32.totalorder %s36, 1
        %s760 = scalar_select %p759, %s36, 1
        %s761 = smul.addr %s760, 4
        %s762 = scalar_lea.vmem %s22, %s761
        %v764 = vld [vmem:[%s754] sm:$0xf]
        %v765 = vld [vmem:[%s758] sm:$0xf]
        %v766 = vld [vmem:[%s2] sm:$0xff]
        %v767 = vld [vmem:[%s2 + $0x8] sm:$0xf]
        %v768 = vld [vmem:[%s2 + $0xc] sm:$0xff]
        %v769 = vld [vmem:[%s2 + $0x14] sm:$0xf]
        %v770 = vld [vmem:[%s2 + $0x18] sm:$0xff]
        %v771 = vld [vmem:[%s2 + $0x20] sm:$0xf]
        %v772 = vld [vmem:[%s2 + $0x24] sm:$0xff]
        %v773 = vld [vmem:[%s2 + $0x2c] sm:$0xf]
        %v774 = vld [vmem:[%s2 + $0x30] sm:$0xff]
        %v775 = vld [vmem:[%s2 + $0x38] sm:$0xf]
        %v776 = vld [vmem:[%s2 + $0x3c] sm:$0xff]
        %v777 = vld [vmem:[%s2 + $0x44] sm:$0xf]
        %v778 = vld [vmem:[%s2 + $0x48] sm:$0xff]
        %v779 = vld [vmem:[%s2 + $0x50] sm:$0xf]
        %v780 = vld [vmem:[%s2 + $0x54] sm:$0xff]
        %v781 = vld [vmem:[%s2 + $0x5c] sm:$0xf]
        %v782 = vld [vmem:[%s2 + $0x60] sm:$0xff]
        %v783 = vld [vmem:[%s2 + $0x68] sm:$0xf]
        %v784 = vld [vmem:[%s2 + $0x6c] sm:$0xff]
        %v785 = vld [vmem:[%s2 + $0x74] sm:$0xf]
        %v786 = vld [vmem:[%s2 + $0x78] sm:$0xff]
        %v787 = vld [vmem:[%s2 + $0x80] sm:$0xf]
        %v788 = vld [vmem:[%s2 + $0x84] sm:$0xff]
        %v789 = vld [vmem:[%s2 + $0x8c] sm:$0xf]
        %v790 = vld [vmem:[%s2 + $0x90] sm:$0xff]
        %v791 = vld [vmem:[%s2 + $0x98] sm:$0xf]
        %v792 = vld [vmem:[%s2 + $0x9c] sm:$0xff]
        %v793 = vld [vmem:[%s2 + $0xa4] sm:$0xf]
        %v794 = vld [vmem:[%s2 + $0xa8] sm:$0xff]
        %v795 = vld [vmem:[%s2 + $0xb0] sm:$0xf]
        %v796 = vld [vmem:[%s2 + $0xb4] sm:$0xff]
        %v797 = vld [vmem:[%s2 + $0xbc] sm:$0xf]
        %v798 = vld [vmem:[%s3] sm:$0x7]
        %v800 = vperm.slane %v798, 0
        %v801 = vperm.slane %v798, 1
        %v802 = vperm.slane %v798, 2
        %v838 = vunpack.c.l.b16 %v766
        %v839 = vunpack.c.h.b16 %v766
        %v840 = vunpack.c.l.b16 %v767
        %v841 = vunpack.c.l.b16 %v768
        %v842 = vunpack.c.h.b16 %v768
        %v843 = vunpack.c.l.b16 %v769
        %v844 = vunpack.c.l.b16 %v770
        %v845 = vunpack.c.h.b16 %v770
        %v846 = vunpack.c.l.b16 %v771
        %v847 = vunpack.c.l.b16 %v772
        %v848 = vunpack.c.h.b16 %v772
        %v849 = vunpack.c.l.b16 %v773
        %v850 = vunpack.c.l.b16 %v774
        %v851 = vunpack.c.h.b16 %v774
        %v852 = vunpack.c.l.b16 %v775
        %v853 = vunpack.c.l.b16 %v776
        %v854 = vunpack.c.h.b16 %v776
        %v855 = vunpack.c.l.b16 %v777
        %v856 = vunpack.c.l.b16 %v778
        %v857 = vunpack.c.h.b16 %v778
        %v858 = vunpack.c.l.b16 %v779
        %v859 = vunpack.c.l.b16 %v780
        %v860 = vunpack.c.h.b16 %v780
        %v861 = vunpack.c.l.b16 %v781
        %v862 = vunpack.c.l.b16 %v782
        %v863 = vunpack.c.h.b16 %v782
        %v864 = vunpack.c.l.b16 %v783
        %v865 = vunpack.c.l.b16 %v784
        %v866 = vunpack.c.h.b16 %v784
        %v867 = vunpack.c.l.b16 %v785
        %v868 = vunpack.c.l.b16 %v786
        %v869 = vunpack.c.h.b16 %v786
        %v870 = vunpack.c.l.b16 %v787
        %v871 = vunpack.c.l.b16 %v788
        %v872 = vunpack.c.h.b16 %v788
        %v873 = vunpack.c.l.b16 %v789
        %v874 = vunpack.c.l.b16 %v790
        %v875 = vunpack.c.h.b16 %v790
        %v876 = vunpack.c.l.b16 %v791
        %v877 = vunpack.c.l.b16 %v792
        %v878 = vunpack.c.h.b16 %v792
        %v879 = vunpack.c.l.b16 %v793
        %v880 = vunpack.c.l.b16 %v794
        %v881 = vunpack.c.h.b16 %v794
        %v882 = vunpack.c.l.b16 %v795
        %v883 = vunpack.c.l.b16 %v796
        %v884 = vunpack.c.h.b16 %v796
        %v885 = vunpack.c.l.b16 %v797
        %v886 = vpack.c.b16 %v841, %v838
        %v887 = vpack.c.b16 %v842, %v839
        %v888 = vpack.c.b16 %v843, %v840
        %v889 = vpack.c.b16 %v847, %v844
        %v890 = vpack.c.b16 %v848, %v845
        %v891 = vpack.c.b16 %v849, %v846
        %v892 = vpack.c.b16 %v853, %v850
        %v893 = vpack.c.b16 %v854, %v851
        %v894 = vpack.c.b16 %v855, %v852
        %v895 = vpack.c.b16 %v859, %v856
        %v896 = vpack.c.b16 %v860, %v857
        %v897 = vpack.c.b16 %v861, %v858
        %v898 = vpack.c.b16 %v865, %v862
        %v899 = vpack.c.b16 %v866, %v863
        %v900 = vpack.c.b16 %v867, %v864
        %v901 = vpack.c.b16 %v871, %v868
        %v902 = vpack.c.b16 %v872, %v869
        %v903 = vpack.c.b16 %v873, %v870
        %v904 = vpack.c.b16 %v877, %v874
        %v905 = vpack.c.b16 %v878, %v875
        %v906 = vpack.c.b16 %v879, %v876
        %v907 = vpack.c.b16 %v883, %v880
        %v908 = vpack.c.b16 %v884, %v881
        %v909 = vpack.c.b16 %v885, %v882
        %934 = vmatpush.bf16.msra.mxu0 %v907
        %935 = vmatpush.bf16.msra.mxu0 %v904
        %936 = vmatpush.bf16.msra.mxu0 %v901
        %937 = vmatpush.bf16.msra.mxu0 %v898
        %938 = vmatpush.bf16.msra.mxu0 %v895
        %939 = vmatpush.bf16.msra.mxu0 %v892
        %940 = vmatpush.bf16.msra.mxu0 %v889
        %941 = vmatpush.bf16.msra.mxu0 %v886
        %942 = vmatmul.bf16.gmra.mxu0 %v764
        %v943 = vpop.f32.mrf.mxu0
        %v944 = vadd.f32 %v800, %v943
        %v945 = vpop.f32.mrf.mxu0
        %946 = vdwg.mxu0
        %947 = vmatpush.bf16.msra.mxu0 %v908
        %948 = vmatpush.bf16.msra.mxu0 %v905
        %949 = vmatpush.bf16.msra.mxu0 %v902
        %950 = vmatpush.bf16.msra.mxu0 %v899
        %951 = vmatpush.bf16.msra.mxu0 %v896
        %952 = vmatpush.bf16.msra.mxu0 %v893
        %953 = vmatpush.bf16.msra.mxu0 %v890
        %954 = vmatpush.bf16.msra.mxu0 %v887
        %955 = vmatmul.bf16.gmra.mxu0 %v764
        %v956 = vpop.f32.mrf.mxu0
        %v957 = vadd.f32 %v801, %v956
        %v958 = vpop.f32.mrf.mxu0
        %959 = vdwg.mxu0
        %960 = vmatpush.bf16.msra.mxu0 %v909
        %961 = vmatpush.bf16.msra.mxu0 %v906
        %962 = vmatpush.bf16.msra.mxu0 %v903
        %963 = vmatpush.bf16.msra.mxu0 %v900
        %964 = vmatpush.bf16.msra.mxu0 %v897
        %965 = vmatpush.bf16.msra.mxu0 %v894
        %966 = vmatpush.bf16.msra.mxu0 %v891
        %967 = vmatpush.bf16.msra.mxu0 %v888
        %968 = vmatmul.bf16.gmra.mxu0 %v764
        %v969 = vpop.f32.mrf.mxu0
        %v970 = vadd.f32 %v802, %v969
        %v971 = vpop.f32.mrf.mxu0
        %972 = vdwg.mxu0
        %v973 = vpack.c.bf16 %v957, %v944
        %v974 = vpack.c.bf16 %v970, %v970
        %976 = vrot.lane.b32.xlu0 %v973, 96
        %v977 = vpop.permute.xlu0 %976
        %978 = vrot.lane.b32.xlu0 %v973, 64
        %v979 = vpop.permute.xlu0 %978
        %980 = vrot.lane.b32.xlu0 %v973, 32
        %v981 = vpop.permute.xlu0 %980
        %v984 = vpack.i.b16 %v977, %v973
        %v985 = vshrl.u32 %v973, 16
        %v986 = vshrl.u32 %v977, 16
        %v987 = vpack.i.b16 %v986, %v985
        %v990 = vpack.i.b16 %v981, %v979
        %v991 = vshrl.u32 %v979, 16
        %v992 = vshrl.u32 %v981, 16
        %v993 = vpack.i.b16 %v992, %v991
        %v996 = vunpack.c.l.s4 1983009808
        %v997 = vunpack.c.0.s8 %v996
        %v998 = vperm.slane %v984, %v997
        %v1001 = vunpack.c.l.s4 1983009808
        %v1002 = vunpack.c.0.s8 %v1001
        %v1003 = vperm.slane %v990, %v1002
        %v1004 = vrot.slane %v1003, 4
        %vm1005 = vcmask 1047556
        %v1006 = vsel %vm1005, %v1004, %v998
        %v1007 = vrot.slane %v998, 4
        %v1008 = vsel %vm1005, %v1003, %v1007
        %v1010 = vunpack.c.l.s4 1934713408
        %v1011 = vunpack.c.0.s8 %v1010
        %v1012 = vperm.slane %v1006, %v1011
        %v1014 = vunpack.c.l.s4 1934713408
        %v1015 = vunpack.c.0.s8 %v1014
        %v1016 = vperm.slane %v1008, %v1015
        %v1017 = vrot.slane %v1012, 4
        %v1018 = vsel %vm1005, 0, %v1017
        %v1019 = vrot.slane %v1016, 4
        %v1020 = vsel %vm1005, 0, %v1019
        %v1023 = vunpack.c.l.s4 1983009808
        %v1024 = vunpack.c.0.s8 %v1023
        %v1025 = vperm.slane %v987, %v1024
        %v1028 = vunpack.c.l.s4 1983009808
        %v1029 = vunpack.c.0.s8 %v1028
        %v1030 = vperm.slane %v993, %v1029
        %v1031 = vrot.slane %v1030, 4
        %v1032 = vsel %vm1005, %v1031, %v1025
        %v1033 = vrot.slane %v1025, 4
        %v1034 = vsel %vm1005, %v1030, %v1033
        %v1036 = vunpack.c.l.s4 1934713408
        %v1037 = vunpack.c.0.s8 %v1036
        %v1038 = vperm.slane %v1032, %v1037
        %v1040 = vunpack.c.l.s4 1934713408
        %v1041 = vunpack.c.0.s8 %v1040
        %v1042 = vperm.slane %v1034, %v1041
        %v1043 = vrot.slane %v1038, 4
        %v1044 = vsel %vm1005, 0, %v1043
        %v1045 = vrot.slane %v1042, 4
        %v1046 = vsel %vm1005, 0, %v1045
        %v1047 = vsel %vm1005, %v1019, %v1012
        %v1049 = vunpack.c.l.s4 1983009808
        %v1050 = vunpack.c.0.s8 %v1049
        %v1051 = vperm.slane %v1047, %v1050
        %v1052 = vrot.slane %v1020, 4
        %v1053 = vsel %vm1005, %v1052, %v1018
        %v1055 = vunpack.c.l.s4 1983009808
        %v1056 = vunpack.c.0.s8 %v1055
        %v1057 = vperm.slane %v1053, %v1056
        %v1058 = vrot.slane %v1057, 4
        %v1059 = vsel %vm1005, %v1058, %v1051
        %v1061 = vunpack.c.l.s4 1934713408
        %v1062 = vunpack.c.0.s8 %v1061
        %v1063 = vperm.slane %v1059, %v1062
        %v1064 = vrot.slane %v1063, 4
        %v1065 = vsel %vm1005, 0, %v1064
        %v1066 = vsel %vm1005, %v1045, %v1038
        %v1068 = vunpack.c.l.s4 1983009808
        %v1069 = vunpack.c.0.s8 %v1068
        %v1070 = vperm.slane %v1066, %v1069
        %v1071 = vrot.slane %v1046, 4
        %v1072 = vsel %vm1005, %v1071, %v1044
        %v1074 = vunpack.c.l.s4 1983009808
        %v1075 = vunpack.c.0.s8 %v1074
        %v1076 = vperm.slane %v1072, %v1075
        %v1077 = vrot.slane %v1076, 4
        %v1078 = vsel %vm1005, %v1077, %v1070
        %v1080 = vunpack.c.l.s4 1934713408
        %v1081 = vunpack.c.0.s8 %v1080
        %v1082 = vperm.slane %v1078, %v1081
        %v1083 = vrot.slane %v1082, 4
        %v1084 = vsel %vm1005, 0, %v1083
        %v1087 = vpack.i.b16 %v1082, %v1063
        %v1088 = vshrl.u32 %v1063, 16
        %v1089 = vshrl.u32 %v1082, 16
        %v1090 = vpack.i.b16 %v1089, %v1088
        %v1093 = vpack.i.b16 %v1084, %v1065
        %v1094 = vshrl.u32 %v1065, 16
        %v1095 = vshrl.u32 %v1084, 16
        %v1096 = vpack.i.b16 %v1095, %v1094
        %v1097 = vrot.slane %v973, 4
        %v1098 = vrot.slane %v977, 4
        %v1099 = vrot.slane %v979, 4
        %v1100 = vrot.slane %v981, 4
        %v1103 = vpack.i.b16 %v1098, %v1097
        %v1104 = vshrl.u32 %v1097, 16
        %v1105 = vshrl.u32 %v1098, 16
        %v1106 = vpack.i.b16 %v1105, %v1104
        %v1109 = vpack.i.b16 %v1100, %v1099
        %v1110 = vshrl.u32 %v1099, 16
        %v1111 = vshrl.u32 %v1100, 16
        %v1112 = vpack.i.b16 %v1111, %v1110
        %v1115 = vunpack.c.l.s4 1983009808
        %v1116 = vunpack.c.0.s8 %v1115
        %v1117 = vperm.slane %v1103, %v1116
        %v1120 = vunpack.c.l.s4 1983009808
        %v1121 = vunpack.c.0.s8 %v1120
        %v1122 = vperm.slane %v1109, %v1121
        %v1123 = vrot.slane %v1122, 4
        %v1124 = vsel %vm1005, %v1123, %v1117
        %v1125 = vrot.slane %v1117, 4
        %v1126 = vsel %vm1005, %v1122, %v1125
        %v1128 = vunpack.c.l.s4 1934713408
        %v1129 = vunpack.c.0.s8 %v1128
        %v1130 = vperm.slane %v1124, %v1129
        %v1132 = vunpack.c.l.s4 1934713408
        %v1133 = vunpack.c.0.s8 %v1132
        %v1134 = vperm.slane %v1126, %v1133
        %v1135 = vrot.slane %v1130, 4
        %v1136 = vsel %vm1005, 0, %v1135
        %v1137 = vrot.slane %v1134, 4
        %v1138 = vsel %vm1005, 0, %v1137
        %v1141 = vunpack.c.l.s4 1983009808
        %v1142 = vunpack.c.0.s8 %v1141
        %v1143 = vperm.slane %v1106, %v1142
        %v1146 = vunpack.c.l.s4 1983009808
        %v1147 = vunpack.c.0.s8 %v1146
        %v1148 = vperm.slane %v1112, %v1147
        %v1149 = vrot.slane %v1148, 4
        %v1150 = vsel %vm1005, %v1149, %v1143
        %v1151 = vrot.slane %v1143, 4
        %v1152 = vsel %vm1005, %v1148, %v1151
        %v1154 = vunpack.c.l.s4 1934713408
        %v1155 = vunpack.c.0.s8 %v1154
        %v1156 = vperm.slane %v1150, %v1155
        %v1158 = vunpack.c.l.s4 1934713408
        %v1159 = vunpack.c.0.s8 %v1158
        %v1160 = vperm.slane %v1152, %v1159
        %v1161 = vrot.slane %v1156, 4
        %v1162 = vsel %vm1005, 0, %v1161
        %v1163 = vrot.slane %v1160, 4
        %v1164 = vsel %vm1005, 0, %v1163
        %v1165 = vsel %vm1005, %v1137, %v1130
        %v1167 = vunpack.c.l.s4 1983009808
        %v1168 = vunpack.c.0.s8 %v1167
        %v1169 = vperm.slane %v1165, %v1168
        %v1170 = vrot.slane %v1138, 4
        %v1171 = vsel %vm1005, %v1170, %v1136
        %v1173 = vunpack.c.l.s4 1983009808
        %v1174 = vunpack.c.0.s8 %v1173
        %v1175 = vperm.slane %v1171, %v1174
        %v1176 = vrot.slane %v1175, 4
        %v1177 = vsel %vm1005, %v1176, %v1169
        %v1179 = vunpack.c.l.s4 1934713408
        %v1180 = vunpack.c.0.s8 %v1179
        %v1181 = vperm.slane %v1177, %v1180
        %v1182 = vrot.slane %v1181, 4
        %v1183 = vsel %vm1005, 0, %v1182
        %v1184 = vsel %vm1005, %v1163, %v1156
        %v1186 = vunpack.c.l.s4 1983009808
        %v1187 = vunpack.c.0.s8 %v1186
        %v1188 = vperm.slane %v1184, %v1187
        %v1189 = vrot.slane %v1164, 4
        %v1190 = vsel %vm1005, %v1189, %v1162
        %v1192 = vunpack.c.l.s4 1983009808
        %v1193 = vunpack.c.0.s8 %v1192
        %v1194 = vperm.slane %v1190, %v1193
        %v1195 = vrot.slane %v1194, 4
        %v1196 = vsel %vm1005, %v1195, %v1188
        %v1198 = vunpack.c.l.s4 1934713408
        %v1199 = vunpack.c.0.s8 %v1198
        %v1200 = vperm.slane %v1196, %v1199
        %v1201 = vrot.slane %v1200, 4
        %v1202 = vsel %vm1005, 0, %v1201
        %v1205 = vpack.i.b16 %v1200, %v1181
        %v1206 = vshrl.u32 %v1181, 16
        %v1207 = vshrl.u32 %v1200, 16
        %v1208 = vpack.i.b16 %v1207, %v1206
        %v1211 = vpack.i.b16 %v1202, %v1183
        %v1212 = vshrl.u32 %v1183, 16
        %v1213 = vshrl.u32 %v1202, 16
        %v1214 = vpack.i.b16 %v1213, %v1212
        %1216 = vrot.lane.b32.xlu0 %v974, 96
        %v1217 = vpop.permute.xlu0 %1216
        %1218 = vrot.lane.b32.xlu0 %v974, 64
        %v1219 = vpop.permute.xlu0 %1218
        %1220 = vrot.lane.b32.xlu0 %v974, 32
        %v1221 = vpop.permute.xlu0 %1220
        %v1224 = vpack.i.b16 %v1217, %v974
        %v1225 = vshrl.u32 %v974, 16
        %v1226 = vshrl.u32 %v1217, 16
        %v1227 = vpack.i.b16 %v1226, %v1225
        %v1230 = vpack.i.b16 %v1221, %v1219
        %v1231 = vshrl.u32 %v1219, 16
        %v1232 = vshrl.u32 %v1221, 16
        %v1233 = vpack.i.b16 %v1232, %v1231
        %v1236 = vunpack.c.l.s4 1983009808
        %v1237 = vunpack.c.0.s8 %v1236
        %v1238 = vperm.slane %v1224, %v1237
        %v1241 = vunpack.c.l.s4 1983009808
        %v1242 = vunpack.c.0.s8 %v1241
        %v1243 = vperm.slane %v1230, %v1242
        %v1244 = vrot.slane %v1243, 4
        %v1245 = vsel %vm1005, %v1244, %v1238
        %v1246 = vrot.slane %v1238, 4
        %v1247 = vsel %vm1005, %v1243, %v1246
        %v1249 = vunpack.c.l.s4 1934713408
        %v1250 = vunpack.c.0.s8 %v1249
        %v1251 = vperm.slane %v1245, %v1250
        %v1253 = vunpack.c.l.s4 1934713408
        %v1254 = vunpack.c.0.s8 %v1253
        %v1255 = vperm.slane %v1247, %v1254
        %v1256 = vrot.slane %v1251, 4
        %v1257 = vsel %vm1005, 0, %v1256
        %v1258 = vrot.slane %v1255, 4
        %v1259 = vsel %vm1005, 0, %v1258
        %v1262 = vunpack.c.l.s4 1983009808
        %v1263 = vunpack.c.0.s8 %v1262
        %v1264 = vperm.slane %v1227, %v1263
        %v1267 = vunpack.c.l.s4 1983009808
        %v1268 = vunpack.c.0.s8 %v1267
        %v1269 = vperm.slane %v1233, %v1268
        %v1270 = vrot.slane %v1269, 4
        %v1271 = vsel %vm1005, %v1270, %v1264
        %v1272 = vrot.slane %v1264, 4
        %v1273 = vsel %vm1005, %v1269, %v1272
        %v1275 = vunpack.c.l.s4 1934713408
        %v1276 = vunpack.c.0.s8 %v1275
        %v1277 = vperm.slane %v1271, %v1276
        %v1279 = vunpack.c.l.s4 1934713408
        %v1280 = vunpack.c.0.s8 %v1279
        %v1281 = vperm.slane %v1273, %v1280
        %v1282 = vrot.slane %v1277, 4
        %v1283 = vsel %vm1005, 0, %v1282
        %v1284 = vrot.slane %v1281, 4
        %v1285 = vsel %vm1005, 0, %v1284
        %v1286 = vsel %vm1005, %v1258, %v1251
        %v1288 = vunpack.c.l.s4 1983009808
        %v1289 = vunpack.c.0.s8 %v1288
        %v1290 = vperm.slane %v1286, %v1289
        %v1291 = vrot.slane %v1259, 4
        %v1292 = vsel %vm1005, %v1291, %v1257
        %v1294 = vunpack.c.l.s4 1983009808
        %v1295 = vunpack.c.0.s8 %v1294
        %v1296 = vperm.slane %v1292, %v1295
        %v1297 = vrot.slane %v1296, 4
        %v1298 = vsel %vm1005, %v1297, %v1290
        %v1300 = vunpack.c.l.s4 1934713408
        %v1301 = vunpack.c.0.s8 %v1300
        %v1302 = vperm.slane %v1298, %v1301
        %v1303 = vrot.slane %v1302, 4
        %v1304 = vsel %vm1005, 0, %v1303
        %v1305 = vsel %vm1005, %v1284, %v1277
        %v1307 = vunpack.c.l.s4 1983009808
        %v1308 = vunpack.c.0.s8 %v1307
        %v1309 = vperm.slane %v1305, %v1308
        %v1310 = vrot.slane %v1285, 4
        %v1311 = vsel %vm1005, %v1310, %v1283
        %v1313 = vunpack.c.l.s4 1983009808
        %v1314 = vunpack.c.0.s8 %v1313
        %v1315 = vperm.slane %v1311, %v1314
        %v1316 = vrot.slane %v1315, 4
        %v1317 = vsel %vm1005, %v1316, %v1309
        %v1319 = vunpack.c.l.s4 1934713408
        %v1320 = vunpack.c.0.s8 %v1319
        %v1321 = vperm.slane %v1317, %v1320
        %v1322 = vrot.slane %v1321, 4
        %v1323 = vsel %vm1005, 0, %v1322
        %v1326 = vpack.i.b16 %v1321, %v1302
        %v1327 = vshrl.u32 %v1302, 16
        %v1328 = vshrl.u32 %v1321, 16
        %v1329 = vpack.i.b16 %v1328, %v1327
        %v1332 = vpack.i.b16 %v1323, %v1304
        %v1333 = vshrl.u32 %v1304, 16
        %v1334 = vshrl.u32 %v1323, 16
        %v1335 = vpack.i.b16 %v1334, %v1333
        %vm1336 = vcmask 261120
        %v1338 = vsel %vm1336, %v1087, 0
        %v1341 = vsel %vm1336, %v1205, 0
        %1343 = vmatpush.bf16.xpose.msra.mxu0 0
        %1344 = vmatpush.bf16.xpose.msra.mxu0 0
        %1345 = vmatpush.bf16.xpose.msra.mxu0 0
        %1346 = vmatpush.bf16.xpose.msra.mxu0 0
        %1347 = vmatpush.bf16.xpose.msra.mxu0 0
        %1348 = vmatpush.bf16.xpose.msra.mxu0 0
        %1349 = vmatpush.bf16.xpose.msra.mxu0 0
        %1350 = vmatpush.bf16.xpose.msra.mxu0 %v1341
        %1351 = vmatmul.bf16.gmra.mxu0 %v1338
        %v1352 = vpop.f32.mrf.mxu0
        %v1353 = vadd.f32 0.0, %v1352
        %v1354 = vpop.f32.mrf.mxu0
        %1355 = vdwg.mxu0
        %v1357 = vsel %vm1336, %v1090, 0
        %v1360 = vsel %vm1336, %v1208, 0
        %1362 = vmatpush.bf16.xpose.msra.mxu0 0
        %1363 = vmatpush.bf16.xpose.msra.mxu0 0
        %1364 = vmatpush.bf16.xpose.msra.mxu0 0
        %1365 = vmatpush.bf16.xpose.msra.mxu0 0
        %1366 = vmatpush.bf16.xpose.msra.mxu0 0
        %1367 = vmatpush.bf16.xpose.msra.mxu0 0
        %1368 = vmatpush.bf16.xpose.msra.mxu0 0
        %1369 = vmatpush.bf16.xpose.msra.mxu0 %v1360
        %1370 = vmatmul.bf16.gmra.mxu0 %v1357
        %v1371 = vpop.f32.mrf.mxu0
        %v1372 = vadd.f32 0.0, %v1371
        %v1373 = vpop.f32.mrf.mxu0
        %1374 = vdwg.mxu0
        %v1376 = vsel %vm1336, %v1093, 0
        %v1379 = vsel %vm1336, %v1211, 0
        %1381 = vmatpush.bf16.xpose.msra.mxu0 0
        %1382 = vmatpush.bf16.xpose.msra.mxu0 0
        %1383 = vmatpush.bf16.xpose.msra.mxu0 0
        %1384 = vmatpush.bf16.xpose.msra.mxu0 0
        %1385 = vmatpush.bf16.xpose.msra.mxu0 0
        %1386 = vmatpush.bf16.xpose.msra.mxu0 0
        %1387 = vmatpush.bf16.xpose.msra.mxu0 0
        %1388 = vmatpush.bf16.xpose.msra.mxu0 %v1379
        %1389 = vmatmul.bf16.gmra.mxu0 %v1376
        %v1390 = vpop.f32.mrf.mxu0
        %v1391 = vadd.f32 0.0, %v1390
        %v1392 = vpop.f32.mrf.mxu0
        %1393 = vdwg.mxu0
        %v1395 = vsel %vm1336, %v1096, 0
        %v1398 = vsel %vm1336, %v1214, 0
        %1400 = vmatpush.bf16.xpose.msra.mxu0 0
        %1401 = vmatpush.bf16.xpose.msra.mxu0 0
        %1402 = vmatpush.bf16.xpose.msra.mxu0 0
        %1403 = vmatpush.bf16.xpose.msra.mxu0 0
        %1404 = vmatpush.bf16.xpose.msra.mxu0 0
        %1405 = vmatpush.bf16.xpose.msra.mxu0 0
        %1406 = vmatpush.bf16.xpose.msra.mxu0 0
        %1407 = vmatpush.bf16.xpose.msra.mxu0 %v1398
        %1408 = vmatmul.bf16.gmra.mxu0 %v1395
        %v1409 = vpop.f32.mrf.mxu0
        %v1410 = vadd.f32 0.0, %v1409
        %v1411 = vpop.f32.mrf.mxu0
        %1412 = vdwg.mxu0
        %v1413 = vmul.f32 %v1353, 0.17677669
        %v1414 = vmul.f32 %v1372, 0.17677669
        %v1415 = vmul.f32 %v1391, 0.17677669
        %v1416 = vmul.f32 %v1410, 0.17677669
        %v1417 = vlaneseq
        %v1418 = vshrl.u32 %v1417, 7
        %v1419 = vlaneseq
        %v1420 = vand.u32 %v1419, 127
        %vm1421 = vcmp.le.s32.totalorder %v1420, %v1418
        %v1422 = vsel %vm1421, 1, 0
        %vm1423 = vcmp.eq.s32.totalorder %v1422, 1
        %v1424 = vsel %vm1423, %v1413, -1e+30
        %v1425 = vsel %vm1423, %v1414, -1e+30
        %v1426 = vsel %vm1423, %v1415, -1e+30
        %v1427 = vsel %vm1423, %v1416, -1e+30
        %vm1428 = vcmask 64512
        %v1429 = vsel %vm1428, %v1424, -inf
        %1430 = vmax.xlane.f32.xlu0 %v1429
        %v1431 = vpop.xlane.xlu0 %1430
        %v1432 = vsel %vm1428, %v1425, -inf
        %1433 = vmax.xlane.f32.xlu0 %v1432
        %v1434 = vpop.xlane.xlu0 %1433
        %v1435 = vsel %vm1428, %v1426, -inf
        %1436 = vmax.xlane.f32.xlu0 %v1435
        %v1437 = vpop.xlane.xlu0 %1436
        %v1438 = vsel %vm1428, %v1427, -inf
        %1439 = vmax.xlane.f32.xlu0 %v1438
        %v1440 = vpop.xlane.xlu0 %1439
        %v1441 = vsub.f32 %v1424, %v1431
        %v1442 = vsub.f32 %v1425, %v1434
        %v1443 = vsub.f32 %v1426, %v1437
        %v1444 = vsub.f32 %v1427, %v1440
        %v1445 = vmul.f32 %v1441, 1.442695
        %v1446 = vpow.pop %v1445
        %v1447 = vmul.f32 %v1442, 1.442695
        %v1448 = vpow.pop %v1447
        %v1449 = vmul.f32 %v1443, 1.442695
        %v1450 = vpow.pop %v1449
        %v1451 = vmul.f32 %v1444, 1.442695
        %v1452 = vpow.pop %v1451
        %v1453 = vsel %vm1428, %v1446, 0.0
        %1454 = vadd.xlane.f32.xlu0 %v1453
        %v1455 = vpop.xlane.xlu0 %1454
        %v1456 = vsel %vm1428, %v1448, 0.0
        %1457 = vadd.xlane.f32.xlu0 %v1456
        %v1458 = vpop.xlane.xlu0 %1457
        %v1459 = vsel %vm1428, %v1450, 0.0
        %1460 = vadd.xlane.f32.xlu0 %v1459
        %v1461 = vpop.xlane.xlu0 %1460
        %v1462 = vsel %vm1428, %v1452, 0.0
        %1463 = vadd.xlane.f32.xlu0 %v1462
        %v1464 = vpop.xlane.xlu0 %1463
        %v1465 = vrcp.pop %v1455
        %v1466 = vmul.f32 %v1455, %v1465
        %v1467 = vsub.f32 1.0, %v1466
        %v1468 = vmul.f32 %v1465, %v1467
        %v1469 = vadd.f32 %v1465, %v1468
        %vm1470 = vweird.f32 %v1455
        %vm1471 = vweird.f32 %v1465
        %vm1472 = vmor %vm1470, %vm1471
        %v1473 = vsel %vm1472, %v1465, %v1469
        %v1474 = vand.u32 2147483647, %v1455
        %vm1475 = vcmp.eq.f32.partialorder %v1474, 8.507059e+37
        %v1476 = vand.u32 %v1455, 2147483648
        %v1477 = vor.u32 1.1754944e-38, %v1476
        %v1478 = vsel %vm1475, %v1477, %v1473
        %v1479 = vmul.f32 %v1446, %v1478
        %v1480 = vrcp.pop %v1458
        %v1481 = vmul.f32 %v1458, %v1480
        %v1482 = vsub.f32 1.0, %v1481
        %v1483 = vmul.f32 %v1480, %v1482
        %v1484 = vadd.f32 %v1480, %v1483
        %vm1485 = vweird.f32 %v1458
        %vm1486 = vweird.f32 %v1480
        %vm1487 = vmor %vm1485, %vm1486
        %v1488 = vsel %vm1487, %v1480, %v1484
        %v1489 = vand.u32 2147483647, %v1458
        %vm1490 = vcmp.eq.f32.partialorder %v1489, 8.507059e+37
        %v1491 = vand.u32 %v1458, 2147483648
        %v1492 = vor.u32 1.1754944e-38, %v1491
        %v1493 = vsel %vm1490, %v1492, %v1488
        %v1494 = vmul.f32 %v1448, %v1493
        %v1495 = vrcp.pop %v1461
        %v1496 = vmul.f32 %v1461, %v1495
        %v1497 = vsub.f32 1.0, %v1496
        %v1498 = vmul.f32 %v1495, %v1497
        %v1499 = vadd.f32 %v1495, %v1498
        %vm1500 = vweird.f32 %v1461
        %vm1501 = vweird.f32 %v1495
        %vm1502 = vmor %vm1500, %vm1501
        %v1503 = vsel %vm1502, %v1495, %v1499
        %v1504 = vand.u32 2147483647, %v1461
        %vm1505 = vcmp.eq.f32.partialorder %v1504, 8.507059e+37
        %v1506 = vand.u32 %v1461, 2147483648
        %v1507 = vor.u32 1.1754944e-38, %v1506
        %v1508 = vsel %vm1505, %v1507, %v1503
        %v1509 = vmul.f32 %v1450, %v1508
        %v1510 = vrcp.pop %v1464
        %v1511 = vmul.f32 %v1464, %v1510
        %v1512 = vsub.f32 1.0, %v1511
        %v1513 = vmul.f32 %v1510, %v1512
        %v1514 = vadd.f32 %v1510, %v1513
        %vm1515 = vweird.f32 %v1464
        %vm1516 = vweird.f32 %v1510
        %vm1517 = vmor %vm1515, %vm1516
        %v1518 = vsel %vm1517, %v1510, %v1514
        %v1519 = vand.u32 2147483647, %v1464
        %vm1520 = vcmp.eq.f32.partialorder %v1519, 8.507059e+37
        %v1521 = vand.u32 %v1464, 2147483648
        %v1522 = vor.u32 1.1754944e-38, %v1521
        %v1523 = vsel %vm1520, %v1522, %v1518
        %v1524 = vmul.f32 %v1452, %v1523
        %v1525 = vpack.c.bf16 %v1479, %v1479
        %v1526 = vpack.c.bf16 %v1494, %v1494
        %v1527 = vpack.c.bf16 %v1509, %v1509
        %v1528 = vpack.c.bf16 %v1524, %v1524
        %v1530 = vsel %vm1428, %v1525, 0
        %vm1532 = vcmask 1043456
        %v1534 = vsel %vm1532, %v1326, 0
        %1536 = vmatpush.bf16.msra.mxu0 0
        %1537 = vmatpush.bf16.msra.mxu0 0
        %1538 = vmatpush.bf16.msra.mxu0 0
        %1539 = vmatpush.bf16.msra.mxu0 0
        %1540 = vmatpush.bf16.msra.mxu0 0
        %1541 = vmatpush.bf16.msra.mxu0 0
        %1542 = vmatpush.bf16.msra.mxu0 0
        %1543 = vmatpush.bf16.msra.mxu0 %v1534
        %1544 = vmatmul.bf16.gmra.mxu0 %v1530
        %v1545 = vpop.f32.mrf.mxu0
        %v1546 = vadd.f32 0.0, %v1545
        %v1547 = vpop.f32.mrf.mxu0
        %1548 = vdwg.mxu0
        %v1550 = vsel %vm1428, %v1526, 0
        %v1553 = vsel %vm1532, %v1329, 0
        %1555 = vmatpush.bf16.msra.mxu0 0
        %1556 = vmatpush.bf16.msra.mxu0 0
        %1557 = vmatpush.bf16.msra.mxu0 0
        %1558 = vmatpush.bf16.msra.mxu0 0
        %1559 = vmatpush.bf16.msra.mxu0 0
        %1560 = vmatpush.bf16.msra.mxu0 0
        %1561 = vmatpush.bf16.msra.mxu0 0
        %1562 = vmatpush.bf16.msra.mxu0 %v1553
        %1563 = vmatmul.bf16.gmra.mxu0 %v1550
        %v1564 = vpop.f32.mrf.mxu0
        %v1565 = vadd.f32 0.0, %v1564
        %v1566 = vpop.f32.mrf.mxu0
        %1567 = vdwg.mxu0
        %v1569 = vsel %vm1428, %v1527, 0
        %v1572 = vsel %vm1532, %v1332, 0
        %1574 = vmatpush.bf16.msra.mxu0 0
        %1575 = vmatpush.bf16.msra.mxu0 0
        %1576 = vmatpush.bf16.msra.mxu0 0
        %1577 = vmatpush.bf16.msra.mxu0 0
        %1578 = vmatpush.bf16.msra.mxu0 0
        %1579 = vmatpush.bf16.msra.mxu0 0
        %1580 = vmatpush.bf16.msra.mxu0 0
        %1581 = vmatpush.bf16.msra.mxu0 %v1572
        %1582 = vmatmul.bf16.gmra.mxu0 %v1569
        %v1583 = vpop.f32.mrf.mxu0
        %v1584 = vadd.f32 0.0, %v1583
        %v1585 = vpop.f32.mrf.mxu0
        %1586 = vdwg.mxu0
        %v1588 = vsel %vm1428, %v1528, 0
        %v1591 = vsel %vm1532, %v1335, 0
        %1593 = vmatpush.bf16.msra.mxu0 0
        %1594 = vmatpush.bf16.msra.mxu0 0
        %1595 = vmatpush.bf16.msra.mxu0 0
        %1596 = vmatpush.bf16.msra.mxu0 0
        %1597 = vmatpush.bf16.msra.mxu0 0
        %1598 = vmatpush.bf16.msra.mxu0 0
        %1599 = vmatpush.bf16.msra.mxu0 0
        %1600 = vmatpush.bf16.msra.mxu0 %v1591
        %1601 = vmatmul.bf16.gmra.mxu0 %v1588
        %v1602 = vpop.f32.mrf.mxu0
        %v1603 = vadd.f32 0.0, %v1602
        %v1604 = vpop.f32.mrf.mxu0
        %1605 = vdwg.mxu0
        %v1606 = vrot.slane %v1584, 4
        %vm1607 = vcmask 1047556
        %v1608 = vsel %vm1607, %v1606, %v1546
        %v1609 = vrot.slane %v1546, 4
        %v1610 = vsel %vm1607, %v1584, %v1609
        %v1612 = vunpack.c.l.s4 1983009808
        %v1613 = vunpack.c.0.s8 %v1612
        %v1614 = vperm.slane %v1608, %v1613
        %v1616 = vunpack.c.l.s4 1983009808
        %v1617 = vunpack.c.0.s8 %v1616
        %v1618 = vperm.slane %v1610, %v1617
        %v1619 = vrot.slane %v1603, 4
        %v1620 = vsel %vm1607, %v1619, %v1565
        %v1621 = vrot.slane %v1565, 4
        %v1622 = vsel %vm1607, %v1603, %v1621
        %v1624 = vunpack.c.l.s4 1983009808
        %v1625 = vunpack.c.0.s8 %v1624
        %v1626 = vperm.slane %v1620, %v1625
        %v1628 = vunpack.c.l.s4 1983009808
        %v1629 = vunpack.c.0.s8 %v1628
        %v1630 = vperm.slane %v1622, %v1629
        %v1631 = vrot.slane %v1626, 4
        %v1632 = vsel %vm1607, %v1631, %v1614
        %v1633 = vrot.slane %v1614, 4
        %v1634 = vsel %vm1607, %v1626, %v1633
        %v1636 = vunpack.c.l.s4 1934713408
        %v1637 = vunpack.c.0.s8 %v1636
        %v1638 = vperm.slane %v1632, %v1637
        %v1640 = vunpack.c.l.s4 1934713408
        %v1641 = vunpack.c.0.s8 %v1640
        %v1642 = vperm.slane %v1634, %v1641
        %v1643 = vrot.slane %v1630, 4
        %v1644 = vsel %vm1607, %v1643, %v1618
        %v1645 = vrot.slane %v1618, 4
        %v1646 = vsel %vm1607, %v1630, %v1645
        %v1648 = vunpack.c.l.s4 1934713408
        %v1649 = vunpack.c.0.s8 %v1648
        %v1650 = vperm.slane %v1644, %v1649
        %v1652 = vunpack.c.l.s4 1934713408
        %v1653 = vunpack.c.0.s8 %v1652
        %v1654 = vperm.slane %v1646, %v1653
        %v1655 = vrot.slane %v1638, 4
        %v1656 = vsel %vm1607, 0.0, %v1655
        %v1657 = vrot.slane %v1642, 4
        %v1658 = vsel %vm1607, 0.0, %v1657
        %v1659 = vrot.slane %v1650, 4
        %v1660 = vsel %vm1607, 0.0, %v1659
        %v1661 = vrot.slane %v1654, 4
        %v1662 = vsel %vm1607, 0.0, %v1661
        %v1663 = vsel %vm1607, %v1657, %v1638
        %v1665 = vunpack.c.l.s4 1983009808
        %v1666 = vunpack.c.0.s8 %v1665
        %v1667 = vperm.slane %v1663, %v1666
        %v1668 = vrot.slane %v1658, 4
        %v1669 = vsel %vm1607, %v1668, %v1656
        %v1671 = vunpack.c.l.s4 1983009808
        %v1672 = vunpack.c.0.s8 %v1671
        %v1673 = vperm.slane %v1669, %v1672
        %v1674 = vsel %vm1607, %v1661, %v1650
        %v1676 = vunpack.c.l.s4 1983009808
        %v1677 = vunpack.c.0.s8 %v1676
        %v1678 = vperm.slane %v1674, %v1677
        %v1679 = vrot.slane %v1662, 4
        %v1680 = vsel %vm1607, %v1679, %v1660
        %v1682 = vunpack.c.l.s4 1983009808
        %v1683 = vunpack.c.0.s8 %v1682
        %v1684 = vperm.slane %v1680, %v1683
        %v1685 = vrot.slane %v1673, 4
        %v1686 = vsel %vm1607, %v1685, %v1667
        %v1687 = vrot.slane %v1667, 4
        %v1688 = vsel %vm1607, %v1673, %v1687
        %v1690 = vunpack.c.l.s4 1934713408
        %v1691 = vunpack.c.0.s8 %v1690
        %v1692 = vperm.slane %v1686, %v1691
        %v1694 = vunpack.c.l.s4 1934713408
        %v1695 = vunpack.c.0.s8 %v1694
        %v1696 = vperm.slane %v1688, %v1695
        %v1697 = vrot.slane %v1684, 4
        %v1698 = vsel %vm1607, %v1697, %v1678
        %v1699 = vrot.slane %v1678, 4
        %v1700 = vsel %vm1607, %v1684, %v1699
        %v1702 = vunpack.c.l.s4 1934713408
        %v1703 = vunpack.c.0.s8 %v1702
        %v1704 = vperm.slane %v1698, %v1703
        %v1706 = vunpack.c.l.s4 1934713408
        %v1707 = vunpack.c.0.s8 %v1706
        %v1708 = vperm.slane %v1700, %v1707
        %v1709 = vrot.slane %v1704, 4
        %v1710 = vsel %vm1607, %v1709, %v1692
        %v1711 = vrot.slane %v1692, 4
        %v1712 = vsel %vm1607, %v1704, %v1711
        %v1713 = vrot.slane %v1708, 4
        %v1714 = vsel %vm1607, %v1713, %v1696
        %v1715 = vrot.slane %v1696, 4
        %v1716 = vsel %vm1607, %v1708, %v1715
        %1718 = vrot.lane.b32.xlu0 %v1712, 32
        %v1719 = vpop.permute.xlu0 %1718
        %1722 = vrot.lane.b32.xlu0 %v1714, 64
        %v1723 = vpop.permute.xlu0 %1722
        %1726 = vrot.lane.b32.xlu0 %v1716, 96
        %v1727 = vpop.permute.xlu0 %1726
        %v1729 = vsel %vm1336, %v1710, %v1719
        %vm1730 = vcmask 523264
        %v1731 = vsel %vm1730, %v1729, %v1723
        %vm1732 = vcmask 785408
        %v1733 = vsel %vm1732, %v1731, %v1727
        %v1734 = vpack.c.bf16 %v1733, %v1733
        %v1735 = vld [vmem:[%s4] sm:$0xf]
        %v1736 = vld [vmem:[%s4 + $0x4] sm:$0xf]
        %v1737 = vld [vmem:[%s4 + $0x8] sm:$0xf]
        %v1738 = vld [vmem:[%s4 + $0xc] sm:$0xf]
        %v1739 = vld [vmem:[%s4 + $0x10] sm:$0xf]
        %v1740 = vld [vmem:[%s4 + $0x14] sm:$0xf]
        %v1741 = vld [vmem:[%s4 + $0x18] sm:$0xf]
        %v1742 = vld [vmem:[%s4 + $0x1c] sm:$0xf]
        %v1743 = vld [vmem:[%s4 + $0x20] sm:$0xf]
        %v1744 = vld [vmem:[%s4 + $0x24] sm:$0xf]
        %v1745 = vld [vmem:[%s4 + $0x28] sm:$0xf]
        %v1746 = vld [vmem:[%s4 + $0x2c] sm:$0xf]
        %v1747 = vld [vmem:[%s4 + $0x30] sm:$0xf]
        %v1748 = vld [vmem:[%s4 + $0x34] sm:$0xf]
        %v1749 = vld [vmem:[%s4 + $0x38] sm:$0xf]
        %v1750 = vld [vmem:[%s4 + $0x3c] sm:$0xf]
        %v1751 = vld [vmem:[%s5] sm:$0x1]
        %v1753 = vperm.slane %v1751, 0
        %v1771 = vunpack.c.l.b16 %v1735
        %v1772 = vunpack.c.l.b16 %v1736
        %v1773 = vunpack.c.l.b16 %v1737
        %v1774 = vunpack.c.l.b16 %v1738
        %v1775 = vunpack.c.l.b16 %v1739
        %v1776 = vunpack.c.l.b16 %v1740
        %v1777 = vunpack.c.l.b16 %v1741
        %v1778 = vunpack.c.l.b16 %v1742
        %v1779 = vunpack.c.l.b16 %v1743
        %v1780 = vunpack.c.l.b16 %v1744
        %v1781 = vunpack.c.l.b16 %v1745
        %v1782 = vunpack.c.l.b16 %v1746
        %v1783 = vunpack.c.l.b16 %v1747
        %v1784 = vunpack.c.l.b16 %v1748
        %v1785 = vunpack.c.l.b16 %v1749
        %v1786 = vunpack.c.l.b16 %v1750
        %v1787 = vpack.c.b16 %v1772, %v1771
        %v1788 = vpack.c.b16 %v1774, %v1773
        %v1789 = vpack.c.b16 %v1776, %v1775
        %v1790 = vpack.c.b16 %v1778, %v1777
        %v1791 = vpack.c.b16 %v1780, %v1779
        %v1792 = vpack.c.b16 %v1782, %v1781
        %v1793 = vpack.c.b16 %v1784, %v1783
        %v1794 = vpack.c.b16 %v1786, %v1785
        %1803 = vmatpush.bf16.msra.mxu0 %v1794
        %1804 = vmatpush.bf16.msra.mxu0 %v1793
        %1805 = vmatpush.bf16.msra.mxu0 %v1792
        %1806 = vmatpush.bf16.msra.mxu0 %v1791
        %1807 = vmatpush.bf16.msra.mxu0 %v1790
        %1808 = vmatpush.bf16.msra.mxu0 %v1789
        %1809 = vmatpush.bf16.msra.mxu0 %v1788
        %1810 = vmatpush.bf16.msra.mxu0 %v1787
        %1811 = vmatmul.bf16.gmra.mxu0 %v1734
        %v1812 = vpop.f32.mrf.mxu0
        %v1813 = vadd.f32 %v1753, %v1812
        %v1814 = vpop.f32.mrf.mxu0
        %1815 = vdwg.mxu0
        %v1816 = vunpack.c.l.bf16 %v764
        %v1817 = vadd.f32 %v1813, %v1816
        %v1818 = vld [vmem:[%s6] sm:$0x1]
        %v1819 = vld [vmem:[%s7] sm:$0x1]
        %1820 = vadd.xlane.f32.xlu0 %v1817
        %v1821 = vpop.xlane.xlu0 %1820
        %v1822 = vrcp.pop 128.0
        %v1823 = vmul.f32 128.0, %v1822
        %v1824 = vsub.f32 1.0, %v1823
        %v1825 = vmul.f32 %v1822, %v1824
        %v1826 = vadd.f32 %v1822, %v1825
        %vm1827 = vweird.f32 %v1822
        %v1828 = vsel %vm1827, %v1822, %v1826
        %v1829 = vmul.f32 %v1821, %v1828
        %v1830 = vsub.f32 %v1817, %v1829
        %v1831 = vmul.f32 %v1830, %v1830
        %1832 = vadd.xlane.f32.xlu0 %v1831
        %v1833 = vpop.xlane.xlu0 %1832
        %v1834 = vmul.f32 %v1833, %v1828
        %v1835 = vadd.f32 %v1834, 1e-05
        %v1836 = vrsqrt.pop %v1835
        %v1837 = vmul.f32 %v1836, %v1835
        %v1838 = vmul.f32 %v1837, %v1836
        %v1839 = vmul.f32 0.5, %v1838
        %v1840 = vsub.f32 1.5, %v1839
        %v1841 = vmul.f32 %v1836, %v1840
        %vm1842 = vweird.f32 %v1835
        %vm1843 = vweird.f32 %v1836
        %vm1844 = vmor %vm1842, %vm1843
        %v1845 = vsel %vm1844, %v1836, %v1841
        %v1846 = vmul.f32 %v1830, %v1845
        %v1848 = vperm.slane %v1818, 0
        %v1850 = vmul.f32 %v1846, %v1848
        %v1852 = vperm.slane %v1819, 0
        %v1854 = vadd.f32 %v1850, %v1852
        %v1855 = vpack.c.bf16 %v1854, %v1854
        %v1856 = vld [vmem:[#allocation2] sm:$0xf]
        %v1857 = vld [vmem:[#allocation2 + $0x4] sm:$0xf]
        %v1858 = vld [vmem:[#allocation2 + $0x8] sm:$0xf]
        %v1859 = vld [vmem:[#allocation2 + $0xc] sm:$0xf]
        %v1860 = vld [vmem:[#allocation2 + $0x10] sm:$0xf]
        %v1861 = vld [vmem:[#allocation2 + $0x14] sm:$0xf]
        %v1862 = vld [vmem:[#allocation2 + $0x18] sm:$0xf]
        %v1863 = vld [vmem:[#allocation2 + $0x1c] sm:$0xf]
        %v1864 = vld [vmem:[#allocation2 + $0x20] sm:$0xf]
        %v1865 = vld [vmem:[#allocation2 + $0x24] sm:$0xf]
        %v1866 = vld [vmem:[#allocation2 + $0x28] sm:$0xf]
        %v1867 = vld [vmem:[#allocation2 + $0x2c] sm:$0xf]
        %v1868 = vld [vmem:[#allocation2 + $0x30] sm:$0xf]
        %v1869 = vld [vmem:[#allocation2 + $0x34] sm:$0xf]
        %v1870 = vld [vmem:[#allocation2 + $0x38] sm:$0xf]
        %v1871 = vld [vmem:[#allocation2 + $0x3c] sm:$0xf]
        %v1872 = vld [vmem:[%s9] sm:$0x1]
        %v1874 = vperm.slane %v1872, 0
        %v1892 = vunpack.c.l.b16 %v1856
        %v1893 = vunpack.c.l.b16 %v1857
        %v1894 = vunpack.c.l.b16 %v1858
        %v1895 = vunpack.c.l.b16 %v1859
        %v1896 = vunpack.c.l.b16 %v1860
        %v1897 = vunpack.c.l.b16 %v1861
        %v1898 = vunpack.c.l.b16 %v1862
        %v1899 = vunpack.c.l.b16 %v1863
        %v1900 = vunpack.c.l.b16 %v1864
        %v1901 = vunpack.c.l.b16 %v1865
        %v1902 = vunpack.c.l.b16 %v1866
        %v1903 = vunpack.c.l.b16 %v1867
        %v1904 = vunpack.c.l.b16 %v1868
        %v1905 = vunpack.c.l.b16 %v1869
        %v1906 = vunpack.c.l.b16 %v1870
        %v1907 = vunpack.c.l.b16 %v1871
        %v1908 = vpack.c.b16 %v1893, %v1892
        %v1909 = vpack.c.b16 %v1895, %v1894
        %v1910 = vpack.c.b16 %v1897, %v1896
        %v1911 = vpack.c.b16 %v1899, %v1898
        %v1912 = vpack.c.b16 %v1901, %v1900
        %v1913 = vpack.c.b16 %v1903, %v1902
        %v1914 = vpack.c.b16 %v1905, %v1904
        %v1915 = vpack.c.b16 %v1907, %v1906
        %1924 = vmatpush.bf16.msra.mxu0 %v1915
        %1925 = vmatpush.bf16.msra.mxu0 %v1914
        %1926 = vmatpush.bf16.msra.mxu0 %v1913
        %1927 = vmatpush.bf16.msra.mxu0 %v1912
        %1928 = vmatpush.bf16.msra.mxu0 %v1911
        %1929 = vmatpush.bf16.msra.mxu0 %v1910
        %1930 = vmatpush.bf16.msra.mxu0 %v1909
        %1931 = vmatpush.bf16.msra.mxu0 %v1908
        %1932 = vmatmul.bf16.gmra.mxu0 %v1855
        %v1933 = vpop.f32.mrf.mxu0
        %v1934 = vadd.f32 %v1874, %v1933
        %v1935 = vpop.f32.mrf.mxu0
        %1936 = vdwg.mxu0
        %v1937 = vld [vmem:[%s10] sm:$0xff]
        %v1938 = vld [vmem:[%s10 + $0x8] sm:$0xff]
        %v1939 = vld [vmem:[%s10 + $0x10] sm:$0xff]
        %v1940 = vld [vmem:[%s10 + $0x18] sm:$0xff]
        %v1941 = vld [vmem:[%s10 + $0x20] sm:$0xff]
        %v1942 = vld [vmem:[%s10 + $0x28] sm:$0xff]
        %v1943 = vld [vmem:[%s10 + $0x30] sm:$0xff]
        %v1944 = vld [vmem:[%s10 + $0x38] sm:$0xff]
        %v1945 = vld [vmem:[%s10 + $0x40] sm:$0xff]
        %v1946 = vld [vmem:[%s10 + $0x48] sm:$0xff]
        %v1947 = vld [vmem:[%s10 + $0x50] sm:$0xff]
        %v1948 = vld [vmem:[%s10 + $0x58] sm:$0xff]
        %v1949 = vld [vmem:[%s10 + $0x60] sm:$0xff]
        %v1950 = vld [vmem:[%s10 + $0x68] sm:$0xff]
        %v1951 = vld [vmem:[%s10 + $0x70] sm:$0xff]
        %v1952 = vld [vmem:[%s10 + $0x78] sm:$0xff]
        %v1953 = vld [vmem:[%s11] sm:$0x3]
        %v1955 = vperm.slane %v1953, 0
        %v1956 = vperm.slane %v1953, 1
        %v1975 = vunpack.c.l.b16 %v1937
        %v1976 = vunpack.c.h.b16 %v1937
        %v1977 = vunpack.c.l.b16 %v1938
        %v1978 = vunpack.c.h.b16 %v1938
        %v1979 = vunpack.c.l.b16 %v1939
        %v1980 = vunpack.c.h.b16 %v1939
        %v1981 = vunpack.c.l.b16 %v1940
        %v1982 = vunpack.c.h.b16 %v1940
        %v1983 = vunpack.c.l.b16 %v1941
        %v1984 = vunpack.c.h.b16 %v1941
        %v1985 = vunpack.c.l.b16 %v1942
        %v1986 = vunpack.c.h.b16 %v1942
        %v1987 = vunpack.c.l.b16 %v1943
        %v1988 = vunpack.c.h.b16 %v1943
        %v1989 = vunpack.c.l.b16 %v1944
        %v1990 = vunpack.c.h.b16 %v1944
        %v1991 = vunpack.c.l.b16 %v1945
        %v1992 = vunpack.c.h.b16 %v1945
        %v1993 = vunpack.c.l.b16 %v1946
        %v1994 = vunpack.c.h.b16 %v1946
        %v1995 = vunpack.c.l.b16 %v1947
        %v1996 = vunpack.c.h.b16 %v1947
        %v1997 = vunpack.c.l.b16 %v1948
        %v1998 = vunpack.c.h.b16 %v1948
        %v1999 = vunpack.c.l.b16 %v1949
        %v2000 = vunpack.c.h.b16 %v1949
        %v2001 = vunpack.c.l.b16 %v1950
        %v2002 = vunpack.c.h.b16 %v1950
        %v2003 = vunpack.c.l.b16 %v1951
        %v2004 = vunpack.c.h.b16 %v1951
        %v2005 = vunpack.c.l.b16 %v1952
        %v2006 = vunpack.c.h.b16 %v1952
        %v2007 = vpack.c.b16 %v1977, %v1975
        %v2008 = vpack.c.b16 %v1978, %v1976
        %v2009 = vpack.c.b16 %v1981, %v1979
        %v2010 = vpack.c.b16 %v1982, %v1980
        %v2011 = vpack.c.b16 %v1985, %v1983
        %v2012 = vpack.c.b16 %v1986, %v1984
        %v2013 = vpack.c.b16 %v1989, %v1987
        %v2014 = vpack.c.b16 %v1990, %v1988
        %v2015 = vpack.c.b16 %v1993, %v1991
        %v2016 = vpack.c.b16 %v1994, %v1992
        %v2017 = vpack.c.b16 %v1997, %v1995
        %v2018 = vpack.c.b16 %v1998, %v1996
        %v2019 = vpack.c.b16 %v2001, %v1999
        %v2020 = vpack.c.b16 %v2002, %v2000
        %v2021 = vpack.c.b16 %v2005, %v2003
        %v2022 = vpack.c.b16 %v2006, %v2004
        %2039 = vmatpush.bf16.msra.mxu0 %v2021
        %2040 = vmatpush.bf16.msra.mxu0 %v2019
        %2041 = vmatpush.bf16.msra.mxu0 %v2017
        %2042 = vmatpush.bf16.msra.mxu0 %v2015
        %2043 = vmatpush.bf16.msra.mxu0 %v2013
        %2044 = vmatpush.bf16.msra.mxu0 %v2011
        %2045 = vmatpush.bf16.msra.mxu0 %v2009
        %2046 = vmatpush.bf16.msra.mxu0 %v2007
        %2047 = vmatmul.bf16.gmra.mxu0 %v765
        %v2048 = vpop.f32.mrf.mxu0
        %v2049 = vadd.f32 %v1955, %v2048
        %v2050 = vpop.f32.mrf.mxu0
        %2051 = vdwg.mxu0
        %2052 = vmatpush.bf16.msra.mxu0 %v2022
        %2053 = vmatpush.bf16.msra.mxu0 %v2020
        %2054 = vmatpush.bf16.msra.mxu0 %v2018
        %2055 = vmatpush.bf16.msra.mxu0 %v2016
        %2056 = vmatpush.bf16.msra.mxu0 %v2014
        %2057 = vmatpush.bf16.msra.mxu0 %v2012
        %2058 = vmatpush.bf16.msra.mxu0 %v2010
        %2059 = vmatpush.bf16.msra.mxu0 %v2008
        %2060 = vmatmul.bf16.gmra.mxu0 %v765
        %v2061 = vpop.f32.mrf.mxu0
        %v2062 = vadd.f32 %v1956, %v2061
        %v2063 = vpop.f32.mrf.mxu0
        %2064 = vdwg.mxu0
        %v2065 = vpack.c.bf16 %v2062, %v2049
        %v2066 = vpack.c.bf16 %v1934, %v1934
        %2068 = vrot.lane.b32.xlu0 %v2066, 96
        %v2069 = vpop.permute.xlu0 %2068
        %2070 = vrot.lane.b32.xlu0 %v2066, 64
        %v2071 = vpop.permute.xlu0 %2070
        %2072 = vrot.lane.b32.xlu0 %v2066, 32
        %v2073 = vpop.permute.xlu0 %2072
        %v2076 = vpack.i.b16 %v2069, %v2066
        %v2077 = vshrl.u32 %v2066, 16
        %v2078 = vshrl.u32 %v2069, 16
        %v2079 = vpack.i.b16 %v2078, %v2077
        %v2082 = vpack.i.b16 %v2073, %v2071
        %v2083 = vshrl.u32 %v2071, 16
        %v2084 = vshrl.u32 %v2073, 16
        %v2085 = vpack.i.b16 %v2084, %v2083
        %v2088 = vunpack.c.l.s4 1983009808
        %v2089 = vunpack.c.0.s8 %v2088
        %v2090 = vperm.slane %v2076, %v2089
        %v2093 = vunpack.c.l.s4 1983009808
        %v2094 = vunpack.c.0.s8 %v2093
        %v2095 = vperm.slane %v2082, %v2094
        %v2096 = vrot.slane %v2095, 4
        %v2097 = vsel %vm1005, %v2096, %v2090
        %v2098 = vrot.slane %v2090, 4
        %v2099 = vsel %vm1005, %v2095, %v2098
        %v2101 = vunpack.c.l.s4 1934713408
        %v2102 = vunpack.c.0.s8 %v2101
        %v2103 = vperm.slane %v2097, %v2102
        %v2105 = vunpack.c.l.s4 1934713408
        %v2106 = vunpack.c.0.s8 %v2105
        %v2107 = vperm.slane %v2099, %v2106
        %v2108 = vrot.slane %v2103, 4
        %v2109 = vsel %vm1005, 0, %v2108
        %v2110 = vrot.slane %v2107, 4
        %v2111 = vsel %vm1005, 0, %v2110
        %v2114 = vunpack.c.l.s4 1983009808
        %v2115 = vunpack.c.0.s8 %v2114
        %v2116 = vperm.slane %v2079, %v2115
        %v2119 = vunpack.c.l.s4 1983009808
        %v2120 = vunpack.c.0.s8 %v2119
        %v2121 = vperm.slane %v2085, %v2120
        %v2122 = vrot.slane %v2121, 4
        %v2123 = vsel %vm1005, %v2122, %v2116
        %v2124 = vrot.slane %v2116, 4
        %v2125 = vsel %vm1005, %v2121, %v2124
        %v2127 = vunpack.c.l.s4 1934713408
        %v2128 = vunpack.c.0.s8 %v2127
        %v2129 = vperm.slane %v2123, %v2128
        %v2131 = vunpack.c.l.s4 1934713408
        %v2132 = vunpack.c.0.s8 %v2131
        %v2133 = vperm.slane %v2125, %v2132
        %v2134 = vrot.slane %v2129, 4
        %v2135 = vsel %vm1005, 0, %v2134
        %v2136 = vrot.slane %v2133, 4
        %v2137 = vsel %vm1005, 0, %v2136
        %v2138 = vsel %vm1005, %v2110, %v2103
        %v2140 = vunpack.c.l.s4 1983009808
        %v2141 = vunpack.c.0.s8 %v2140
        %v2142 = vperm.slane %v2138, %v2141
        %v2143 = vrot.slane %v2111, 4
        %v2144 = vsel %vm1005, %v2143, %v2109
        %v2146 = vunpack.c.l.s4 1983009808
        %v2147 = vunpack.c.0.s8 %v2146
        %v2148 = vperm.slane %v2144, %v2147
        %v2149 = vrot.slane %v2148, 4
        %v2150 = vsel %vm1005, %v2149, %v2142
        %v2152 = vunpack.c.l.s4 1934713408
        %v2153 = vunpack.c.0.s8 %v2152
        %v2154 = vperm.slane %v2150, %v2153
        %v2155 = vrot.slane %v2154, 4
        %v2156 = vsel %vm1005, 0, %v2155
        %v2157 = vsel %vm1005, %v2136, %v2129
        %v2159 = vunpack.c.l.s4 1983009808
        %v2160 = vunpack.c.0.s8 %v2159
        %v2161 = vperm.slane %v2157, %v2160
        %v2162 = vrot.slane %v2137, 4
        %v2163 = vsel %vm1005, %v2162, %v2135
        %v2165 = vunpack.c.l.s4 1983009808
        %v2166 = vunpack.c.0.s8 %v2165
        %v2167 = vperm.slane %v2163, %v2166
        %v2168 = vrot.slane %v2167, 4
        %v2169 = vsel %vm1005, %v2168, %v2161
        %v2171 = vunpack.c.l.s4 1934713408
        %v2172 = vunpack.c.0.s8 %v2171
        %v2173 = vperm.slane %v2169, %v2172
        %v2174 = vrot.slane %v2173, 4
        %v2175 = vsel %vm1005, 0, %v2174
        %v2178 = vpack.i.b16 %v2173, %v2154
        %v2179 = vshrl.u32 %v2154, 16
        %v2180 = vshrl.u32 %v2173, 16
        %v2181 = vpack.i.b16 %v2180, %v2179
        %v2184 = vpack.i.b16 %v2175, %v2156
        %v2185 = vshrl.u32 %v2156, 16
        %v2186 = vshrl.u32 %v2175, 16
        %v2187 = vpack.i.b16 %v2186, %v2185
        %2189 = vrot.lane.b32.xlu0 %v2065, 96
        %v2190 = vpop.permute.xlu0 %2189
        %2191 = vrot.lane.b32.xlu0 %v2065, 64
        %v2192 = vpop.permute.xlu0 %2191
        %2193 = vrot.lane.b32.xlu0 %v2065, 32
        %v2194 = vpop.permute.xlu0 %2193
        %v2197 = vpack.i.b16 %v2190, %v2065
        %v2198 = vshrl.u32 %v2065, 16
        %v2199 = vshrl.u32 %v2190, 16
        %v2200 = vpack.i.b16 %v2199, %v2198
        %v2203 = vpack.i.b16 %v2194, %v2192
        %v2204 = vshrl.u32 %v2192, 16
        %v2205 = vshrl.u32 %v2194, 16
        %v2206 = vpack.i.b16 %v2205, %v2204
        %v2209 = vunpack.c.l.s4 1983009808
        %v2210 = vunpack.c.0.s8 %v2209
        %v2211 = vperm.slane %v2197, %v2210
        %v2214 = vunpack.c.l.s4 1983009808
        %v2215 = vunpack.c.0.s8 %v2214
        %v2216 = vperm.slane %v2203, %v2215
        %v2217 = vrot.slane %v2216, 4
        %v2218 = vsel %vm1005, %v2217, %v2211
        %v2219 = vrot.slane %v2211, 4
        %v2220 = vsel %vm1005, %v2216, %v2219
        %v2222 = vunpack.c.l.s4 1934713408
        %v2223 = vunpack.c.0.s8 %v2222
        %v2224 = vperm.slane %v2218, %v2223
        %v2226 = vunpack.c.l.s4 1934713408
        %v2227 = vunpack.c.0.s8 %v2226
        %v2228 = vperm.slane %v2220, %v2227
        %v2229 = vrot.slane %v2224, 4
        %v2230 = vsel %vm1005, 0, %v2229
        %v2231 = vrot.slane %v2228, 4
        %v2232 = vsel %vm1005, 0, %v2231
        %v2235 = vunpack.c.l.s4 1983009808
        %v2236 = vunpack.c.0.s8 %v2235
        %v2237 = vperm.slane %v2200, %v2236
        %v2240 = vunpack.c.l.s4 1983009808
        %v2241 = vunpack.c.0.s8 %v2240
        %v2242 = vperm.slane %v2206, %v2241
        %v2243 = vrot.slane %v2242, 4
        %v2244 = vsel %vm1005, %v2243, %v2237
        %v2245 = vrot.slane %v2237, 4
        %v2246 = vsel %vm1005, %v2242, %v2245
        %v2248 = vunpack.c.l.s4 1934713408
        %v2249 = vunpack.c.0.s8 %v2248
        %v2250 = vperm.slane %v2244, %v2249
        %v2252 = vunpack.c.l.s4 1934713408
        %v2253 = vunpack.c.0.s8 %v2252
        %v2254 = vperm.slane %v2246, %v2253
        %v2255 = vrot.slane %v2250, 4
        %v2256 = vsel %vm1005, 0, %v2255
        %v2257 = vrot.slane %v2254, 4
        %v2258 = vsel %vm1005, 0, %v2257
        %v2259 = vsel %vm1005, %v2231, %v2224
        %v2261 = vunpack.c.l.s4 1983009808
        %v2262 = vunpack.c.0.s8 %v2261
        %v2263 = vperm.slane %v2259, %v2262
        %v2264 = vrot.slane %v2232, 4
        %v2265 = vsel %vm1005, %v2264, %v2230
        %v2267 = vunpack.c.l.s4 1983009808
        %v2268 = vunpack.c.0.s8 %v2267
        %v2269 = vperm.slane %v2265, %v2268
        %v2270 = vrot.slane %v2269, 4
        %v2271 = vsel %vm1005, %v2270, %v2263
        %v2273 = vunpack.c.l.s4 1934713408
        %v2274 = vunpack.c.0.s8 %v2273
        %v2275 = vperm.slane %v2271, %v2274
        %v2276 = vrot.slane %v2275, 4
        %v2277 = vsel %vm1005, 0, %v2276
        %v2278 = vsel %vm1005, %v2257, %v2250
        %v2280 = vunpack.c.l.s4 1983009808
        %v2281 = vunpack.c.0.s8 %v2280
        %v2282 = vperm.slane %v2278, %v2281
        %v2283 = vrot.slane %v2258, 4
        %v2284 = vsel %vm1005, %v2283, %v2256
        %v2286 = vunpack.c.l.s4 1983009808
        %v2287 = vunpack.c.0.s8 %v2286
        %v2288 = vperm.slane %v2284, %v2287
        %v2289 = vrot.slane %v2288, 4
        %v2290 = vsel %vm1005, %v2289, %v2282
        %v2292 = vunpack.c.l.s4 1934713408
        %v2293 = vunpack.c.0.s8 %v2292
        %v2294 = vperm.slane %v2290, %v2293
        %v2295 = vrot.slane %v2294, 4
        %v2296 = vsel %vm1005, 0, %v2295
        %v2299 = vpack.i.b16 %v2294, %v2275
        %v2300 = vshrl.u32 %v2275, 16
        %v2301 = vshrl.u32 %v2294, 16
        %v2302 = vpack.i.b16 %v2301, %v2300
        %v2305 = vpack.i.b16 %v2296, %v2277
        %v2306 = vshrl.u32 %v2277, 16
        %v2307 = vshrl.u32 %v2296, 16
        %v2308 = vpack.i.b16 %v2307, %v2306
        %v2309 = vrot.slane %v2065, 4
        %v2310 = vrot.slane %v2190, 4
        %v2311 = vrot.slane %v2192, 4
        %v2312 = vrot.slane %v2194, 4
        %v2315 = vpack.i.b16 %v2310, %v2309
        %v2316 = vshrl.u32 %v2309, 16
        %v2317 = vshrl.u32 %v2310, 16
        %v2318 = vpack.i.b16 %v2317, %v2316
        %v2321 = vpack.i.b16 %v2312, %v2311
        %v2322 = vshrl.u32 %v2311, 16
        %v2323 = vshrl.u32 %v2312, 16
        %v2324 = vpack.i.b16 %v2323, %v2322
        %v2327 = vunpack.c.l.s4 1983009808
        %v2328 = vunpack.c.0.s8 %v2327
        %v2329 = vperm.slane %v2315, %v2328
        %v2332 = vunpack.c.l.s4 1983009808
        %v2333 = vunpack.c.0.s8 %v2332
        %v2334 = vperm.slane %v2321, %v2333
        %v2335 = vrot.slane %v2334, 4
        %v2336 = vsel %vm1005, %v2335, %v2329
        %v2337 = vrot.slane %v2329, 4
        %v2338 = vsel %vm1005, %v2334, %v2337
        %v2340 = vunpack.c.l.s4 1934713408
        %v2341 = vunpack.c.0.s8 %v2340
        %v2342 = vperm.slane %v2336, %v2341
        %v2344 = vunpack.c.l.s4 1934713408
        %v2345 = vunpack.c.0.s8 %v2344
        %v2346 = vperm.slane %v2338, %v2345
        %v2347 = vrot.slane %v2342, 4
        %v2348 = vsel %vm1005, 0, %v2347
        %v2349 = vrot.slane %v2346, 4
        %v2350 = vsel %vm1005, 0, %v2349
        %v2353 = vunpack.c.l.s4 1983009808
        %v2354 = vunpack.c.0.s8 %v2353
        %v2355 = vperm.slane %v2318, %v2354
        %v2358 = vunpack.c.l.s4 1983009808
        %v2359 = vunpack.c.0.s8 %v2358
        %v2360 = vperm.slane %v2324, %v2359
        %v2361 = vrot.slane %v2360, 4
        %v2362 = vsel %vm1005, %v2361, %v2355
        %v2363 = vrot.slane %v2355, 4
        %v2364 = vsel %vm1005, %v2360, %v2363
        %v2366 = vunpack.c.l.s4 1934713408
        %v2367 = vunpack.c.0.s8 %v2366
        %v2368 = vperm.slane %v2362, %v2367
        %v2370 = vunpack.c.l.s4 1934713408
        %v2371 = vunpack.c.0.s8 %v2370
        %v2372 = vperm.slane %v2364, %v2371
        %v2373 = vrot.slane %v2368, 4
        %v2374 = vsel %vm1005, 0, %v2373
        %v2375 = vrot.slane %v2372, 4
        %v2376 = vsel %vm1005, 0, %v2375
        %v2377 = vsel %vm1005, %v2349, %v2342
        %v2379 = vunpack.c.l.s4 1983009808
        %v2380 = vunpack.c.0.s8 %v2379
        %v2381 = vperm.slane %v2377, %v2380
        %v2382 = vrot.slane %v2350, 4
        %v2383 = vsel %vm1005, %v2382, %v2348
        %v2385 = vunpack.c.l.s4 1983009808
        %v2386 = vunpack.c.0.s8 %v2385
        %v2387 = vperm.slane %v2383, %v2386
        %v2388 = vrot.slane %v2387, 4
        %v2389 = vsel %vm1005, %v2388, %v2381
        %v2391 = vunpack.c.l.s4 1934713408
        %v2392 = vunpack.c.0.s8 %v2391
        %v2393 = vperm.slane %v2389, %v2392
        %v2394 = vrot.slane %v2393, 4
        %v2395 = vsel %vm1005, 0, %v2394
        %v2396 = vsel %vm1005, %v2375, %v2368
        %v2398 = vunpack.c.l.s4 1983009808
        %v2399 = vunpack.c.0.s8 %v2398
        %v2400 = vperm.slane %v2396, %v2399
        %v2401 = vrot.slane %v2376, 4
        %v2402 = vsel %vm1005, %v2401, %v2374
        %v2404 = vunpack.c.l.s4 1983009808
        %v2405 = vunpack.c.0.s8 %v2404
        %v2406 = vperm.slane %v2402, %v2405
        %v2407 = vrot.slane %v2406, 4
        %v2408 = vsel %vm1005, %v2407, %v2400
        %v2410 = vunpack.c.l.s4 1934713408
        %v2411 = vunpack.c.0.s8 %v2410
        %v2412 = vperm.slane %v2408, %v2411
        %v2413 = vrot.slane %v2412, 4
        %v2414 = vsel %vm1005, 0, %v2413
        %v2417 = vpack.i.b16 %v2412, %v2393
        %v2418 = vshrl.u32 %v2393, 16
        %v2419 = vshrl.u32 %v2412, 16
        %v2420 = vpack.i.b16 %v2419, %v2418
        %v2423 = vpack.i.b16 %v2414, %v2395
        %v2424 = vshrl.u32 %v2395, 16
        %v2425 = vshrl.u32 %v2414, 16
        %v2426 = vpack.i.b16 %v2425, %v2424
        %v2428 = vsel %vm1336, %v2178, 0
        %v2431 = vsel %vm1336, %v2299, 0
        %2433 = vmatpush.bf16.xpose.msra.mxu0 0
        %2434 = vmatpush.bf16.xpose.msra.mxu0 0
        %2435 = vmatpush.bf16.xpose.msra.mxu0 0
        %2436 = vmatpush.bf16.xpose.msra.mxu0 0
        %2437 = vmatpush.bf16.xpose.msra.mxu0 0
        %2438 = vmatpush.bf16.xpose.msra.mxu0 0
        %2439 = vmatpush.bf16.xpose.msra.mxu0 0
        %2440 = vmatpush.bf16.xpose.msra.mxu0 %v2431
        %2441 = vmatmul.bf16.gmra.mxu0 %v2428
        %v2442 = vpop.f32.mrf.mxu0
        %v2443 = vadd.f32 0.0, %v2442
        %v2444 = vpop.f32.mrf.mxu0
        %2445 = vdwg.mxu0
        %v2447 = vsel %vm1336, %v2181, 0
        %v2450 = vsel %vm1336, %v2302, 0
        %2452 = vmatpush.bf16.xpose.msra.mxu0 0
        %2453 = vmatpush.bf16.xpose.msra.mxu0 0
        %2454 = vmatpush.bf16.xpose.msra.mxu0 0
        %2455 = vmatpush.bf16.xpose.msra.mxu0 0
        %2456 = vmatpush.bf16.xpose.msra.mxu0 0
        %2457 = vmatpush.bf16.xpose.msra.mxu0 0
        %2458 = vmatpush.bf16.xpose.msra.mxu0 0
        %2459 = vmatpush.bf16.xpose.msra.mxu0 %v2450
        %2460 = vmatmul.bf16.gmra.mxu0 %v2447
        %v2461 = vpop.f32.mrf.mxu0
        %v2462 = vadd.f32 0.0, %v2461
        %v2463 = vpop.f32.mrf.mxu0
        %2464 = vdwg.mxu0
        %v2466 = vsel %vm1336, %v2184, 0
        %v2469 = vsel %vm1336, %v2305, 0
        %2471 = vmatpush.bf16.xpose.msra.mxu0 0
        %2472 = vmatpush.bf16.xpose.msra.mxu0 0
        %2473 = vmatpush.bf16.xpose.msra.mxu0 0
        %2474 = vmatpush.bf16.xpose.msra.mxu0 0
        %2475 = vmatpush.bf16.xpose.msra.mxu0 0
        %2476 = vmatpush.bf16.xpose.msra.mxu0 0
        %2477 = vmatpush.bf16.xpose.msra.mxu0 0
        %2478 = vmatpush.bf16.xpose.msra.mxu0 %v2469
        %2479 = vmatmul.bf16.gmra.mxu0 %v2466
        %v2480 = vpop.f32.mrf.mxu0
        %v2481 = vadd.f32 0.0, %v2480
        %v2482 = vpop.f32.mrf.mxu0
        %2483 = vdwg.mxu0
        %v2485 = vsel %vm1336, %v2187, 0
        %v2488 = vsel %vm1336, %v2308, 0
        %2490 = vmatpush.bf16.xpose.msra.mxu0 0
        %2491 = vmatpush.bf16.xpose.msra.mxu0 0
        %2492 = vmatpush.bf16.xpose.msra.mxu0 0
        %2493 = vmatpush.bf16.xpose.msra.mxu0 0
        %2494 = vmatpush.bf16.xpose.msra.mxu0 0
        %2495 = vmatpush.bf16.xpose.msra.mxu0 0
        %2496 = vmatpush.bf16.xpose.msra.mxu0 0
        %2497 = vmatpush.bf16.xpose.msra.mxu0 %v2488
        %2498 = vmatmul.bf16.gmra.mxu0 %v2485
        %v2499 = vpop.f32.mrf.mxu0
        %v2500 = vadd.f32 0.0, %v2499
        %v2501 = vpop.f32.mrf.mxu0
        %2502 = vdwg.mxu0
        %v2503 = vmul.f32 %v2443, 0.17677669
        %v2504 = vmul.f32 %v2462, 0.17677669
        %v2505 = vmul.f32 %v2481, 0.17677669
        %v2506 = vmul.f32 %v2500, 0.17677669
        %v2507 = vsel %vm1428, %v2503, -inf
        %2508 = vmax.xlane.f32.xlu0 %v2507
        %v2509 = vpop.xlane.xlu0 %2508
        %v2510 = vsel %vm1428, %v2504, -inf
        %2511 = vmax.xlane.f32.xlu0 %v2510
        %v2512 = vpop.xlane.xlu0 %2511
        %v2513 = vsel %vm1428, %v2505, -inf
        %2514 = vmax.xlane.f32.xlu0 %v2513
        %v2515 = vpop.xlane.xlu0 %2514
        %v2516 = vsel %vm1428, %v2506, -inf
        %2517 = vmax.xlane.f32.xlu0 %v2516
        %v2518 = vpop.xlane.xlu0 %2517
        %v2519 = vsub.f32 %v2503, %v2509
        %v2520 = vsub.f32 %v2504, %v2512
        %v2521 = vsub.f32 %v2505, %v2515
        %v2522 = vsub.f32 %v2506, %v2518
        %v2523 = vmul.f32 %v2519, 1.442695
        %v2524 = vpow.pop %v2523
        %v2525 = vmul.f32 %v2520, 1.442695
        %v2526 = vpow.pop %v2525
        %v2527 = vmul.f32 %v2521, 1.442695
        %v2528 = vpow.pop %v2527
        %v2529 = vmul.f32 %v2522, 1.442695
        %v2530 = vpow.pop %v2529
        %v2531 = vsel %vm1428, %v2524, 0.0
        %2532 = vadd.xlane.f32.xlu0 %v2531
        %v2533 = vpop.xlane.xlu0 %2532
        %v2534 = vsel %vm1428, %v2526, 0.0
        %2535 = vadd.xlane.f32.xlu0 %v2534
        %v2536 = vpop.xlane.xlu0 %2535
        %v2537 = vsel %vm1428, %v2528, 0.0
        %2538 = vadd.xlane.f32.xlu0 %v2537
        %v2539 = vpop.xlane.xlu0 %2538
        %v2540 = vsel %vm1428, %v2530, 0.0
        %2541 = vadd.xlane.f32.xlu0 %v2540
        %v2542 = vpop.xlane.xlu0 %2541
        %v2543 = vrcp.pop %v2533
        %v2544 = vmul.f32 %v2533, %v2543
        %v2545 = vsub.f32 1.0, %v2544
        %v2546 = vmul.f32 %v2543, %v2545
        %v2547 = vadd.f32 %v2543, %v2546
        %vm2548 = vweird.f32 %v2533
        %vm2549 = vweird.f32 %v2543
        %vm2550 = vmor %vm2548, %vm2549
        %v2551 = vsel %vm2550, %v2543, %v2547
        %v2552 = vand.u32 2147483647, %v2533
        %vm2553 = vcmp.eq.f32.partialorder %v2552, 8.507059e+37
        %v2554 = vand.u32 %v2533, 2147483648
        %v2555 = vor.u32 1.1754944e-38, %v2554
        %v2556 = vsel %vm2553, %v2555, %v2551
        %v2557 = vmul.f32 %v2524, %v2556
        %v2558 = vrcp.pop %v2536
        %v2559 = vmul.f32 %v2536, %v2558
        %v2560 = vsub.f32 1.0, %v2559
        %v2561 = vmul.f32 %v2558, %v2560
        %v2562 = vadd.f32 %v2558, %v2561
        %vm2563 = vweird.f32 %v2536
        %vm2564 = vweird.f32 %v2558
        %vm2565 = vmor %vm2563, %vm2564
        %v2566 = vsel %vm2565, %v2558, %v2562
        %v2567 = vand.u32 2147483647, %v2536
        %vm2568 = vcmp.eq.f32.partialorder %v2567, 8.507059e+37
        %v2569 = vand.u32 %v2536, 2147483648
        %v2570 = vor.u32 1.1754944e-38, %v2569
        %v2571 = vsel %vm2568, %v2570, %v2566
        %v2572 = vmul.f32 %v2526, %v2571
        %v2573 = vrcp.pop %v2539
        %v2574 = vmul.f32 %v2539, %v2573
        %v2575 = vsub.f32 1.0, %v2574
        %v2576 = vmul.f32 %v2573, %v2575
        %v2577 = vadd.f32 %v2573, %v2576
        %vm2578 = vweird.f32 %v2539
        %vm2579 = vweird.f32 %v2573
        %vm2580 = vmor %vm2578, %vm2579
        %v2581 = vsel %vm2580, %v2573, %v2577
        %v2582 = vand.u32 2147483647, %v2539
        %vm2583 = vcmp.eq.f32.partialorder %v2582, 8.507059e+37
        %v2584 = vand.u32 %v2539, 2147483648
        %v2585 = vor.u32 1.1754944e-38, %v2584
        %v2586 = vsel %vm2583, %v2585, %v2581
        %v2587 = vmul.f32 %v2528, %v2586
        %v2588 = vrcp.pop %v2542
        %v2589 = vmul.f32 %v2542, %v2588
        %v2590 = vsub.f32 1.0, %v2589
        %v2591 = vmul.f32 %v2588, %v2590
        %v2592 = vadd.f32 %v2588, %v2591
        %vm2593 = vweird.f32 %v2542
        %vm2594 = vweird.f32 %v2588
        %vm2595 = vmor %vm2593, %vm2594
        %v2596 = vsel %vm2595, %v2588, %v2592
        %v2597 = vand.u32 2147483647, %v2542
        %vm2598 = vcmp.eq.f32.partialorder %v2597, 8.507059e+37
        %v2599 = vand.u32 %v2542, 2147483648
        %v2600 = vor.u32 1.1754944e-38, %v2599
        %v2601 = vsel %vm2598, %v2600, %v2596
        %v2602 = vmul.f32 %v2530, %v2601
        %v2603 = vpack.c.bf16 %v2557, %v2557
        %v2604 = vpack.c.bf16 %v2572, %v2572
        %v2605 = vpack.c.bf16 %v2587, %v2587
        %v2606 = vpack.c.bf16 %v2602, %v2602
        %v2608 = vsel %vm1428, %v2603, 0
        %v2611 = vsel %vm1532, %v2417, 0
        %2613 = vmatpush.bf16.msra.mxu0 0
        %2614 = vmatpush.bf16.msra.mxu0 0
        %2615 = vmatpush.bf16.msra.mxu0 0
        %2616 = vmatpush.bf16.msra.mxu0 0
        %2617 = vmatpush.bf16.msra.mxu0 0
        %2618 = vmatpush.bf16.msra.mxu0 0
        %2619 = vmatpush.bf16.msra.mxu0 0
        %2620 = vmatpush.bf16.msra.mxu0 %v2611
        %2621 = vmatmul.bf16.gmra.mxu0 %v2608
        %v2622 = vpop.f32.mrf.mxu0
        %v2623 = vadd.f32 0.0, %v2622
        %v2624 = vpop.f32.mrf.mxu0
        %2625 = vdwg.mxu0
        %v2627 = vsel %vm1428, %v2604, 0
        %v2630 = vsel %vm1532, %v2420, 0
        %2632 = vmatpush.bf16.msra.mxu0 0
        %2633 = vmatpush.bf16.msra.mxu0 0
        %2634 = vmatpush.bf16.msra.mxu0 0
        %2635 = vmatpush.bf16.msra.mxu0 0
        %2636 = vmatpush.bf16.msra.mxu0 0
        %2637 = vmatpush.bf16.msra.mxu0 0
        %2638 = vmatpush.bf16.msra.mxu0 0
        %2639 = vmatpush.bf16.msra.mxu0 %v2630
        %2640 = vmatmul.bf16.gmra.mxu0 %v2627
        %v2641 = vpop.f32.mrf.mxu0
        %v2642 = vadd.f32 0.0, %v2641
        %v2643 = vpop.f32.mrf.mxu0
        %2644 = vdwg.mxu0
        %v2646 = vsel %vm1428, %v2605, 0
        %v2649 = vsel %vm1532, %v2423, 0
        %2651 = vmatpush.bf16.msra.mxu0 0
        %2652 = vmatpush.bf16.msra.mxu0 0
        %2653 = vmatpush.bf16.msra.mxu0 0
        %2654 = vmatpush.bf16.msra.mxu0 0
        %2655 = vmatpush.bf16.msra.mxu0 0
        %2656 = vmatpush.bf16.msra.mxu0 0
        %2657 = vmatpush.bf16.msra.mxu0 0
        %2658 = vmatpush.bf16.msra.mxu0 %v2649
        %2659 = vmatmul.bf16.gmra.mxu0 %v2646
        %v2660 = vpop.f32.mrf.mxu0
        %v2661 = vadd.f32 0.0, %v2660
        %v2662 = vpop.f32.mrf.mxu0
        %2663 = vdwg.mxu0
        %v2665 = vsel %vm1428, %v2606, 0
        %v2668 = vsel %vm1532, %v2426, 0
        %2670 = vmatpush.bf16.msra.mxu0 0
        %2671 = vmatpush.bf16.msra.mxu0 0
        %2672 = vmatpush.bf16.msra.mxu0 0
        %2673 = vmatpush.bf16.msra.mxu0 0
        %2674 = vmatpush.bf16.msra.mxu0 0
        %2675 = vmatpush.bf16.msra.mxu0 0
        %2676 = vmatpush.bf16.msra.mxu0 0
        %2677 = vmatpush.bf16.msra.mxu0 %v2668
        %2678 = vmatmul.bf16.gmra.mxu0 %v2665
        %v2679 = vpop.f32.mrf.mxu0
        %v2680 = vadd.f32 0.0, %v2679
        %v2681 = vpop.f32.mrf.mxu0
        %2682 = vdwg.mxu0
        %v2683 = vrot.slane %v2661, 4
        %v2684 = vsel %vm1607, %v2683, %v2623
        %v2685 = vrot.slane %v2623, 4
        %v2686 = vsel %vm1607, %v2661, %v2685
        %v2688 = vunpack.c.l.s4 1983009808
        %v2689 = vunpack.c.0.s8 %v2688
        %v2690 = vperm.slane %v2684, %v2689
        %v2692 = vunpack.c.l.s4 1983009808
        %v2693 = vunpack.c.0.s8 %v2692
        %v2694 = vperm.slane %v2686, %v2693
        %v2695 = vrot.slane %v2680, 4
        %v2696 = vsel %vm1607, %v2695, %v2642
        %v2697 = vrot.slane %v2642, 4
        %v2698 = vsel %vm1607, %v2680, %v2697
        %v2700 = vunpack.c.l.s4 1983009808
        %v2701 = vunpack.c.0.s8 %v2700
        %v2702 = vperm.slane %v2696, %v2701
        %v2704 = vunpack.c.l.s4 1983009808
        %v2705 = vunpack.c.0.s8 %v2704
        %v2706 = vperm.slane %v2698, %v2705
        %v2707 = vrot.slane %v2702, 4
        %v2708 = vsel %vm1607, %v2707, %v2690
        %v2709 = vrot.slane %v2690, 4
        %v2710 = vsel %vm1607, %v2702, %v2709
        %v2712 = vunpack.c.l.s4 1934713408
        %v2713 = vunpack.c.0.s8 %v2712
        %v2714 = vperm.slane %v2708, %v2713
        %v2716 = vunpack.c.l.s4 1934713408
        %v2717 = vunpack.c.0.s8 %v2716
        %v2718 = vperm.slane %v2710, %v2717
        %v2719 = vrot.slane %v2706, 4
        %v2720 = vsel %vm1607, %v2719, %v2694
        %v2721 = vrot.slane %v2694, 4
        %v2722 = vsel %vm1607, %v2706, %v2721
        %v2724 = vunpack.c.l.s4 1934713408
        %v2725 = vunpack.c.0.s8 %v2724
        %v2726 = vperm.slane %v2720, %v2725
        %v2728 = vunpack.c.l.s4 1934713408
        %v2729 = vunpack.c.0.s8 %v2728
        %v2730 = vperm.slane %v2722, %v2729
        %v2731 = vrot.slane %v2714, 4
        %v2732 = vsel %vm1607, 0.0, %v2731
        %v2733 = vrot.slane %v2718, 4
        %v2734 = vsel %vm1607, 0.0, %v2733
        %v2735 = vrot.slane %v2726, 4
        %v2736 = vsel %vm1607, 0.0, %v2735
        %v2737 = vrot.slane %v2730, 4
        %v2738 = vsel %vm1607, 0.0, %v2737
        %v2739 = vsel %vm1607, %v2733, %v2714
        %v2741 = vunpack.c.l.s4 1983009808
        %v2742 = vunpack.c.0.s8 %v2741
        %v2743 = vperm.slane %v2739, %v2742
        %v2744 = vrot.slane %v2734, 4
        %v2745 = vsel %vm1607, %v2744, %v2732
        %v2747 = vunpack.c.l.s4 1983009808
        %v2748 = vunpack.c.0.s8 %v2747
        %v2749 = vperm.slane %v2745, %v2748
        %v2750 = vsel %vm1607, %v2737, %v2726
        %v2752 = vunpack.c.l.s4 1983009808
        %v2753 = vunpack.c.0.s8 %v2752
        %v2754 = vperm.slane %v2750, %v2753
        %v2755 = vrot.slane %v2738, 4
        %v2756 = vsel %vm1607, %v2755, %v2736
        %v2758 = vunpack.c.l.s4 1983009808
        %v2759 = vunpack.c.0.s8 %v2758
        %v2760 = vperm.slane %v2756, %v2759
        %v2761 = vrot.slane %v2749, 4
        %v2762 = vsel %vm1607, %v2761, %v2743
        %v2763 = vrot.slane %v2743, 4
        %v2764 = vsel %vm1607, %v2749, %v2763
        %v2766 = vunpack.c.l.s4 1934713408
        %v2767 = vunpack.c.0.s8 %v2766
        %v2768 = vperm.slane %v2762, %v2767
        %v2770 = vunpack.c.l.s4 1934713408
        %v2771 = vunpack.c.0.s8 %v2770
        %v2772 = vperm.slane %v2764, %v2771
        %v2773 = vrot.slane %v2760, 4
        %v2774 = vsel %vm1607, %v2773, %v2754
        %v2775 = vrot.slane %v2754, 4
        %v2776 = vsel %vm1607, %v2760, %v2775
        %v2778 = vunpack.c.l.s4 1934713408
        %v2779 = vunpack.c.0.s8 %v2778
        %v2780 = vperm.slane %v2774, %v2779
        %v2782 = vunpack.c.l.s4 1934713408
        %v2783 = vunpack.c.0.s8 %v2782
        %v2784 = vperm.slane %v2776, %v2783
        %v2785 = vrot.slane %v2780, 4
        %v2786 = vsel %vm1607, %v2785, %v2768
        %v2787 = vrot.slane %v2768, 4
        %v2788 = vsel %vm1607, %v2780, %v2787
        %v2789 = vrot.slane %v2784, 4
        %v2790 = vsel %vm1607, %v2789, %v2772
        %v2791 = vrot.slane %v2772, 4
        %v2792 = vsel %vm1607, %v2784, %v2791
        %2794 = vrot.lane.b32.xlu0 %v2788, 32
        %v2795 = vpop.permute.xlu0 %2794
        %2798 = vrot.lane.b32.xlu0 %v2790, 64
        %v2799 = vpop.permute.xlu0 %2798
        %2802 = vrot.lane.b32.xlu0 %v2792, 96
        %v2803 = vpop.permute.xlu0 %2802
        %v2805 = vsel %vm1336, %v2786, %v2795
        %v2806 = vsel %vm1730, %v2805, %v2799
        %v2807 = vsel %vm1732, %v2806, %v2803
        %v2808 = vpack.c.bf16 %v2807, %v2807
        %v2809 = vld [vmem:[#allocation4] sm:$0xf]
        %v2810 = vld [vmem:[#allocation4 + $0x4] sm:$0xf]
        %v2811 = vld [vmem:[#allocation4 + $0x8] sm:$0xf]
        %v2812 = vld [vmem:[#allocation4 + $0xc] sm:$0xf]
        %v2813 = vld [vmem:[#allocation4 + $0x10] sm:$0xf]
        %v2814 = vld [vmem:[#allocation4 + $0x14] sm:$0xf]
        %v2815 = vld [vmem:[#allocation4 + $0x18] sm:$0xf]
        %v2816 = vld [vmem:[#allocation4 + $0x1c] sm:$0xf]
        %v2817 = vld [vmem:[#allocation4 + $0x20] sm:$0xf]
        %v2818 = vld [vmem:[#allocation4 + $0x24] sm:$0xf]
        %v2819 = vld [vmem:[#allocation4 + $0x28] sm:$0xf]
        %v2820 = vld [vmem:[#allocation4 + $0x2c] sm:$0xf]
        %v2821 = vld [vmem:[#allocation4 + $0x30] sm:$0xf]
        %v2822 = vld [vmem:[#allocation4 + $0x34] sm:$0xf]
        %v2823 = vld [vmem:[#allocation4 + $0x38] sm:$0xf]
        %v2824 = vld [vmem:[#allocation4 + $0x3c] sm:$0xf]
        %v2825 = vld [vmem:[%s13] sm:$0x1]
        %v2827 = vperm.slane %v2825, 0
        %v2845 = vunpack.c.l.b16 %v2809
        %v2846 = vunpack.c.l.b16 %v2810
        %v2847 = vunpack.c.l.b16 %v2811
        %v2848 = vunpack.c.l.b16 %v2812
        %v2849 = vunpack.c.l.b16 %v2813
        %v2850 = vunpack.c.l.b16 %v2814
        %v2851 = vunpack.c.l.b16 %v2815
        %v2852 = vunpack.c.l.b16 %v2816
        %v2853 = vunpack.c.l.b16 %v2817
        %v2854 = vunpack.c.l.b16 %v2818
        %v2855 = vunpack.c.l.b16 %v2819
        %v2856 = vunpack.c.l.b16 %v2820
        %v2857 = vunpack.c.l.b16 %v2821
        %v2858 = vunpack.c.l.b16 %v2822
        %v2859 = vunpack.c.l.b16 %v2823
        %v2860 = vunpack.c.l.b16 %v2824
        %v2861 = vpack.c.b16 %v2846, %v2845
        %v2862 = vpack.c.b16 %v2848, %v2847
        %v2863 = vpack.c.b16 %v2850, %v2849
        %v2864 = vpack.c.b16 %v2852, %v2851
        %v2865 = vpack.c.b16 %v2854, %v2853
        %v2866 = vpack.c.b16 %v2856, %v2855
        %v2867 = vpack.c.b16 %v2858, %v2857
        %v2868 = vpack.c.b16 %v2860, %v2859
        %2877 = vmatpush.bf16.msra.mxu0 %v2868
        %2878 = vmatpush.bf16.msra.mxu0 %v2867
        %2879 = vmatpush.bf16.msra.mxu0 %v2866
        %2880 = vmatpush.bf16.msra.mxu0 %v2865
        %2881 = vmatpush.bf16.msra.mxu0 %v2864
        %2882 = vmatpush.bf16.msra.mxu0 %v2863
        %2883 = vmatpush.bf16.msra.mxu0 %v2862
        %2884 = vmatpush.bf16.msra.mxu0 %v2861
        %2885 = vmatmul.bf16.gmra.mxu0 %v2808
        %v2886 = vpop.f32.mrf.mxu0
        %v2887 = vadd.f32 %v2827, %v2886
        %v2888 = vpop.f32.mrf.mxu0
        %2889 = vdwg.mxu0
        %v2890 = vadd.f32 %v2887, %v1854
        %v2891 = vld [vmem:[%s14] sm:$0x1]
        %v2892 = vld [vmem:[%s15] sm:$0x1]
        %2893 = vadd.xlane.f32.xlu0 %v2890
        %v2894 = vpop.xlane.xlu0 %2893
        %v2895 = vmul.f32 %v2894, %v1828
        %v2896 = vsub.f32 %v2890, %v2895
        %v2897 = vmul.f32 %v2896, %v2896
        %2898 = vadd.xlane.f32.xlu0 %v2897
        %v2899 = vpop.xlane.xlu0 %2898
        %v2900 = vmul.f32 %v2899, %v1828
        %v2901 = vadd.f32 %v2900, 1e-05
        %v2902 = vrsqrt.pop %v2901
        %v2903 = vmul.f32 %v2902, %v2901
        %v2904 = vmul.f32 %v2903, %v2902
        %v2905 = vmul.f32 0.5, %v2904
        %v2906 = vsub.f32 1.5, %v2905
        %v2907 = vmul.f32 %v2902, %v2906
        %vm2908 = vweird.f32 %v2901
        %vm2909 = vweird.f32 %v2902
        %vm2910 = vmor %vm2908, %vm2909
        %v2911 = vsel %vm2910, %v2902, %v2907
        %v2912 = vmul.f32 %v2896, %v2911
        %v2914 = vperm.slane %v2891, 0
        %v2916 = vmul.f32 %v2912, %v2914
        %v2918 = vperm.slane %v2892, 0
        %v2920 = vadd.f32 %v2916, %v2918
        %v2921 = vpack.c.bf16 %v2920, %v2920
        %v2922 = vld [vmem:[#allocation6] sm:$0xff]
        %v2923 = vld [vmem:[#allocation6 + $0x8] sm:$0xff]
        %v2924 = vld [vmem:[#allocation6 + $0x10] sm:$0xff]
        %v2925 = vld [vmem:[#allocation6 + $0x18] sm:$0xff]
        %v2926 = vld [vmem:[#allocation6 + $0x20] sm:$0xff]
        %v2927 = vld [vmem:[#allocation6 + $0x28] sm:$0xff]
        %v2928 = vld [vmem:[#allocation6 + $0x30] sm:$0xff]
        %v2929 = vld [vmem:[#allocation6 + $0x38] sm:$0xff]
        %v2930 = vld [vmem:[#allocation6 + $0x40] sm:$0xff]
        %v2931 = vld [vmem:[#allocation6 + $0x48] sm:$0xff]
        %v2932 = vld [vmem:[#allocation6 + $0x50] sm:$0xff]
        %v2933 = vld [vmem:[#allocation6 + $0x58] sm:$0xff]
        %v2934 = vld [vmem:[#allocation6 + $0x60] sm:$0xff]
        %v2935 = vld [vmem:[#allocation6 + $0x68] sm:$0xff]
        %v2936 = vld [vmem:[#allocation6 + $0x70] sm:$0xff]
        %v2937 = vld [vmem:[#allocation6 + $0x78] sm:$0xff]
        %v2938 = vld [vmem:[%s17] sm:$0x3]
        %v2940 = vperm.slane %v2938, 0
        %v2941 = vperm.slane %v2938, 1
        %v2960 = vunpack.c.l.b16 %v2922
        %v2961 = vunpack.c.h.b16 %v2922
        %v2962 = vunpack.c.l.b16 %v2923
        %v2963 = vunpack.c.h.b16 %v2923
        %v2964 = vunpack.c.l.b16 %v2924
        %v2965 = vunpack.c.h.b16 %v2924
        %v2966 = vunpack.c.l.b16 %v2925
        %v2967 = vunpack.c.h.b16 %v2925
        %v2968 = vunpack.c.l.b16 %v2926
        %v2969 = vunpack.c.h.b16 %v2926
        %v2970 = vunpack.c.l.b16 %v2927
        %v2971 = vunpack.c.h.b16 %v2927
        %v2972 = vunpack.c.l.b16 %v2928
        %v2973 = vunpack.c.h.b16 %v2928
        %v2974 = vunpack.c.l.b16 %v2929
        %v2975 = vunpack.c.h.b16 %v2929
        %v2976 = vunpack.c.l.b16 %v2930
        %v2977 = vunpack.c.h.b16 %v2930
        %v2978 = vunpack.c.l.b16 %v2931
        %v2979 = vunpack.c.h.b16 %v2931
        %v2980 = vunpack.c.l.b16 %v2932
        %v2981 = vunpack.c.h.b16 %v2932
        %v2982 = vunpack.c.l.b16 %v2933
        %v2983 = vunpack.c.h.b16 %v2933
        %v2984 = vunpack.c.l.b16 %v2934
        %v2985 = vunpack.c.h.b16 %v2934
        %v2986 = vunpack.c.l.b16 %v2935
        %v2987 = vunpack.c.h.b16 %v2935
        %v2988 = vunpack.c.l.b16 %v2936
        %v2989 = vunpack.c.h.b16 %v2936
        %v2990 = vunpack.c.l.b16 %v2937
        %v2991 = vunpack.c.h.b16 %v2937
        %v2992 = vpack.c.b16 %v2962, %v2960
        %v2993 = vpack.c.b16 %v2963, %v2961
        %v2994 = vpack.c.b16 %v2966, %v2964
        %v2995 = vpack.c.b16 %v2967, %v2965
        %v2996 = vpack.c.b16 %v2970, %v2968
        %v2997 = vpack.c.b16 %v2971, %v2969
        %v2998 = vpack.c.b16 %v2974, %v2972
        %v2999 = vpack.c.b16 %v2975, %v2973
        %v3000 = vpack.c.b16 %v2978, %v2976
        %v3001 = vpack.c.b16 %v2979, %v2977
        %v3002 = vpack.c.b16 %v2982, %v2980
        %v3003 = vpack.c.b16 %v2983, %v2981
        %v3004 = vpack.c.b16 %v2986, %v2984
        %v3005 = vpack.c.b16 %v2987, %v2985
        %v3006 = vpack.c.b16 %v2990, %v2988
        %v3007 = vpack.c.b16 %v2991, %v2989
        %3024 = vmatpush.bf16.msra.mxu0 %v3006
        %3025 = vmatpush.bf16.msra.mxu0 %v3004
        %3026 = vmatpush.bf16.msra.mxu0 %v3002
        %3027 = vmatpush.bf16.msra.mxu0 %v3000
        %3028 = vmatpush.bf16.msra.mxu0 %v2998
        %3029 = vmatpush.bf16.msra.mxu0 %v2996
        %3030 = vmatpush.bf16.msra.mxu0 %v2994
        %3031 = vmatpush.bf16.msra.mxu0 %v2992
        %3032 = vmatmul.bf16.gmra.mxu0 %v2921
        %v3033 = vpop.f32.mrf.mxu0
        %v3034 = vadd.f32 %v2940, %v3033
        %v3035 = vpop.f32.mrf.mxu0
        %3036 = vdwg.mxu0
        %3037 = vmatpush.bf16.msra.mxu0 %v3007
        %3038 = vmatpush.bf16.msra.mxu0 %v3005
        %3039 = vmatpush.bf16.msra.mxu0 %v3003
        %3040 = vmatpush.bf16.msra.mxu0 %v3001
        %3041 = vmatpush.bf16.msra.mxu0 %v2999
        %3042 = vmatpush.bf16.msra.mxu0 %v2997
        %3043 = vmatpush.bf16.msra.mxu0 %v2995
        %3044 = vmatpush.bf16.msra.mxu0 %v2993
        %3045 = vmatmul.bf16.gmra.mxu0 %v2921
        %v3046 = vpop.f32.mrf.mxu0
        %v3047 = vadd.f32 %v2941, %v3046
        %v3048 = vpop.f32.mrf.mxu0
        %3049 = vdwg.mxu0
        %v3050 = vmax.f32 %v3034, 0.0
        %v3051 = vmax.f32 %v3047, 0.0
        %v3052 = vpack.c.bf16 %v3050, %v3050
        %v3053 = vpack.c.bf16 %v3051, %v3051
        %v3054 = vld [vmem:[#allocation7] sm:$0xf]
        %v3055 = vld [vmem:[#allocation7 + $0x4] sm:$0xf]
        %v3056 = vld [vmem:[#allocation7 + $0x8] sm:$0xf]
        %v3057 = vld [vmem:[#allocation7 + $0xc] sm:$0xf]
        %v3058 = vld [vmem:[#allocation7 + $0x10] sm:$0xf]
        %v3059 = vld [vmem:[#allocation7 + $0x14] sm:$0xf]
        %v3060 = vld [vmem:[#allocation7 + $0x18] sm:$0xf]
        %v3061 = vld [vmem:[#allocation7 + $0x1c] sm:$0xf]
        %v3062 = vld [vmem:[#allocation7 + $0x20] sm:$0xf]
        %v3063 = vld [vmem:[#allocation7 + $0x24] sm:$0xf]
        %v3064 = vld [vmem:[#allocation7 + $0x28] sm:$0xf]
        %v3065 = vld [vmem:[#allocation7 + $0x2c] sm:$0xf]
        %v3066 = vld [vmem:[#allocation7 + $0x30] sm:$0xf]
        %v3067 = vld [vmem:[#allocation7 + $0x34] sm:$0xf]
        %v3068 = vld [vmem:[#allocation7 + $0x38] sm:$0xf]
        %v3069 = vld [vmem:[#allocation7 + $0x3c] sm:$0xf]
        %v3070 = vld [vmem:[#allocation7 + $0x40] sm:$0xf]
        %v3071 = vld [vmem:[#allocation7 + $0x44] sm:$0xf]
        %v3072 = vld [vmem:[#allocation7 + $0x48] sm:$0xf]
        %v3073 = vld [vmem:[#allocation7 + $0x4c] sm:$0xf]
        %v3074 = vld [vmem:[#allocation7 + $0x50] sm:$0xf]
        %v3075 = vld [vmem:[#allocation7 + $0x54] sm:$0xf]
        %v3076 = vld [vmem:[#allocation7 + $0x58] sm:$0xf]
        %v3077 = vld [vmem:[#allocation7 + $0x5c] sm:$0xf]
        %v3078 = vld [vmem:[#allocation7 + $0x60] sm:$0xf]
        %v3079 = vld [vmem:[#allocation7 + $0x64] sm:$0xf]
        %v3080 = vld [vmem:[#allocation7 + $0x68] sm:$0xf]
        %v3081 = vld [vmem:[#allocation7 + $0x6c] sm:$0xf]
        %v3082 = vld [vmem:[#allocation7 + $0x70] sm:$0xf]
        %v3083 = vld [vmem:[#allocation7 + $0x74] sm:$0xf]
        %v3084 = vld [vmem:[#allocation7 + $0x78] sm:$0xf]
        %v3085 = vld [vmem:[#allocation7 + $0x7c] sm:$0xf]
        %v3086 = vld [vmem:[%s19] sm:$0x1]
        %v3088 = vperm.slane %v3086, 0
        %v3122 = vunpack.c.l.b16 %v3054
        %v3123 = vunpack.c.l.b16 %v3055
        %v3124 = vunpack.c.l.b16 %v3056
        %v3125 = vunpack.c.l.b16 %v3057
        %v3126 = vunpack.c.l.b16 %v3058
        %v3127 = vunpack.c.l.b16 %v3059
        %v3128 = vunpack.c.l.b16 %v3060
        %v3129 = vunpack.c.l.b16 %v3061
        %v3130 = vunpack.c.l.b16 %v3062
        %v3131 = vunpack.c.l.b16 %v3063
        %v3132 = vunpack.c.l.b16 %v3064
        %v3133 = vunpack.c.l.b16 %v3065
        %v3134 = vunpack.c.l.b16 %v3066
        %v3135 = vunpack.c.l.b16 %v3067
        %v3136 = vunpack.c.l.b16 %v3068
        %v3137 = vunpack.c.l.b16 %v3069
        %v3138 = vunpack.c.l.b16 %v3070
        %v3139 = vunpack.c.l.b16 %v3071
        %v3140 = vunpack.c.l.b16 %v3072
        %v3141 = vunpack.c.l.b16 %v3073
        %v3142 = vunpack.c.l.b16 %v3074
        %v3143 = vunpack.c.l.b16 %v3075
        %v3144 = vunpack.c.l.b16 %v3076
        %v3145 = vunpack.c.l.b16 %v3077
        %v3146 = vunpack.c.l.b16 %v3078
        %v3147 = vunpack.c.l.b16 %v3079
        %v3148 = vunpack.c.l.b16 %v3080
        %v3149 = vunpack.c.l.b16 %v3081
        %v3150 = vunpack.c.l.b16 %v3082
        %v3151 = vunpack.c.l.b16 %v3083
        %v3152 = vunpack.c.l.b16 %v3084
        %v3153 = vunpack.c.l.b16 %v3085
        %v3154 = vpack.c.b16 %v3123, %v3122
        %v3155 = vpack.c.b16 %v3125, %v3124
        %v3156 = vpack.c.b16 %v3127, %v3126
        %v3157 = vpack.c.b16 %v3129, %v3128
        %v3158 = vpack.c.b16 %v3131, %v3130
        %v3159 = vpack.c.b16 %v3133, %v3132
        %v3160 = vpack.c.b16 %v3135, %v3134
        %v3161 = vpack.c.b16 %v3137, %v3136
        %v3162 = vpack.c.b16 %v3139, %v3138
        %v3163 = vpack.c.b16 %v3141, %v3140
        %v3164 = vpack.c.b16 %v3143, %v3142
        %v3165 = vpack.c.b16 %v3145, %v3144
        %v3166 = vpack.c.b16 %v3147, %v3146
        %v3167 = vpack.c.b16 %v3149, %v3148
        %v3168 = vpack.c.b16 %v3151, %v3150
        %v3169 = vpack.c.b16 %v3153, %v3152
        %3186 = vmatpush.bf16.msra.mxu0 %v3161
        %3187 = vmatpush.bf16.msra.mxu0 %v3160
        %3188 = vmatpush.bf16.msra.mxu0 %v3159
        %3189 = vmatpush.bf16.msra.mxu0 %v3158
        %3190 = vmatpush.bf16.msra.mxu0 %v3157
        %3191 = vmatpush.bf16.msra.mxu0 %v3156
        %3192 = vmatpush.bf16.msra.mxu0 %v3155
        %3193 = vmatpush.bf16.msra.mxu0 %v3154
        %3194 = vmatmul.bf16.gmra.mxu0 %v3052
        %v3195 = vpop.f32.mrf.mxu0
        %v3196 = vadd.f32 %v3088, %v3195
        %v3197 = vpop.f32.mrf.mxu0
        %3198 = vdwg.mxu0
        %3199 = vmatpush.bf16.msra.mxu0 %v3169
        %3200 = vmatpush.bf16.msra.mxu0 %v3168
        %3201 = vmatpush.bf16.msra.mxu0 %v3167
        %3202 = vmatpush.bf16.msra.mxu0 %v3166
        %3203 = vmatpush.bf16.msra.mxu0 %v3165
        %3204 = vmatpush.bf16.msra.mxu0 %v3164
        %3205 = vmatpush.bf16.msra.mxu0 %v3163
        %3206 = vmatpush.bf16.msra.mxu0 %v3162
        %3207 = vmatmul.bf16.gmra.mxu0 %v3053
        %v3208 = vpop.f32.mrf.mxu0
        %v3209 = vadd.f32 %v3196, %v3208
        %v3210 = vpop.f32.mrf.mxu0
        %3211 = vdwg.mxu0
        %v3212 = vadd.f32 %v3209, %v2920
        %v3213 = vld [vmem:[%s20] sm:$0x1]
        %v3214 = vld [vmem:[%s21] sm:$0x1]
        %3215 = vadd.xlane.f32.xlu0 %v3212
        %v3216 = vpop.xlane.xlu0 %3215
        %v3217 = vmul.f32 %v3216, %v1828
        %v3218 = vsub.f32 %v3212, %v3217
        %v3219 = vmul.f32 %v3218, %v3218
        %3220 = vadd.xlane.f32.xlu0 %v3219
        %v3221 = vpop.xlane.xlu0 %3220
        %v3222 = vmul.f32 %v3221, %v1828
        %v3223 = vadd.f32 %v3222, 1e-05
        %v3224 = vrsqrt.pop %v3223
        %v3225 = vmul.f32 %v3224, %v3223
        %v3226 = vmul.f32 %v3225, %v3224
        %v3227 = vmul.f32 0.5, %v3226
        %v3228 = vsub.f32 1.5, %v3227
        %v3229 = vmul.f32 %v3224, %v3228
        %vm3230 = vweird.f32 %v3223
        %vm3231 = vweird.f32 %v3224
        %vm3232 = vmor %vm3230, %vm3231
        %v3233 = vsel %vm3232, %v3224, %v3229
        %v3234 = vmul.f32 %v3218, %v3233
        %v3236 = vperm.slane %v3213, 0
        %v3238 = vmul.f32 %v3234, %v3236
        %v3240 = vperm.slane %v3214, 0
        %v3242 = vadd.f32 %v3238, %v3240
        %v3243 = vpack.c.bf16 %v3242, %v3242
        %3244 = vst [vmem:[%s762] sm:$0xf] %v3243
        %p3245 = scmp.lt.s32.totalorder %s36, 1
        %s3246 = scalar_select %p3245, %s36, 1
        %s3247 = smul.addr %s3246, 4
        %s3248 = scalar_lea.vmem %s22, %s3247
        // Predicated region
        $region125: #{beatmap_decoder_forward.3} parent=107 // pred_check
          %p3249 = pneg %p526
        $region126: #{beatmap_decoder_forward.3} parent=107 // pred_check_branch
          %3251 = sbr.rel (%p3249) target = $region128
        $region127: #{beatmap_decoder_forward.3} parent=107 // pred_region
          _
        $region128: #{beatmap_decoder_forward.3} parent=107 // pred_fallthru
          _
      $region108: #{beatmap_decoder_forward.3} parent=5 // pred_fallthru
        _
      %p3252 = scmp.le.s32.totalorder 2, %s31
      // Predicated region
      $region129: #{beatmap_decoder_forward.3} parent=5 // pred_check
        %p3253 = pneg %p3252
      $region130: #{beatmap_decoder_forward.3} parent=5 // pred_check_branch
        %3255 = sbr.rel (%p3253) target = $region132
      $region131: #{beatmap_decoder_forward.3} parent=5 // pred_region
        %s3256 = ssub.s32 %s31, 2
        // Predicated region
        $region133: #{beatmap_decoder_forward.3} parent=131 // pred_check
          %p3257 = pneg %p532
        $region134: #{beatmap_decoder_forward.3} parent=131 // pred_check_branch
          %3259 = sbr.rel (%p3257) target = $region136
        $region135: #{beatmap_decoder_forward.3} parent=131 // pred_region
          %p3260 = scmp.lt.s32.totalorder %s37, 1
          %s3261 = scalar_select %p3260, %s37, 1
          %s3262 = smul.addr %s3261, 4
          %s3263 = scalar_lea.vmem %s22, %s3262
        $region136: #{beatmap_decoder_forward.3} parent=131 // pred_fallthru
          _
      $region132: #{beatmap_decoder_forward.3} parent=5 // pred_fallthru
        _
    $region6: #{beatmap_decoder_forward.3} parent=1 // loop_footer
      %s35 = sadd.s32 1, %s31
    $region7: #{beatmap_decoder_forward.3} parent=1 // loop_footer_branch
      %30 = sbr.rel target = $region3
    $region8: #{beatmap_decoder_forward.3} parent=1 // loop_exit
      _
    %3264 = vsyncpa [#allocation3], 1
    %s3265 = scalar_lea.sflag [#allocation3], 1
    %3266 = vsyncpa %s3265, 1
    %3267 = vsyncpa [#allocation5], 1
    %3268 = vsyncpa [#allocation8], 1

// kernel: beatmap_decoder_forward.4
$region0: #{beatmap_decoder_forward.4}
  #allocation0 [shape = 'u32[]', space=smem, size = 0x4, offset = 0x4, fixed_abs, tag = 'smem constant byte address 0x4 - core index']
  #allocation1 [shape = 'u32[72,128]{1,0:T(1,128)}', space=vmem, size = 0x9000, scoped, tag = 'internal scratch']
  %s0 = inlined_call_operand.vmem [shape: bf16[2,8,128], index: 0, kind: input, shape index: {}]
  %s1 = inlined_call_operand.vmem [shape: bf16[2,8,128], index: 1, kind: input, shape index: {}]
  %s2 = inlined_call_operand.hbm [shape: bf16[128,384], index: 2, kind: input, shape index: {}]
  %s3 = inlined_call_operand.vmem [shape: f32[1,384], index: 3, kind: input, shape index: {}]
  %s4 = inlined_call_operand.hbm [shape: bf16[128,128], index: 4, kind: input, shape index: {}]
  %s5 = inlined_call_operand.vmem [shape: f32[1,128], index: 5, kind: input, shape index: {}]
  %s6 = inlined_call_operand.vmem [shape: f32[1,128], index: 6, kind: input, shape index: {}]
  %s7 = inlined_call_operand.vmem [shape: f32[1,128], index: 7, kind: input, shape index: {}]
  %s8 = inlined_call_operand.hbm [shape: bf16[128,128], index: 8, kind: input, shape index: {}]
  %s9 = inlined_call_operand.vmem [shape: f32[1,128], index: 9, kind: input, shape index: {}]
  %s10 = inlined_call_operand.hbm [shape: bf16[128,256], index: 10, kind: input, shape index: {}]
  %s11 = inlined_call_operand.vmem [shape: f32[1,256], index: 11, kind: input, shape index: {}]
  %s12 = inlined_call_operand.hbm [shape: bf16[128,128], index: 12, kind: input, shape index: {}]
  %s13 = inlined_call_operand.vmem [shape: f32[1,128], index: 13, kind: input, shape index: {}]
  %s14 = inlined_call_operand.vmem [shape: f32[1,128], index: 14, kind: input, shape index: {}]
  %s15 = inlined_call_operand.vmem [shape: f32[1,128], index: 15, kind: input, shape index: {}]
  %s16 = inlined_call_operand.hbm [shape: bf16[128,256], index: 16, kind: input, shape index: {}]
  %s17 = inlined_call_operand.vmem [shape: f32[1,256], index: 17, kind: input, shape index: {}]
  %s18 = inlined_call_operand.hbm [shape: bf16[256,128], index: 18, kind: input, shape index: {}]
  %s19 = inlined_call_operand.vmem [shape: f32[1,128], index: 19, kind: input, shape index: {}]
  %s20 = inlined_call_operand.vmem [shape: f32[1,128], index: 20, kind: input, shape index: {}]
  %s21 = inlined_call_operand.vmem [shape: f32[1,128], index: 21, kind: input, shape index: {}]
  %s22 = inlined_call_operand.vmem [shape: bf16[2,8,128], index: 22, kind: output, shape index: {}]
  %s23 = sld [smem:[#allocation0]]
  $region149: #{beatmap_decoder_forward.4} parent=0
    _
  %s25 = ssub.s32 1, %s23
  %s26 = scalar_select 0, %s25, %s23
  $region1: #{beatmap_decoder_forward.4} parent=0
    #allocation2 [shape = 'u8[98304]{0}', space=vmem, size = 0x18000, scoped, tag = 'input window, operand 2, single buffered']
    #allocation3 [shape = 's32[2]{0}', space=sflag, size = 0x8, scoped, tag = 'scoped memory for beatmap_decoder_forward.4']
    #allocation4 [shape = 'u8[32768]{0}', space=vmem, size = 0x8000, scoped, tag = 'input window, operand 4, single buffered']
    #allocation5 [shape = 's32[1]{0}', space=sflag, size = 0x4, scoped, tag = 'scoped memory for beatmap_decoder_forward.4']
    #allocation6 [shape = 'u8[32768]{0}', space=vmem, size = 0x8000, scoped, tag = 'input window, operand 8, single buffered']
    #allocation7 [shape = 'u8[65536]{0}', space=vmem, size = 0x10000, scoped, tag = 'input window, operand 10, single buffered']
    #allocation8 [shape = 's32[1]{0}', space=sflag, size = 0x4, scoped, tag = 'scoped memory for beatmap_decoder_forward.4']
    #allocation9 [shape = 'u8[32768]{0}', space=vmem, size = 0x8000, scoped, tag = 'input window, operand 12, single buffered']
    #allocation10 [shape = 'u8[65536]{0}', space=vmem, size = 0x10000, scoped, tag = 'input window, operand 16, single buffered']
    #allocation11 [shape = 's32[1]{0}', space=sflag, size = 0x4, scoped, tag = 'scoped memory for beatmap_decoder_forward.4']
    #allocation12 [shape = 'u8[65536]{0}', space=vmem, size = 0x10000, scoped, tag = 'input window, operand 18, single buffered']
    %27 = vsyncpa [#allocation3], 0
    %28 = vsyncpa [#allocation5], 0
    %29 = vsyncpa [#allocation8], 0
    %30 = vsyncpa [#allocation11], 0
    loop: start=0, step=1, limit=4
    $region2: #{beatmap_decoder_forward.4} parent=1 // loop_pre_header
      _
    $region3: #{beatmap_decoder_forward.4} parent=1 // loop_header
      %s32 = sphi 0, %s36
      %p33 = scmp.ge.s32.totalorder %s32, 4
      %s42 = sphi 0, %s44
      %s45 = sphi 0, %s42
      %s46 = sphi 0, %s45
      %s62 = sphi 0, %s46
      %s68 = sphi 0, %s70
      %s71 = sphi 0, %s68
      %s72 = sphi 0, %s71
      %s88 = sphi 0, %s72
      %s92 = sphi 0, %s92
      %s94 = sphi 0, %s92
      %s95 = sphi 0, %s94
      %s109 = sphi 0, %s95
      %s113 = sphi 0, %s113
      %s115 = sphi 0, %s113
      %s116 = sphi 0, %s115
      %s130 = sphi 0, %s116
      %s134 = sphi 0, %s134
      %s136 = sphi 0, %s134
      %s137 = sphi 0, %s136
      %s151 = sphi 0, %s137
      %s155 = sphi 0, %s155
      %s157 = sphi 0, %s155
      %s158 = sphi 0, %s157
      %s172 = sphi 0, %s158
      %s176 = sphi 0, %s176
      %s178 = sphi 0, %s176
      %s179 = sphi 0, %s178
      %s193 = sphi 0, %s179
      %s197 = sphi 0, %s197
      %s199 = sphi 0, %s197
      %s200 = sphi 0, %s199
      %s214 = sphi 0, %s200
      %s218 = sphi 0, %s218
      %s220 = sphi 0, %s218
      %s221 = sphi 0, %s220
      %s235 = sphi 0, %s221
      %s239 = sphi 0, %s239
      %s241 = sphi 0, %s239
      %s242 = sphi 0, %s241
      %s256 = sphi 0, %s242
      %s260 = sphi 0, %s260
      %s262 = sphi 0, %s260
      %s263 = sphi 0, %s262
      %s277 = sphi 0, %s263
      %s281 = sphi 0, %s281
      %s283 = sphi 0, %s281
      %s284 = sphi 0, %s283
      %s298 = sphi 0, %s284
      %s302 = sphi 0, %s302
      %s304 = sphi 0, %s302
      %s305 = sphi 0, %s304
      %s319 = sphi 0, %s305
      %s323 = sphi 0, %s323
      %s325 = sphi 0, %s323
      %s326 = sphi 0, %s325
      %s340 = sphi 0, %s326
      %s344 = sphi 0, %s344
      %s346 = sphi 0, %s344
      %s347 = sphi 0, %s346
      %s361 = sphi 0, %s347
      %s365 = sphi 0, %s365
      %s367 = sphi 0, %s365
      %s368 = sphi 0, %s367
      %s382 = sphi 0, %s368
      %s386 = sphi 0, %s386
      %s388 = sphi 0, %s386
      %s389 = sphi 0, %s388
      %s403 = sphi 0, %s389
      %s407 = sphi 0, %s407
      %s409 = sphi 0, %s407
      %s410 = sphi 0, %s409
      %s424 = sphi 0, %s410
      %s428 = sphi 0, %s428
      %s430 = sphi 0, %s428
      %s431 = sphi 0, %s430
      %s445 = sphi 0, %s431
      %s449 = sphi 0, %s449
      %s451 = sphi 0, %s449
      %s452 = sphi 0, %s451
      %s466 = sphi 0, %s452
      %s470 = sphi 0, %s470
      %s472 = sphi 0, %s470
      %s473 = sphi 0, %s472
      %s487 = sphi 0, %s473
      %s491 = sphi 0, %s491
      %s493 = sphi 0, %s491
      %s494 = sphi 0, %s493
      %s508 = sphi 0, %s494
      %s514 = sphi 0, %s516
      %s517 = sphi 0, %s514
      %s518 = sphi 0, %s517
      %s534 = sphi 0, %s518
    $region4: #{beatmap_decoder_forward.4} parent=1 // loop_header_branch
      %35 = sbr.rel (%p33) target = $region8
    $region5: #{beatmap_decoder_forward.4} parent=1 // loop_body
      %s37 = ssub.s32 %s32, 1
      %s38 = ssub.s32 %s32, 2
      %s39 = sadd.s32 %s32, 1
      %s40 = ssub.s32 %s32, %s39
      %p41 = scmp.eq.s32.totalorder %s40, 0
      %s43 = sadd.s32 %s42, 1
      %s44 = scalar_select %p41, %s42, %s43
      %p47 = pneg %p41
      %p48 = scmp.eq.s32.totalorder %s32, 1
      %p49 = por %p47, %p48
      %p50 = scmp.ne.s32.totalorder %s42, %s45
      %p51 = scmp.eq.s32.totalorder %s32, 0
      %p52 = por %p50, %p51
      %p53 = scmp.ne.s32.totalorder %s42, %s45
      %p54 = scmp.eq.s32.totalorder %s37, 1
      %p55 = por %p53, %p54
      %p56 = scmp.ne.s32.totalorder %s45, %s46
      %p57 = scmp.eq.s32.totalorder %s37, 0
      %p58 = por %p56, %p57
      %p59 = scmp.ne.s32.totalorder %s45, %s46
      %p60 = scmp.eq.s32.totalorder %s38, 1
      %p61 = por %p59, %p60
      %p63 = scmp.ne.s32.totalorder %s46, %s62
      %p64 = scmp.eq.s32.totalorder %s38, 0
      %p65 = por %p63, %p64
      %s66 = ssub.s32 %s32, %s39
      %p67 = scmp.eq.s32.totalorder %s66, 0
      %s69 = sadd.s32 %s68, 1
      %s70 = scalar_select %p67, %s68, %s69
      %p73 = pneg %p67
      %p74 = scmp.eq.s32.totalorder %s32, 1
      %p75 = por %p73, %p74
      %p76 = scmp.ne.s32.totalorder %s68, %s71
      %p77 = scmp.eq.s32.totalorder %s32, 0
      %p78 = por %p76, %p77
      %p79 = scmp.ne.s32.totalorder %s68, %s71
      %p80 = scmp.eq.s32.totalorder %s37, 1
      %p81 = por %p79, %p80
      %p82 = scmp.ne.s32.totalorder %s71, %s72
      %p83 = scmp.eq.s32.totalorder %s37, 0
      %p84 = por %p82, %p83
      %p85 = scmp.ne.s32.totalorder %s71, %s72
      %p86 = scmp.eq.s32.totalorder %s38, 1
      %p87 = por %p85, %p86
      %p89 = scmp.ne.s32.totalorder %s72, %s88
      %p90 = scmp.eq.s32.totalorder %s38, 0
      %p91 = por %p89, %p90
      %s93 = sadd.s32 %s92, 1
      %p96 = scmp.eq.s32.totalorder %s32, 1
      %p97 = scmp.ne.s32.totalorder %s92, %s94
      %p98 = scmp.eq.s32.totalorder %s32, 0
      %p99 = por %p97, %p98
      %p100 = scmp.ne.s32.totalorder %s92, %s94
      %p101 = scmp.eq.s32.totalorder %s37, 1
      %p102 = por %p100, %p101
      %p103 = scmp.ne.s32.totalorder %s94, %s95
      %p104 = scmp.eq.s32.totalorder %s37, 0
      %p105 = por %p103, %p104
      %p106 = scmp.ne.s32.totalorder %s94, %s95
      %p107 = scmp.eq.s32.totalorder %s38, 1
      %p108 = por %p106, %p107
      %p110 = scmp.ne.s32.totalorder %s95, %s109
      %p111 = scmp.eq.s32.totalorder %s38, 0
      %p112 = por %p110, %p111
      %s114 = sadd.s32 %s113, 1
      %p117 = scmp.eq.s32.totalorder %s32, 1
      %p118 = scmp.ne.s32.totalorder %s113, %s115
      %p119 = scmp.eq.s32.totalorder %s32, 0
      %p120 = por %p118, %p119
      %p121 = scmp.ne.s32.totalorder %s113, %s115
      %p122 = scmp.eq.s32.totalorder %s37, 1
      %p123 = por %p121, %p122
      %p124 = scmp.ne.s32.totalorder %s115, %s116
      %p125 = scmp.eq.s32.totalorder %s37, 0
      %p126 = por %p124, %p125
      %p127 = scmp.ne.s32.totalorder %s115, %s116
      %p128 = scmp.eq.s32.totalorder %s38, 1
      %p129 = por %p127, %p128
      %p131 = scmp.ne.s32.totalorder %s116, %s130
      %p132 = scmp.eq.s32.totalorder %s38, 0
      %p133 = por %p131, %p132
      %s135 = sadd.s32 %s134, 1
      %p138 = scmp.eq.s32.totalorder %s32, 1
      %p139 = scmp.ne.s32.totalorder %s134, %s136
      %p140 = scmp.eq.s32.totalorder %s32, 0
      %p141 = por %p139, %p140
      %p142 = scmp.ne.s32.totalorder %s134, %s136
      %p143 = scmp.eq.s32.totalorder %s37, 1
      %p144 = por %p142, %p143
      %p145 = scmp.ne.s32.totalorder %s136, %s137
      %p146 = scmp.eq.s32.totalorder %s37, 0
      %p147 = por %p145, %p146
      %p148 = scmp.ne.s32.totalorder %s136, %s137
      %p149 = scmp.eq.s32.totalorder %s38, 1
      %p150 = por %p148, %p149
      %p152 = scmp.ne.s32.totalorder %s137, %s151
      %p153 = scmp.eq.s32.totalorder %s38, 0
      %p154 = por %p152, %p153
      %s156 = sadd.s32 %s155, 1
      %p159 = scmp.eq.s32.totalorder %s32, 1
      %p160 = scmp.ne.s32.totalorder %s155, %s157
      %p161 = scmp.eq.s32.totalorder %s32, 0
      %p162 = por %p160, %p161
      %p163 = scmp.ne.s32.totalorder %s155, %s157
      %p164 = scmp.eq.s32.totalorder %s37, 1
      %p165 = por %p163, %p164
      %p166 = scmp.ne.s32.totalorder %s157, %s158
      %p167 = scmp.eq.s32.totalorder %s37, 0
      %p168 = por %p166, %p167
      %p169 = scmp.ne.s32.totalorder %s157, %s158
      %p170 = scmp.eq.s32.totalorder %s38, 1
      %p171 = por %p169, %p170
      %p173 = scmp.ne.s32.totalorder %s158, %s172
      %p174 = scmp.eq.s32.totalorder %s38, 0
      %p175 = por %p173, %p174
      %s177 = sadd.s32 %s176, 1
      %p180 = scmp.eq.s32.totalorder %s32, 1
      %p181 = scmp.ne.s32.totalorder %s176, %s178
      %p182 = scmp.eq.s32.totalorder %s32, 0
      %p183 = por %p181, %p182
      %p184 = scmp.ne.s32.totalorder %s176, %s178
      %p185 = scmp.eq.s32.totalorder %s37, 1
      %p186 = por %p184, %p185
      %p187 = scmp.ne.s32.totalorder %s178, %s179
      %p188 = scmp.eq.s32.totalorder %s37, 0
      %p189 = por %p187, %p188
      %p190 = scmp.ne.s32.totalorder %s178, %s179
      %p191 = scmp.eq.s32.totalorder %s38, 1
      %p192 = por %p190, %p191
      %p194 = scmp.ne.s32.totalorder %s179, %s193
      %p195 = scmp.eq.s32.totalorder %s38, 0
      %p196 = por %p194, %p195
      %s198 = sadd.s32 %s197, 1
      %p201 = scmp.eq.s32.totalorder %s32, 1
      %p202 = scmp.ne.s32.totalorder %s197, %s199
      %p203 = scmp.eq.s32.totalorder %s32, 0
      %p204 = por %p202, %p203
      %p205 = scmp.ne.s32.totalorder %s197, %s199
      %p206 = scmp.eq.s32.totalorder %s37, 1
      %p207 = por %p205, %p206
      %p208 = scmp.ne.s32.totalorder %s199, %s200
      %p209 = scmp.eq.s32.totalorder %s37, 0
      %p210 = por %p208, %p209
      %p211 = scmp.ne.s32.totalorder %s199, %s200
      %p212 = scmp.eq.s32.totalorder %s38, 1
      %p213 = por %p211, %p212
      %p215 = scmp.ne.s32.totalorder %s200, %s214
      %p216 = scmp.eq.s32.totalorder %s38, 0
      %p217 = por %p215, %p216
      %s219 = sadd.s32 %s218, 1
      %p222 = scmp.eq.s32.totalorder %s32, 1
      %p223 = scmp.ne.s32.totalorder %s218, %s220
      %p224 = scmp.eq.s32.totalorder %s32, 0
      %p225 = por %p223, %p224
      %p226 = scmp.ne.s32.totalorder %s218, %s220
      %p227 = scmp.eq.s32.totalorder %s37, 1
      %p228 = por %p226, %p227
      %p229 = scmp.ne.s32.totalorder %s220, %s221
      %p230 = scmp.eq.s32.totalorder %s37, 0
      %p231 = por %p229, %p230
      %p232 = scmp.ne.s32.totalorder %s220, %s221
      %p233 = scmp.eq.s32.totalorder %s38, 1
      %p234 = por %p232, %p233
      %p236 = scmp.ne.s32.totalorder %s221, %s235
      %p237 = scmp.eq.s32.totalorder %s38, 0
      %p238 = por %p236, %p237
      %s240 = sadd.s32 %s239, 1
      %p243 = scmp.eq.s32.totalorder %s32, 1
      %p244 = scmp.ne.s32.totalorder %s239, %s241
      %p245 = scmp.eq.s32.totalorder %s32, 0
      %p246 = por %p244, %p245
      %p247 = scmp.ne.s32.totalorder %s239, %s241
      %p248 = scmp.eq.s32.totalorder %s37, 1
      %p249 = por %p247, %p248
      %p250 = scmp.ne.s32.totalorder %s241, %s242
      %p251 = scmp.eq.s32.totalorder %s37, 0
      %p252 = por %p250, %p251
      %p253 = scmp.ne.s32.totalorder %s241, %s242
      %p254 = scmp.eq.s32.totalorder %s38, 1
      %p255 = por %p253, %p254
      %p257 = scmp.ne.s32.totalorder %s242, %s256
      %p258 = scmp.eq.s32.totalorder %s38, 0
      %p259 = por %p257, %p258
      %s261 = sadd.s32 %s260, 1
      %p264 = scmp.eq.s32.totalorder %s32, 1
      %p265 = scmp.ne.s32.totalorder %s260, %s262
      %p266 = scmp.eq.s32.totalorder %s32, 0
      %p267 = por %p265, %p266
      %p268 = scmp.ne.s32.totalorder %s260, %s262
      %p269 = scmp.eq.s32.totalorder %s37, 1
      %p270 = por %p268, %p269
      %p271 = scmp.ne.s32.totalorder %s262, %s263
      %p272 = scmp.eq.s32.totalorder %s37, 0
      %p273 = por %p271, %p272
      %p274 = scmp.ne.s32.totalorder %s262, %s263
      %p275 = scmp.eq.s32.totalorder %s38, 1
      %p276 = por %p274, %p275
      %p278 = scmp.ne.s32.totalorder %s263, %s277
      %p279 = scmp.eq.s32.totalorder %s38, 0
      %p280 = por %p278, %p279
      %s282 = sadd.s32 %s281, 1
      %p285 = scmp.eq.s32.totalorder %s32, 1
      %p286 = scmp.ne.s32.totalorder %s281, %s283
      %p287 = scmp.eq.s32.totalorder %s32, 0
      %p288 = por %p286, %p287
      %p289 = scmp.ne.s32.totalorder %s281, %s283
      %p290 = scmp.eq.s32.totalorder %s37, 1
      %p291 = por %p289, %p290
      %p292 = scmp.ne.s32.totalorder %s283, %s284
      %p293 = scmp.eq.s32.totalorder %s37, 0
      %p294 = por %p292, %p293
      %p295 = scmp.ne.s32.totalorder %s283, %s284
      %p296 = scmp.eq.s32.totalorder %s38, 1
      %p297 = por %p295, %p296
      %p299 = scmp.ne.s32.totalorder %s284, %s298
      %p300 = scmp.eq.s32.totalorder %s38, 0
      %p301 = por %p299, %p300
      %s303 = sadd.s32 %s302, 1
      %p306 = scmp.eq.s32.totalorder %s32, 1
      %p307 = scmp.ne.s32.totalorder %s302, %s304
      %p308 = scmp.eq.s32.totalorder %s32, 0
      %p309 = por %p307, %p308
      %p310 = scmp.ne.s32.totalorder %s302, %s304
      %p311 = scmp.eq.s32.totalorder %s37, 1
      %p312 = por %p310, %p311
      %p313 = scmp.ne.s32.totalorder %s304, %s305
      %p314 = scmp.eq.s32.totalorder %s37, 0
      %p315 = por %p313, %p314
      %p316 = scmp.ne.s32.totalorder %s304, %s305
      %p317 = scmp.eq.s32.totalorder %s38, 1
      %p318 = por %p316, %p317
      %p320 = scmp.ne.s32.totalorder %s305, %s319
      %p321 = scmp.eq.s32.totalorder %s38, 0
      %p322 = por %p320, %p321
      %s324 = sadd.s32 %s323, 1
      %p327 = scmp.eq.s32.totalorder %s32, 1
      %p328 = scmp.ne.s32.totalorder %s323, %s325
      %p329 = scmp.eq.s32.totalorder %s32, 0
      %p330 = por %p328, %p329
      %p331 = scmp.ne.s32.totalorder %s323, %s325
      %p332 = scmp.eq.s32.totalorder %s37, 1
      %p333 = por %p331, %p332
      %p334 = scmp.ne.s32.totalorder %s325, %s326
      %p335 = scmp.eq.s32.totalorder %s37, 0
      %p336 = por %p334, %p335
      %p337 = scmp.ne.s32.totalorder %s325, %s326
      %p338 = scmp.eq.s32.totalorder %s38, 1
      %p339 = por %p337, %p338
      %p341 = scmp.ne.s32.totalorder %s326, %s340
      %p342 = scmp.eq.s32.totalorder %s38, 0
      %p343 = por %p341, %p342
      %s345 = sadd.s32 %s344, 1
      %p348 = scmp.eq.s32.totalorder %s32, 1
      %p349 = scmp.ne.s32.totalorder %s344, %s346
      %p350 = scmp.eq.s32.totalorder %s32, 0
      %p351 = por %p349, %p350
      %p352 = scmp.ne.s32.totalorder %s344, %s346
      %p353 = scmp.eq.s32.totalorder %s37, 1
      %p354 = por %p352, %p353
      %p355 = scmp.ne.s32.totalorder %s346, %s347
      %p356 = scmp.eq.s32.totalorder %s37, 0
      %p357 = por %p355, %p356
      %p358 = scmp.ne.s32.totalorder %s346, %s347
      %p359 = scmp.eq.s32.totalorder %s38, 1
      %p360 = por %p358, %p359
      %p362 = scmp.ne.s32.totalorder %s347, %s361
      %p363 = scmp.eq.s32.totalorder %s38, 0
      %p364 = por %p362, %p363
      %s366 = sadd.s32 %s365, 1
      %p369 = scmp.eq.s32.totalorder %s32, 1
      %p370 = scmp.ne.s32.totalorder %s365, %s367
      %p371 = scmp.eq.s32.totalorder %s32, 0
      %p372 = por %p370, %p371
      %p373 = scmp.ne.s32.totalorder %s365, %s367
      %p374 = scmp.eq.s32.totalorder %s37, 1
      %p375 = por %p373, %p374
      %p376 = scmp.ne.s32.totalorder %s367, %s368
      %p377 = scmp.eq.s32.totalorder %s37, 0
      %p378 = por %p376, %p377
      %p379 = scmp.ne.s32.totalorder %s367, %s368
      %p380 = scmp.eq.s32.totalorder %s38, 1
      %p381 = por %p379, %p380
      %p383 = scmp.ne.s32.totalorder %s368, %s382
      %p384 = scmp.eq.s32.totalorder %s38, 0
      %p385 = por %p383, %p384
      %s387 = sadd.s32 %s386, 1
      %p390 = scmp.eq.s32.totalorder %s32, 1
      %p391 = scmp.ne.s32.totalorder %s386, %s388
      %p392 = scmp.eq.s32.totalorder %s32, 0
      %p393 = por %p391, %p392
      %p394 = scmp.ne.s32.totalorder %s386, %s388
      %p395 = scmp.eq.s32.totalorder %s37, 1
      %p396 = por %p394, %p395
      %p397 = scmp.ne.s32.totalorder %s388, %s389
      %p398 = scmp.eq.s32.totalorder %s37, 0
      %p399 = por %p397, %p398
      %p400 = scmp.ne.s32.totalorder %s388, %s389
      %p401 = scmp.eq.s32.totalorder %s38, 1
      %p402 = por %p400, %p401
      %p404 = scmp.ne.s32.totalorder %s389, %s403
      %p405 = scmp.eq.s32.totalorder %s38, 0
      %p406 = por %p404, %p405
      %s408 = sadd.s32 %s407, 1
      %p411 = scmp.eq.s32.totalorder %s32, 1
      %p412 = scmp.ne.s32.totalorder %s407, %s409
      %p413 = scmp.eq.s32.totalorder %s32, 0
      %p414 = por %p412, %p413
      %p415 = scmp.ne.s32.totalorder %s407, %s409
      %p416 = scmp.eq.s32.totalorder %s37, 1
      %p417 = por %p415, %p416
      %p418 = scmp.ne.s32.totalorder %s409, %s410
      %p419 = scmp.eq.s32.totalorder %s37, 0
      %p420 = por %p418, %p419
      %p421 = scmp.ne.s32.totalorder %s409, %s410
      %p422 = scmp.eq.s32.totalorder %s38, 1
      %p423 = por %p421, %p422
      %p425 = scmp.ne.s32.totalorder %s410, %s424
      %p426 = scmp.eq.s32.totalorder %s38, 0
      %p427 = por %p425, %p426
      %s429 = sadd.s32 %s428, 1
      %p432 = scmp.eq.s32.totalorder %s32, 1
      %p433 = scmp.ne.s32.totalorder %s428, %s430
      %p434 = scmp.eq.s32.totalorder %s32, 0
      %p435 = por %p433, %p434
      %p436 = scmp.ne.s32.totalorder %s428, %s430
      %p437 = scmp.eq.s32.totalorder %s37, 1
      %p438 = por %p436, %p437
      %p439 = scmp.ne.s32.totalorder %s430, %s431
      %p440 = scmp.eq.s32.totalorder %s37, 0
      %p441 = por %p439, %p440
      %p442 = scmp.ne.s32.totalorder %s430, %s431
      %p443 = scmp.eq.s32.totalorder %s38, 1
      %p444 = por %p442, %p443
      %p446 = scmp.ne.s32.totalorder %s431, %s445
      %p447 = scmp.eq.s32.totalorder %s38, 0
      %p448 = por %p446, %p447
      %s450 = sadd.s32 %s449, 1
      %p453 = scmp.eq.s32.totalorder %s32, 1
      %p454 = scmp.ne.s32.totalorder %s449, %s451
      %p455 = scmp.eq.s32.totalorder %s32, 0
      %p456 = por %p454, %p455
      %p457 = scmp.ne.s32.totalorder %s449, %s451
      %p458 = scmp.eq.s32.totalorder %s37, 1
      %p459 = por %p457, %p458
      %p460 = scmp.ne.s32.totalorder %s451, %s452
      %p461 = scmp.eq.s32.totalorder %s37, 0
      %p462 = por %p460, %p461
      %p463 = scmp.ne.s32.totalorder %s451, %s452
      %p464 = scmp.eq.s32.totalorder %s38, 1
      %p465 = por %p463, %p464
      %p467 = scmp.ne.s32.totalorder %s452, %s466
      %p468 = scmp.eq.s32.totalorder %s38, 0
      %p469 = por %p467, %p468
      %s471 = sadd.s32 %s470, 1
      %p474 = scmp.eq.s32.totalorder %s32, 1
      %p475 = scmp.ne.s32.totalorder %s470, %s472
      %p476 = scmp.eq.s32.totalorder %s32, 0
      %p477 = por %p475, %p476
      %p478 = scmp.ne.s32.totalorder %s470, %s472
      %p479 = scmp.eq.s32.totalorder %s37, 1
      %p480 = por %p478, %p479
      %p481 = scmp.ne.s32.totalorder %s472, %s473
      %p482 = scmp.eq.s32.totalorder %s37, 0
      %p483 = por %p481, %p482
      %p484 = scmp.ne.s32.totalorder %s472, %s473
      %p485 = scmp.eq.s32.totalorder %s38, 1
      %p486 = por %p484, %p485
      %p488 = scmp.ne.s32.totalorder %s473, %s487
      %p489 = scmp.eq.s32.totalorder %s38, 0
      %p490 = por %p488, %p489
      %s492 = sadd.s32 %s491, 1
      %p495 = scmp.eq.s32.totalorder %s32, 1
      %p496 = scmp.ne.s32.totalorder %s491, %s493
      %p497 = scmp.eq.s32.totalorder %s32, 0
      %p498 = por %p496, %p497
      %p499 = scmp.ne.s32.totalorder %s491, %s493
      %p500 = scmp.eq.s32.totalorder %s37, 1
      %p501 = por %p499, %p500
      %p502 = scmp.ne.s32.totalorder %s493, %s494
      %p503 = scmp.eq.s32.totalorder %s37, 0
      %p504 = por %p502, %p503
      %p505 = scmp.ne.s32.totalorder %s493, %s494
      %p506 = scmp.eq.s32.totalorder %s38, 1
      %p507 = por %p505, %p506
      %p509 = scmp.ne.s32.totalorder %s494, %s508
      %p510 = scmp.eq.s32.totalorder %s38, 0
      %p511 = por %p509, %p510
      %s512 = ssub.s32 %s32, %s39
      %p513 = scmp.eq.s32.totalorder %s512, 0
      %s515 = sadd.s32 %s514, 1
      %s516 = scalar_select %p513, %s514, %s515
      %p519 = pneg %p513
      %p520 = scmp.eq.s32.totalorder %s32, 1
      %p521 = por %p519, %p520
      %p522 = scmp.ne.s32.totalorder %s514, %s517
      %p523 = scmp.eq.s32.totalorder %s32, 0
      %p524 = por %p522, %p523
      %p525 = scmp.ne.s32.totalorder %s514, %s517
      %p526 = scmp.eq.s32.totalorder %s37, 1
      %p527 = por %p525, %p526
      %p528 = scmp.ne.s32.totalorder %s517, %s518
      %p529 = scmp.eq.s32.totalorder %s37, 0
      %p530 = por %p528, %p529
      %p531 = scmp.ne.s32.totalorder %s517, %s518
      %p532 = scmp.eq.s32.totalorder %s38, 1
      %p533 = por %p531, %p532
      %p535 = scmp.ne.s32.totalorder %s518, %s534
      %p536 = scmp.eq.s32.totalorder %s38, 0
      %p537 = por %p535, %p536
      %p538 = scmp.le.s32.totalorder 1, %s32
      %p539 = scmp.lt.s32.totalorder %s32, 3
      %p540 = pnand %p538, %p539
      %p541 = pneg %p540
      // Predicated region
      $region9: #{beatmap_decoder_forward.4} parent=5 // pred_check
        _
      $region10: #{beatmap_decoder_forward.4} parent=5 // pred_check_branch
        %543 = sbr.rel (%p540) target = $region12
      $region11: #{beatmap_decoder_forward.4} parent=5 // pred_region
        %s544 = ssub.s32 %s32, 1
        // Predicated region
        $region13: #{beatmap_decoder_forward.4} parent=11 // pred_check
          %p545 = pneg %p105
        $region14: #{beatmap_decoder_forward.4} parent=11 // pred_check_branch
          %547 = sbr.rel (%p545) target = $region16
        $region15: #{beatmap_decoder_forward.4} parent=11 // pred_region
          %549 = vsyncadd [#allocation3], 0
          %s550 = sshll.u32 %s2, 4
          %s551 = int_to_ptr.hbm [resolvable:$true] %s550
          %s552 = sshll.u32 [#allocation2], 4
          %s553 = int_to_ptr.vmem [resolvable:$true] %s552
          %558 = dma.hbm_to_vmem [thread:$0]  %s551, 3072, %s553, [#allocation3], 192, 192, 12
        $region16: #{beatmap_decoder_forward.4} parent=11 // pred_fallthru
          _
        // Predicated region
        $region17: #{beatmap_decoder_forward.4} parent=11 // pred_check
          %p559 = pneg %p126
        $region18: #{beatmap_decoder_forward.4} parent=11 // pred_check_branch
          %561 = sbr.rel (%p559) target = $region20
        $region19: #{beatmap_decoder_forward.4} parent=11 // pred_region
          _
        $region20: #{beatmap_decoder_forward.4} parent=11 // pred_fallthru
          _
        // Predicated region
        $region21: #{beatmap_decoder_forward.4} parent=11 // pred_check
          %p562 = pneg %p147
        $region22: #{beatmap_decoder_forward.4} parent=11 // pred_check_branch
          %564 = sbr.rel (%p562) target = $region24
        $region23: #{beatmap_decoder_forward.4} parent=11 // pred_region
          %566 = vsyncadd [#allocation5], 0
          %s567 = sshll.u32 %s4, 4
          %s568 = int_to_ptr.hbm [resolvable:$true] %s567
          %s569 = sshll.u32 [#allocation4], 4
          %s570 = int_to_ptr.vmem [resolvable:$true] %s569
          %575 = dma.hbm_to_vmem [thread:$0]  %s568, 1024, %s570, [#allocation5], 64, 64, 4
        $region24: #{beatmap_decoder_forward.4} parent=11 // pred_fallthru
          _
        // Predicated region
        $region25: #{beatmap_decoder_forward.4} parent=11 // pred_check
          %p576 = pneg %p168
        $region26: #{beatmap_decoder_forward.4} parent=11 // pred_check_branch
          %578 = sbr.rel (%p576) target = $region28
        $region27: #{beatmap_decoder_forward.4} parent=11 // pred_region
          _
        $region28: #{beatmap_decoder_forward.4} parent=11 // pred_fallthru
          _
        // Predicated region
        $region29: #{beatmap_decoder_forward.4} parent=11 // pred_check
          %p579 = pneg %p189
        $region30: #{beatmap_decoder_forward.4} parent=11 // pred_check_branch
          %581 = sbr.rel (%p579) target = $region32
        $region31: #{beatmap_decoder_forward.4} parent=11 // pred_region
          _
        $region32: #{beatmap_decoder_forward.4} parent=11 // pred_fallthru
          _
        // Predicated region
        $region33: #{beatmap_decoder_forward.4} parent=11 // pred_check
          %p582 = pneg %p210
        $region34: #{beatmap_decoder_forward.4} parent=11 // pred_check_branch
          %584 = sbr.rel (%p582) target = $region36
        $region35: #{beatmap_decoder_forward.4} parent=11 // pred_region
          _
        $region36: #{beatmap_decoder_forward.4} parent=11 // pred_fallthru
          _
        // Predicated region
        $region37: #{beatmap_decoder_forward.4} parent=11 // pred_check
          %p585 = pneg %p231
        $region38: #{beatmap_decoder_forward.4} parent=11 // pred_check_branch
          %587 = sbr.rel (%p585) target = $region40
        $region39: #{beatmap_decoder_forward.4} parent=11 // pred_region
          %589 = vsyncadd [#allocation5], 0
          %s590 = sshll.u32 %s8, 4
          %s591 = int_to_ptr.hbm [resolvable:$true] %s590
          %s592 = sshll.u32 [#allocation6], 4
          %s593 = int_to_ptr.vmem [resolvable:$true] %s592
          %598 = dma.hbm_to_vmem [thread:$0]  %s591, 1024, %s593, [#allocation5], 64, 64, 4
        $region40: #{beatmap_decoder_forward.4} parent=11 // pred_fallthru
          _
        // Predicated region
        $region41: #{beatmap_decoder_forward.4} parent=11 // pred_check
          %p599 = pneg %p252
        $region42: #{beatmap_decoder_forward.4} parent=11 // pred_check_branch
          %601 = sbr.rel (%p599) target = $region44
        $region43: #{beatmap_decoder_forward.4} parent=11 // pred_region
          _
        $region44: #{beatmap_decoder_forward.4} parent=11 // pred_fallthru
          _
        // Predicated region
        $region45: #{beatmap_decoder_forward.4} parent=11 // pred_check
          %p602 = pneg %p273
        $region46: #{beatmap_decoder_forward.4} parent=11 // pred_check_branch
          %604 = sbr.rel (%p602) target = $region48
        $region47: #{beatmap_decoder_forward.4} parent=11 // pred_region
          %606 = vsyncadd [#allocation8], 0
          %s607 = sshll.u32 %s10, 4
          %s608 = int_to_ptr.hbm [resolvable:$true] %s607
          %s609 = sshll.u32 [#allocation7], 4
          %s610 = int_to_ptr.vmem [resolvable:$true] %s609
          %615 = dma.hbm_to_vmem [thread:$0]  %s608, 2048, %s610, [#allocation8], 128, 128, 8
        $region48: #{beatmap_decoder_forward.4} parent=11 // pred_fallthru
          _
        // Predicated region
        $region49: #{beatmap_decoder_forward.4} parent=11 // pred_check
          %p616 = pneg %p294
        $region50: #{beatmap_decoder_forward.4} parent=11 // pred_check_branch
          %618 = sbr.rel (%p616) target = $region52
        $region51: #{beatmap_decoder_forward.4} parent=11 // pred_region
          _
        $region52: #{beatmap_decoder_forward.4} parent=11 // pred_fallthru
          _
        // Predicated region
        $region53: #{beatmap_decoder_forward.4} parent=11 // pred_check
          %p619 = pneg %p315
        $region54: #{beatmap_decoder_forward.4} parent=11 // pred_check_branch
          %621 = sbr.rel (%p619) target = $region56
        $region55: #{beatmap_decoder_forward.4} parent=11 // pred_region
          %623 = vsyncadd [#allocation8], 0
          %s624 = sshll.u32 %s12, 4
          %s625 = int_to_ptr.hbm [resolvable:$true] %s624
          %s626 = sshll.u32 [#allocation9], 4
          %s627 = int_to_ptr.vmem [resolvable:$true] %s626
          %632 = dma.hbm_to_vmem [thread:$0]  %s625, 1024, %s627, [#allocation8], 64, 64, 4
        $region56: #{beatmap_decoder_forward.4} parent=11 // pred_fallthru
          _
        // Predicated region
        $region57: #{beatmap_decoder_forward.4} parent=11 // pred_check
          %p633 = pneg %p336
        $region58: #{beatmap_decoder_forward.4} parent=11 // pred_check_branch
          %635 = sbr.rel (%p633) target = $region60
        $region59: #{beatmap_decoder_forward.4} parent=11 // pred_region
          _
        $region60: #{beatmap_decoder_forward.4} parent=11 // pred_fallthru
          _
        // Predicated region
        $region61: #{beatmap_decoder_forward.4} parent=11 // pred_check
          %p636 = pneg %p357
        $region62: #{beatmap_decoder_forward.4} parent=11 // pred_check_branch
          %638 = sbr.rel (%p636) target = $region64
        $region63: #{beatmap_decoder_forward.4} parent=11 // pred_region
          _
        $region64: #{beatmap_decoder_forward.4} parent=11 // pred_fallthru
          _
        // Predicated region
        $region65: #{beatmap_decoder_forward.4} parent=11 // pred_check
          %p639 = pneg %p378
        $region66: #{beatmap_decoder_forward.4} parent=11 // pred_check_branch
          %641 = sbr.rel (%p639) target = $region68
        $region67: #{beatmap_decoder_forward.4} parent=11 // pred_region
          _
        $region68: #{beatmap_decoder_forward.4} parent=11 // pred_fallthru
          _
        // Predicated region
        $region69: #{beatmap_decoder_forward.4} parent=11 // pred_check
          %p642 = pneg %p399
        $region70: #{beatmap_decoder_forward.4} parent=11 // pred_check_branch
          %644 = sbr.rel (%p642) target = $region72
        $region71: #{beatmap_decoder_forward.4} parent=11 // pred_region
          %646 = vsyncadd [#allocation11], 0
          %s647 = sshll.u32 %s16, 4
          %s648 = int_to_ptr.hbm [resolvable:$true] %s647
          %s649 = sshll.u32 [#allocation10], 4
          %s650 = int_to_ptr.vmem [resolvable:$true] %s649
          %655 = dma.hbm_to_vmem [thread:$0]  %s648, 2048, %s650, [#allocation11], 128, 128, 8
        $region72: #{beatmap_decoder_forward.4} parent=11 // pred_fallthru
          _
        // Predicated region
        $region73: #{beatmap_decoder_forward.4} parent=11 // pred_check
          %p656 = pneg %p420
        $region74: #{beatmap_decoder_forward.4} parent=11 // pred_check_branch
          %658 = sbr.rel (%p656) target = $region76
        $region75: #{beatmap_decoder_forward.4} parent=11 // pred_region
          _
        $region76: #{beatmap_decoder_forward.4} parent=11 // pred_fallthru
          _
        // Predicated region
        $region77: #{beatmap_decoder_forward.4} parent=11 // pred_check
          %p659 = pneg %p441
        $region78: #{beatmap_decoder_forward.4} parent=11 // pred_check_branch
          %661 = sbr.rel (%p659) target = $region80
        $region79: #{beatmap_decoder_forward.4} parent=11 // pred_region
          %663 = vsyncadd [#allocation11], 0
          %s664 = sshll.u32 %s18, 4
          %s665 = int_to_ptr.hbm [resolvable:$true] %s664
          %s666 = sshll.u32 [#allocation12], 4
          %s667 = int_to_ptr.vmem [resolvable:$true] %s666
          %672 = dma.hbm_to_vmem [thread:$0]  %s665, 2048, %s667, [#allocation11], 64, 64, 4
        $region80: #{beatmap_decoder_forward.4} parent=11 // pred_fallthru
          _
        // Predicated region
        $region81: #{beatmap_decoder_forward.4} parent=11 // pred_check
          %p673 = pneg %p462
        $region82: #{beatmap_decoder_forward.4} parent=11 // pred_check_branch
          %675 = sbr.rel (%p673) target = $region84
        $region83: #{beatmap_decoder_forward.4} parent=11 // pred_region
          _
        $region84: #{beatmap_decoder_forward.4} parent=11 // pred_fallthru
          _
        // Predicated region
        $region85: #{beatmap_decoder_forward.4} parent=11 // pred_check
          %p676 = pneg %p483
        $region86: #{beatmap_decoder_forward.4} parent=11 // pred_check_branch
          %678 = sbr.rel (%p676) target = $region88
        $region87: #{beatmap_decoder_forward.4} parent=11 // pred_region
          _
        $region88: #{beatmap_decoder_forward.4} parent=11 // pred_fallthru
          _
        // Predicated region
        $region89: #{beatmap_decoder_forward.4} parent=11 // pred_check
          %p679 = pneg %p504
        $region90: #{beatmap_decoder_forward.4} parent=11 // pred_check_branch
          %681 = sbr.rel (%p679) target = $region92
        $region91: #{beatmap_decoder_forward.4} parent=11 // pred_region
          _
        $region92: #{beatmap_decoder_forward.4} parent=11 // pred_fallthru
          _
      $region12: #{beatmap_decoder_forward.4} parent=5 // pred_fallthru
        _
      %p682 = scmp.lt.s32.totalorder %s32, 2
      // Predicated region
      $region93: #{beatmap_decoder_forward.4} parent=5 // pred_check
        %p683 = pneg %p682
      $region94: #{beatmap_decoder_forward.4} parent=5 // pred_check_branch
        %685 = sbr.rel (%p683) target = $region96
      $region95: #{beatmap_decoder_forward.4} parent=5 // pred_region
        // Predicated region
        $region97: #{beatmap_decoder_forward.4} parent=95 // pred_check
          %p686 = pneg %p52
        $region98: #{beatmap_decoder_forward.4} parent=95 // pred_check_branch
          %688 = sbr.rel (%p686) target = $region100
        $region99: #{beatmap_decoder_forward.4} parent=95 // pred_region
          %p689 = scmp.lt.s32.totalorder %s32, 1
          %s690 = scalar_select %p689, %s32, 1
          %s691 = smul.addr %s690, 4
          %s692 = scalar_lea.vmem %s0, %s691
        $region100: #{beatmap_decoder_forward.4} parent=95 // pred_fallthru
          _
        // Predicated region
        $region101: #{beatmap_decoder_forward.4} parent=95 // pred_check
          %p693 = pneg %p78
        $region102: #{beatmap_decoder_forward.4} parent=95 // pred_check_branch
          %695 = sbr.rel (%p693) target = $region104
        $region103: #{beatmap_decoder_forward.4} parent=95 // pred_region
          %p696 = scmp.lt.s32.totalorder %s32, 1
          %s697 = scalar_select %p696, %s32, 1
          %s698 = smul.addr %s697, 4
          %s699 = scalar_lea.vmem %s1, %s698
        $region104: #{beatmap_decoder_forward.4} parent=95 // pred_fallthru
          _
      $region96: #{beatmap_decoder_forward.4} parent=5 // pred_fallthru
        _
      %p700 = scmp.le.s32.totalorder 1, %s32
      %p701 = scmp.lt.s32.totalorder %s32, 3
      %p702 = pnand %p700, %p701
      %p703 = pneg %p702
      // Predicated region
      $region105: #{beatmap_decoder_forward.4} parent=5 // pred_check
        _
      $region106: #{beatmap_decoder_forward.4} parent=5 // pred_check_branch
        %705 = sbr.rel (%p702) target = $region108
      $region107: #{beatmap_decoder_forward.4} parent=5 // pred_region
        %s706 = ssub.s32 %s32, 1
        // Predicated region
        $region109: #{beatmap_decoder_forward.4} parent=107 // pred_check
          %p707 = pneg %p105
        $region110: #{beatmap_decoder_forward.4} parent=107 // pred_check_branch
          %709 = sbr.rel (%p707) target = $region112
        $region111: #{beatmap_decoder_forward.4} parent=107 // pred_region
          %711 = dma.done [#allocation3], 3072
        $region112: #{beatmap_decoder_forward.4} parent=107 // pred_fallthru
          _
        // Predicated region
        $region113: #{beatmap_decoder_forward.4} parent=107 // pred_check
          %p712 = pneg %p147
        $region114: #{beatmap_decoder_forward.4} parent=107 // pred_check_branch
          %714 = sbr.rel (%p712) target = $region116
        $region115: #{beatmap_decoder_forward.4} parent=107 // pred_region
          %716 = dma.done [#allocation5], 1024
        $region116: #{beatmap_decoder_forward.4} parent=107 // pred_fallthru
          _
        // Predicated region
        $region117: #{beatmap_decoder_forward.4} parent=107 // pred_check
          %p717 = pneg %p231
        $region118: #{beatmap_decoder_forward.4} parent=107 // pred_check_branch
          %719 = sbr.rel (%p717) target = $region120
        $region119: #{beatmap_decoder_forward.4} parent=107 // pred_region
          %721 = dma.done [#allocation5], 1024
        $region120: #{beatmap_decoder_forward.4} parent=107 // pred_fallthru
          _
        // Predicated region
        $region121: #{beatmap_decoder_forward.4} parent=107 // pred_check
          %p722 = pneg %p273
        $region122: #{beatmap_decoder_forward.4} parent=107 // pred_check_branch
          %724 = sbr.rel (%p722) target = $region124
        $region123: #{beatmap_decoder_forward.4} parent=107 // pred_region
          %726 = dma.done [#allocation8], 2048
        $region124: #{beatmap_decoder_forward.4} parent=107 // pred_fallthru
          _
        // Predicated region
        $region125: #{beatmap_decoder_forward.4} parent=107 // pred_check
          %p727 = pneg %p315
        $region126: #{beatmap_decoder_forward.4} parent=107 // pred_check_branch
          %729 = sbr.rel (%p727) target = $region128
        $region127: #{beatmap_decoder_forward.4} parent=107 // pred_region
          %731 = dma.done [#allocation8], 1024
        $region128: #{beatmap_decoder_forward.4} parent=107 // pred_fallthru
          _
        // Predicated region
        $region129: #{beatmap_decoder_forward.4} parent=107 // pred_check
          %p732 = pneg %p399
        $region130: #{beatmap_decoder_forward.4} parent=107 // pred_check_branch
          %734 = sbr.rel (%p732) target = $region132
        $region131: #{beatmap_decoder_forward.4} parent=107 // pred_region
          %736 = dma.done [#allocation11], 2048
        $region132: #{beatmap_decoder_forward.4} parent=107 // pred_fallthru
          _
        // Predicated region
        $region133: #{beatmap_decoder_forward.4} parent=107 // pred_check
          %p737 = pneg %p441
        $region134: #{beatmap_decoder_forward.4} parent=107 // pred_check_branch
          %739 = sbr.rel (%p737) target = $region136
        $region135: #{beatmap_decoder_forward.4} parent=107 // pred_region
          %741 = dma.done [#allocation11], 2048
        $region136: #{beatmap_decoder_forward.4} parent=107 // pred_fallthru
          _
        %p742 = scmp.lt.s32.totalorder %s37, 1
        %s743 = scalar_select %p742, %s37, 1
        %s744 = smul.addr %s743, 4
        %s745 = scalar_lea.vmem %s0, %s744
        %p746 = pneg %p58
        %p747 = pneg %p55
        %p748 = scmp.lt.s32.totalorder %s37, 1
        %s749 = scalar_select %p748, %s37, 1
        %s750 = smul.addr %s749, 4
        %s751 = scalar_lea.vmem %s1, %s750
        %p752 = pneg %p84
        %p753 = pneg %p81
        %p754 = pneg %p105
        %p755 = pneg %p102
        %p756 = pneg %p126
        %p757 = pneg %p123
        %p758 = pneg %p147
        %p759 = pneg %p144
        %p760 = pneg %p168
        %p761 = pneg %p165
        %p762 = pneg %p189
        %p763 = pneg %p186
        %p764 = pneg %p210
        %p765 = pneg %p207
        %p766 = pneg %p231
        %p767 = pneg %p228
        %p768 = pneg %p252
        %p769 = pneg %p249
        %p770 = pneg %p273
        %p771 = pneg %p270
        %p772 = pneg %p294
        %p773 = pneg %p291
        %p774 = pneg %p315
        %p775 = pneg %p312
        %p776 = pneg %p336
        %p777 = pneg %p333
        %p778 = pneg %p357
        %p779 = pneg %p354
        %p780 = pneg %p378
        %p781 = pneg %p375
        %p782 = pneg %p399
        %p783 = pneg %p396
        %p784 = pneg %p420
        %p785 = pneg %p417
        %p786 = pneg %p441
        %p787 = pneg %p438
        %p788 = pneg %p462
        %p789 = pneg %p459
        %p790 = pneg %p483
        %p791 = pneg %p480
        %p792 = pneg %p504
        %p793 = pneg %p501
        %p794 = pneg %p530
        %p795 = pneg %p527
        %p796 = scmp.lt.s32.totalorder %s37, 1
        %s797 = scalar_select %p796, %s37, 1
        %s798 = smul.addr %s797, 4
        %s799 = scalar_lea.vmem %s22, %s798
        %p800 = scmp.lt.s32.totalorder %s37, 1
        %s801 = scalar_select %p800, %s37, 1
        %s802 = smul.addr %s801, 4
        %s803 = scalar_lea.vmem %s0, %s802
        %p804 = scmp.lt.s32.totalorder %s37, 1
        %s805 = scalar_select %p804, %s37, 1
        %s806 = smul.addr %s805, 4
        %s807 = scalar_lea.vmem %s1, %s806
        %p808 = scmp.lt.s32.totalorder %s37, 1
        %s809 = scalar_select %p808, %s37, 1
        %s810 = smul.addr %s809, 4
        %s811 = scalar_lea.vmem %s22, %s810
        %v813 = vld [vmem:[%s803] sm:$0xf]
        %v814 = vld [vmem:[%s807] sm:$0xf]
        %v815 = vld [vmem:[#allocation2] sm:$0xff]
        %v816 = vld [vmem:[#allocation2 + $0x8] sm:$0xf]
        %v817 = vld [vmem:[#allocation2 + $0xc] sm:$0xff]
        %v818 = vld [vmem:[#allocation2 + $0x14] sm:$0xf]
        %v819 = vld [vmem:[#allocation2 + $0x18] sm:$0xff]
        %v820 = vld [vmem:[#allocation2 + $0x20] sm:$0xf]
        %v821 = vld [vmem:[#allocation2 + $0x24] sm:$0xff]
        %v822 = vld [vmem:[#allocation2 + $0x2c] sm:$0xf]
        %v823 = vld [vmem:[#allocation2 + $0x30] sm:$0xff]
        %v824 = vld [vmem:[#allocation2 + $0x38] sm:$0xf]
        %v825 = vld [vmem:[#allocation2 + $0x3c] sm:$0xff]
        %v826 = vld [vmem:[#allocation2 + $0x44] sm:$0xf]
        %v827 = vld [vmem:[#allocation2 + $0x48] sm:$0xff]
        %v828 = vld [vmem:[#allocation2 + $0x50] sm:$0xf]
        %v829 = vld [vmem:[#allocation2 + $0x54] sm:$0xff]
        %v830 = vld [vmem:[#allocation2 + $0x5c] sm:$0xf]
        %v831 = vld [vmem:[#allocation2 + $0x60] sm:$0xff]
        %v832 = vld [vmem:[#allocation2 + $0x68] sm:$0xf]
        %v833 = vld [vmem:[#allocation2 + $0x6c] sm:$0xff]
        %v834 = vld [vmem:[#allocation2 + $0x74] sm:$0xf]
        %v835 = vld [vmem:[#allocation2 + $0x78] sm:$0xff]
        %v836 = vld [vmem:[#allocation2 + $0x80] sm:$0xf]
        %v837 = vld [vmem:[#allocation2 + $0x84] sm:$0xff]
        %v838 = vld [vmem:[#allocation2 + $0x8c] sm:$0xf]
        %v839 = vld [vmem:[#allocation2 + $0x90] sm:$0xff]
        %v840 = vld [vmem:[#allocation2 + $0x98] sm:$0xf]
        %v841 = vld [vmem:[#allocation2 + $0x9c] sm:$0xff]
        %v842 = vld [vmem:[#allocation2 + $0xa4] sm:$0xf]
        %v843 = vld [vmem:[#allocation2 + $0xa8] sm:$0xff]
        %v844 = vld [vmem:[#allocation2 + $0xb0] sm:$0xf]
        %v845 = vld [vmem:[#allocation2 + $0xb4] sm:$0xff]
        %v846 = vld [vmem:[#allocation2 + $0xbc] sm:$0xf]
        %v847 = vld [vmem:[%s3] sm:$0x7]
        %v849 = vperm.slane %v847, 0
        %v850 = vperm.slane %v847, 1
        %v851 = vperm.slane %v847, 2
        %v887 = vunpack.c.l.b16 %v815
        %v888 = vunpack.c.h.b16 %v815
        %v889 = vunpack.c.l.b16 %v816
        %v890 = vunpack.c.l.b16 %v817
        %v891 = vunpack.c.h.b16 %v817
        %v892 = vunpack.c.l.b16 %v818
        %v893 = vunpack.c.l.b16 %v819
        %v894 = vunpack.c.h.b16 %v819
        %v895 = vunpack.c.l.b16 %v820
        %v896 = vunpack.c.l.b16 %v821
        %v897 = vunpack.c.h.b16 %v821
        %v898 = vunpack.c.l.b16 %v822
        %v899 = vunpack.c.l.b16 %v823
        %v900 = vunpack.c.h.b16 %v823
        %v901 = vunpack.c.l.b16 %v824
        %v902 = vunpack.c.l.b16 %v825
        %v903 = vunpack.c.h.b16 %v825
        %v904 = vunpack.c.l.b16 %v826
        %v905 = vunpack.c.l.b16 %v827
        %v906 = vunpack.c.h.b16 %v827
        %v907 = vunpack.c.l.b16 %v828
        %v908 = vunpack.c.l.b16 %v829
        %v909 = vunpack.c.h.b16 %v829
        %v910 = vunpack.c.l.b16 %v830
        %v911 = vunpack.c.l.b16 %v831
        %v912 = vunpack.c.h.b16 %v831
        %v913 = vunpack.c.l.b16 %v832
        %v914 = vunpack.c.l.b16 %v833
        %v915 = vunpack.c.h.b16 %v833
        %v916 = vunpack.c.l.b16 %v834
        %v917 = vunpack.c.l.b16 %v835
        %v918 = vunpack.c.h.b16 %v835
        %v919 = vunpack.c.l.b16 %v836
        %v920 = vunpack.c.l.b16 %v837
        %v921 = vunpack.c.h.b16 %v837
        %v922 = vunpack.c.l.b16 %v838
        %v923 = vunpack.c.l.b16 %v839
        %v924 = vunpack.c.h.b16 %v839
        %v925 = vunpack.c.l.b16 %v840
        %v926 = vunpack.c.l.b16 %v841
        %v927 = vunpack.c.h.b16 %v841
        %v928 = vunpack.c.l.b16 %v842
        %v929 = vunpack.c.l.b16 %v843
        %v930 = vunpack.c.h.b16 %v843
        %v931 = vunpack.c.l.b16 %v844
        %v932 = vunpack.c.l.b16 %v845
        %v933 = vunpack.c.h.b16 %v845
        %v934 = vunpack.c.l.b16 %v846
        %v935 = vpack.c.b16 %v890, %v887
        %v936 = vpack.c.b16 %v891, %v888
        %v937 = vpack.c.b16 %v892, %v889
        %v938 = vpack.c.b16 %v896, %v893
        %v939 = vpack.c.b16 %v897, %v894
        %v940 = vpack.c.b16 %v898, %v895
        %v941 = vpack.c.b16 %v902, %v899
        %v942 = vpack.c.b16 %v903, %v900
        %v943 = vpack.c.b16 %v904, %v901
        %v944 = vpack.c.b16 %v908, %v905
        %v945 = vpack.c.b16 %v909, %v906
        %v946 = vpack.c.b16 %v910, %v907
        %v947 = vpack.c.b16 %v914, %v911
        %v948 = vpack.c.b16 %v915, %v912
        %v949 = vpack.c.b16 %v916, %v913
        %v950 = vpack.c.b16 %v920, %v917
        %v951 = vpack.c.b16 %v921, %v918
        %v952 = vpack.c.b16 %v922, %v919
        %v953 = vpack.c.b16 %v926, %v923
        %v954 = vpack.c.b16 %v927, %v924
        %v955 = vpack.c.b16 %v928, %v925
        %v956 = vpack.c.b16 %v932, %v929
        %v957 = vpack.c.b16 %v933, %v930
        %v958 = vpack.c.b16 %v934, %v931
        %983 = vmatpush.bf16.msra.mxu0 %v956
        %984 = vmatpush.bf16.msra.mxu0 %v953
        %985 = vmatpush.bf16.msra.mxu0 %v950
        %986 = vmatpush.bf16.msra.mxu0 %v947
        %987 = vmatpush.bf16.msra.mxu0 %v944
        %988 = vmatpush.bf16.msra.mxu0 %v941
        %989 = vmatpush.bf16.msra.mxu0 %v938
        %990 = vmatpush.bf16.msra.mxu0 %v935
        %991 = vmatmul.bf16.gmra.mxu0 %v813
        %v992 = vpop.f32.mrf.mxu0
        %v993 = vadd.f32 %v849, %v992
        %v994 = vpop.f32.mrf.mxu0
        %995 = vdwg.mxu0
        %996 = vmatpush.bf16.msra.mxu0 %v957
        %997 = vmatpush.bf16.msra.mxu0 %v954
        %998 = vmatpush.bf16.msra.mxu0 %v951
        %999 = vmatpush.bf16.msra.mxu0 %v948
        %1000 = vmatpush.bf16.msra.mxu0 %v945
        %1001 = vmatpush.bf16.msra.mxu0 %v942
        %1002 = vmatpush.bf16.msra.mxu0 %v939
        %1003 = vmatpush.bf16.msra.mxu0 %v936
        %1004 = vmatmul.bf16.gmra.mxu0 %v813
        %v1005 = vpop.f32.mrf.mxu0
        %v1006 = vadd.f32 %v850, %v1005
        %v1007 = vpop.f32.mrf.mxu0
        %1008 = vdwg.mxu0
        %1009 = vmatpush.bf16.msra.mxu0 %v958
        %1010 = vmatpush.bf16.msra.mxu0 %v955
        %1011 = vmatpush.bf16.msra.mxu0 %v952
        %1012 = vmatpush.bf16.msra.mxu0 %v949
        %1013 = vmatpush.bf16.msra.mxu0 %v946
        %1014 = vmatpush.bf16.msra.mxu0 %v943
        %1015 = vmatpush.bf16.msra.mxu0 %v940
        %1016 = vmatpush.bf16.msra.mxu0 %v937
        %1017 = vmatmul.bf16.gmra.mxu0 %v813
        %v1018 = vpop.f32.mrf.mxu0
        %v1019 = vadd.f32 %v851, %v1018
        %v1020 = vpop.f32.mrf.mxu0
        %1021 = vdwg.mxu0
        %v1022 = vpack.c.bf16 %v1006, %v993
        %v1023 = vpack.c.bf16 %v1019, %v1019
        %1025 = vrot.lane.b32.xlu0 %v1022, 96
        %v1026 = vpop.permute.xlu0 %1025
        %1027 = vrot.lane.b32.xlu0 %v1022, 64
        %v1028 = vpop.permute.xlu0 %1027
        %1029 = vrot.lane.b32.xlu0 %v1022, 32
        %v1030 = vpop.permute.xlu0 %1029
        %v1033 = vpack.i.b16 %v1026, %v1022
        %v1034 = vshrl.u32 %v1022, 16
        %v1035 = vshrl.u32 %v1026, 16
        %v1036 = vpack.i.b16 %v1035, %v1034
        %v1039 = vpack.i.b16 %v1030, %v1028
        %v1040 = vshrl.u32 %v1028, 16
        %v1041 = vshrl.u32 %v1030, 16
        %v1042 = vpack.i.b16 %v1041, %v1040
        %v1045 = vunpack.c.l.s4 1983009808
        %v1046 = vunpack.c.0.s8 %v1045
        %v1047 = vperm.slane %v1033, %v1046
        %v1050 = vunpack.c.l.s4 1983009808
        %v1051 = vunpack.c.0.s8 %v1050
        %v1052 = vperm.slane %v1039, %v1051
        %v1053 = vrot.slane %v1052, 4
        %vm1054 = vcmask 1047556
        %v1055 = vsel %vm1054, %v1053, %v1047
        %v1056 = vrot.slane %v1047, 4
        %v1057 = vsel %vm1054, %v1052, %v1056
        %v1059 = vunpack.c.l.s4 1934713408
        %v1060 = vunpack.c.0.s8 %v1059
        %v1061 = vperm.slane %v1055, %v1060
        %v1063 = vunpack.c.l.s4 1934713408
        %v1064 = vunpack.c.0.s8 %v1063
        %v1065 = vperm.slane %v1057, %v1064
        %v1066 = vrot.slane %v1061, 4
        %v1067 = vsel %vm1054, 0, %v1066
        %v1068 = vrot.slane %v1065, 4
        %v1069 = vsel %vm1054, 0, %v1068
        %v1072 = vunpack.c.l.s4 1983009808
        %v1073 = vunpack.c.0.s8 %v1072
        %v1074 = vperm.slane %v1036, %v1073
        %v1077 = vunpack.c.l.s4 1983009808
        %v1078 = vunpack.c.0.s8 %v1077
        %v1079 = vperm.slane %v1042, %v1078
        %v1080 = vrot.slane %v1079, 4
        %v1081 = vsel %vm1054, %v1080, %v1074
        %v1082 = vrot.slane %v1074, 4
        %v1083 = vsel %vm1054, %v1079, %v1082
        %v1085 = vunpack.c.l.s4 1934713408
        %v1086 = vunpack.c.0.s8 %v1085
        %v1087 = vperm.slane %v1081, %v1086
        %v1089 = vunpack.c.l.s4 1934713408
        %v1090 = vunpack.c.0.s8 %v1089
        %v1091 = vperm.slane %v1083, %v1090
        %v1092 = vrot.slane %v1087, 4
        %v1093 = vsel %vm1054, 0, %v1092
        %v1094 = vrot.slane %v1091, 4
        %v1095 = vsel %vm1054, 0, %v1094
        %v1096 = vsel %vm1054, %v1068, %v1061
        %v1098 = vunpack.c.l.s4 1983009808
        %v1099 = vunpack.c.0.s8 %v1098
        %v1100 = vperm.slane %v1096, %v1099
        %v1101 = vrot.slane %v1069, 4
        %v1102 = vsel %vm1054, %v1101, %v1067
        %v1104 = vunpack.c.l.s4 1983009808
        %v1105 = vunpack.c.0.s8 %v1104
        %v1106 = vperm.slane %v1102, %v1105
        %v1107 = vrot.slane %v1106, 4
        %v1108 = vsel %vm1054, %v1107, %v1100
        %v1110 = vunpack.c.l.s4 1934713408
        %v1111 = vunpack.c.0.s8 %v1110
        %v1112 = vperm.slane %v1108, %v1111
        %v1113 = vrot.slane %v1112, 4
        %v1114 = vsel %vm1054, 0, %v1113
        %v1115 = vsel %vm1054, %v1094, %v1087
        %v1117 = vunpack.c.l.s4 1983009808
        %v1118 = vunpack.c.0.s8 %v1117
        %v1119 = vperm.slane %v1115, %v1118
        %v1120 = vrot.slane %v1095, 4
        %v1121 = vsel %vm1054, %v1120, %v1093
        %v1123 = vunpack.c.l.s4 1983009808
        %v1124 = vunpack.c.0.s8 %v1123
        %v1125 = vperm.slane %v1121, %v1124
        %v1126 = vrot.slane %v1125, 4
        %v1127 = vsel %vm1054, %v1126, %v1119
        %v1129 = vunpack.c.l.s4 1934713408
        %v1130 = vunpack.c.0.s8 %v1129
        %v1131 = vperm.slane %v1127, %v1130
        %v1132 = vrot.slane %v1131, 4
        %v1133 = vsel %vm1054, 0, %v1132
        %v1136 = vpack.i.b16 %v1131, %v1112
        %v1137 = vshrl.u32 %v1112, 16
        %v1138 = vshrl.u32 %v1131, 16
        %v1139 = vpack.i.b16 %v1138, %v1137
        %v1142 = vpack.i.b16 %v1133, %v1114
        %v1143 = vshrl.u32 %v1114, 16
        %v1144 = vshrl.u32 %v1133, 16
        %v1145 = vpack.i.b16 %v1144, %v1143
        %v1146 = vrot.slane %v1022, 4
        %v1147 = vrot.slane %v1026, 4
        %v1148 = vrot.slane %v1028, 4
        %v1149 = vrot.slane %v1030, 4
        %v1152 = vpack.i.b16 %v1147, %v1146
        %v1153 = vshrl.u32 %v1146, 16
        %v1154 = vshrl.u32 %v1147, 16
        %v1155 = vpack.i.b16 %v1154, %v1153
        %v1158 = vpack.i.b16 %v1149, %v1148
        %v1159 = vshrl.u32 %v1148, 16
        %v1160 = vshrl.u32 %v1149, 16
        %v1161 = vpack.i.b16 %v1160, %v1159
        %v1164 = vunpack.c.l.s4 1983009808
        %v1165 = vunpack.c.0.s8 %v1164
        %v1166 = vperm.slane %v1152, %v1165
        %v1169 = vunpack.c.l.s4 1983009808
        %v1170 = vunpack.c.0.s8 %v1169
        %v1171 = vperm.slane %v1158, %v1170
        %v1172 = vrot.slane %v1171, 4
        %v1173 = vsel %vm1054, %v1172, %v1166
        %v1174 = vrot.slane %v1166, 4
        %v1175 = vsel %vm1054, %v1171, %v1174
        %v1177 = vunpack.c.l.s4 1934713408
        %v1178 = vunpack.c.0.s8 %v1177
        %v1179 = vperm.slane %v1173, %v1178
        %v1181 = vunpack.c.l.s4 1934713408
        %v1182 = vunpack.c.0.s8 %v1181
        %v1183 = vperm.slane %v1175, %v1182
        %v1184 = vrot.slane %v1179, 4
        %v1185 = vsel %vm1054, 0, %v1184
        %v1186 = vrot.slane %v1183, 4
        %v1187 = vsel %vm1054, 0, %v1186
        %v1190 = vunpack.c.l.s4 1983009808
        %v1191 = vunpack.c.0.s8 %v1190
        %v1192 = vperm.slane %v1155, %v1191
        %v1195 = vunpack.c.l.s4 1983009808
        %v1196 = vunpack.c.0.s8 %v1195
        %v1197 = vperm.slane %v1161, %v1196
        %v1198 = vrot.slane %v1197, 4
        %v1199 = vsel %vm1054, %v1198, %v1192
        %v1200 = vrot.slane %v1192, 4
        %v1201 = vsel %vm1054, %v1197, %v1200
        %v1203 = vunpack.c.l.s4 1934713408
        %v1204 = vunpack.c.0.s8 %v1203
        %v1205 = vperm.slane %v1199, %v1204
        %v1207 = vunpack.c.l.s4 1934713408
        %v1208 = vunpack.c.0.s8 %v1207
        %v1209 = vperm.slane %v1201, %v1208
        %v1210 = vrot.slane %v1205, 4
        %v1211 = vsel %vm1054, 0, %v1210
        %v1212 = vrot.slane %v1209, 4
        %v1213 = vsel %vm1054, 0, %v1212
        %v1214 = vsel %vm1054, %v1186, %v1179
        %v1216 = vunpack.c.l.s4 1983009808
        %v1217 = vunpack.c.0.s8 %v1216
        %v1218 = vperm.slane %v1214, %v1217
        %v1219 = vrot.slane %v1187, 4
        %v1220 = vsel %vm1054, %v1219, %v1185
        %v1222 = vunpack.c.l.s4 1983009808
        %v1223 = vunpack.c.0.s8 %v1222
        %v1224 = vperm.slane %v1220, %v1223
        %v1225 = vrot.slane %v1224, 4
        %v1226 = vsel %vm1054, %v1225, %v1218
        %v1228 = vunpack.c.l.s4 1934713408
        %v1229 = vunpack.c.0.s8 %v1228
        %v1230 = vperm.slane %v1226, %v1229
        %v1231 = vrot.slane %v1230, 4
        %v1232 = vsel %vm1054, 0, %v1231
        %v1233 = vsel %vm1054, %v1212, %v1205
        %v1235 = vunpack.c.l.s4 1983009808
        %v1236 = vunpack.c.0.s8 %v1235
        %v1237 = vperm.slane %v1233, %v1236
        %v1238 = vrot.slane %v1213, 4
        %v1239 = vsel %vm1054, %v1238, %v1211
        %v1241 = vunpack.c.l.s4 1983009808
        %v1242 = vunpack.c.0.s8 %v1241
        %v1243 = vperm.slane %v1239, %v1242
        %v1244 = vrot.slane %v1243, 4
        %v1245 = vsel %vm1054, %v1244, %v1237
        %v1247 = vunpack.c.l.s4 1934713408
        %v1248 = vunpack.c.0.s8 %v1247
        %v1249 = vperm.slane %v1245, %v1248
        %v1250 = vrot.slane %v1249, 4
        %v1251 = vsel %vm1054, 0, %v1250
        %v1254 = vpack.i.b16 %v1249, %v1230
        %v1255 = vshrl.u32 %v1230, 16
        %v1256 = vshrl.u32 %v1249, 16
        %v1257 = vpack.i.b16 %v1256, %v1255
        %v1260 = vpack.i.b16 %v1251, %v1232
        %v1261 = vshrl.u32 %v1232, 16
        %v1262 = vshrl.u32 %v1251, 16
        %v1263 = vpack.i.b16 %v1262, %v1261
        %1265 = vrot.lane.b32.xlu0 %v1023, 96
        %v1266 = vpop.permute.xlu0 %1265
        %1267 = vrot.lane.b32.xlu0 %v1023, 64
        %v1268 = vpop.permute.xlu0 %1267
        %1269 = vrot.lane.b32.xlu0 %v1023, 32
        %v1270 = vpop.permute.xlu0 %1269
        %v1273 = vpack.i.b16 %v1266, %v1023
        %v1274 = vshrl.u32 %v1023, 16
        %v1275 = vshrl.u32 %v1266, 16
        %v1276 = vpack.i.b16 %v1275, %v1274
        %v1279 = vpack.i.b16 %v1270, %v1268
        %v1280 = vshrl.u32 %v1268, 16
        %v1281 = vshrl.u32 %v1270, 16
        %v1282 = vpack.i.b16 %v1281, %v1280
        %v1285 = vunpack.c.l.s4 1983009808
        %v1286 = vunpack.c.0.s8 %v1285
        %v1287 = vperm.slane %v1273, %v1286
        %v1290 = vunpack.c.l.s4 1983009808
        %v1291 = vunpack.c.0.s8 %v1290
        %v1292 = vperm.slane %v1279, %v1291
        %v1293 = vrot.slane %v1292, 4
        %v1294 = vsel %vm1054, %v1293, %v1287
        %v1295 = vrot.slane %v1287, 4
        %v1296 = vsel %vm1054, %v1292, %v1295
        %v1298 = vunpack.c.l.s4 1934713408
        %v1299 = vunpack.c.0.s8 %v1298
        %v1300 = vperm.slane %v1294, %v1299
        %v1302 = vunpack.c.l.s4 1934713408
        %v1303 = vunpack.c.0.s8 %v1302
        %v1304 = vperm.slane %v1296, %v1303
        %v1305 = vrot.slane %v1300, 4
        %v1306 = vsel %vm1054, 0, %v1305
        %v1307 = vrot.slane %v1304, 4
        %v1308 = vsel %vm1054, 0, %v1307
        %v1311 = vunpack.c.l.s4 1983009808
        %v1312 = vunpack.c.0.s8 %v1311
        %v1313 = vperm.slane %v1276, %v1312
        %v1316 = vunpack.c.l.s4 1983009808
        %v1317 = vunpack.c.0.s8 %v1316
        %v1318 = vperm.slane %v1282, %v1317
        %v1319 = vrot.slane %v1318, 4
        %v1320 = vsel %vm1054, %v1319, %v1313
        %v1321 = vrot.slane %v1313, 4
        %v1322 = vsel %vm1054, %v1318, %v1321
        %v1324 = vunpack.c.l.s4 1934713408
        %v1325 = vunpack.c.0.s8 %v1324
        %v1326 = vperm.slane %v1320, %v1325
        %v1328 = vunpack.c.l.s4 1934713408
        %v1329 = vunpack.c.0.s8 %v1328
        %v1330 = vperm.slane %v1322, %v1329
        %v1331 = vrot.slane %v1326, 4
        %v1332 = vsel %vm1054, 0, %v1331
        %v1333 = vrot.slane %v1330, 4
        %v1334 = vsel %vm1054, 0, %v1333
        %v1335 = vsel %vm1054, %v1307, %v1300
        %v1337 = vunpack.c.l.s4 1983009808
        %v1338 = vunpack.c.0.s8 %v1337
        %v1339 = vperm.slane %v1335, %v1338
        %v1340 = vrot.slane %v1308, 4
        %v1341 = vsel %vm1054, %v1340, %v1306
        %v1343 = vunpack.c.l.s4 1983009808
        %v1344 = vunpack.c.0.s8 %v1343
        %v1345 = vperm.slane %v1341, %v1344
        %v1346 = vrot.slane %v1345, 4
        %v1347 = vsel %vm1054, %v1346, %v1339
        %v1349 = vunpack.c.l.s4 1934713408
        %v1350 = vunpack.c.0.s8 %v1349
        %v1351 = vperm.slane %v1347, %v1350
        %v1352 = vrot.slane %v1351, 4
        %v1353 = vsel %vm1054, 0, %v1352
        %v1354 = vsel %vm1054, %v1333, %v1326
        %v1356 = vunpack.c.l.s4 1983009808
        %v1357 = vunpack.c.0.s8 %v1356
        %v1358 = vperm.slane %v1354, %v1357
        %v1359 = vrot.slane %v1334, 4
        %v1360 = vsel %vm1054, %v1359, %v1332
        %v1362 = vunpack.c.l.s4 1983009808
        %v1363 = vunpack.c.0.s8 %v1362
        %v1364 = vperm.slane %v1360, %v1363
        %v1365 = vrot.slane %v1364, 4
        %v1366 = vsel %vm1054, %v1365, %v1358
        %v1368 = vunpack.c.l.s4 1934713408
        %v1369 = vunpack.c.0.s8 %v1368
        %v1370 = vperm.slane %v1366, %v1369
        %v1371 = vrot.slane %v1370, 4
        %v1372 = vsel %vm1054, 0, %v1371
        %v1375 = vpack.i.b16 %v1370, %v1351
        %v1376 = vshrl.u32 %v1351, 16
        %v1377 = vshrl.u32 %v1370, 16
        %v1378 = vpack.i.b16 %v1377, %v1376
        %v1381 = vpack.i.b16 %v1372, %v1353
        %v1382 = vshrl.u32 %v1353, 16
        %v1383 = vshrl.u32 %v1372, 16
        %v1384 = vpack.i.b16 %v1383, %v1382
        %vm1385 = vcmask 261120
        %v1387 = vsel %vm1385, %v1136, 0
        %v1390 = vsel %vm1385, %v1254, 0
        %1392 = vmatpush.bf16.xpose.msra.mxu0 0
        %1393 = vmatpush.bf16.xpose.msra.mxu0 0
        %1394 = vmatpush.bf16.xpose.msra.mxu0 0
        %1395 = vmatpush.bf16.xpose.msra.mxu0 0
        %1396 = vmatpush.bf16.xpose.msra.mxu0 0
        %1397 = vmatpush.bf16.xpose.msra.mxu0 0
        %1398 = vmatpush.bf16.xpose.msra.mxu0 0
        %1399 = vmatpush.bf16.xpose.msra.mxu0 %v1390
        %1400 = vmatmul.bf16.gmra.mxu0 %v1387
        %v1401 = vpop.f32.mrf.mxu0
        %v1402 = vadd.f32 0.0, %v1401
        %v1403 = vpop.f32.mrf.mxu0
        %1404 = vdwg.mxu0
        %v1406 = vsel %vm1385, %v1139, 0
        %v1409 = vsel %vm1385, %v1257, 0
        %1411 = vmatpush.bf16.xpose.msra.mxu0 0
        %1412 = vmatpush.bf16.xpose.msra.mxu0 0
        %1413 = vmatpush.bf16.xpose.msra.mxu0 0
        %1414 = vmatpush.bf16.xpose.msra.mxu0 0
        %1415 = vmatpush.bf16.xpose.msra.mxu0 0
        %1416 = vmatpush.bf16.xpose.msra.mxu0 0
        %1417 = vmatpush.bf16.xpose.msra.mxu0 0
        %1418 = vmatpush.bf16.xpose.msra.mxu0 %v1409
        %1419 = vmatmul.bf16.gmra.mxu0 %v1406
        %v1420 = vpop.f32.mrf.mxu0
        %v1421 = vadd.f32 0.0, %v1420
        %v1422 = vpop.f32.mrf.mxu0
        %1423 = vdwg.mxu0
        %v1425 = vsel %vm1385, %v1142, 0
        %v1428 = vsel %vm1385, %v1260, 0
        %1430 = vmatpush.bf16.xpose.msra.mxu0 0
        %1431 = vmatpush.bf16.xpose.msra.mxu0 0
        %1432 = vmatpush.bf16.xpose.msra.mxu0 0
        %1433 = vmatpush.bf16.xpose.msra.mxu0 0
        %1434 = vmatpush.bf16.xpose.msra.mxu0 0
        %1435 = vmatpush.bf16.xpose.msra.mxu0 0
        %1436 = vmatpush.bf16.xpose.msra.mxu0 0
        %1437 = vmatpush.bf16.xpose.msra.mxu0 %v1428
        %1438 = vmatmul.bf16.gmra.mxu0 %v1425
        %v1439 = vpop.f32.mrf.mxu0
        %v1440 = vadd.f32 0.0, %v1439
        %v1441 = vpop.f32.mrf.mxu0
        %1442 = vdwg.mxu0
        %v1444 = vsel %vm1385, %v1145, 0
        %v1447 = vsel %vm1385, %v1263, 0
        %1449 = vmatpush.bf16.xpose.msra.mxu0 0
        %1450 = vmatpush.bf16.xpose.msra.mxu0 0
        %1451 = vmatpush.bf16.xpose.msra.mxu0 0
        %1452 = vmatpush.bf16.xpose.msra.mxu0 0
        %1453 = vmatpush.bf16.xpose.msra.mxu0 0
        %1454 = vmatpush.bf16.xpose.msra.mxu0 0
        %1455 = vmatpush.bf16.xpose.msra.mxu0 0
        %1456 = vmatpush.bf16.xpose.msra.mxu0 %v1447
        %1457 = vmatmul.bf16.gmra.mxu0 %v1444
        %v1458 = vpop.f32.mrf.mxu0
        %v1459 = vadd.f32 0.0, %v1458
        %v1460 = vpop.f32.mrf.mxu0
        %1461 = vdwg.mxu0
        %v1462 = vmul.f32 %v1402, 0.17677669
        %v1463 = vmul.f32 %v1421, 0.17677669
        %v1464 = vmul.f32 %v1440, 0.17677669
        %v1465 = vmul.f32 %v1459, 0.17677669
        %v1466 = vlaneseq
        %v1467 = vshrl.u32 %v1466, 7
        %v1468 = vlaneseq
        %v1469 = vand.u32 %v1468, 127
        %vm1470 = vcmp.le.s32.totalorder %v1469, %v1467
        %v1471 = vsel %vm1470, 1, 0
        %vm1472 = vcmp.eq.s32.totalorder %v1471, 1
        %v1473 = vsel %vm1472, %v1462, -1e+30
        %v1474 = vsel %vm1472, %v1463, -1e+30
        %v1475 = vsel %vm1472, %v1464, -1e+30
        %v1476 = vsel %vm1472, %v1465, -1e+30
        %vm1477 = vcmask 64512
        %v1478 = vsel %vm1477, %v1473, -inf
        %1479 = vmax.xlane.f32.xlu0 %v1478
        %v1480 = vpop.xlane.xlu0 %1479
        %v1481 = vsel %vm1477, %v1474, -inf
        %1482 = vmax.xlane.f32.xlu0 %v1481
        %v1483 = vpop.xlane.xlu0 %1482
        %v1484 = vsel %vm1477, %v1475, -inf
        %1485 = vmax.xlane.f32.xlu0 %v1484
        %v1486 = vpop.xlane.xlu0 %1485
        %v1487 = vsel %vm1477, %v1476, -inf
        %1488 = vmax.xlane.f32.xlu0 %v1487
        %v1489 = vpop.xlane.xlu0 %1488
        %v1490 = vsub.f32 %v1473, %v1480
        %v1491 = vsub.f32 %v1474, %v1483
        %v1492 = vsub.f32 %v1475, %v1486
        %v1493 = vsub.f32 %v1476, %v1489
        %v1494 = vmul.f32 %v1490, 1.442695
        %v1495 = vpow.pop %v1494
        %v1496 = vmul.f32 %v1491, 1.442695
        %v1497 = vpow.pop %v1496
        %v1498 = vmul.f32 %v1492, 1.442695
        %v1499 = vpow.pop %v1498
        %v1500 = vmul.f32 %v1493, 1.442695
        %v1501 = vpow.pop %v1500
        %v1502 = vsel %vm1477, %v1495, 0.0
        %1503 = vadd.xlane.f32.xlu0 %v1502
        %v1504 = vpop.xlane.xlu0 %1503
        %v1505 = vsel %vm1477, %v1497, 0.0
        %1506 = vadd.xlane.f32.xlu0 %v1505
        %v1507 = vpop.xlane.xlu0 %1506
        %v1508 = vsel %vm1477, %v1499, 0.0
        %1509 = vadd.xlane.f32.xlu0 %v1508
        %v1510 = vpop.xlane.xlu0 %1509
        %v1511 = vsel %vm1477, %v1501, 0.0
        %1512 = vadd.xlane.f32.xlu0 %v1511
        %v1513 = vpop.xlane.xlu0 %1512
        %v1514 = vrcp.pop %v1504
        %v1515 = vmul.f32 %v1504, %v1514
        %v1516 = vsub.f32 1.0, %v1515
        %v1517 = vmul.f32 %v1514, %v1516
        %v1518 = vadd.f32 %v1514, %v1517
        %vm1519 = vweird.f32 %v1504
        %vm1520 = vweird.f32 %v1514
        %vm1521 = vmor %vm1519, %vm1520
        %v1522 = vsel %vm1521, %v1514, %v1518
        %v1523 = vand.u32 2147483647, %v1504
        %vm1524 = vcmp.eq.f32.partialorder %v1523, 8.507059e+37
        %v1525 = vand.u32 %v1504, 2147483648
        %v1526 = vor.u32 1.1754944e-38, %v1525
        %v1527 = vsel %vm1524, %v1526, %v1522
        %v1528 = vmul.f32 %v1495, %v1527
        %v1529 = vrcp.pop %v1507
        %v1530 = vmul.f32 %v1507, %v1529
        %v1531 = vsub.f32 1.0, %v1530
        %v1532 = vmul.f32 %v1529, %v1531
        %v1533 = vadd.f32 %v1529, %v1532
        %vm1534 = vweird.f32 %v1507
        %vm1535 = vweird.f32 %v1529
        %vm1536 = vmor %vm1534, %vm1535
        %v1537 = vsel %vm1536, %v1529, %v1533
        %v1538 = vand.u32 2147483647, %v1507
        %vm1539 = vcmp.eq.f32.partialorder %v1538, 8.507059e+37
        %v1540 = vand.u32 %v1507, 2147483648
        %v1541 = vor.u32 1.1754944e-38, %v1540
        %v1542 = vsel %vm1539, %v1541, %v1537
        %v1543 = vmul.f32 %v1497, %v1542
        %v1544 = vrcp.pop %v1510
        %v1545 = vmul.f32 %v1510, %v1544
        %v1546 = vsub.f32 1.0, %v1545
        %v1547 = vmul.f32 %v1544, %v1546
        %v1548 = vadd.f32 %v1544, %v1547
        %vm1549 = vweird.f32 %v1510
        %vm1550 = vweird.f32 %v1544
        %vm1551 = vmor %vm1549, %vm1550
        %v1552 = vsel %vm1551, %v1544, %v1548
        %v1553 = vand.u32 2147483647, %v1510
        %vm1554 = vcmp.eq.f32.partialorder %v1553, 8.507059e+37
        %v1555 = vand.u32 %v1510, 2147483648
        %v1556 = vor.u32 1.1754944e-38, %v1555
        %v1557 = vsel %vm1554, %v1556, %v1552
        %v1558 = vmul.f32 %v1499, %v1557
        %v1559 = vrcp.pop %v1513
        %v1560 = vmul.f32 %v1513, %v1559
        %v1561 = vsub.f32 1.0, %v1560
        %v1562 = vmul.f32 %v1559, %v1561
        %v1563 = vadd.f32 %v1559, %v1562
        %vm1564 = vweird.f32 %v1513
        %vm1565 = vweird.f32 %v1559
        %vm1566 = vmor %vm1564, %vm1565
        %v1567 = vsel %vm1566, %v1559, %v1563
        %v1568 = vand.u32 2147483647, %v1513
        %vm1569 = vcmp.eq.f32.partialorder %v1568, 8.507059e+37
        %v1570 = vand.u32 %v1513, 2147483648
        %v1571 = vor.u32 1.1754944e-38, %v1570
        %v1572 = vsel %vm1569, %v1571, %v1567
        %v1573 = vmul.f32 %v1501, %v1572
        %v1574 = vpack.c.bf16 %v1528, %v1528
        %v1575 = vpack.c.bf16 %v1543, %v1543
        %v1576 = vpack.c.bf16 %v1558, %v1558
        %v1577 = vpack.c.bf16 %v1573, %v1573
        %v1579 = vsel %vm1477, %v1574, 0
        %vm1581 = vcmask 1043456
        %v1583 = vsel %vm1581, %v1375, 0
        %1585 = vmatpush.bf16.msra.mxu0 0
        %1586 = vmatpush.bf16.msra.mxu0 0
        %1587 = vmatpush.bf16.msra.mxu0 0
        %1588 = vmatpush.bf16.msra.mxu0 0
        %1589 = vmatpush.bf16.msra.mxu0 0
        %1590 = vmatpush.bf16.msra.mxu0 0
        %1591 = vmatpush.bf16.msra.mxu0 0
        %1592 = vmatpush.bf16.msra.mxu0 %v1583
        %1593 = vmatmul.bf16.gmra.mxu0 %v1579
        %v1594 = vpop.f32.mrf.mxu0
        %v1595 = vadd.f32 0.0, %v1594
        %v1596 = vpop.f32.mrf.mxu0
        %1597 = vdwg.mxu0
        %v1599 = vsel %vm1477, %v1575, 0
        %v1602 = vsel %vm1581, %v1378, 0
        %1604 = vmatpush.bf16.msra.mxu0 0
        %1605 = vmatpush.bf16.msra.mxu0 0
        %1606 = vmatpush.bf16.msra.mxu0 0
        %1607 = vmatpush.bf16.msra.mxu0 0
        %1608 = vmatpush.bf16.msra.mxu0 0
        %1609 = vmatpush.bf16.msra.mxu0 0
        %1610 = vmatpush.bf16.msra.mxu0 0
        %1611 = vmatpush.bf16.msra.mxu0 %v1602
        %1612 = vmatmul.bf16.gmra.mxu0 %v1599
        %v1613 = vpop.f32.mrf.mxu0
        %v1614 = vadd.f32 0.0, %v1613
        %v1615 = vpop.f32.mrf.mxu0
        %1616 = vdwg.mxu0
        %v1618 = vsel %vm1477, %v1576, 0
        %v1621 = vsel %vm1581, %v1381, 0
        %1623 = vmatpush.bf16.msra.mxu0 0
        %1624 = vmatpush.bf16.msra.mxu0 0
        %1625 = vmatpush.bf16.msra.mxu0 0
        %1626 = vmatpush.bf16.msra.mxu0 0
        %1627 = vmatpush.bf16.msra.mxu0 0
        %1628 = vmatpush.bf16.msra.mxu0 0
        %1629 = vmatpush.bf16.msra.mxu0 0
        %1630 = vmatpush.bf16.msra.mxu0 %v1621
        %1631 = vmatmul.bf16.gmra.mxu0 %v1618
        %v1632 = vpop.f32.mrf.mxu0
        %v1633 = vadd.f32 0.0, %v1632
        %v1634 = vpop.f32.mrf.mxu0
        %1635 = vdwg.mxu0
        %v1637 = vsel %vm1477, %v1577, 0
        %v1640 = vsel %vm1581, %v1384, 0
        %1642 = vmatpush.bf16.msra.mxu0 0
        %1643 = vmatpush.bf16.msra.mxu0 0
        %1644 = vmatpush.bf16.msra.mxu0 0
        %1645 = vmatpush.bf16.msra.mxu0 0
        %1646 = vmatpush.bf16.msra.mxu0 0
        %1647 = vmatpush.bf16.msra.mxu0 0
        %1648 = vmatpush.bf16.msra.mxu0 0
        %1649 = vmatpush.bf16.msra.mxu0 %v1640
        %1650 = vmatmul.bf16.gmra.mxu0 %v1637
        %v1651 = vpop.f32.mrf.mxu0
        %v1652 = vadd.f32 0.0, %v1651
        %v1653 = vpop.f32.mrf.mxu0
        %1654 = vdwg.mxu0
        %v1655 = vrot.slane %v1633, 4
        %vm1656 = vcmask 1047556
        %v1657 = vsel %vm1656, %v1655, %v1595
        %v1658 = vrot.slane %v1595, 4
        %v1659 = vsel %vm1656, %v1633, %v1658
        %v1661 = vunpack.c.l.s4 1983009808
        %v1662 = vunpack.c.0.s8 %v1661
        %v1663 = vperm.slane %v1657, %v1662
        %v1665 = vunpack.c.l.s4 1983009808
        %v1666 = vunpack.c.0.s8 %v1665
        %v1667 = vperm.slane %v1659, %v1666
        %v1668 = vrot.slane %v1652, 4
        %v1669 = vsel %vm1656, %v1668, %v1614
        %v1670 = vrot.slane %v1614, 4
        %v1671 = vsel %vm1656, %v1652, %v1670
        %v1673 = vunpack.c.l.s4 1983009808
        %v1674 = vunpack.c.0.s8 %v1673
        %v1675 = vperm.slane %v1669, %v1674
        %v1677 = vunpack.c.l.s4 1983009808
        %v1678 = vunpack.c.0.s8 %v1677
        %v1679 = vperm.slane %v1671, %v1678
        %v1680 = vrot.slane %v1675, 4
        %v1681 = vsel %vm1656, %v1680, %v1663
        %v1682 = vrot.slane %v1663, 4
        %v1683 = vsel %vm1656, %v1675, %v1682
        %v1685 = vunpack.c.l.s4 1934713408
        %v1686 = vunpack.c.0.s8 %v1685
        %v1687 = vperm.slane %v1681, %v1686
        %v1689 = vunpack.c.l.s4 1934713408
        %v1690 = vunpack.c.0.s8 %v1689
        %v1691 = vperm.slane %v1683, %v1690
        %v1692 = vrot.slane %v1679, 4
        %v1693 = vsel %vm1656, %v1692, %v1667
        %v1694 = vrot.slane %v1667, 4
        %v1695 = vsel %vm1656, %v1679, %v1694
        %v1697 = vunpack.c.l.s4 1934713408
        %v1698 = vunpack.c.0.s8 %v1697
        %v1699 = vperm.slane %v1693, %v1698
        %v1701 = vunpack.c.l.s4 1934713408
        %v1702 = vunpack.c.0.s8 %v1701
        %v1703 = vperm.slane %v1695, %v1702
        %v1704 = vrot.slane %v1687, 4
        %v1705 = vsel %vm1656, 0.0, %v1704
        %v1706 = vrot.slane %v1691, 4
        %v1707 = vsel %vm1656, 0.0, %v1706
        %v1708 = vrot.slane %v1699, 4
        %v1709 = vsel %vm1656, 0.0, %v1708
        %v1710 = vrot.slane %v1703, 4
        %v1711 = vsel %vm1656, 0.0, %v1710
        %v1712 = vsel %vm1656, %v1706, %v1687
        %v1714 = vunpack.c.l.s4 1983009808
        %v1715 = vunpack.c.0.s8 %v1714
        %v1716 = vperm.slane %v1712, %v1715
        %v1717 = vrot.slane %v1707, 4
        %v1718 = vsel %vm1656, %v1717, %v1705
        %v1720 = vunpack.c.l.s4 1983009808
        %v1721 = vunpack.c.0.s8 %v1720
        %v1722 = vperm.slane %v1718, %v1721
        %v1723 = vsel %vm1656, %v1710, %v1699
        %v1725 = vunpack.c.l.s4 1983009808
        %v1726 = vunpack.c.0.s8 %v1725
        %v1727 = vperm.slane %v1723, %v1726
        %v1728 = vrot.slane %v1711, 4
        %v1729 = vsel %vm1656, %v1728, %v1709
        %v1731 = vunpack.c.l.s4 1983009808
        %v1732 = vunpack.c.0.s8 %v1731
        %v1733 = vperm.slane %v1729, %v1732
        %v1734 = vrot.slane %v1722, 4
        %v1735 = vsel %vm1656, %v1734, %v1716
        %v1736 = vrot.slane %v1716, 4
        %v1737 = vsel %vm1656, %v1722, %v1736
        %v1739 = vunpack.c.l.s4 1934713408
        %v1740 = vunpack.c.0.s8 %v1739
        %v1741 = vperm.slane %v1735, %v1740
        %v1743 = vunpack.c.l.s4 1934713408
        %v1744 = vunpack.c.0.s8 %v1743
        %v1745 = vperm.slane %v1737, %v1744
        %v1746 = vrot.slane %v1733, 4
        %v1747 = vsel %vm1656, %v1746, %v1727
        %v1748 = vrot.slane %v1727, 4
        %v1749 = vsel %vm1656, %v1733, %v1748
        %v1751 = vunpack.c.l.s4 1934713408
        %v1752 = vunpack.c.0.s8 %v1751
        %v1753 = vperm.slane %v1747, %v1752
        %v1755 = vunpack.c.l.s4 1934713408
        %v1756 = vunpack.c.0.s8 %v1755
        %v1757 = vperm.slane %v1749, %v1756
        %v1758 = vrot.slane %v1753, 4
        %v1759 = vsel %vm1656, %v1758, %v1741
        %v1760 = vrot.slane %v1741, 4
        %v1761 = vsel %vm1656, %v1753, %v1760
        %v1762 = vrot.slane %v1757, 4
        %v1763 = vsel %vm1656, %v1762, %v1745
        %v1764 = vrot.slane %v1745, 4
        %v1765 = vsel %vm1656, %v1757, %v1764
        %1767 = vrot.lane.b32.xlu0 %v1761, 32
        %v1768 = vpop.permute.xlu0 %1767
        %1771 = vrot.lane.b32.xlu0 %v1763, 64
        %v1772 = vpop.permute.xlu0 %1771
        %1775 = vrot.lane.b32.xlu0 %v1765, 96
        %v1776 = vpop.permute.xlu0 %1775
        %v1778 = vsel %vm1385, %v1759, %v1768
        %vm1779 = vcmask 523264
        %v1780 = vsel %vm1779, %v1778, %v1772
        %vm1781 = vcmask 785408
        %v1782 = vsel %vm1781, %v1780, %v1776
        %v1783 = vpack.c.bf16 %v1782, %v1782
        %v1784 = vld [vmem:[#allocation4] sm:$0xf]
        %v1785 = vld [vmem:[#allocation4 + $0x4] sm:$0xf]
        %v1786 = vld [vmem:[#allocation4 + $0x8] sm:$0xf]
        %v1787 = vld [vmem:[#allocation4 + $0xc] sm:$0xf]
        %v1788 = vld [vmem:[#allocation4 + $0x10] sm:$0xf]
        %v1789 = vld [vmem:[#allocation4 + $0x14] sm:$0xf]
        %v1790 = vld [vmem:[#allocation4 + $0x18] sm:$0xf]
        %v1791 = vld [vmem:[#allocation4 + $0x1c] sm:$0xf]
        %v1792 = vld [vmem:[#allocation4 + $0x20] sm:$0xf]
        %v1793 = vld [vmem:[#allocation4 + $0x24] sm:$0xf]
        %v1794 = vld [vmem:[#allocation4 + $0x28] sm:$0xf]
        %v1795 = vld [vmem:[#allocation4 + $0x2c] sm:$0xf]
        %v1796 = vld [vmem:[#allocation4 + $0x30] sm:$0xf]
        %v1797 = vld [vmem:[#allocation4 + $0x34] sm:$0xf]
        %v1798 = vld [vmem:[#allocation4 + $0x38] sm:$0xf]
        %v1799 = vld [vmem:[#allocation4 + $0x3c] sm:$0xf]
        %v1800 = vld [vmem:[%s5] sm:$0x1]
        %v1802 = vperm.slane %v1800, 0
        %v1820 = vunpack.c.l.b16 %v1784
        %v1821 = vunpack.c.l.b16 %v1785
        %v1822 = vunpack.c.l.b16 %v1786
        %v1823 = vunpack.c.l.b16 %v1787
        %v1824 = vunpack.c.l.b16 %v1788
        %v1825 = vunpack.c.l.b16 %v1789
        %v1826 = vunpack.c.l.b16 %v1790
        %v1827 = vunpack.c.l.b16 %v1791
        %v1828 = vunpack.c.l.b16 %v1792
        %v1829 = vunpack.c.l.b16 %v1793
        %v1830 = vunpack.c.l.b16 %v1794
        %v1831 = vunpack.c.l.b16 %v1795
        %v1832 = vunpack.c.l.b16 %v1796
        %v1833 = vunpack.c.l.b16 %v1797
        %v1834 = vunpack.c.l.b16 %v1798
        %v1835 = vunpack.c.l.b16 %v1799
        %v1836 = vpack.c.b16 %v1821, %v1820
        %v1837 = vpack.c.b16 %v1823, %v1822
        %v1838 = vpack.c.b16 %v1825, %v1824
        %v1839 = vpack.c.b16 %v1827, %v1826
        %v1840 = vpack.c.b16 %v1829, %v1828
        %v1841 = vpack.c.b16 %v1831, %v1830
        %v1842 = vpack.c.b16 %v1833, %v1832
        %v1843 = vpack.c.b16 %v1835, %v1834
        %1852 = vmatpush.bf16.msra.mxu0 %v1843
        %1853 = vmatpush.bf16.msra.mxu0 %v1842
        %1854 = vmatpush.bf16.msra.mxu0 %v1841
        %1855 = vmatpush.bf16.msra.mxu0 %v1840
        %1856 = vmatpush.bf16.msra.mxu0 %v1839
        %1857 = vmatpush.bf16.msra.mxu0 %v1838
        %1858 = vmatpush.bf16.msra.mxu0 %v1837
        %1859 = vmatpush.bf16.msra.mxu0 %v1836
        %1860 = vmatmul.bf16.gmra.mxu0 %v1783
        %v1861 = vpop.f32.mrf.mxu0
        %v1862 = vadd.f32 %v1802, %v1861
        %v1863 = vpop.f32.mrf.mxu0
        %1864 = vdwg.mxu0
        %v1865 = vunpack.c.l.bf16 %v813
        %v1866 = vadd.f32 %v1862, %v1865
        %v1867 = vld [vmem:[%s6] sm:$0x1]
        %v1868 = vld [vmem:[%s7] sm:$0x1]
        %1869 = vadd.xlane.f32.xlu0 %v1866
        %v1870 = vpop.xlane.xlu0 %1869
        %v1871 = vrcp.pop 128.0
        %v1872 = vmul.f32 128.0, %v1871
        %v1873 = vsub.f32 1.0, %v1872
        %v1874 = vmul.f32 %v1871, %v1873
        %v1875 = vadd.f32 %v1871, %v1874
        %vm1876 = vweird.f32 %v1871
        %v1877 = vsel %vm1876, %v1871, %v1875
        %v1878 = vmul.f32 %v1870, %v1877
        %v1879 = vsub.f32 %v1866, %v1878
        %v1880 = vmul.f32 %v1879, %v1879
        %1881 = vadd.xlane.f32.xlu0 %v1880
        %v1882 = vpop.xlane.xlu0 %1881
        %v1883 = vmul.f32 %v1882, %v1877
        %v1884 = vadd.f32 %v1883, 1e-05
        %v1885 = vrsqrt.pop %v1884
        %v1886 = vmul.f32 %v1885, %v1884
        %v1887 = vmul.f32 %v1886, %v1885
        %v1888 = vmul.f32 0.5, %v1887
        %v1889 = vsub.f32 1.5, %v1888
        %v1890 = vmul.f32 %v1885, %v1889
        %vm1891 = vweird.f32 %v1884
        %vm1892 = vweird.f32 %v1885
        %vm1893 = vmor %vm1891, %vm1892
        %v1894 = vsel %vm1893, %v1885, %v1890
        %v1895 = vmul.f32 %v1879, %v1894
        %v1897 = vperm.slane %v1867, 0
        %v1899 = vmul.f32 %v1895, %v1897
        %v1901 = vperm.slane %v1868, 0
        %v1903 = vadd.f32 %v1899, %v1901
        %v1904 = vpack.c.bf16 %v1903, %v1903
        %v1905 = vld [vmem:[#allocation6] sm:$0xf]
        %v1906 = vld [vmem:[#allocation6 + $0x4] sm:$0xf]
        %v1907 = vld [vmem:[#allocation6 + $0x8] sm:$0xf]
        %v1908 = vld [vmem:[#allocation6 + $0xc] sm:$0xf]
        %v1909 = vld [vmem:[#allocation6 + $0x10] sm:$0xf]
        %v1910 = vld [vmem:[#allocation6 + $0x14] sm:$0xf]
        %v1911 = vld [vmem:[#allocation6 + $0x18] sm:$0xf]
        %v1912 = vld [vmem:[#allocation6 + $0x1c] sm:$0xf]
        %v1913 = vld [vmem:[#allocation6 + $0x20] sm:$0xf]
        %v1914 = vld [vmem:[#allocation6 + $0x24] sm:$0xf]
        %v1915 = vld [vmem:[#allocation6 + $0x28] sm:$0xf]
        %v1916 = vld [vmem:[#allocation6 + $0x2c] sm:$0xf]
        %v1917 = vld [vmem:[#allocation6 + $0x30] sm:$0xf]
        %v1918 = vld [vmem:[#allocation6 + $0x34] sm:$0xf]
        %v1919 = vld [vmem:[#allocation6 + $0x38] sm:$0xf]
        %v1920 = vld [vmem:[#allocation6 + $0x3c] sm:$0xf]
        %v1921 = vld [vmem:[%s9] sm:$0x1]
        %v1923 = vperm.slane %v1921, 0
        %v1941 = vunpack.c.l.b16 %v1905
        %v1942 = vunpack.c.l.b16 %v1906
        %v1943 = vunpack.c.l.b16 %v1907
        %v1944 = vunpack.c.l.b16 %v1908
        %v1945 = vunpack.c.l.b16 %v1909
        %v1946 = vunpack.c.l.b16 %v1910
        %v1947 = vunpack.c.l.b16 %v1911
        %v1948 = vunpack.c.l.b16 %v1912
        %v1949 = vunpack.c.l.b16 %v1913
        %v1950 = vunpack.c.l.b16 %v1914
        %v1951 = vunpack.c.l.b16 %v1915
        %v1952 = vunpack.c.l.b16 %v1916
        %v1953 = vunpack.c.l.b16 %v1917
        %v1954 = vunpack.c.l.b16 %v1918
        %v1955 = vunpack.c.l.b16 %v1919
        %v1956 = vunpack.c.l.b16 %v1920
        %v1957 = vpack.c.b16 %v1942, %v1941
        %v1958 = vpack.c.b16 %v1944, %v1943
        %v1959 = vpack.c.b16 %v1946, %v1945
        %v1960 = vpack.c.b16 %v1948, %v1947
        %v1961 = vpack.c.b16 %v1950, %v1949
        %v1962 = vpack.c.b16 %v1952, %v1951
        %v1963 = vpack.c.b16 %v1954, %v1953
        %v1964 = vpack.c.b16 %v1956, %v1955
        %1973 = vmatpush.bf16.msra.mxu0 %v1964
        %1974 = vmatpush.bf16.msra.mxu0 %v1963
        %1975 = vmatpush.bf16.msra.mxu0 %v1962
        %1976 = vmatpush.bf16.msra.mxu0 %v1961
        %1977 = vmatpush.bf16.msra.mxu0 %v1960
        %1978 = vmatpush.bf16.msra.mxu0 %v1959
        %1979 = vmatpush.bf16.msra.mxu0 %v1958
        %1980 = vmatpush.bf16.msra.mxu0 %v1957
        %1981 = vmatmul.bf16.gmra.mxu0 %v1904
        %v1982 = vpop.f32.mrf.mxu0
        %v1983 = vadd.f32 %v1923, %v1982
        %v1984 = vpop.f32.mrf.mxu0
        %1985 = vdwg.mxu0
        %v1986 = vld [vmem:[#allocation7] sm:$0xff]
        %v1987 = vld [vmem:[#allocation7 + $0x8] sm:$0xff]
        %v1988 = vld [vmem:[#allocation7 + $0x10] sm:$0xff]
        %v1989 = vld [vmem:[#allocation7 + $0x18] sm:$0xff]
        %v1990 = vld [vmem:[#allocation7 + $0x20] sm:$0xff]
        %v1991 = vld [vmem:[#allocation7 + $0x28] sm:$0xff]
        %v1992 = vld [vmem:[#allocation7 + $0x30] sm:$0xff]
        %v1993 = vld [vmem:[#allocation7 + $0x38] sm:$0xff]
        %v1994 = vld [vmem:[#allocation7 + $0x40] sm:$0xff]
        %v1995 = vld [vmem:[#allocation7 + $0x48] sm:$0xff]
        %v1996 = vld [vmem:[#allocation7 + $0x50] sm:$0xff]
        %v1997 = vld [vmem:[#allocation7 + $0x58] sm:$0xff]
        %v1998 = vld [vmem:[#allocation7 + $0x60] sm:$0xff]
        %v1999 = vld [vmem:[#allocation7 + $0x68] sm:$0xff]
        %v2000 = vld [vmem:[#allocation7 + $0x70] sm:$0xff]
        %v2001 = vld [vmem:[#allocation7 + $0x78] sm:$0xff]
        %v2002 = vld [vmem:[%s11] sm:$0x3]
        %v2004 = vperm.slane %v2002, 0
        %v2005 = vperm.slane %v2002, 1
        %v2024 = vunpack.c.l.b16 %v1986
        %v2025 = vunpack.c.h.b16 %v1986
        %v2026 = vunpack.c.l.b16 %v1987
        %v2027 = vunpack.c.h.b16 %v1987
        %v2028 = vunpack.c.l.b16 %v1988
        %v2029 = vunpack.c.h.b16 %v1988
        %v2030 = vunpack.c.l.b16 %v1989
        %v2031 = vunpack.c.h.b16 %v1989
        %v2032 = vunpack.c.l.b16 %v1990
        %v2033 = vunpack.c.h.b16 %v1990
        %v2034 = vunpack.c.l.b16 %v1991
        %v2035 = vunpack.c.h.b16 %v1991
        %v2036 = vunpack.c.l.b16 %v1992
        %v2037 = vunpack.c.h.b16 %v1992
        %v2038 = vunpack.c.l.b16 %v1993
        %v2039 = vunpack.c.h.b16 %v1993
        %v2040 = vunpack.c.l.b16 %v1994
        %v2041 = vunpack.c.h.b16 %v1994
        %v2042 = vunpack.c.l.b16 %v1995
        %v2043 = vunpack.c.h.b16 %v1995
        %v2044 = vunpack.c.l.b16 %v1996
        %v2045 = vunpack.c.h.b16 %v1996
        %v2046 = vunpack.c.l.b16 %v1997
        %v2047 = vunpack.c.h.b16 %v1997
        %v2048 = vunpack.c.l.b16 %v1998
        %v2049 = vunpack.c.h.b16 %v1998
        %v2050 = vunpack.c.l.b16 %v1999
        %v2051 = vunpack.c.h.b16 %v1999
        %v2052 = vunpack.c.l.b16 %v2000
        %v2053 = vunpack.c.h.b16 %v2000
        %v2054 = vunpack.c.l.b16 %v2001
        %v2055 = vunpack.c.h.b16 %v2001
        %v2056 = vpack.c.b16 %v2026, %v2024
        %v2057 = vpack.c.b16 %v2027, %v2025
        %v2058 = vpack.c.b16 %v2030, %v2028
        %v2059 = vpack.c.b16 %v2031, %v2029
        %v2060 = vpack.c.b16 %v2034, %v2032
        %v2061 = vpack.c.b16 %v2035, %v2033
        %v2062 = vpack.c.b16 %v2038, %v2036
        %v2063 = vpack.c.b16 %v2039, %v2037
        %v2064 = vpack.c.b16 %v2042, %v2040
        %v2065 = vpack.c.b16 %v2043, %v2041
        %v2066 = vpack.c.b16 %v2046, %v2044
        %v2067 = vpack.c.b16 %v2047, %v2045
        %v2068 = vpack.c.b16 %v2050, %v2048
        %v2069 = vpack.c.b16 %v2051, %v2049
        %v2070 = vpack.c.b16 %v2054, %v2052
        %v2071 = vpack.c.b16 %v2055, %v2053
        %2088 = vmatpush.bf16.msra.mxu0 %v2070
        %2089 = vmatpush.bf16.msra.mxu0 %v2068
        %2090 = vmatpush.bf16.msra.mxu0 %v2066
        %2091 = vmatpush.bf16.msra.mxu0 %v2064
        %2092 = vmatpush.bf16.msra.mxu0 %v2062
        %2093 = vmatpush.bf16.msra.mxu0 %v2060
        %2094 = vmatpush.bf16.msra.mxu0 %v2058
        %2095 = vmatpush.bf16.msra.mxu0 %v2056
        %2096 = vmatmul.bf16.gmra.mxu0 %v814
        %v2097 = vpop.f32.mrf.mxu0
        %v2098 = vadd.f32 %v2004, %v2097
        %v2099 = vpop.f32.mrf.mxu0
        %2100 = vdwg.mxu0
        %2101 = vmatpush.bf16.msra.mxu0 %v2071
        %2102 = vmatpush.bf16.msra.mxu0 %v2069
        %2103 = vmatpush.bf16.msra.mxu0 %v2067
        %2104 = vmatpush.bf16.msra.mxu0 %v2065
        %2105 = vmatpush.bf16.msra.mxu0 %v2063
        %2106 = vmatpush.bf16.msra.mxu0 %v2061
        %2107 = vmatpush.bf16.msra.mxu0 %v2059
        %2108 = vmatpush.bf16.msra.mxu0 %v2057
        %2109 = vmatmul.bf16.gmra.mxu0 %v814
        %v2110 = vpop.f32.mrf.mxu0
        %v2111 = vadd.f32 %v2005, %v2110
        %v2112 = vpop.f32.mrf.mxu0
        %2113 = vdwg.mxu0
        %v2114 = vpack.c.bf16 %v2111, %v2098
        %v2115 = vpack.c.bf16 %v1983, %v1983
        %2117 = vrot.lane.b32.xlu0 %v2115, 96
        %v2118 = vpop.permute.xlu0 %2117
        %2119 = vrot.lane.b32.xlu0 %v2115, 64
        %v2120 = vpop.permute.xlu0 %2119
        %2121 = vrot.lane.b32.xlu0 %v2115, 32
        %v2122 = vpop.permute.xlu0 %2121
        %v2125 = vpack.i.b16 %v2118, %v2115
        %v2126 = vshrl.u32 %v2115, 16
        %v2127 = vshrl.u32 %v2118, 16
        %v2128 = vpack.i.b16 %v2127, %v2126
        %v2131 = vpack.i.b16 %v2122, %v2120
        %v2132 = vshrl.u32 %v2120, 16
        %v2133 = vshrl.u32 %v2122, 16
        %v2134 = vpack.i.b16 %v2133, %v2132
        %v2137 = vunpack.c.l.s4 1983009808
        %v2138 = vunpack.c.0.s8 %v2137
        %v2139 = vperm.slane %v2125, %v2138
        %v2142 = vunpack.c.l.s4 1983009808
        %v2143 = vunpack.c.0.s8 %v2142
        %v2144 = vperm.slane %v2131, %v2143
        %v2145 = vrot.slane %v2144, 4
        %v2146 = vsel %vm1054, %v2145, %v2139
        %v2147 = vrot.slane %v2139, 4
        %v2148 = vsel %vm1054, %v2144, %v2147
        %v2150 = vunpack.c.l.s4 1934713408
        %v2151 = vunpack.c.0.s8 %v2150
        %v2152 = vperm.slane %v2146, %v2151
        %v2154 = vunpack.c.l.s4 1934713408
        %v2155 = vunpack.c.0.s8 %v2154
        %v2156 = vperm.slane %v2148, %v2155
        %v2157 = vrot.slane %v2152, 4
        %v2158 = vsel %vm1054, 0, %v2157
        %v2159 = vrot.slane %v2156, 4
        %v2160 = vsel %vm1054, 0, %v2159
        %v2163 = vunpack.c.l.s4 1983009808
        %v2164 = vunpack.c.0.s8 %v2163
        %v2165 = vperm.slane %v2128, %v2164
        %v2168 = vunpack.c.l.s4 1983009808
        %v2169 = vunpack.c.0.s8 %v2168
        %v2170 = vperm.slane %v2134, %v2169
        %v2171 = vrot.slane %v2170, 4
        %v2172 = vsel %vm1054, %v2171, %v2165
        %v2173 = vrot.slane %v2165, 4
        %v2174 = vsel %vm1054, %v2170, %v2173
        %v2176 = vunpack.c.l.s4 1934713408
        %v2177 = vunpack.c.0.s8 %v2176
        %v2178 = vperm.slane %v2172, %v2177
        %v2180 = vunpack.c.l.s4 1934713408
        %v2181 = vunpack.c.0.s8 %v2180
        %v2182 = vperm.slane %v2174, %v2181
        %v2183 = vrot.slane %v2178, 4
        %v2184 = vsel %vm1054, 0, %v2183
        %v2185 = vrot.slane %v2182, 4
        %v2186 = vsel %vm1054, 0, %v2185
        %v2187 = vsel %vm1054, %v2159, %v2152
        %v2189 = vunpack.c.l.s4 1983009808
        %v2190 = vunpack.c.0.s8 %v2189
        %v2191 = vperm.slane %v2187, %v2190
        %v2192 = vrot.slane %v2160, 4
        %v2193 = vsel %vm1054, %v2192, %v2158
        %v2195 = vunpack.c.l.s4 1983009808
        %v2196 = vunpack.c.0.s8 %v2195
        %v2197 = vperm.slane %v2193, %v2196
        %v2198 = vrot.slane %v2197, 4
        %v2199 = vsel %vm1054, %v2198, %v2191
        %v2201 = vunpack.c.l.s4 1934713408
        %v2202 = vunpack.c.0.s8 %v2201
        %v2203 = vperm.slane %v2199, %v2202
        %v2204 = vrot.slane %v2203, 4
        %v2205 = vsel %vm1054, 0, %v2204
        %v2206 = vsel %vm1054, %v2185, %v2178
        %v2208 = vunpack.c.l.s4 1983009808
        %v2209 = vunpack.c.0.s8 %v2208
        %v2210 = vperm.slane %v2206, %v2209
        %v2211 = vrot.slane %v2186, 4
        %v2212 = vsel %vm1054, %v2211, %v2184
        %v2214 = vunpack.c.l.s4 1983009808
        %v2215 = vunpack.c.0.s8 %v2214
        %v2216 = vperm.slane %v2212, %v2215
        %v2217 = vrot.slane %v2216, 4
        %v2218 = vsel %vm1054, %v2217, %v2210
        %v2220 = vunpack.c.l.s4 1934713408
        %v2221 = vunpack.c.0.s8 %v2220
        %v2222 = vperm.slane %v2218, %v2221
        %v2223 = vrot.slane %v2222, 4
        %v2224 = vsel %vm1054, 0, %v2223
        %v2227 = vpack.i.b16 %v2222, %v2203
        %v2228 = vshrl.u32 %v2203, 16
        %v2229 = vshrl.u32 %v2222, 16
        %v2230 = vpack.i.b16 %v2229, %v2228
        %v2233 = vpack.i.b16 %v2224, %v2205
        %v2234 = vshrl.u32 %v2205, 16
        %v2235 = vshrl.u32 %v2224, 16
        %v2236 = vpack.i.b16 %v2235, %v2234
        %2238 = vrot.lane.b32.xlu0 %v2114, 96
        %v2239 = vpop.permute.xlu0 %2238
        %2240 = vrot.lane.b32.xlu0 %v2114, 64
        %v2241 = vpop.permute.xlu0 %2240
        %2242 = vrot.lane.b32.xlu0 %v2114, 32
        %v2243 = vpop.permute.xlu0 %2242
        %v2246 = vpack.i.b16 %v2239, %v2114
        %v2247 = vshrl.u32 %v2114, 16
        %v2248 = vshrl.u32 %v2239, 16
        %v2249 = vpack.i.b16 %v2248, %v2247
        %v2252 = vpack.i.b16 %v2243, %v2241
        %v2253 = vshrl.u32 %v2241, 16
        %v2254 = vshrl.u32 %v2243, 16
        %v2255 = vpack.i.b16 %v2254, %v2253
        %v2258 = vunpack.c.l.s4 1983009808
        %v2259 = vunpack.c.0.s8 %v2258
        %v2260 = vperm.slane %v2246, %v2259
        %v2263 = vunpack.c.l.s4 1983009808
        %v2264 = vunpack.c.0.s8 %v2263
        %v2265 = vperm.slane %v2252, %v2264
        %v2266 = vrot.slane %v2265, 4
        %v2267 = vsel %vm1054, %v2266, %v2260
        %v2268 = vrot.slane %v2260, 4
        %v2269 = vsel %vm1054, %v2265, %v2268
        %v2271 = vunpack.c.l.s4 1934713408
        %v2272 = vunpack.c.0.s8 %v2271
        %v2273 = vperm.slane %v2267, %v2272
        %v2275 = vunpack.c.l.s4 1934713408
        %v2276 = vunpack.c.0.s8 %v2275
        %v2277 = vperm.slane %v2269, %v2276
        %v2278 = vrot.slane %v2273, 4
        %v2279 = vsel %vm1054, 0, %v2278
        %v2280 = vrot.slane %v2277, 4
        %v2281 = vsel %vm1054, 0, %v2280
        %v2284 = vunpack.c.l.s4 1983009808
        %v2285 = vunpack.c.0.s8 %v2284
        %v2286 = vperm.slane %v2249, %v2285
        %v2289 = vunpack.c.l.s4 1983009808
        %v2290 = vunpack.c.0.s8 %v2289
        %v2291 = vperm.slane %v2255, %v2290
        %v2292 = vrot.slane %v2291, 4
        %v2293 = vsel %vm1054, %v2292, %v2286
        %v2294 = vrot.slane %v2286, 4
        %v2295 = vsel %vm1054, %v2291, %v2294
        %v2297 = vunpack.c.l.s4 1934713408
        %v2298 = vunpack.c.0.s8 %v2297
        %v2299 = vperm.slane %v2293, %v2298
        %v2301 = vunpack.c.l.s4 1934713408
        %v2302 = vunpack.c.0.s8 %v2301
        %v2303 = vperm.slane %v2295, %v2302
        %v2304 = vrot.slane %v2299, 4
        %v2305 = vsel %vm1054, 0, %v2304
        %v2306 = vrot.slane %v2303, 4
        %v2307 = vsel %vm1054, 0, %v2306
        %v2308 = vsel %vm1054, %v2280, %v2273
        %v2310 = vunpack.c.l.s4 1983009808
        %v2311 = vunpack.c.0.s8 %v2310
        %v2312 = vperm.slane %v2308, %v2311
        %v2313 = vrot.slane %v2281, 4
        %v2314 = vsel %vm1054, %v2313, %v2279
        %v2316 = vunpack.c.l.s4 1983009808
        %v2317 = vunpack.c.0.s8 %v2316
        %v2318 = vperm.slane %v2314, %v2317
        %v2319 = vrot.slane %v2318, 4
        %v2320 = vsel %vm1054, %v2319, %v2312
        %v2322 = vunpack.c.l.s4 1934713408
        %v2323 = vunpack.c.0.s8 %v2322
        %v2324 = vperm.slane %v2320, %v2323
        %v2325 = vrot.slane %v2324, 4
        %v2326 = vsel %vm1054, 0, %v2325
        %v2327 = vsel %vm1054, %v2306, %v2299
        %v2329 = vunpack.c.l.s4 1983009808
        %v2330 = vunpack.c.0.s8 %v2329
        %v2331 = vperm.slane %v2327, %v2330
        %v2332 = vrot.slane %v2307, 4
        %v2333 = vsel %vm1054, %v2332, %v2305
        %v2335 = vunpack.c.l.s4 1983009808
        %v2336 = vunpack.c.0.s8 %v2335
        %v2337 = vperm.slane %v2333, %v2336
        %v2338 = vrot.slane %v2337, 4
        %v2339 = vsel %vm1054, %v2338, %v2331
        %v2341 = vunpack.c.l.s4 1934713408
        %v2342 = vunpack.c.0.s8 %v2341
        %v2343 = vperm.slane %v2339, %v2342
        %v2344 = vrot.slane %v2343, 4
        %v2345 = vsel %vm1054, 0, %v2344
        %v2348 = vpack.i.b16 %v2343, %v2324
        %v2349 = vshrl.u32 %v2324, 16
        %v2350 = vshrl.u32 %v2343, 16
        %v2351 = vpack.i.b16 %v2350, %v2349
        %v2354 = vpack.i.b16 %v2345, %v2326
        %v2355 = vshrl.u32 %v2326, 16
        %v2356 = vshrl.u32 %v2345, 16
        %v2357 = vpack.i.b16 %v2356, %v2355
        %v2358 = vrot.slane %v2114, 4
        %v2359 = vrot.slane %v2239, 4
        %v2360 = vrot.slane %v2241, 4
        %v2361 = vrot.slane %v2243, 4
        %v2364 = vpack.i.b16 %v2359, %v2358
        %v2365 = vshrl.u32 %v2358, 16
        %v2366 = vshrl.u32 %v2359, 16
        %v2367 = vpack.i.b16 %v2366, %v2365
        %v2370 = vpack.i.b16 %v2361, %v2360
        %v2371 = vshrl.u32 %v2360, 16
        %v2372 = vshrl.u32 %v2361, 16
        %v2373 = vpack.i.b16 %v2372, %v2371
        %v2376 = vunpack.c.l.s4 1983009808
        %v2377 = vunpack.c.0.s8 %v2376
        %v2378 = vperm.slane %v2364, %v2377
        %v2381 = vunpack.c.l.s4 1983009808
        %v2382 = vunpack.c.0.s8 %v2381
        %v2383 = vperm.slane %v2370, %v2382
        %v2384 = vrot.slane %v2383, 4
        %v2385 = vsel %vm1054, %v2384, %v2378
        %v2386 = vrot.slane %v2378, 4
        %v2387 = vsel %vm1054, %v2383, %v2386
        %v2389 = vunpack.c.l.s4 1934713408
        %v2390 = vunpack.c.0.s8 %v2389
        %v2391 = vperm.slane %v2385, %v2390
        %v2393 = vunpack.c.l.s4 1934713408
        %v2394 = vunpack.c.0.s8 %v2393
        %v2395 = vperm.slane %v2387, %v2394
        %v2396 = vrot.slane %v2391, 4
        %v2397 = vsel %vm1054, 0, %v2396
        %v2398 = vrot.slane %v2395, 4
        %v2399 = vsel %vm1054, 0, %v2398
        %v2402 = vunpack.c.l.s4 1983009808
        %v2403 = vunpack.c.0.s8 %v2402
        %v2404 = vperm.slane %v2367, %v2403
        %v2407 = vunpack.c.l.s4 1983009808
        %v2408 = vunpack.c.0.s8 %v2407
        %v2409 = vperm.slane %v2373, %v2408
        %v2410 = vrot.slane %v2409, 4
        %v2411 = vsel %vm1054, %v2410, %v2404
        %v2412 = vrot.slane %v2404, 4
        %v2413 = vsel %vm1054, %v2409, %v2412
        %v2415 = vunpack.c.l.s4 1934713408
        %v2416 = vunpack.c.0.s8 %v2415
        %v2417 = vperm.slane %v2411, %v2416
        %v2419 = vunpack.c.l.s4 1934713408
        %v2420 = vunpack.c.0.s8 %v2419
        %v2421 = vperm.slane %v2413, %v2420
        %v2422 = vrot.slane %v2417, 4
        %v2423 = vsel %vm1054, 0, %v2422
        %v2424 = vrot.slane %v2421, 4
        %v2425 = vsel %vm1054, 0, %v2424
        %v2426 = vsel %vm1054, %v2398, %v2391
        %v2428 = vunpack.c.l.s4 1983009808
        %v2429 = vunpack.c.0.s8 %v2428
        %v2430 = vperm.slane %v2426, %v2429
        %v2431 = vrot.slane %v2399, 4
        %v2432 = vsel %vm1054, %v2431, %v2397
        %v2434 = vunpack.c.l.s4 1983009808
        %v2435 = vunpack.c.0.s8 %v2434
        %v2436 = vperm.slane %v2432, %v2435
        %v2437 = vrot.slane %v2436, 4
        %v2438 = vsel %vm1054, %v2437, %v2430
        %v2440 = vunpack.c.l.s4 1934713408
        %v2441 = vunpack.c.0.s8 %v2440
        %v2442 = vperm.slane %v2438, %v2441
        %v2443 = vrot.slane %v2442, 4
        %v2444 = vsel %vm1054, 0, %v2443
        %v2445 = vsel %vm1054, %v2424, %v2417
        %v2447 = vunpack.c.l.s4 1983009808
        %v2448 = vunpack.c.0.s8 %v2447
        %v2449 = vperm.slane %v2445, %v2448
        %v2450 = vrot.slane %v2425, 4
        %v2451 = vsel %vm1054, %v2450, %v2423
        %v2453 = vunpack.c.l.s4 1983009808
        %v2454 = vunpack.c.0.s8 %v2453
        %v2455 = vperm.slane %v2451, %v2454
        %v2456 = vrot.slane %v2455, 4
        %v2457 = vsel %vm1054, %v2456, %v2449
        %v2459 = vunpack.c.l.s4 1934713408
        %v2460 = vunpack.c.0.s8 %v2459
        %v2461 = vperm.slane %v2457, %v2460
        %v2462 = vrot.slane %v2461, 4
        %v2463 = vsel %vm1054, 0, %v2462
        %v2466 = vpack.i.b16 %v2461, %v2442
        %v2467 = vshrl.u32 %v2442, 16
        %v2468 = vshrl.u32 %v2461, 16
        %v2469 = vpack.i.b16 %v2468, %v2467
        %v2472 = vpack.i.b16 %v2463, %v2444
        %v2473 = vshrl.u32 %v2444, 16
        %v2474 = vshrl.u32 %v2463, 16
        %v2475 = vpack.i.b16 %v2474, %v2473
        %v2477 = vsel %vm1385, %v2227, 0
        %v2480 = vsel %vm1385, %v2348, 0
        %2482 = vmatpush.bf16.xpose.msra.mxu0 0
        %2483 = vmatpush.bf16.xpose.msra.mxu0 0
        %2484 = vmatpush.bf16.xpose.msra.mxu0 0
        %2485 = vmatpush.bf16.xpose.msra.mxu0 0
        %2486 = vmatpush.bf16.xpose.msra.mxu0 0
        %2487 = vmatpush.bf16.xpose.msra.mxu0 0
        %2488 = vmatpush.bf16.xpose.msra.mxu0 0
        %2489 = vmatpush.bf16.xpose.msra.mxu0 %v2480
        %2490 = vmatmul.bf16.gmra.mxu0 %v2477
        %v2491 = vpop.f32.mrf.mxu0
        %v2492 = vadd.f32 0.0, %v2491
        %v2493 = vpop.f32.mrf.mxu0
        %2494 = vdwg.mxu0
        %v2496 = vsel %vm1385, %v2230, 0
        %v2499 = vsel %vm1385, %v2351, 0
        %2501 = vmatpush.bf16.xpose.msra.mxu0 0
        %2502 = vmatpush.bf16.xpose.msra.mxu0 0
        %2503 = vmatpush.bf16.xpose.msra.mxu0 0
        %2504 = vmatpush.bf16.xpose.msra.mxu0 0
        %2505 = vmatpush.bf16.xpose.msra.mxu0 0
        %2506 = vmatpush.bf16.xpose.msra.mxu0 0
        %2507 = vmatpush.bf16.xpose.msra.mxu0 0
        %2508 = vmatpush.bf16.xpose.msra.mxu0 %v2499
        %2509 = vmatmul.bf16.gmra.mxu0 %v2496
        %v2510 = vpop.f32.mrf.mxu0
        %v2511 = vadd.f32 0.0, %v2510
        %v2512 = vpop.f32.mrf.mxu0
        %2513 = vdwg.mxu0
        %v2515 = vsel %vm1385, %v2233, 0
        %v2518 = vsel %vm1385, %v2354, 0
        %2520 = vmatpush.bf16.xpose.msra.mxu0 0
        %2521 = vmatpush.bf16.xpose.msra.mxu0 0
        %2522 = vmatpush.bf16.xpose.msra.mxu0 0
        %2523 = vmatpush.bf16.xpose.msra.mxu0 0
        %2524 = vmatpush.bf16.xpose.msra.mxu0 0
        %2525 = vmatpush.bf16.xpose.msra.mxu0 0
        %2526 = vmatpush.bf16.xpose.msra.mxu0 0
        %2527 = vmatpush.bf16.xpose.msra.mxu0 %v2518
        %2528 = vmatmul.bf16.gmra.mxu0 %v2515
        %v2529 = vpop.f32.mrf.mxu0
        %v2530 = vadd.f32 0.0, %v2529
        %v2531 = vpop.f32.mrf.mxu0
        %2532 = vdwg.mxu0
        %v2534 = vsel %vm1385, %v2236, 0
        %v2537 = vsel %vm1385, %v2357, 0
        %2539 = vmatpush.bf16.xpose.msra.mxu0 0
        %2540 = vmatpush.bf16.xpose.msra.mxu0 0
        %2541 = vmatpush.bf16.xpose.msra.mxu0 0
        %2542 = vmatpush.bf16.xpose.msra.mxu0 0
        %2543 = vmatpush.bf16.xpose.msra.mxu0 0
        %2544 = vmatpush.bf16.xpose.msra.mxu0 0
        %2545 = vmatpush.bf16.xpose.msra.mxu0 0
        %2546 = vmatpush.bf16.xpose.msra.mxu0 %v2537
        %2547 = vmatmul.bf16.gmra.mxu0 %v2534
        %v2548 = vpop.f32.mrf.mxu0
        %v2549 = vadd.f32 0.0, %v2548
        %v2550 = vpop.f32.mrf.mxu0
        %2551 = vdwg.mxu0
        %v2552 = vmul.f32 %v2492, 0.17677669
        %v2553 = vmul.f32 %v2511, 0.17677669
        %v2554 = vmul.f32 %v2530, 0.17677669
        %v2555 = vmul.f32 %v2549, 0.17677669
        %v2556 = vsel %vm1477, %v2552, -inf
        %2557 = vmax.xlane.f32.xlu0 %v2556
        %v2558 = vpop.xlane.xlu0 %2557
        %v2559 = vsel %vm1477, %v2553, -inf
        %2560 = vmax.xlane.f32.xlu0 %v2559
        %v2561 = vpop.xlane.xlu0 %2560
        %v2562 = vsel %vm1477, %v2554, -inf
        %2563 = vmax.xlane.f32.xlu0 %v2562
        %v2564 = vpop.xlane.xlu0 %2563
        %v2565 = vsel %vm1477, %v2555, -inf
        %2566 = vmax.xlane.f32.xlu0 %v2565
        %v2567 = vpop.xlane.xlu0 %2566
        %v2568 = vsub.f32 %v2552, %v2558
        %v2569 = vsub.f32 %v2553, %v2561
        %v2570 = vsub.f32 %v2554, %v2564
        %v2571 = vsub.f32 %v2555, %v2567
        %v2572 = vmul.f32 %v2568, 1.442695
        %v2573 = vpow.pop %v2572
        %v2574 = vmul.f32 %v2569, 1.442695
        %v2575 = vpow.pop %v2574
        %v2576 = vmul.f32 %v2570, 1.442695
        %v2577 = vpow.pop %v2576
        %v2578 = vmul.f32 %v2571, 1.442695
        %v2579 = vpow.pop %v2578
        %v2580 = vsel %vm1477, %v2573, 0.0
        %2581 = vadd.xlane.f32.xlu0 %v2580
        %v2582 = vpop.xlane.xlu0 %2581
        %v2583 = vsel %vm1477, %v2575, 0.0
        %2584 = vadd.xlane.f32.xlu0 %v2583
        %v2585 = vpop.xlane.xlu0 %2584
        %v2586 = vsel %vm1477, %v2577, 0.0
        %2587 = vadd.xlane.f32.xlu0 %v2586
        %v2588 = vpop.xlane.xlu0 %2587
        %v2589 = vsel %vm1477, %v2579, 0.0
        %2590 = vadd.xlane.f32.xlu0 %v2589
        %v2591 = vpop.xlane.xlu0 %2590
        %v2592 = vrcp.pop %v2582
        %v2593 = vmul.f32 %v2582, %v2592
        %v2594 = vsub.f32 1.0, %v2593
        %v2595 = vmul.f32 %v2592, %v2594
        %v2596 = vadd.f32 %v2592, %v2595
        %vm2597 = vweird.f32 %v2582
        %vm2598 = vweird.f32 %v2592
        %vm2599 = vmor %vm2597, %vm2598
        %v2600 = vsel %vm2599, %v2592, %v2596
        %v2601 = vand.u32 2147483647, %v2582
        %vm2602 = vcmp.eq.f32.partialorder %v2601, 8.507059e+37
        %v2603 = vand.u32 %v2582, 2147483648
        %v2604 = vor.u32 1.1754944e-38, %v2603
        %v2605 = vsel %vm2602, %v2604, %v2600
        %v2606 = vmul.f32 %v2573, %v2605
        %v2607 = vrcp.pop %v2585
        %v2608 = vmul.f32 %v2585, %v2607
        %v2609 = vsub.f32 1.0, %v2608
        %v2610 = vmul.f32 %v2607, %v2609
        %v2611 = vadd.f32 %v2607, %v2610
        %vm2612 = vweird.f32 %v2585
        %vm2613 = vweird.f32 %v2607
        %vm2614 = vmor %vm2612, %vm2613
        %v2615 = vsel %vm2614, %v2607, %v2611
        %v2616 = vand.u32 2147483647, %v2585
        %vm2617 = vcmp.eq.f32.partialorder %v2616, 8.507059e+37
        %v2618 = vand.u32 %v2585, 2147483648
        %v2619 = vor.u32 1.1754944e-38, %v2618
        %v2620 = vsel %vm2617, %v2619, %v2615
        %v2621 = vmul.f32 %v2575, %v2620
        %v2622 = vrcp.pop %v2588
        %v2623 = vmul.f32 %v2588, %v2622
        %v2624 = vsub.f32 1.0, %v2623
        %v2625 = vmul.f32 %v2622, %v2624
        %v2626 = vadd.f32 %v2622, %v2625
        %vm2627 = vweird.f32 %v2588
        %vm2628 = vweird.f32 %v2622
        %vm2629 = vmor %vm2627, %vm2628
        %v2630 = vsel %vm2629, %v2622, %v2626
        %v2631 = vand.u32 2147483647, %v2588
        %vm2632 = vcmp.eq.f32.partialorder %v2631, 8.507059e+37
        %v2633 = vand.u32 %v2588, 2147483648
        %v2634 = vor.u32 1.1754944e-38, %v2633
        %v2635 = vsel %vm2632, %v2634, %v2630
        %v2636 = vmul.f32 %v2577, %v2635
        %v2637 = vrcp.pop %v2591
        %v2638 = vmul.f32 %v2591, %v2637
        %v2639 = vsub.f32 1.0, %v2638
        %v2640 = vmul.f32 %v2637, %v2639
        %v2641 = vadd.f32 %v2637, %v2640
        %vm2642 = vweird.f32 %v2591
        %vm2643 = vweird.f32 %v2637
        %vm2644 = vmor %vm2642, %vm2643
        %v2645 = vsel %vm2644, %v2637, %v2641
        %v2646 = vand.u32 2147483647, %v2591
        %vm2647 = vcmp.eq.f32.partialorder %v2646, 8.507059e+37
        %v2648 = vand.u32 %v2591, 2147483648
        %v2649 = vor.u32 1.1754944e-38, %v2648
        %v2650 = vsel %vm2647, %v2649, %v2645
        %v2651 = vmul.f32 %v2579, %v2650
        %v2652 = vpack.c.bf16 %v2606, %v2606
        %v2653 = vpack.c.bf16 %v2621, %v2621
        %v2654 = vpack.c.bf16 %v2636, %v2636
        %v2655 = vpack.c.bf16 %v2651, %v2651
        %v2657 = vsel %vm1477, %v2652, 0
        %v2660 = vsel %vm1581, %v2466, 0
        %2662 = vmatpush.bf16.msra.mxu0 0
        %2663 = vmatpush.bf16.msra.mxu0 0
        %2664 = vmatpush.bf16.msra.mxu0 0
        %2665 = vmatpush.bf16.msra.mxu0 0
        %2666 = vmatpush.bf16.msra.mxu0 0
        %2667 = vmatpush.bf16.msra.mxu0 0
        %2668 = vmatpush.bf16.msra.mxu0 0
        %2669 = vmatpush.bf16.msra.mxu0 %v2660
        %2670 = vmatmul.bf16.gmra.mxu0 %v2657
        %v2671 = vpop.f32.mrf.mxu0
        %v2672 = vadd.f32 0.0, %v2671
        %v2673 = vpop.f32.mrf.mxu0
        %2674 = vdwg.mxu0
        %v2676 = vsel %vm1477, %v2653, 0
        %v2679 = vsel %vm1581, %v2469, 0
        %2681 = vmatpush.bf16.msra.mxu0 0
        %2682 = vmatpush.bf16.msra.mxu0 0
        %2683 = vmatpush.bf16.msra.mxu0 0
        %2684 = vmatpush.bf16.msra.mxu0 0
        %2685 = vmatpush.bf16.msra.mxu0 0
        %2686 = vmatpush.bf16.msra.mxu0 0
        %2687 = vmatpush.bf16.msra.mxu0 0
        %2688 = vmatpush.bf16.msra.mxu0 %v2679
        %2689 = vmatmul.bf16.gmra.mxu0 %v2676
        %v2690 = vpop.f32.mrf.mxu0
        %v2691 = vadd.f32 0.0, %v2690
        %v2692 = vpop.f32.mrf.mxu0
        %2693 = vdwg.mxu0
        %v2695 = vsel %vm1477, %v2654, 0
        %v2698 = vsel %vm1581, %v2472, 0
        %2700 = vmatpush.bf16.msra.mxu0 0
        %2701 = vmatpush.bf16.msra.mxu0 0
        %2702 = vmatpush.bf16.msra.mxu0 0
        %2703 = vmatpush.bf16.msra.mxu0 0
        %2704 = vmatpush.bf16.msra.mxu0 0
        %2705 = vmatpush.bf16.msra.mxu0 0
        %2706 = vmatpush.bf16.msra.mxu0 0
        %2707 = vmatpush.bf16.msra.mxu0 %v2698
        %2708 = vmatmul.bf16.gmra.mxu0 %v2695
        %v2709 = vpop.f32.mrf.mxu0
        %v2710 = vadd.f32 0.0, %v2709
        %v2711 = vpop.f32.mrf.mxu0
        %2712 = vdwg.mxu0
        %v2714 = vsel %vm1477, %v2655, 0
        %v2717 = vsel %vm1581, %v2475, 0
        %2719 = vmatpush.bf16.msra.mxu0 0
        %2720 = vmatpush.bf16.msra.mxu0 0
        %2721 = vmatpush.bf16.msra.mxu0 0
        %2722 = vmatpush.bf16.msra.mxu0 0
        %2723 = vmatpush.bf16.msra.mxu0 0
        %2724 = vmatpush.bf16.msra.mxu0 0
        %2725 = vmatpush.bf16.msra.mxu0 0
        %2726 = vmatpush.bf16.msra.mxu0 %v2717
        %2727 = vmatmul.bf16.gmra.mxu0 %v2714
        %v2728 = vpop.f32.mrf.mxu0
        %v2729 = vadd.f32 0.0, %v2728
        %v2730 = vpop.f32.mrf.mxu0
        %2731 = vdwg.mxu0
        %v2732 = vrot.slane %v2710, 4
        %v2733 = vsel %vm1656, %v2732, %v2672
        %v2734 = vrot.slane %v2672, 4
        %v2735 = vsel %vm1656, %v2710, %v2734
        %v2737 = vunpack.c.l.s4 1983009808
        %v2738 = vunpack.c.0.s8 %v2737
        %v2739 = vperm.slane %v2733, %v2738
        %v2741 = vunpack.c.l.s4 1983009808
        %v2742 = vunpack.c.0.s8 %v2741
        %v2743 = vperm.slane %v2735, %v2742
        %v2744 = vrot.slane %v2729, 4
        %v2745 = vsel %vm1656, %v2744, %v2691
        %v2746 = vrot.slane %v2691, 4
        %v2747 = vsel %vm1656, %v2729, %v2746
        %v2749 = vunpack.c.l.s4 1983009808
        %v2750 = vunpack.c.0.s8 %v2749
        %v2751 = vperm.slane %v2745, %v2750
        %v2753 = vunpack.c.l.s4 1983009808
        %v2754 = vunpack.c.0.s8 %v2753
        %v2755 = vperm.slane %v2747, %v2754
        %v2756 = vrot.slane %v2751, 4
        %v2757 = vsel %vm1656, %v2756, %v2739
        %v2758 = vrot.slane %v2739, 4
        %v2759 = vsel %vm1656, %v2751, %v2758
        %v2761 = vunpack.c.l.s4 1934713408
        %v2762 = vunpack.c.0.s8 %v2761
        %v2763 = vperm.slane %v2757, %v2762
        %v2765 = vunpack.c.l.s4 1934713408
        %v2766 = vunpack.c.0.s8 %v2765
        %v2767 = vperm.slane %v2759, %v2766
        %v2768 = vrot.slane %v2755, 4
        %v2769 = vsel %vm1656, %v2768, %v2743
        %v2770 = vrot.slane %v2743, 4
        %v2771 = vsel %vm1656, %v2755, %v2770
        %v2773 = vunpack.c.l.s4 1934713408
        %v2774 = vunpack.c.0.s8 %v2773
        %v2775 = vperm.slane %v2769, %v2774
        %v2777 = vunpack.c.l.s4 1934713408
        %v2778 = vunpack.c.0.s8 %v2777
        %v2779 = vperm.slane %v2771, %v2778
        %v2780 = vrot.slane %v2763, 4
        %v2781 = vsel %vm1656, 0.0, %v2780
        %v2782 = vrot.slane %v2767, 4
        %v2783 = vsel %vm1656, 0.0, %v2782
        %v2784 = vrot.slane %v2775, 4
        %v2785 = vsel %vm1656, 0.0, %v2784
        %v2786 = vrot.slane %v2779, 4
        %v2787 = vsel %vm1656, 0.0, %v2786
        %v2788 = vsel %vm1656, %v2782, %v2763
        %v2790 = vunpack.c.l.s4 1983009808
        %v2791 = vunpack.c.0.s8 %v2790
        %v2792 = vperm.slane %v2788, %v2791
        %v2793 = vrot.slane %v2783, 4
        %v2794 = vsel %vm1656, %v2793, %v2781
        %v2796 = vunpack.c.l.s4 1983009808
        %v2797 = vunpack.c.0.s8 %v2796
        %v2798 = vperm.slane %v2794, %v2797
        %v2799 = vsel %vm1656, %v2786, %v2775
        %v2801 = vunpack.c.l.s4 1983009808
        %v2802 = vunpack.c.0.s8 %v2801
        %v2803 = vperm.slane %v2799, %v2802
        %v2804 = vrot.slane %v2787, 4
        %v2805 = vsel %vm1656, %v2804, %v2785
        %v2807 = vunpack.c.l.s4 1983009808
        %v2808 = vunpack.c.0.s8 %v2807
        %v2809 = vperm.slane %v2805, %v2808
        %v2810 = vrot.slane %v2798, 4
        %v2811 = vsel %vm1656, %v2810, %v2792
        %v2812 = vrot.slane %v2792, 4
        %v2813 = vsel %vm1656, %v2798, %v2812
        %v2815 = vunpack.c.l.s4 1934713408
        %v2816 = vunpack.c.0.s8 %v2815
        %v2817 = vperm.slane %v2811, %v2816
        %v2819 = vunpack.c.l.s4 1934713408
        %v2820 = vunpack.c.0.s8 %v2819
        %v2821 = vperm.slane %v2813, %v2820
        %v2822 = vrot.slane %v2809, 4
        %v2823 = vsel %vm1656, %v2822, %v2803
        %v2824 = vrot.slane %v2803, 4
        %v2825 = vsel %vm1656, %v2809, %v2824
        %v2827 = vunpack.c.l.s4 1934713408
        %v2828 = vunpack.c.0.s8 %v2827
        %v2829 = vperm.slane %v2823, %v2828
        %v2831 = vunpack.c.l.s4 1934713408
        %v2832 = vunpack.c.0.s8 %v2831
        %v2833 = vperm.slane %v2825, %v2832
        %v2834 = vrot.slane %v2829, 4
        %v2835 = vsel %vm1656, %v2834, %v2817
        %v2836 = vrot.slane %v2817, 4
        %v2837 = vsel %vm1656, %v2829, %v2836
        %v2838 = vrot.slane %v2833, 4
        %v2839 = vsel %vm1656, %v2838, %v2821
        %v2840 = vrot.slane %v2821, 4
        %v2841 = vsel %vm1656, %v2833, %v2840
        %2843 = vrot.lane.b32.xlu0 %v2837, 32
        %v2844 = vpop.permute.xlu0 %2843
        %2847 = vrot.lane.b32.xlu0 %v2839, 64
        %v2848 = vpop.permute.xlu0 %2847
        %2851 = vrot.lane.b32.xlu0 %v2841, 96
        %v2852 = vpop.permute.xlu0 %2851
        %v2854 = vsel %vm1385, %v2835, %v2844
        %v2855 = vsel %vm1779, %v2854, %v2848
        %v2856 = vsel %vm1781, %v2855, %v2852
        %v2857 = vpack.c.bf16 %v2856, %v2856
        %v2858 = vld [vmem:[#allocation9] sm:$0xf]
        %v2859 = vld [vmem:[#allocation9 + $0x4] sm:$0xf]
        %v2860 = vld [vmem:[#allocation9 + $0x8] sm:$0xf]
        %v2861 = vld [vmem:[#allocation9 + $0xc] sm:$0xf]
        %v2862 = vld [vmem:[#allocation9 + $0x10] sm:$0xf]
        %v2863 = vld [vmem:[#allocation9 + $0x14] sm:$0xf]
        %v2864 = vld [vmem:[#allocation9 + $0x18] sm:$0xf]
        %v2865 = vld [vmem:[#allocation9 + $0x1c] sm:$0xf]
        %v2866 = vld [vmem:[#allocation9 + $0x20] sm:$0xf]
        %v2867 = vld [vmem:[#allocation9 + $0x24] sm:$0xf]
        %v2868 = vld [vmem:[#allocation9 + $0x28] sm:$0xf]
        %v2869 = vld [vmem:[#allocation9 + $0x2c] sm:$0xf]
        %v2870 = vld [vmem:[#allocation9 + $0x30] sm:$0xf]
        %v2871 = vld [vmem:[#allocation9 + $0x34] sm:$0xf]
        %v2872 = vld [vmem:[#allocation9 + $0x38] sm:$0xf]
        %v2873 = vld [vmem:[#allocation9 + $0x3c] sm:$0xf]
        %v2874 = vld [vmem:[%s13] sm:$0x1]
        %v2876 = vperm.slane %v2874, 0
        %v2894 = vunpack.c.l.b16 %v2858
        %v2895 = vunpack.c.l.b16 %v2859
        %v2896 = vunpack.c.l.b16 %v2860
        %v2897 = vunpack.c.l.b16 %v2861
        %v2898 = vunpack.c.l.b16 %v2862
        %v2899 = vunpack.c.l.b16 %v2863
        %v2900 = vunpack.c.l.b16 %v2864
        %v2901 = vunpack.c.l.b16 %v2865
        %v2902 = vunpack.c.l.b16 %v2866
        %v2903 = vunpack.c.l.b16 %v2867
        %v2904 = vunpack.c.l.b16 %v2868
        %v2905 = vunpack.c.l.b16 %v2869
        %v2906 = vunpack.c.l.b16 %v2870
        %v2907 = vunpack.c.l.b16 %v2871
        %v2908 = vunpack.c.l.b16 %v2872
        %v2909 = vunpack.c.l.b16 %v2873
        %v2910 = vpack.c.b16 %v2895, %v2894
        %v2911 = vpack.c.b16 %v2897, %v2896
        %v2912 = vpack.c.b16 %v2899, %v2898
        %v2913 = vpack.c.b16 %v2901, %v2900
        %v2914 = vpack.c.b16 %v2903, %v2902
        %v2915 = vpack.c.b16 %v2905, %v2904
        %v2916 = vpack.c.b16 %v2907, %v2906
        %v2917 = vpack.c.b16 %v2909, %v2908
        %2926 = vmatpush.bf16.msra.mxu0 %v2917
        %2927 = vmatpush.bf16.msra.mxu0 %v2916
        %2928 = vmatpush.bf16.msra.mxu0 %v2915
        %2929 = vmatpush.bf16.msra.mxu0 %v2914
        %2930 = vmatpush.bf16.msra.mxu0 %v2913
        %2931 = vmatpush.bf16.msra.mxu0 %v2912
        %2932 = vmatpush.bf16.msra.mxu0 %v2911
        %2933 = vmatpush.bf16.msra.mxu0 %v2910
        %2934 = vmatmul.bf16.gmra.mxu0 %v2857
        %v2935 = vpop.f32.mrf.mxu0
        %v2936 = vadd.f32 %v2876, %v2935
        %v2937 = vpop.f32.mrf.mxu0
        %2938 = vdwg.mxu0
        %v2939 = vadd.f32 %v2936, %v1903
        %v2940 = vld [vmem:[%s14] sm:$0x1]
        %v2941 = vld [vmem:[%s15] sm:$0x1]
        %2942 = vadd.xlane.f32.xlu0 %v2939
        %v2943 = vpop.xlane.xlu0 %2942
        %v2944 = vmul.f32 %v2943, %v1877
        %v2945 = vsub.f32 %v2939, %v2944
        %v2946 = vmul.f32 %v2945, %v2945
        %2947 = vadd.xlane.f32.xlu0 %v2946
        %v2948 = vpop.xlane.xlu0 %2947
        %v2949 = vmul.f32 %v2948, %v1877
        %v2950 = vadd.f32 %v2949, 1e-05
        %v2951 = vrsqrt.pop %v2950
        %v2952 = vmul.f32 %v2951, %v2950
        %v2953 = vmul.f32 %v2952, %v2951
        %v2954 = vmul.f32 0.5, %v2953
        %v2955 = vsub.f32 1.5, %v2954
        %v2956 = vmul.f32 %v2951, %v2955
        %vm2957 = vweird.f32 %v2950
        %vm2958 = vweird.f32 %v2951
        %vm2959 = vmor %vm2957, %vm2958
        %v2960 = vsel %vm2959, %v2951, %v2956
        %v2961 = vmul.f32 %v2945, %v2960
        %v2963 = vperm.slane %v2940, 0
        %v2965 = vmul.f32 %v2961, %v2963
        %v2967 = vperm.slane %v2941, 0
        %v2969 = vadd.f32 %v2965, %v2967
        %v2970 = vpack.c.bf16 %v2969, %v2969
        %v2971 = vld [vmem:[#allocation10] sm:$0xff]
        %v2972 = vld [vmem:[#allocation10 + $0x8] sm:$0xff]
        %v2973 = vld [vmem:[#allocation10 + $0x10] sm:$0xff]
        %v2974 = vld [vmem:[#allocation10 + $0x18] sm:$0xff]
        %v2975 = vld [vmem:[#allocation10 + $0x20] sm:$0xff]
        %v2976 = vld [vmem:[#allocation10 + $0x28] sm:$0xff]
        %v2977 = vld [vmem:[#allocation10 + $0x30] sm:$0xff]
        %v2978 = vld [vmem:[#allocation10 + $0x38] sm:$0xff]
        %v2979 = vld [vmem:[#allocation10 + $0x40] sm:$0xff]
        %v2980 = vld [vmem:[#allocation10 + $0x48] sm:$0xff]
        %v2981 = vld [vmem:[#allocation10 + $0x50] sm:$0xff]
        %v2982 = vld [vmem:[#allocation10 + $0x58] sm:$0xff]
        %v2983 = vld [vmem:[#allocation10 + $0x60] sm:$0xff]
        %v2984 = vld [vmem:[#allocation10 + $0x68] sm:$0xff]
        %v2985 = vld [vmem:[#allocation10 + $0x70] sm:$0xff]
        %v2986 = vld [vmem:[#allocation10 + $0x78] sm:$0xff]
        %v2987 = vld [vmem:[%s17] sm:$0x3]
        %v2989 = vperm.slane %v2987, 0
        %v2990 = vperm.slane %v2987, 1
        %v3009 = vunpack.c.l.b16 %v2971
        %v3010 = vunpack.c.h.b16 %v2971
        %v3011 = vunpack.c.l.b16 %v2972
        %v3012 = vunpack.c.h.b16 %v2972
        %v3013 = vunpack.c.l.b16 %v2973
        %v3014 = vunpack.c.h.b16 %v2973
        %v3015 = vunpack.c.l.b16 %v2974
        %v3016 = vunpack.c.h.b16 %v2974
        %v3017 = vunpack.c.l.b16 %v2975
        %v3018 = vunpack.c.h.b16 %v2975
        %v3019 = vunpack.c.l.b16 %v2976
        %v3020 = vunpack.c.h.b16 %v2976
        %v3021 = vunpack.c.l.b16 %v2977
        %v3022 = vunpack.c.h.b16 %v2977
        %v3023 = vunpack.c.l.b16 %v2978
        %v3024 = vunpack.c.h.b16 %v2978
        %v3025 = vunpack.c.l.b16 %v2979
        %v3026 = vunpack.c.h.b16 %v2979
        %v3027 = vunpack.c.l.b16 %v2980
        %v3028 = vunpack.c.h.b16 %v2980
        %v3029 = vunpack.c.l.b16 %v2981
        %v3030 = vunpack.c.h.b16 %v2981
        %v3031 = vunpack.c.l.b16 %v2982
        %v3032 = vunpack.c.h.b16 %v2982
        %v3033 = vunpack.c.l.b16 %v2983
        %v3034 = vunpack.c.h.b16 %v2983
        %v3035 = vunpack.c.l.b16 %v2984
        %v3036 = vunpack.c.h.b16 %v2984
        %v3037 = vunpack.c.l.b16 %v2985
        %v3038 = vunpack.c.h.b16 %v2985
        %v3039 = vunpack.c.l.b16 %v2986
        %v3040 = vunpack.c.h.b16 %v2986
        %v3041 = vpack.c.b16 %v3011, %v3009
        %v3042 = vpack.c.b16 %v3012, %v3010
        %v3043 = vpack.c.b16 %v3015, %v3013
        %v3044 = vpack.c.b16 %v3016, %v3014
        %v3045 = vpack.c.b16 %v3019, %v3017
        %v3046 = vpack.c.b16 %v3020, %v3018
        %v3047 = vpack.c.b16 %v3023, %v3021
        %v3048 = vpack.c.b16 %v3024, %v3022
        %v3049 = vpack.c.b16 %v3027, %v3025
        %v3050 = vpack.c.b16 %v3028, %v3026
        %v3051 = vpack.c.b16 %v3031, %v3029
        %v3052 = vpack.c.b16 %v3032, %v3030
        %v3053 = vpack.c.b16 %v3035, %v3033
        %v3054 = vpack.c.b16 %v3036, %v3034
        %v3055 = vpack.c.b16 %v3039, %v3037
        %v3056 = vpack.c.b16 %v3040, %v3038
        %3073 = vmatpush.bf16.msra.mxu0 %v3055
        %3074 = vmatpush.bf16.msra.mxu0 %v3053
        %3075 = vmatpush.bf16.msra.mxu0 %v3051
        %3076 = vmatpush.bf16.msra.mxu0 %v3049
        %3077 = vmatpush.bf16.msra.mxu0 %v3047
        %3078 = vmatpush.bf16.msra.mxu0 %v3045
        %3079 = vmatpush.bf16.msra.mxu0 %v3043
        %3080 = vmatpush.bf16.msra.mxu0 %v3041
        %3081 = vmatmul.bf16.gmra.mxu0 %v2970
        %v3082 = vpop.f32.mrf.mxu0
        %v3083 = vadd.f32 %v2989, %v3082
        %v3084 = vpop.f32.mrf.mxu0
        %3085 = vdwg.mxu0
        %3086 = vmatpush.bf16.msra.mxu0 %v3056
        %3087 = vmatpush.bf16.msra.mxu0 %v3054
        %3088 = vmatpush.bf16.msra.mxu0 %v3052
        %3089 = vmatpush.bf16.msra.mxu0 %v3050
        %3090 = vmatpush.bf16.msra.mxu0 %v3048
        %3091 = vmatpush.bf16.msra.mxu0 %v3046
        %3092 = vmatpush.bf16.msra.mxu0 %v3044
        %3093 = vmatpush.bf16.msra.mxu0 %v3042
        %3094 = vmatmul.bf16.gmra.mxu0 %v2970
        %v3095 = vpop.f32.mrf.mxu0
        %v3096 = vadd.f32 %v2990, %v3095
        %v3097 = vpop.f32.mrf.mxu0
        %3098 = vdwg.mxu0
        %v3099 = vmax.f32 %v3083, 0.0
        %v3100 = vmax.f32 %v3096, 0.0
        %v3101 = vpack.c.bf16 %v3099, %v3099
        %v3102 = vpack.c.bf16 %v3100, %v3100
        %v3103 = vld [vmem:[#allocation12] sm:$0xf]
        %v3104 = vld [vmem:[#allocation12 + $0x4] sm:$0xf]
        %v3105 = vld [vmem:[#allocation12 + $0x8] sm:$0xf]
        %v3106 = vld [vmem:[#allocation12 + $0xc] sm:$0xf]
        %v3107 = vld [vmem:[#allocation12 + $0x10] sm:$0xf]
        %v3108 = vld [vmem:[#allocation12 + $0x14] sm:$0xf]
        %v3109 = vld [vmem:[#allocation12 + $0x18] sm:$0xf]
        %v3110 = vld [vmem:[#allocation12 + $0x1c] sm:$0xf]
        %v3111 = vld [vmem:[#allocation12 + $0x20] sm:$0xf]
        %v3112 = vld [vmem:[#allocation12 + $0x24] sm:$0xf]
        %v3113 = vld [vmem:[#allocation12 + $0x28] sm:$0xf]
        %v3114 = vld [vmem:[#allocation12 + $0x2c] sm:$0xf]
        %v3115 = vld [vmem:[#allocation12 + $0x30] sm:$0xf]
        %v3116 = vld [vmem:[#allocation12 + $0x34] sm:$0xf]
        %v3117 = vld [vmem:[#allocation12 + $0x38] sm:$0xf]
        %v3118 = vld [vmem:[#allocation12 + $0x3c] sm:$0xf]
        %v3119 = vld [vmem:[#allocation12 + $0x40] sm:$0xf]
        %v3120 = vld [vmem:[#allocation12 + $0x44] sm:$0xf]
        %v3121 = vld [vmem:[#allocation12 + $0x48] sm:$0xf]
        %v3122 = vld [vmem:[#allocation12 + $0x4c] sm:$0xf]
        %v3123 = vld [vmem:[#allocation12 + $0x50] sm:$0xf]
        %v3124 = vld [vmem:[#allocation12 + $0x54] sm:$0xf]
        %v3125 = vld [vmem:[#allocation12 + $0x58] sm:$0xf]
        %v3126 = vld [vmem:[#allocation12 + $0x5c] sm:$0xf]
        %v3127 = vld [vmem:[#allocation12 + $0x60] sm:$0xf]
        %v3128 = vld [vmem:[#allocation12 + $0x64] sm:$0xf]
        %v3129 = vld [vmem:[#allocation12 + $0x68] sm:$0xf]
        %v3130 = vld [vmem:[#allocation12 + $0x6c] sm:$0xf]
        %v3131 = vld [vmem:[#allocation12 + $0x70] sm:$0xf]
        %v3132 = vld [vmem:[#allocation12 + $0x74] sm:$0xf]
        %v3133 = vld [vmem:[#allocation12 + $0x78] sm:$0xf]
        %v3134 = vld [vmem:[#allocation12 + $0x7c] sm:$0xf]
        %v3135 = vld [vmem:[%s19] sm:$0x1]
        %v3137 = vperm.slane %v3135, 0
        %v3171 = vunpack.c.l.b16 %v3103
        %v3172 = vunpack.c.l.b16 %v3104
        %v3173 = vunpack.c.l.b16 %v3105
        %v3174 = vunpack.c.l.b16 %v3106
        %v3175 = vunpack.c.l.b16 %v3107
        %v3176 = vunpack.c.l.b16 %v3108
        %v3177 = vunpack.c.l.b16 %v3109
        %v3178 = vunpack.c.l.b16 %v3110
        %v3179 = vunpack.c.l.b16 %v3111
        %v3180 = vunpack.c.l.b16 %v3112
        %v3181 = vunpack.c.l.b16 %v3113
        %v3182 = vunpack.c.l.b16 %v3114
        %v3183 = vunpack.c.l.b16 %v3115
        %v3184 = vunpack.c.l.b16 %v3116
        %v3185 = vunpack.c.l.b16 %v3117
        %v3186 = vunpack.c.l.b16 %v3118
        %v3187 = vunpack.c.l.b16 %v3119
        %v3188 = vunpack.c.l.b16 %v3120
        %v3189 = vunpack.c.l.b16 %v3121
        %v3190 = vunpack.c.l.b16 %v3122
        %v3191 = vunpack.c.l.b16 %v3123
        %v3192 = vunpack.c.l.b16 %v3124
        %v3193 = vunpack.c.l.b16 %v3125
        %v3194 = vunpack.c.l.b16 %v3126
        %v3195 = vunpack.c.l.b16 %v3127
        %v3196 = vunpack.c.l.b16 %v3128
        %v3197 = vunpack.c.l.b16 %v3129
        %v3198 = vunpack.c.l.b16 %v3130
        %v3199 = vunpack.c.l.b16 %v3131
        %v3200 = vunpack.c.l.b16 %v3132
        %v3201 = vunpack.c.l.b16 %v3133
        %v3202 = vunpack.c.l.b16 %v3134
        %v3203 = vpack.c.b16 %v3172, %v3171
        %v3204 = vpack.c.b16 %v3174, %v3173
        %v3205 = vpack.c.b16 %v3176, %v3175
        %v3206 = vpack.c.b16 %v3178, %v3177
        %v3207 = vpack.c.b16 %v3180, %v3179
        %v3208 = vpack.c.b16 %v3182, %v3181
        %v3209 = vpack.c.b16 %v3184, %v3183
        %v3210 = vpack.c.b16 %v3186, %v3185
        %v3211 = vpack.c.b16 %v3188, %v3187
        %v3212 = vpack.c.b16 %v3190, %v3189
        %v3213 = vpack.c.b16 %v3192, %v3191
        %v3214 = vpack.c.b16 %v3194, %v3193
        %v3215 = vpack.c.b16 %v3196, %v3195
        %v3216 = vpack.c.b16 %v3198, %v3197
        %v3217 = vpack.c.b16 %v3200, %v3199
        %v3218 = vpack.c.b16 %v3202, %v3201
        %3235 = vmatpush.bf16.msra.mxu0 %v3210
        %3236 = vmatpush.bf16.msra.mxu0 %v3209
        %3237 = vmatpush.bf16.msra.mxu0 %v3208
        %3238 = vmatpush.bf16.msra.mxu0 %v3207
        %3239 = vmatpush.bf16.msra.mxu0 %v3206
        %3240 = vmatpush.bf16.msra.mxu0 %v3205
        %3241 = vmatpush.bf16.msra.mxu0 %v3204
        %3242 = vmatpush.bf16.msra.mxu0 %v3203
        %3243 = vmatmul.bf16.gmra.mxu0 %v3101
        %v3244 = vpop.f32.mrf.mxu0
        %v3245 = vadd.f32 %v3137, %v3244
        %v3246 = vpop.f32.mrf.mxu0
        %3247 = vdwg.mxu0
        %3248 = vmatpush.bf16.msra.mxu0 %v3218
        %3249 = vmatpush.bf16.msra.mxu0 %v3217
        %3250 = vmatpush.bf16.msra.mxu0 %v3216
        %3251 = vmatpush.bf16.msra.mxu0 %v3215
        %3252 = vmatpush.bf16.msra.mxu0 %v3214
        %3253 = vmatpush.bf16.msra.mxu0 %v3213
        %3254 = vmatpush.bf16.msra.mxu0 %v3212
        %3255 = vmatpush.bf16.msra.mxu0 %v3211
        %3256 = vmatmul.bf16.gmra.mxu0 %v3102
        %v3257 = vpop.f32.mrf.mxu0
        %v3258 = vadd.f32 %v3245, %v3257
        %v3259 = vpop.f32.mrf.mxu0
        %3260 = vdwg.mxu0
        %v3261 = vadd.f32 %v3258, %v2969
        %v3262 = vld [vmem:[%s20] sm:$0x1]
        %v3263 = vld [vmem:[%s21] sm:$0x1]
        %3264 = vadd.xlane.f32.xlu0 %v3261
        %v3265 = vpop.xlane.xlu0 %3264
        %v3266 = vmul.f32 %v3265, %v1877
        %v3267 = vsub.f32 %v3261, %v3266
        %v3268 = vmul.f32 %v3267, %v3267
        %3269 = vadd.xlane.f32.xlu0 %v3268
        %v3270 = vpop.xlane.xlu0 %3269
        %v3271 = vmul.f32 %v3270, %v1877
        %v3272 = vadd.f32 %v3271, 1e-05
        %v3273 = vrsqrt.pop %v3272
        %v3274 = vmul.f32 %v3273, %v3272
        %v3275 = vmul.f32 %v3274, %v3273
        %v3276 = vmul.f32 0.5, %v3275
        %v3277 = vsub.f32 1.5, %v3276
        %v3278 = vmul.f32 %v3273, %v3277
        %vm3279 = vweird.f32 %v3272
        %vm3280 = vweird.f32 %v3273
        %vm3281 = vmor %vm3279, %vm3280
        %v3282 = vsel %vm3281, %v3273, %v3278
        %v3283 = vmul.f32 %v3267, %v3282
        %v3285 = vperm.slane %v3262, 0
        %v3287 = vmul.f32 %v3283, %v3285
        %v3289 = vperm.slane %v3263, 0
        %v3291 = vadd.f32 %v3287, %v3289
        %v3292 = vpack.c.bf16 %v3291, %v3291
        %3293 = vst [vmem:[%s811] sm:$0xf] %v3292
        %p3294 = scmp.lt.s32.totalorder %s37, 1
        %s3295 = scalar_select %p3294, %s37, 1
        %s3296 = smul.addr %s3295, 4
        %s3297 = scalar_lea.vmem %s22, %s3296
        // Predicated region
        $region137: #{beatmap_decoder_forward.4} parent=107 // pred_check
          %p3298 = pneg %p527
        $region138: #{beatmap_decoder_forward.4} parent=107 // pred_check_branch
          %3300 = sbr.rel (%p3298) target = $region140
        $region139: #{beatmap_decoder_forward.4} parent=107 // pred_region
          _
        $region140: #{beatmap_decoder_forward.4} parent=107 // pred_fallthru
          _
      $region108: #{beatmap_decoder_forward.4} parent=5 // pred_fallthru
        _
      %p3301 = scmp.le.s32.totalorder 2, %s32
      // Predicated region
      $region141: #{beatmap_decoder_forward.4} parent=5 // pred_check
        %p3302 = pneg %p3301
      $region142: #{beatmap_decoder_forward.4} parent=5 // pred_check_branch
        %3304 = sbr.rel (%p3302) target = $region144
      $region143: #{beatmap_decoder_forward.4} parent=5 // pred_region
        %s3305 = ssub.s32 %s32, 2
        // Predicated region
        $region145: #{beatmap_decoder_forward.4} parent=143 // pred_check
          %p3306 = pneg %p533
        $region146: #{beatmap_decoder_forward.4} parent=143 // pred_check_branch
          %3308 = sbr.rel (%p3306) target = $region148
        $region147: #{beatmap_decoder_forward.4} parent=143 // pred_region
          %p3309 = scmp.lt.s32.totalorder %s38, 1
          %s3310 = scalar_select %p3309, %s38, 1
          %s3311 = smul.addr %s3310, 4
          %s3312 = scalar_lea.vmem %s22, %s3311
        $region148: #{beatmap_decoder_forward.4} parent=143 // pred_fallthru
          _
      $region144: #{beatmap_decoder_forward.4} parent=5 // pred_fallthru
        _
    $region6: #{beatmap_decoder_forward.4} parent=1 // loop_footer
      %s36 = sadd.s32 1, %s32
    $region7: #{beatmap_decoder_forward.4} parent=1 // loop_footer_branch
      %31 = sbr.rel target = $region3
    $region8: #{beatmap_decoder_forward.4} parent=1 // loop_exit
      _
    %3313 = vsyncpa [#allocation3], 1
    %s3314 = scalar_lea.sflag [#allocation3], 1
    %3315 = vsyncpa %s3314, 1
    %3316 = vsyncpa [#allocation5], 1
    %3317 = vsyncpa [#allocation8], 1
    %3318 = vsyncpa [#allocation11], 1

</llo_original>
